<compile_context>
chip_gen: v7x
topology: tpu7x:2x2x1
jax: 0.10.0
libtpu: 0.0.40
codegen_flags: <defaults>
</compile_context>

<pallas_src>
import math
import functools

import jax
import jax.numpy as jnp
from jax.experimental import pallas as pl
from jax.experimental.pallas import tpu as pltpu


# ----------------------------------------------------------------------------
# Config (small shapes consistent with the torch module under test)
# ----------------------------------------------------------------------------
class Config:
    vocab_size = 64
    d_model = 32
    encoder_layers = 2
    decoder_layers = 2
    num_heads = 4
    ffn_dim = 64
    max_position_embeddings = 32
    pad_token_id = 1
    mask_token_id = 3


# Fixed ordering of the (stacked) weight arrays fed to the fused kernel.
_WEIGHT_NAMES = (
    # embedding layer-norms
    "e_emb_g", "e_emb_b", "d_emb_g", "d_emb_b",
    # encoder layers (stacked over encoder_layers)
    "e_wqkv", "e_bqkv", "e_wo", "e_bo", "e_ln1g", "e_ln1b",
    "e_w1", "e_b1", "e_w2", "e_b2", "e_ln2g", "e_ln2b",
    # decoder layers (stacked over decoder_layers)
    "d_wqkv", "d_bqkv", "d_wo", "d_bo", "d_ln1g", "d_ln1b",
    "d_cwq", "d_cbq", "d_cwkv", "d_cbkv", "d_cwo", "d_cbo", "d_ln2g", "d_ln2b",
    "d_w1", "d_b1", "d_w2", "d_b2", "d_ln3g", "d_ln3b",
)


# ----------------------------------------------------------------------------
# Fused whole-model Pallas kernel (one grid step == one batch element)
# ----------------------------------------------------------------------------
def _bart_fused_kernel(x_enc_ref, x_dec_ref, *args,
                       num_heads, n_enc, n_dec, eps):
    w = dict(zip(_WEIGHT_NAMES, args[:len(_WEIGHT_NAMES)]))
    enc_out_ref, dec_out_ref = args[len(_WEIGHT_NAMES):]

    D = x_enc_ref.shape[-1]
    dh = D // num_heads
    scale = 1.0 / math.sqrt(dh)

    def layer_norm(x, g, b):
        mean = jnp.mean(x, axis=-1, keepdims=True)
        c = x - mean
        var = jnp.mean(c * c, axis=-1, keepdims=True)
        return c * jax.lax.rsqrt(var + eps) * g + b

    def softmax_rows(s):
        s = s - jnp.max(s, axis=-1, keepdims=True)
        p = jnp.exp(s)
        # approx reciprocal goes to the EUP slot; tiny deviation vs exact divide.
        return p * pl.reciprocal(jnp.sum(p, axis=-1, keepdims=True), approx=True)

    def attention(q, k, v, causal):
        # q: (Tq, D), k/v: (Tk, D).  Heads live on static lane slices of D.
        Tq, Tk = q.shape[0], k.shape[0]
        if causal:
            iq = jax.lax.broadcasted_iota(jnp.int32, (Tq, Tk), 0)
            ik = jax.lax.broadcasted_iota(jnp.int32, (Tq, Tk), 1)
            neg = jnp.where(iq >= ik, jnp.float32(0.0), jnp.float32(-1e9))
        kt = k.T                                            # (D, Tk), one transpose
        outs = []
        for hh in range(num_heads):
            sl = slice(hh * dh, (hh + 1) * dh)
            s = jnp.dot(q[:, sl], kt[sl, :],
                        preferred_element_type=jnp.float32) * scale
            if causal:
                s = s + neg
            p = softmax_rows(s)
            outs.append(jnp.dot(p, v[:, sl], preferred_element_type=jnp.float32))
        return jnp.concatenate(outs, axis=-1)               # (Tq, D)

    def self_attn_block(x, wqkv, bqkv, wo, bo, g, b, causal):
        qkv = jnp.dot(x, wqkv, preferred_element_type=jnp.float32) + bqkv
        q, k, v = qkv[:, :D], qkv[:, D:2 * D], qkv[:, 2 * D:]
        o = attention(q, k, v, causal)
        o = jnp.dot(o, wo, preferred_element_type=jnp.float32) + bo
        return layer_norm(x + o, g, b)

    def cross_attn_block(x, kv_src, wq, bq, wkv, bkv, wo, bo, g, b):
        q = jnp.dot(x, wq, preferred_element_type=jnp.float32) + bq
        kv = jnp.dot(kv_src, wkv, preferred_element_type=jnp.float32) + bkv
        k, v = kv[:, :D], kv[:, D:]
        o = attention(q, k, v, causal=False)
        o = jnp.dot(o, wo, preferred_element_type=jnp.float32) + bo
        return layer_norm(x + o, g, b)

    def ffn_block(x, w1, b1, w2, b2, g, b):
        hdn = jnp.dot(x, w1, preferred_element_type=jnp.float32) + b1
        # exact (erf) GELU, matching torch.nn.functional.gelu default
        hdn = 0.5 * hdn * (1.0 + jax.lax.erf(hdn * (1.0 / math.sqrt(2.0))))
        hdn = jnp.dot(hdn, w2, preferred_element_type=jnp.float32) + b2
        return layer_norm(x + hdn, g, b)

    # -------------------------- encoder --------------------------
    h = x_enc_ref[0].astype(jnp.float32)                    # (Te, D)
    h = layer_norm(h, w["e_emb_g"][...], w["e_emb_b"][...])
    for l in range(n_enc):
        h = self_attn_block(h, w["e_wqkv"][l], w["e_bqkv"][l],
                            w["e_wo"][l], w["e_bo"][l],
                            w["e_ln1g"][l], w["e_ln1b"][l], causal=False)
        h = ffn_block(h, w["e_w1"][l], w["e_b1"][l],
                      w["e_w2"][l], w["e_b2"][l],
                      w["e_ln2g"][l], w["e_ln2b"][l])
    enc_out_ref[0] = h.astype(enc_out_ref.dtype)

    # -------------------------- decoder --------------------------
    d = x_dec_ref[0].astype(jnp.float32)                    # (Td, D)
    d = layer_norm(d, w["d_emb_g"][...], w["d_emb_b"][...])
    for l in range(n_dec):
        d = self_attn_block(d, w["d_wqkv"][l], w["d_bqkv"][l],
                            w["d_wo"][l], w["d_bo"][l],
                            w["d_ln1g"][l], w["d_ln1b"][l], causal=True)
        d = cross_attn_block(d, h, w["d_cwq"][l], w["d_cbq"][l],
                             w["d_cwkv"][l], w["d_cbkv"][l],
                             w["d_cwo"][l], w["d_cbo"][l],
                             w["d_ln2g"][l], w["d_ln2b"][l])
        d = ffn_block(d, w["d_w1"][l], w["d_b1"][l],
                      w["d_w2"][l], w["d_b2"][l],
                      w["d_ln3g"][l], w["d_ln3b"][l])
    dec_out_ref[0] = d.astype(dec_out_ref.dtype)


# ----------------------------------------------------------------------------
# Parameter init (stacked per-layer weights; matches the torch module structure)
# ----------------------------------------------------------------------------
def _init_params(cfg, key):
    std = 0.02
    D, F = cfg.d_model, cfg.ffn_dim
    Le, Ld = cfg.encoder_layers, cfg.decoder_layers
    keys = iter(jax.random.split(key, 64))

    def wrand(shape):
        return jax.random.normal(next(keys), shape, jnp.float32) * std

    def zeros(shape):
        return jnp.zeros(shape, jnp.float32)

    def ones(shape):
        return jnp.ones(shape, jnp.float32)

    params = {
        # shared token embedding (== self.item_embedding in the torch module)
        "shared": wrand((cfg.vocab_size, D)),
        # learned positional embeddings (BART offset of 2)
        "enc_pos": wrand((cfg.max_position_embeddings + 2, D)),
        "dec_pos": wrand((cfg.max_position_embeddings + 2, D)),
        # embedding layer-norms
        "e_emb_g": ones((1, D)), "e_emb_b": zeros((1, D)),
        "d_emb_g": ones((1, D)), "d_emb_b": zeros((1, D)),
        # encoder layers: fused QKV proj, out proj, post-LN, FFN, post-LN
        "e_wqkv": wrand((Le, D, 3 * D)), "e_bqkv": zeros((Le, 1, 3 * D)),
        "e_wo": wrand((Le, D, D)), "e_bo": zeros((Le, 1, D)),
        "e_ln1g": ones((Le, 1, D)), "e_ln1b": zeros((Le, 1, D)),
        "e_w1": wrand((Le, D, F)), "e_b1": zeros((Le, 1, F)),
        "e_w2": wrand((Le, F, D)), "e_b2": zeros((Le, 1, D)),
        "e_ln2g": ones((Le, 1, D)), "e_ln2b": zeros((Le, 1, D)),
        # decoder layers: self-attn (fused QKV), cross-attn (Q + fused KV), FFN
        "d_wqkv": wrand((Ld, D, 3 * D)), "d_bqkv": zeros((Ld, 1, 3 * D)),
        "d_wo": wrand((Ld, D, D)), "d_bo": zeros((Ld, 1, D)),
        "d_ln1g": ones((Ld, 1, D)), "d_ln1b": zeros((Ld, 1, D)),
        "d_cwq": wrand((Ld, D, D)), "d_cbq": zeros((Ld, 1, D)),
        "d_cwkv": wrand((Ld, D, 2 * D)), "d_cbkv": zeros((Ld, 1, 2 * D)),
        "d_cwo": wrand((Ld, D, D)), "d_cbo": zeros((Ld, 1, D)),
        "d_ln2g": ones((Ld, 1, D)), "d_ln2b": zeros((Ld, 1, D)),
        "d_w1": wrand((Ld, D, F)), "d_b1": zeros((Ld, 1, F)),
        "d_w2": wrand((Ld, F, D)), "d_b2": zeros((Ld, 1, D)),
        "d_ln3g": ones((Ld, 1, D)), "d_ln3b": zeros((Ld, 1, D)),
    }
    return params


# ----------------------------------------------------------------------------
# Forward: equivalent of BartModel.forward(input_ids, decoder_input_ids)
# ----------------------------------------------------------------------------
def bart_forward(params, cfg, input_ids, decoder_ids):
    """Returns (decoder last_hidden_state, encoder last_hidden_state)."""
    B, Te = input_ids.shape
    _, Td = decoder_ids.shape
    D = cfg.d_model

    # Embedding gathers + learned positional embeddings (offset 2) stay in glue.
    h0 = params["shared"][input_ids] + params["enc_pos"][jnp.arange(Te) + 2][None, :, :]
    d0 = params["shared"][decoder_ids] + params["dec_pos"][jnp.arange(Td) + 2][None, :, :]

    weight_args = [params[name] for name in _WEIGHT_NAMES]

    def full_spec(a):
        return pl.BlockSpec(a.shape, lambda i, n=a.ndim: (0,) * n)

    kernel = functools.partial(
        _bart_fused_kernel,
        num_heads=cfg.num_heads,
        n_enc=cfg.encoder_layers,
        n_dec=cfg.decoder_layers,
        eps=1e-5,
    )

    enc_out, dec_out = pl.pallas_call(
        kernel,
        out_shape=(jax.ShapeDtypeStruct((B, Te, D), jnp.float32),
                   jax.ShapeDtypeStruct((B, Td, D), jnp.float32)),
        grid=(B,),
        in_specs=[pl.BlockSpec((1, Te, D), lambda i: (i, 0, 0)),
                  pl.BlockSpec((1, Td, D), lambda i: (i, 0, 0))]
                 + [full_spec(a) for a in weight_args],
        out_specs=(pl.BlockSpec((1, Te, D), lambda i: (i, 0, 0)),
                   pl.BlockSpec((1, Td, D), lambda i: (i, 0, 0))),
        compiler_params=pltpu.CompilerParams(
            dimension_semantics=("parallel",)),
    )(h0, d0, *weight_args)

    return dec_out, enc_out


# TODO(synk): predict() path (LM-head logits + softmax + topk) is not part of
#             forward() and is omitted.

# ----------------------------------------------------------------------------
if __name__ == "__main__":
    cfg = Config()
    key = jax.random.PRNGKey(0)
    pkey, ikey, dkey = jax.random.split(key, 3)

    params = _init_params(cfg, pkey)

    batch, enc_len, dec_len = 2, 8, 8
    input_ids = jax.random.randint(ikey, (batch, enc_len), 4, cfg.vocab_size, jnp.int32)
    decoder_ids = jax.random.randint(dkey, (batch, dec_len), 4, cfg.vocab_size, jnp.int32)

    fwd = jax.jit(functools.partial(bart_forward, params, cfg))
    dec_out, enc_out = fwd(input_ids, decoder_ids)
    jax.block_until_ready(dec_out)
    jax.block_until_ready(enc_out)

    assert dec_out.shape == (batch, dec_len, cfg.d_model)
    assert enc_out.shape == (batch, enc_len, cfg.d_model)
    assert bool(jnp.all(jnp.isfinite(dec_out)))
    assert bool(jnp.all(jnp.isfinite(enc_out)))
    print("KERNEL_OK")
</pallas_src>

<mosaic_0001>
module attributes {stable_mosaic.version = 11 : i64} {
  func.func @_bart_fused_kernel(%arg0: i32, %arg1: memref<1x8x32xf32, #tpu.memory_space<vmem>>, %arg2: memref<1x8x32xf32, #tpu.memory_space<vmem>>, %arg3: memref<1x32xf32, #tpu.memory_space<vmem>>, %arg4: memref<1x32xf32, #tpu.memory_space<vmem>>, %arg5: memref<1x32xf32, #tpu.memory_space<vmem>>, %arg6: memref<1x32xf32, #tpu.memory_space<vmem>>, %arg7: memref<2x32x96xf32, #tpu.memory_space<vmem>>, %arg8: memref<2x1x96xf32, #tpu.memory_space<vmem>>, %arg9: memref<2x32x32xf32, #tpu.memory_space<vmem>>, %arg10: memref<2x1x32xf32, #tpu.memory_space<vmem>>, %arg11: memref<2x1x32xf32, #tpu.memory_space<vmem>>, %arg12: memref<2x1x32xf32, #tpu.memory_space<vmem>>, %arg13: memref<2x32x64xf32, #tpu.memory_space<vmem>>, %arg14: memref<2x1x64xf32, #tpu.memory_space<vmem>>, %arg15: memref<2x64x32xf32, #tpu.memory_space<vmem>>, %arg16: memref<2x1x32xf32, #tpu.memory_space<vmem>>, %arg17: memref<2x1x32xf32, #tpu.memory_space<vmem>>, %arg18: memref<2x1x32xf32, #tpu.memory_space<vmem>>, %arg19: memref<2x32x96xf32, #tpu.memory_space<vmem>>, %arg20: memref<2x1x96xf32, #tpu.memory_space<vmem>>, %arg21: memref<2x32x32xf32, #tpu.memory_space<vmem>>, %arg22: memref<2x1x32xf32, #tpu.memory_space<vmem>>, %arg23: memref<2x1x32xf32, #tpu.memory_space<vmem>>, %arg24: memref<2x1x32xf32, #tpu.memory_space<vmem>>, %arg25: memref<2x32x32xf32, #tpu.memory_space<vmem>>, %arg26: memref<2x1x32xf32, #tpu.memory_space<vmem>>, %arg27: memref<2x32x64xf32, #tpu.memory_space<vmem>>, %arg28: memref<2x1x64xf32, #tpu.memory_space<vmem>>, %arg29: memref<2x32x32xf32, #tpu.memory_space<vmem>>, %arg30: memref<2x1x32xf32, #tpu.memory_space<vmem>>, %arg31: memref<2x1x32xf32, #tpu.memory_space<vmem>>, %arg32: memref<2x1x32xf32, #tpu.memory_space<vmem>>, %arg33: memref<2x32x64xf32, #tpu.memory_space<vmem>>, %arg34: memref<2x1x64xf32, #tpu.memory_space<vmem>>, %arg35: memref<2x64x32xf32, #tpu.memory_space<vmem>>, %arg36: memref<2x1x32xf32, #tpu.memory_space<vmem>>, %arg37: memref<2x1x32xf32, #tpu.memory_space<vmem>>, %arg38: memref<2x1x32xf32, #tpu.memory_space<vmem>>, %arg39: memref<1x8x32xf32, #tpu.memory_space<vmem>>, %arg40: memref<1x8x32xf32, #tpu.memory_space<vmem>>) attributes {dimension_semantics = [#tpu.dimension_semantics<parallel>], iteration_bounds = array<i64: 2>, scalar_prefetch = 0 : i64, scratch_operands = 0 : i64, tpu.core_type = #tpu.core_type<tc>, window_params = [{transform_indices = @transform_0, window_bounds = array<i64: 1, 8, 32>}, {transform_indices = @transform_1, window_bounds = array<i64: 1, 8, 32>}, {pipeline_mode = #tpu.pipeline_mode<synchronous>, transform_indices = @transform_2, window_bounds = array<i64: 1, 32>}, {pipeline_mode = #tpu.pipeline_mode<synchronous>, transform_indices = @transform_3, window_bounds = array<i64: 1, 32>}, {pipeline_mode = #tpu.pipeline_mode<synchronous>, transform_indices = @transform_4, window_bounds = array<i64: 1, 32>}, {pipeline_mode = #tpu.pipeline_mode<synchronous>, transform_indices = @transform_5, window_bounds = array<i64: 1, 32>}, {pipeline_mode = #tpu.pipeline_mode<synchronous>, transform_indices = @transform_6, window_bounds = array<i64: 2, 32, 96>}, {pipeline_mode = #tpu.pipeline_mode<synchronous>, transform_indices = @transform_7, window_bounds = array<i64: 2, 1, 96>}, {pipeline_mode = #tpu.pipeline_mode<synchronous>, transform_indices = @transform_8, window_bounds = array<i64: 2, 32, 32>}, {pipeline_mode = #tpu.pipeline_mode<synchronous>, transform_indices = @transform_9, window_bounds = array<i64: 2, 1, 32>}, {pipeline_mode = #tpu.pipeline_mode<synchronous>, transform_indices = @transform_10, window_bounds = array<i64: 2, 1, 32>}, {pipeline_mode = #tpu.pipeline_mode<synchronous>, transform_indices = @transform_11, window_bounds = array<i64: 2, 1, 32>}, {pipeline_mode = #tpu.pipeline_mode<synchronous>, transform_indices = @transform_12, window_bounds = array<i64: 2, 32, 64>}, {pipeline_mode = #tpu.pipeline_mode<synchronous>, transform_indices = @transform_13, window_bounds = array<i64: 2, 1, 64>}, {pipeline_mode = #tpu.pipeline_mode<synchronous>, transform_indices = @transform_14, window_bounds = array<i64: 2, 64, 32>}, {pipeline_mode = #tpu.pipeline_mode<synchronous>, transform_indices = @transform_15, window_bounds = array<i64: 2, 1, 32>}, {pipeline_mode = #tpu.pipeline_mode<synchronous>, transform_indices = @transform_16, window_bounds = array<i64: 2, 1, 32>}, {pipeline_mode = #tpu.pipeline_mode<synchronous>, transform_indices = @transform_17, window_bounds = array<i64: 2, 1, 32>}, {pipeline_mode = #tpu.pipeline_mode<synchronous>, transform_indices = @transform_18, window_bounds = array<i64: 2, 32, 96>}, {pipeline_mode = #tpu.pipeline_mode<synchronous>, transform_indices = @transform_19, window_bounds = array<i64: 2, 1, 96>}, {pipeline_mode = #tpu.pipeline_mode<synchronous>, transform_indices = @transform_20, window_bounds = array<i64: 2, 32, 32>}, {pipeline_mode = #tpu.pipeline_mode<synchronous>, transform_indices = @transform_21, window_bounds = array<i64: 2, 1, 32>}, {pipeline_mode = #tpu.pipeline_mode<synchronous>, transform_indices = @transform_22, window_bounds = array<i64: 2, 1, 32>}, {pipeline_mode = #tpu.pipeline_mode<synchronous>, transform_indices = @transform_23, window_bounds = array<i64: 2, 1, 32>}, {pipeline_mode = #tpu.pipeline_mode<synchronous>, transform_indices = @transform_24, window_bounds = array<i64: 2, 32, 32>}, {pipeline_mode = #tpu.pipeline_mode<synchronous>, transform_indices = @transform_25, window_bounds = array<i64: 2, 1, 32>}, {pipeline_mode = #tpu.pipeline_mode<synchronous>, transform_indices = @transform_26, window_bounds = array<i64: 2, 32, 64>}, {pipeline_mode = #tpu.pipeline_mode<synchronous>, transform_indices = @transform_27, window_bounds = array<i64: 2, 1, 64>}, {pipeline_mode = #tpu.pipeline_mode<synchronous>, transform_indices = @transform_28, window_bounds = array<i64: 2, 32, 32>}, {pipeline_mode = #tpu.pipeline_mode<synchronous>, transform_indices = @transform_29, window_bounds = array<i64: 2, 1, 32>}, {pipeline_mode = #tpu.pipeline_mode<synchronous>, transform_indices = @transform_30, window_bounds = array<i64: 2, 1, 32>}, {pipeline_mode = #tpu.pipeline_mode<synchronous>, transform_indices = @transform_31, window_bounds = array<i64: 2, 1, 32>}, {pipeline_mode = #tpu.pipeline_mode<synchronous>, transform_indices = @transform_32, window_bounds = array<i64: 2, 32, 64>}, {pipeline_mode = #tpu.pipeline_mode<synchronous>, transform_indices = @transform_33, window_bounds = array<i64: 2, 1, 64>}, {pipeline_mode = #tpu.pipeline_mode<synchronous>, transform_indices = @transform_34, window_bounds = array<i64: 2, 64, 32>}, {pipeline_mode = #tpu.pipeline_mode<synchronous>, transform_indices = @transform_35, window_bounds = array<i64: 2, 1, 32>}, {pipeline_mode = #tpu.pipeline_mode<synchronous>, transform_indices = @transform_36, window_bounds = array<i64: 2, 1, 32>}, {pipeline_mode = #tpu.pipeline_mode<synchronous>, transform_indices = @transform_37, window_bounds = array<i64: 2, 1, 32>}, {transform_indices = @transform_38, window_bounds = array<i64: 1, 8, 32>}, {transform_indices = @transform_39, window_bounds = array<i64: 1, 8, 32>}]} {
    %c0 = arith.constant 0 : index
    %c0_0 = arith.constant 0 : index
    %c0_1 = arith.constant 0 : index
    %0 = vector.load %arg1[%c0, %c0_0, %c0_1] : memref<1x8x32xf32, #tpu.memory_space<vmem>>, vector<1x8x32xf32>
    %1 = vector.shape_cast %0 : vector<1x8x32xf32> to vector<8x32xf32>
    %c0_2 = arith.constant 0 : index
    %c0_3 = arith.constant 0 : index
    %2 = vector.load %arg3[%c0_2, %c0_3] : memref<1x32xf32, #tpu.memory_space<vmem>>, vector<1x32xf32>
    %c0_4 = arith.constant 0 : index
    %c0_5 = arith.constant 0 : index
    %3 = vector.load %arg4[%c0_4, %c0_5] : memref<1x32xf32, #tpu.memory_space<vmem>>, vector<1x32xf32>
    %cst = arith.constant dense<0.000000e+00> : vector<8xf32>
    %4 = vector.multi_reduction <add>, %1, %cst [1] : vector<8x32xf32> to vector<8xf32>
    %5 = vector.shape_cast %4 : vector<8xf32> to vector<8x1xf32>
    %cst_6 = arith.constant 3.200000e+01 : f32
    %6 = vector.broadcast %cst_6 : f32 to vector<8x1xf32>
    %7 = arith.divf %5, %6 : vector<8x1xf32>
    %8 = vector.broadcast %7 : vector<8x1xf32> to vector<8x32xf32>
    %9 = arith.subf %1, %8 : vector<8x32xf32>
    %10 = arith.mulf %9, %9 : vector<8x32xf32>
    %cst_7 = arith.constant dense<0.000000e+00> : vector<8xf32>
    %11 = vector.multi_reduction <add>, %10, %cst_7 [1] : vector<8x32xf32> to vector<8xf32>
    %12 = vector.shape_cast %11 : vector<8xf32> to vector<8x1xf32>
    %cst_8 = arith.constant 3.200000e+01 : f32
    %13 = vector.broadcast %cst_8 : f32 to vector<8x1xf32>
    %14 = arith.divf %12, %13 : vector<8x1xf32>
    %cst_9 = arith.constant 9.99999974E-6 : f32
    %15 = vector.broadcast %cst_9 : f32 to vector<8x1xf32>
    %16 = arith.addf %14, %15 : vector<8x1xf32>
    %17 = math.rsqrt %16 : vector<8x1xf32>
    %18 = vector.broadcast %17 : vector<8x1xf32> to vector<8x32xf32>
    %19 = arith.mulf %9, %18 : vector<8x32xf32>
    %20 = vector.broadcast %2 : vector<1x32xf32> to vector<8x32xf32>
    %21 = arith.mulf %19, %20 : vector<8x32xf32>
    %22 = vector.broadcast %3 : vector<1x32xf32> to vector<8x32xf32>
    %23 = arith.addf %21, %22 : vector<8x32xf32>
    %c0_10 = arith.constant 0 : index
    %c0_11 = arith.constant 0 : index
    %c0_12 = arith.constant 0 : index
    %24 = vector.load %arg7[%c0_10, %c0_11, %c0_12] : memref<2x32x96xf32, #tpu.memory_space<vmem>>, vector<1x32x96xf32>
    %25 = vector.shape_cast %24 : vector<1x32x96xf32> to vector<32x96xf32>
    %c0_13 = arith.constant 0 : index
    %c0_14 = arith.constant 0 : index
    %c0_15 = arith.constant 0 : index
    %26 = vector.load %arg8[%c0_13, %c0_14, %c0_15] : memref<2x1x96xf32, #tpu.memory_space<vmem>>, vector<1x1x96xf32>
    %27 = vector.shape_cast %26 : vector<1x1x96xf32> to vector<1x96xf32>
    %c0_16 = arith.constant 0 : index
    %c0_17 = arith.constant 0 : index
    %c0_18 = arith.constant 0 : index
    %28 = vector.load %arg9[%c0_16, %c0_17, %c0_18] : memref<2x32x32xf32, #tpu.memory_space<vmem>>, vector<1x32x32xf32>
    %29 = vector.shape_cast %28 : vector<1x32x32xf32> to vector<32x32xf32>
    %c0_19 = arith.constant 0 : index
    %c0_20 = arith.constant 0 : index
    %c0_21 = arith.constant 0 : index
    %30 = vector.load %arg10[%c0_19, %c0_20, %c0_21] : memref<2x1x32xf32, #tpu.memory_space<vmem>>, vector<1x1x32xf32>
    %31 = vector.shape_cast %30 : vector<1x1x32xf32> to vector<1x32xf32>
    %c0_22 = arith.constant 0 : index
    %c0_23 = arith.constant 0 : index
    %c0_24 = arith.constant 0 : index
    %32 = vector.load %arg11[%c0_22, %c0_23, %c0_24] : memref<2x1x32xf32, #tpu.memory_space<vmem>>, vector<1x1x32xf32>
    %33 = vector.shape_cast %32 : vector<1x1x32xf32> to vector<1x32xf32>
    %c0_25 = arith.constant 0 : index
    %c0_26 = arith.constant 0 : index
    %c0_27 = arith.constant 0 : index
    %34 = vector.load %arg12[%c0_25, %c0_26, %c0_27] : memref<2x1x32xf32, #tpu.memory_space<vmem>>, vector<1x1x32xf32>
    %35 = vector.shape_cast %34 : vector<1x1x32xf32> to vector<1x32xf32>
    %cst_28 = arith.constant dense<0.000000e+00> : vector<8x96xf32>
    %36 = tpu.matmul %23, %25, %cst_28 {dimension_numbers = #tpu.dot_dimension_numbers<[1], [0], [0], [1], [0, 0, 1, 1], [], []>} : vector<8x32xf32>, vector<32x96xf32>, vector<8x96xf32> -> vector<8x96xf32>
    %37 = vector.broadcast %27 : vector<1x96xf32> to vector<8x96xf32>
    %38 = arith.addf %36, %37 : vector<8x96xf32>
    %39 = vector.extract_strided_slice %38 {offsets = [0, 0], sizes = [8, 32], strides = [1, 1]} : vector<8x96xf32> to vector<8x32xf32>
    %40 = vector.extract_strided_slice %38 {offsets = [0, 32], sizes = [8, 32], strides = [1, 1]} : vector<8x96xf32> to vector<8x32xf32>
    %41 = vector.extract_strided_slice %38 {offsets = [0, 64], sizes = [8, 32], strides = [1, 1]} : vector<8x96xf32> to vector<8x32xf32>
    %42 = tpu.transpose %40, [1, 0] : vector<8x32xf32> -> vector<32x8xf32>
    %43 = vector.extract_strided_slice %39 {offsets = [0, 0], sizes = [8, 8], strides = [1, 1]} : vector<8x32xf32> to vector<8x8xf32>
    %44 = vector.extract_strided_slice %42 {offsets = [0, 0], sizes = [8, 8], strides = [1, 1]} : vector<32x8xf32> to vector<8x8xf32>
    %cst_29 = arith.constant dense<0.000000e+00> : vector<8x8xf32>
    %45 = tpu.matmul %43, %44, %cst_29 {dimension_numbers = #tpu.dot_dimension_numbers<[1], [0], [0], [1], [0, 0, 1, 1], [], []>} : vector<8x8xf32>, vector<8x8xf32>, vector<8x8xf32> -> vector<8x8xf32>
    %cst_30 = arith.constant 0.353553385 : f32
    %46 = vector.broadcast %cst_30 : f32 to vector<8x8xf32>
    %47 = arith.mulf %45, %46 : vector<8x8xf32>
    %cst_31 = arith.constant dense<0xFF800000> : vector<8xf32>
    %48 = vector.multi_reduction <maximumf>, %47, %cst_31 [1] : vector<8x8xf32> to vector<8xf32>
    %49 = vector.shape_cast %48 : vector<8xf32> to vector<8x1xf32>
    %50 = vector.broadcast %49 : vector<8x1xf32> to vector<8x8xf32>
    %51 = arith.subf %47, %50 : vector<8x8xf32>
    %52 = math.exp %51 : vector<8x8xf32>
    %cst_32 = arith.constant dense<0.000000e+00> : vector<8xf32>
    %53 = vector.multi_reduction <add>, %52, %cst_32 [1] : vector<8x8xf32> to vector<8xf32>
    %54 = vector.shape_cast %53 : vector<8xf32> to vector<8x1xf32>
    %55 = tpu.reciprocal %54 {approx = true} : vector<8x1xf32> -> vector<8x1xf32>
    %56 = vector.broadcast %55 : vector<8x1xf32> to vector<8x8xf32>
    %57 = arith.mulf %52, %56 : vector<8x8xf32>
    %58 = vector.extract_strided_slice %41 {offsets = [0, 0], sizes = [8, 8], strides = [1, 1]} : vector<8x32xf32> to vector<8x8xf32>
    %cst_33 = arith.constant dense<0.000000e+00> : vector<8x8xf32>
    %59 = tpu.matmul %57, %58, %cst_33 {dimension_numbers = #tpu.dot_dimension_numbers<[1], [0], [0], [1], [0, 0, 1, 1], [], []>} : vector<8x8xf32>, vector<8x8xf32>, vector<8x8xf32> -> vector<8x8xf32>
    %60 = vector.extract_strided_slice %39 {offsets = [0, 8], sizes = [8, 8], strides = [1, 1]} : vector<8x32xf32> to vector<8x8xf32>
    %61 = vector.extract_strided_slice %42 {offsets = [8, 0], sizes = [8, 8], strides = [1, 1]} : vector<32x8xf32> to vector<8x8xf32>
    %cst_34 = arith.constant dense<0.000000e+00> : vector<8x8xf32>
    %62 = tpu.matmul %60, %61, %cst_34 {dimension_numbers = #tpu.dot_dimension_numbers<[1], [0], [0], [1], [0, 0, 1, 1], [], []>} : vector<8x8xf32>, vector<8x8xf32>, vector<8x8xf32> -> vector<8x8xf32>
    %cst_35 = arith.constant 0.353553385 : f32
    %63 = vector.broadcast %cst_35 : f32 to vector<8x8xf32>
    %64 = arith.mulf %62, %63 : vector<8x8xf32>
    %cst_36 = arith.constant dense<0xFF800000> : vector<8xf32>
    %65 = vector.multi_reduction <maximumf>, %64, %cst_36 [1] : vector<8x8xf32> to vector<8xf32>
    %66 = vector.shape_cast %65 : vector<8xf32> to vector<8x1xf32>
    %67 = vector.broadcast %66 : vector<8x1xf32> to vector<8x8xf32>
    %68 = arith.subf %64, %67 : vector<8x8xf32>
    %69 = math.exp %68 : vector<8x8xf32>
    %cst_37 = arith.constant dense<0.000000e+00> : vector<8xf32>
    %70 = vector.multi_reduction <add>, %69, %cst_37 [1] : vector<8x8xf32> to vector<8xf32>
    %71 = vector.shape_cast %70 : vector<8xf32> to vector<8x1xf32>
    %72 = tpu.reciprocal %71 {approx = true} : vector<8x1xf32> -> vector<8x1xf32>
    %73 = vector.broadcast %72 : vector<8x1xf32> to vector<8x8xf32>
    %74 = arith.mulf %69, %73 : vector<8x8xf32>
    %75 = vector.extract_strided_slice %41 {offsets = [0, 8], sizes = [8, 8], strides = [1, 1]} : vector<8x32xf32> to vector<8x8xf32>
    %cst_38 = arith.constant dense<0.000000e+00> : vector<8x8xf32>
    %76 = tpu.matmul %74, %75, %cst_38 {dimension_numbers = #tpu.dot_dimension_numbers<[1], [0], [0], [1], [0, 0, 1, 1], [], []>} : vector<8x8xf32>, vector<8x8xf32>, vector<8x8xf32> -> vector<8x8xf32>
    %77 = vector.extract_strided_slice %39 {offsets = [0, 16], sizes = [8, 8], strides = [1, 1]} : vector<8x32xf32> to vector<8x8xf32>
    %78 = vector.extract_strided_slice %42 {offsets = [16, 0], sizes = [8, 8], strides = [1, 1]} : vector<32x8xf32> to vector<8x8xf32>
    %cst_39 = arith.constant dense<0.000000e+00> : vector<8x8xf32>
    %79 = tpu.matmul %77, %78, %cst_39 {dimension_numbers = #tpu.dot_dimension_numbers<[1], [0], [0], [1], [0, 0, 1, 1], [], []>} : vector<8x8xf32>, vector<8x8xf32>, vector<8x8xf32> -> vector<8x8xf32>
    %cst_40 = arith.constant 0.353553385 : f32
    %80 = vector.broadcast %cst_40 : f32 to vector<8x8xf32>
    %81 = arith.mulf %79, %80 : vector<8x8xf32>
    %cst_41 = arith.constant dense<0xFF800000> : vector<8xf32>
    %82 = vector.multi_reduction <maximumf>, %81, %cst_41 [1] : vector<8x8xf32> to vector<8xf32>
    %83 = vector.shape_cast %82 : vector<8xf32> to vector<8x1xf32>
    %84 = vector.broadcast %83 : vector<8x1xf32> to vector<8x8xf32>
    %85 = arith.subf %81, %84 : vector<8x8xf32>
    %86 = math.exp %85 : vector<8x8xf32>
    %cst_42 = arith.constant dense<0.000000e+00> : vector<8xf32>
    %87 = vector.multi_reduction <add>, %86, %cst_42 [1] : vector<8x8xf32> to vector<8xf32>
    %88 = vector.shape_cast %87 : vector<8xf32> to vector<8x1xf32>
    %89 = tpu.reciprocal %88 {approx = true} : vector<8x1xf32> -> vector<8x1xf32>
    %90 = vector.broadcast %89 : vector<8x1xf32> to vector<8x8xf32>
    %91 = arith.mulf %86, %90 : vector<8x8xf32>
    %92 = vector.extract_strided_slice %41 {offsets = [0, 16], sizes = [8, 8], strides = [1, 1]} : vector<8x32xf32> to vector<8x8xf32>
    %cst_43 = arith.constant dense<0.000000e+00> : vector<8x8xf32>
    %93 = tpu.matmul %91, %92, %cst_43 {dimension_numbers = #tpu.dot_dimension_numbers<[1], [0], [0], [1], [0, 0, 1, 1], [], []>} : vector<8x8xf32>, vector<8x8xf32>, vector<8x8xf32> -> vector<8x8xf32>
    %94 = vector.extract_strided_slice %39 {offsets = [0, 24], sizes = [8, 8], strides = [1, 1]} : vector<8x32xf32> to vector<8x8xf32>
    %95 = vector.extract_strided_slice %42 {offsets = [24, 0], sizes = [8, 8], strides = [1, 1]} : vector<32x8xf32> to vector<8x8xf32>
    %cst_44 = arith.constant dense<0.000000e+00> : vector<8x8xf32>
    %96 = tpu.matmul %94, %95, %cst_44 {dimension_numbers = #tpu.dot_dimension_numbers<[1], [0], [0], [1], [0, 0, 1, 1], [], []>} : vector<8x8xf32>, vector<8x8xf32>, vector<8x8xf32> -> vector<8x8xf32>
    %cst_45 = arith.constant 0.353553385 : f32
    %97 = vector.broadcast %cst_45 : f32 to vector<8x8xf32>
    %98 = arith.mulf %96, %97 : vector<8x8xf32>
    %cst_46 = arith.constant dense<0xFF800000> : vector<8xf32>
    %99 = vector.multi_reduction <maximumf>, %98, %cst_46 [1] : vector<8x8xf32> to vector<8xf32>
    %100 = vector.shape_cast %99 : vector<8xf32> to vector<8x1xf32>
    %101 = vector.broadcast %100 : vector<8x1xf32> to vector<8x8xf32>
    %102 = arith.subf %98, %101 : vector<8x8xf32>
    %103 = math.exp %102 : vector<8x8xf32>
    %cst_47 = arith.constant dense<0.000000e+00> : vector<8xf32>
    %104 = vector.multi_reduction <add>, %103, %cst_47 [1] : vector<8x8xf32> to vector<8xf32>
    %105 = vector.shape_cast %104 : vector<8xf32> to vector<8x1xf32>
    %106 = tpu.reciprocal %105 {approx = true} : vector<8x1xf32> -> vector<8x1xf32>
    %107 = vector.broadcast %106 : vector<8x1xf32> to vector<8x8xf32>
    %108 = arith.mulf %103, %107 : vector<8x8xf32>
    %109 = vector.extract_strided_slice %41 {offsets = [0, 24], sizes = [8, 8], strides = [1, 1]} : vector<8x32xf32> to vector<8x8xf32>
    %cst_48 = arith.constant dense<0.000000e+00> : vector<8x8xf32>
    %110 = tpu.matmul %108, %109, %cst_48 {dimension_numbers = #tpu.dot_dimension_numbers<[1], [0], [0], [1], [0, 0, 1, 1], [], []>} : vector<8x8xf32>, vector<8x8xf32>, vector<8x8xf32> -> vector<8x8xf32>
    %111 = tpu.concatenate %59, %76, %93, %110 in 1 : vector<8x8xf32>, vector<8x8xf32>, vector<8x8xf32>, vector<8x8xf32> -> vector<8x32xf32>
    %cst_49 = arith.constant dense<0.000000e+00> : vector<8x32xf32>
    %112 = tpu.matmul %111, %29, %cst_49 {dimension_numbers = #tpu.dot_dimension_numbers<[1], [0], [0], [1], [0, 0, 1, 1], [], []>} : vector<8x32xf32>, vector<32x32xf32>, vector<8x32xf32> -> vector<8x32xf32>
    %113 = vector.broadcast %31 : vector<1x32xf32> to vector<8x32xf32>
    %114 = arith.addf %112, %113 : vector<8x32xf32>
    %115 = arith.addf %23, %114 : vector<8x32xf32>
    %cst_50 = arith.constant dense<0.000000e+00> : vector<8xf32>
    %116 = vector.multi_reduction <add>, %115, %cst_50 [1] : vector<8x32xf32> to vector<8xf32>
    %117 = vector.shape_cast %116 : vector<8xf32> to vector<8x1xf32>
    %cst_51 = arith.constant 3.200000e+01 : f32
    %118 = vector.broadcast %cst_51 : f32 to vector<8x1xf32>
    %119 = arith.divf %117, %118 : vector<8x1xf32>
    %120 = vector.broadcast %119 : vector<8x1xf32> to vector<8x32xf32>
    %121 = arith.subf %115, %120 : vector<8x32xf32>
    %122 = arith.mulf %121, %121 : vector<8x32xf32>
    %cst_52 = arith.constant dense<0.000000e+00> : vector<8xf32>
    %123 = vector.multi_reduction <add>, %122, %cst_52 [1] : vector<8x32xf32> to vector<8xf32>
    %124 = vector.shape_cast %123 : vector<8xf32> to vector<8x1xf32>
    %cst_53 = arith.constant 3.200000e+01 : f32
    %125 = vector.broadcast %cst_53 : f32 to vector<8x1xf32>
    %126 = arith.divf %124, %125 : vector<8x1xf32>
    %cst_54 = arith.constant 9.99999974E-6 : f32
    %127 = vector.broadcast %cst_54 : f32 to vector<8x1xf32>
    %128 = arith.addf %126, %127 : vector<8x1xf32>
    %129 = math.rsqrt %128 : vector<8x1xf32>
    %130 = vector.broadcast %129 : vector<8x1xf32> to vector<8x32xf32>
    %131 = arith.mulf %121, %130 : vector<8x32xf32>
    %132 = vector.broadcast %33 : vector<1x32xf32> to vector<8x32xf32>
    %133 = arith.mulf %131, %132 : vector<8x32xf32>
    %134 = vector.broadcast %35 : vector<1x32xf32> to vector<8x32xf32>
    %135 = arith.addf %133, %134 : vector<8x32xf32>
    %c0_55 = arith.constant 0 : index
    %c0_56 = arith.constant 0 : index
    %c0_57 = arith.constant 0 : index
    %136 = vector.load %arg13[%c0_55, %c0_56, %c0_57] : memref<2x32x64xf32, #tpu.memory_space<vmem>>, vector<1x32x64xf32>
    %137 = vector.shape_cast %136 : vector<1x32x64xf32> to vector<32x64xf32>
    %c0_58 = arith.constant 0 : index
    %c0_59 = arith.constant 0 : index
    %c0_60 = arith.constant 0 : index
    %138 = vector.load %arg14[%c0_58, %c0_59, %c0_60] : memref<2x1x64xf32, #tpu.memory_space<vmem>>, vector<1x1x64xf32>
    %139 = vector.shape_cast %138 : vector<1x1x64xf32> to vector<1x64xf32>
    %c0_61 = arith.constant 0 : index
    %c0_62 = arith.constant 0 : index
    %c0_63 = arith.constant 0 : index
    %140 = vector.load %arg15[%c0_61, %c0_62, %c0_63] : memref<2x64x32xf32, #tpu.memory_space<vmem>>, vector<1x64x32xf32>
    %141 = vector.shape_cast %140 : vector<1x64x32xf32> to vector<64x32xf32>
    %c0_64 = arith.constant 0 : index
    %c0_65 = arith.constant 0 : index
    %c0_66 = arith.constant 0 : index
    %142 = vector.load %arg16[%c0_64, %c0_65, %c0_66] : memref<2x1x32xf32, #tpu.memory_space<vmem>>, vector<1x1x32xf32>
    %143 = vector.shape_cast %142 : vector<1x1x32xf32> to vector<1x32xf32>
    %c0_67 = arith.constant 0 : index
    %c0_68 = arith.constant 0 : index
    %c0_69 = arith.constant 0 : index
    %144 = vector.load %arg17[%c0_67, %c0_68, %c0_69] : memref<2x1x32xf32, #tpu.memory_space<vmem>>, vector<1x1x32xf32>
    %145 = vector.shape_cast %144 : vector<1x1x32xf32> to vector<1x32xf32>
    %c0_70 = arith.constant 0 : index
    %c0_71 = arith.constant 0 : index
    %c0_72 = arith.constant 0 : index
    %146 = vector.load %arg18[%c0_70, %c0_71, %c0_72] : memref<2x1x32xf32, #tpu.memory_space<vmem>>, vector<1x1x32xf32>
    %147 = vector.shape_cast %146 : vector<1x1x32xf32> to vector<1x32xf32>
    %cst_73 = arith.constant dense<0.000000e+00> : vector<8x64xf32>
    %148 = tpu.matmul %135, %137, %cst_73 {dimension_numbers = #tpu.dot_dimension_numbers<[1], [0], [0], [1], [0, 0, 1, 1], [], []>} : vector<8x32xf32>, vector<32x64xf32>, vector<8x64xf32> -> vector<8x64xf32>
    %149 = vector.broadcast %139 : vector<1x64xf32> to vector<8x64xf32>
    %150 = arith.addf %148, %149 : vector<8x64xf32>
    %cst_74 = arith.constant 5.000000e-01 : f32
    %151 = vector.broadcast %cst_74 : f32 to vector<8x64xf32>
    %152 = arith.mulf %151, %150 : vector<8x64xf32>
    %cst_75 = arith.constant 0.707106769 : f32
    %153 = vector.broadcast %cst_75 : f32 to vector<8x64xf32>
    %154 = arith.mulf %150, %153 : vector<8x64xf32>
    %155 = math.erf %154 : vector<8x64xf32>
    %cst_76 = arith.constant 1.000000e+00 : f32
    %156 = vector.broadcast %cst_76 : f32 to vector<8x64xf32>
    %157 = arith.addf %156, %155 : vector<8x64xf32>
    %158 = arith.mulf %152, %157 : vector<8x64xf32>
    %cst_77 = arith.constant dense<0.000000e+00> : vector<8x32xf32>
    %159 = tpu.matmul %158, %141, %cst_77 {dimension_numbers = #tpu.dot_dimension_numbers<[1], [0], [0], [1], [0, 0, 1, 1], [], []>} : vector<8x64xf32>, vector<64x32xf32>, vector<8x32xf32> -> vector<8x32xf32>
    %160 = vector.broadcast %143 : vector<1x32xf32> to vector<8x32xf32>
    %161 = arith.addf %159, %160 : vector<8x32xf32>
    %162 = arith.addf %135, %161 : vector<8x32xf32>
    %cst_78 = arith.constant dense<0.000000e+00> : vector<8xf32>
    %163 = vector.multi_reduction <add>, %162, %cst_78 [1] : vector<8x32xf32> to vector<8xf32>
    %164 = vector.shape_cast %163 : vector<8xf32> to vector<8x1xf32>
    %cst_79 = arith.constant 3.200000e+01 : f32
    %165 = vector.broadcast %cst_79 : f32 to vector<8x1xf32>
    %166 = arith.divf %164, %165 : vector<8x1xf32>
    %167 = vector.broadcast %166 : vector<8x1xf32> to vector<8x32xf32>
    %168 = arith.subf %162, %167 : vector<8x32xf32>
    %169 = arith.mulf %168, %168 : vector<8x32xf32>
    %cst_80 = arith.constant dense<0.000000e+00> : vector<8xf32>
    %170 = vector.multi_reduction <add>, %169, %cst_80 [1] : vector<8x32xf32> to vector<8xf32>
    %171 = vector.shape_cast %170 : vector<8xf32> to vector<8x1xf32>
    %cst_81 = arith.constant 3.200000e+01 : f32
    %172 = vector.broadcast %cst_81 : f32 to vector<8x1xf32>
    %173 = arith.divf %171, %172 : vector<8x1xf32>
    %cst_82 = arith.constant 9.99999974E-6 : f32
    %174 = vector.broadcast %cst_82 : f32 to vector<8x1xf32>
    %175 = arith.addf %173, %174 : vector<8x1xf32>
    %176 = math.rsqrt %175 : vector<8x1xf32>
    %177 = vector.broadcast %176 : vector<8x1xf32> to vector<8x32xf32>
    %178 = arith.mulf %168, %177 : vector<8x32xf32>
    %179 = vector.broadcast %145 : vector<1x32xf32> to vector<8x32xf32>
    %180 = arith.mulf %178, %179 : vector<8x32xf32>
    %181 = vector.broadcast %147 : vector<1x32xf32> to vector<8x32xf32>
    %182 = arith.addf %180, %181 : vector<8x32xf32>
    %c1 = arith.constant 1 : index
    %c0_83 = arith.constant 0 : index
    %c0_84 = arith.constant 0 : index
    %183 = vector.load %arg7[%c1, %c0_83, %c0_84] : memref<2x32x96xf32, #tpu.memory_space<vmem>>, vector<1x32x96xf32>
    %184 = vector.shape_cast %183 : vector<1x32x96xf32> to vector<32x96xf32>
    %c1_85 = arith.constant 1 : index
    %c0_86 = arith.constant 0 : index
    %c0_87 = arith.constant 0 : index
    %185 = vector.load %arg8[%c1_85, %c0_86, %c0_87] : memref<2x1x96xf32, #tpu.memory_space<vmem>>, vector<1x1x96xf32>
    %186 = vector.shape_cast %185 : vector<1x1x96xf32> to vector<1x96xf32>
    %c1_88 = arith.constant 1 : index
    %c0_89 = arith.constant 0 : index
    %c0_90 = arith.constant 0 : index
    %187 = vector.load %arg9[%c1_88, %c0_89, %c0_90] : memref<2x32x32xf32, #tpu.memory_space<vmem>>, vector<1x32x32xf32>
    %188 = vector.shape_cast %187 : vector<1x32x32xf32> to vector<32x32xf32>
    %c1_91 = arith.constant 1 : index
    %c0_92 = arith.constant 0 : index
    %c0_93 = arith.constant 0 : index
    %189 = vector.load %arg10[%c1_91, %c0_92, %c0_93] : memref<2x1x32xf32, #tpu.memory_space<vmem>>, vector<1x1x32xf32>
    %190 = vector.shape_cast %189 : vector<1x1x32xf32> to vector<1x32xf32>
    %c1_94 = arith.constant 1 : index
    %c0_95 = arith.constant 0 : index
    %c0_96 = arith.constant 0 : index
    %191 = vector.load %arg11[%c1_94, %c0_95, %c0_96] : memref<2x1x32xf32, #tpu.memory_space<vmem>>, vector<1x1x32xf32>
    %192 = vector.shape_cast %191 : vector<1x1x32xf32> to vector<1x32xf32>
    %c1_97 = arith.constant 1 : index
    %c0_98 = arith.constant 0 : index
    %c0_99 = arith.constant 0 : index
    %193 = vector.load %arg12[%c1_97, %c0_98, %c0_99] : memref<2x1x32xf32, #tpu.memory_space<vmem>>, vector<1x1x32xf32>
    %194 = vector.shape_cast %193 : vector<1x1x32xf32> to vector<1x32xf32>
    %cst_100 = arith.constant dense<0.000000e+00> : vector<8x96xf32>
    %195 = tpu.matmul %182, %184, %cst_100 {dimension_numbers = #tpu.dot_dimension_numbers<[1], [0], [0], [1], [0, 0, 1, 1], [], []>} : vector<8x32xf32>, vector<32x96xf32>, vector<8x96xf32> -> vector<8x96xf32>
    %196 = vector.broadcast %186 : vector<1x96xf32> to vector<8x96xf32>
    %197 = arith.addf %195, %196 : vector<8x96xf32>
    %198 = vector.extract_strided_slice %197 {offsets = [0, 0], sizes = [8, 32], strides = [1, 1]} : vector<8x96xf32> to vector<8x32xf32>
    %199 = vector.extract_strided_slice %197 {offsets = [0, 32], sizes = [8, 32], strides = [1, 1]} : vector<8x96xf32> to vector<8x32xf32>
    %200 = vector.extract_strided_slice %197 {offsets = [0, 64], sizes = [8, 32], strides = [1, 1]} : vector<8x96xf32> to vector<8x32xf32>
    %201 = tpu.transpose %199, [1, 0] : vector<8x32xf32> -> vector<32x8xf32>
    %202 = vector.extract_strided_slice %198 {offsets = [0, 0], sizes = [8, 8], strides = [1, 1]} : vector<8x32xf32> to vector<8x8xf32>
    %203 = vector.extract_strided_slice %201 {offsets = [0, 0], sizes = [8, 8], strides = [1, 1]} : vector<32x8xf32> to vector<8x8xf32>
    %cst_101 = arith.constant dense<0.000000e+00> : vector<8x8xf32>
    %204 = tpu.matmul %202, %203, %cst_101 {dimension_numbers = #tpu.dot_dimension_numbers<[1], [0], [0], [1], [0, 0, 1, 1], [], []>} : vector<8x8xf32>, vector<8x8xf32>, vector<8x8xf32> -> vector<8x8xf32>
    %cst_102 = arith.constant 0.353553385 : f32
    %205 = vector.broadcast %cst_102 : f32 to vector<8x8xf32>
    %206 = arith.mulf %204, %205 : vector<8x8xf32>
    %cst_103 = arith.constant dense<0xFF800000> : vector<8xf32>
    %207 = vector.multi_reduction <maximumf>, %206, %cst_103 [1] : vector<8x8xf32> to vector<8xf32>
    %208 = vector.shape_cast %207 : vector<8xf32> to vector<8x1xf32>
    %209 = vector.broadcast %208 : vector<8x1xf32> to vector<8x8xf32>
    %210 = arith.subf %206, %209 : vector<8x8xf32>
    %211 = math.exp %210 : vector<8x8xf32>
    %cst_104 = arith.constant dense<0.000000e+00> : vector<8xf32>
    %212 = vector.multi_reduction <add>, %211, %cst_104 [1] : vector<8x8xf32> to vector<8xf32>
    %213 = vector.shape_cast %212 : vector<8xf32> to vector<8x1xf32>
    %214 = tpu.reciprocal %213 {approx = true} : vector<8x1xf32> -> vector<8x1xf32>
    %215 = vector.broadcast %214 : vector<8x1xf32> to vector<8x8xf32>
    %216 = arith.mulf %211, %215 : vector<8x8xf32>
    %217 = vector.extract_strided_slice %200 {offsets = [0, 0], sizes = [8, 8], strides = [1, 1]} : vector<8x32xf32> to vector<8x8xf32>
    %cst_105 = arith.constant dense<0.000000e+00> : vector<8x8xf32>
    %218 = tpu.matmul %216, %217, %cst_105 {dimension_numbers = #tpu.dot_dimension_numbers<[1], [0], [0], [1], [0, 0, 1, 1], [], []>} : vector<8x8xf32>, vector<8x8xf32>, vector<8x8xf32> -> vector<8x8xf32>
    %219 = vector.extract_strided_slice %198 {offsets = [0, 8], sizes = [8, 8], strides = [1, 1]} : vector<8x32xf32> to vector<8x8xf32>
    %220 = vector.extract_strided_slice %201 {offsets = [8, 0], sizes = [8, 8], strides = [1, 1]} : vector<32x8xf32> to vector<8x8xf32>
    %cst_106 = arith.constant dense<0.000000e+00> : vector<8x8xf32>
    %221 = tpu.matmul %219, %220, %cst_106 {dimension_numbers = #tpu.dot_dimension_numbers<[1], [0], [0], [1], [0, 0, 1, 1], [], []>} : vector<8x8xf32>, vector<8x8xf32>, vector<8x8xf32> -> vector<8x8xf32>
    %cst_107 = arith.constant 0.353553385 : f32
    %222 = vector.broadcast %cst_107 : f32 to vector<8x8xf32>
    %223 = arith.mulf %221, %222 : vector<8x8xf32>
    %cst_108 = arith.constant dense<0xFF800000> : vector<8xf32>
    %224 = vector.multi_reduction <maximumf>, %223, %cst_108 [1] : vector<8x8xf32> to vector<8xf32>
    %225 = vector.shape_cast %224 : vector<8xf32> to vector<8x1xf32>
    %226 = vector.broadcast %225 : vector<8x1xf32> to vector<8x8xf32>
    %227 = arith.subf %223, %226 : vector<8x8xf32>
    %228 = math.exp %227 : vector<8x8xf32>
    %cst_109 = arith.constant dense<0.000000e+00> : vector<8xf32>
    %229 = vector.multi_reduction <add>, %228, %cst_109 [1] : vector<8x8xf32> to vector<8xf32>
    %230 = vector.shape_cast %229 : vector<8xf32> to vector<8x1xf32>
    %231 = tpu.reciprocal %230 {approx = true} : vector<8x1xf32> -> vector<8x1xf32>
    %232 = vector.broadcast %231 : vector<8x1xf32> to vector<8x8xf32>
    %233 = arith.mulf %228, %232 : vector<8x8xf32>
    %234 = vector.extract_strided_slice %200 {offsets = [0, 8], sizes = [8, 8], strides = [1, 1]} : vector<8x32xf32> to vector<8x8xf32>
    %cst_110 = arith.constant dense<0.000000e+00> : vector<8x8xf32>
    %235 = tpu.matmul %233, %234, %cst_110 {dimension_numbers = #tpu.dot_dimension_numbers<[1], [0], [0], [1], [0, 0, 1, 1], [], []>} : vector<8x8xf32>, vector<8x8xf32>, vector<8x8xf32> -> vector<8x8xf32>
    %236 = vector.extract_strided_slice %198 {offsets = [0, 16], sizes = [8, 8], strides = [1, 1]} : vector<8x32xf32> to vector<8x8xf32>
    %237 = vector.extract_strided_slice %201 {offsets = [16, 0], sizes = [8, 8], strides = [1, 1]} : vector<32x8xf32> to vector<8x8xf32>
    %cst_111 = arith.constant dense<0.000000e+00> : vector<8x8xf32>
    %238 = tpu.matmul %236, %237, %cst_111 {dimension_numbers = #tpu.dot_dimension_numbers<[1], [0], [0], [1], [0, 0, 1, 1], [], []>} : vector<8x8xf32>, vector<8x8xf32>, vector<8x8xf32> -> vector<8x8xf32>
    %cst_112 = arith.constant 0.353553385 : f32
    %239 = vector.broadcast %cst_112 : f32 to vector<8x8xf32>
    %240 = arith.mulf %238, %239 : vector<8x8xf32>
    %cst_113 = arith.constant dense<0xFF800000> : vector<8xf32>
    %241 = vector.multi_reduction <maximumf>, %240, %cst_113 [1] : vector<8x8xf32> to vector<8xf32>
    %242 = vector.shape_cast %241 : vector<8xf32> to vector<8x1xf32>
    %243 = vector.broadcast %242 : vector<8x1xf32> to vector<8x8xf32>
    %244 = arith.subf %240, %243 : vector<8x8xf32>
    %245 = math.exp %244 : vector<8x8xf32>
    %cst_114 = arith.constant dense<0.000000e+00> : vector<8xf32>
    %246 = vector.multi_reduction <add>, %245, %cst_114 [1] : vector<8x8xf32> to vector<8xf32>
    %247 = vector.shape_cast %246 : vector<8xf32> to vector<8x1xf32>
    %248 = tpu.reciprocal %247 {approx = true} : vector<8x1xf32> -> vector<8x1xf32>
    %249 = vector.broadcast %248 : vector<8x1xf32> to vector<8x8xf32>
    %250 = arith.mulf %245, %249 : vector<8x8xf32>
    %251 = vector.extract_strided_slice %200 {offsets = [0, 16], sizes = [8, 8], strides = [1, 1]} : vector<8x32xf32> to vector<8x8xf32>
    %cst_115 = arith.constant dense<0.000000e+00> : vector<8x8xf32>
    %252 = tpu.matmul %250, %251, %cst_115 {dimension_numbers = #tpu.dot_dimension_numbers<[1], [0], [0], [1], [0, 0, 1, 1], [], []>} : vector<8x8xf32>, vector<8x8xf32>, vector<8x8xf32> -> vector<8x8xf32>
    %253 = vector.extract_strided_slice %198 {offsets = [0, 24], sizes = [8, 8], strides = [1, 1]} : vector<8x32xf32> to vector<8x8xf32>
    %254 = vector.extract_strided_slice %201 {offsets = [24, 0], sizes = [8, 8], strides = [1, 1]} : vector<32x8xf32> to vector<8x8xf32>
    %cst_116 = arith.constant dense<0.000000e+00> : vector<8x8xf32>
    %255 = tpu.matmul %253, %254, %cst_116 {dimension_numbers = #tpu.dot_dimension_numbers<[1], [0], [0], [1], [0, 0, 1, 1], [], []>} : vector<8x8xf32>, vector<8x8xf32>, vector<8x8xf32> -> vector<8x8xf32>
    %cst_117 = arith.constant 0.353553385 : f32
    %256 = vector.broadcast %cst_117 : f32 to vector<8x8xf32>
    %257 = arith.mulf %255, %256 : vector<8x8xf32>
    %cst_118 = arith.constant dense<0xFF800000> : vector<8xf32>
    %258 = vector.multi_reduction <maximumf>, %257, %cst_118 [1] : vector<8x8xf32> to vector<8xf32>
    %259 = vector.shape_cast %258 : vector<8xf32> to vector<8x1xf32>
    %260 = vector.broadcast %259 : vector<8x1xf32> to vector<8x8xf32>
    %261 = arith.subf %257, %260 : vector<8x8xf32>
    %262 = math.exp %261 : vector<8x8xf32>
    %cst_119 = arith.constant dense<0.000000e+00> : vector<8xf32>
    %263 = vector.multi_reduction <add>, %262, %cst_119 [1] : vector<8x8xf32> to vector<8xf32>
    %264 = vector.shape_cast %263 : vector<8xf32> to vector<8x1xf32>
    %265 = tpu.reciprocal %264 {approx = true} : vector<8x1xf32> -> vector<8x1xf32>
    %266 = vector.broadcast %265 : vector<8x1xf32> to vector<8x8xf32>
    %267 = arith.mulf %262, %266 : vector<8x8xf32>
    %268 = vector.extract_strided_slice %200 {offsets = [0, 24], sizes = [8, 8], strides = [1, 1]} : vector<8x32xf32> to vector<8x8xf32>
    %cst_120 = arith.constant dense<0.000000e+00> : vector<8x8xf32>
    %269 = tpu.matmul %267, %268, %cst_120 {dimension_numbers = #tpu.dot_dimension_numbers<[1], [0], [0], [1], [0, 0, 1, 1], [], []>} : vector<8x8xf32>, vector<8x8xf32>, vector<8x8xf32> -> vector<8x8xf32>
    %270 = tpu.concatenate %218, %235, %252, %269 in 1 : vector<8x8xf32>, vector<8x8xf32>, vector<8x8xf32>, vector<8x8xf32> -> vector<8x32xf32>
    %cst_121 = arith.constant dense<0.000000e+00> : vector<8x32xf32>
    %271 = tpu.matmul %270, %188, %cst_121 {dimension_numbers = #tpu.dot_dimension_numbers<[1], [0], [0], [1], [0, 0, 1, 1], [], []>} : vector<8x32xf32>, vector<32x32xf32>, vector<8x32xf32> -> vector<8x32xf32>
    %272 = vector.broadcast %190 : vector<1x32xf32> to vector<8x32xf32>
    %273 = arith.addf %271, %272 : vector<8x32xf32>
    %274 = arith.addf %182, %273 : vector<8x32xf32>
    %cst_122 = arith.constant dense<0.000000e+00> : vector<8xf32>
    %275 = vector.multi_reduction <add>, %274, %cst_122 [1] : vector<8x32xf32> to vector<8xf32>
    %276 = vector.shape_cast %275 : vector<8xf32> to vector<8x1xf32>
    %cst_123 = arith.constant 3.200000e+01 : f32
    %277 = vector.broadcast %cst_123 : f32 to vector<8x1xf32>
    %278 = arith.divf %276, %277 : vector<8x1xf32>
    %279 = vector.broadcast %278 : vector<8x1xf32> to vector<8x32xf32>
    %280 = arith.subf %274, %279 : vector<8x32xf32>
    %281 = arith.mulf %280, %280 : vector<8x32xf32>
    %cst_124 = arith.constant dense<0.000000e+00> : vector<8xf32>
    %282 = vector.multi_reduction <add>, %281, %cst_124 [1] : vector<8x32xf32> to vector<8xf32>
    %283 = vector.shape_cast %282 : vector<8xf32> to vector<8x1xf32>
    %cst_125 = arith.constant 3.200000e+01 : f32
    %284 = vector.broadcast %cst_125 : f32 to vector<8x1xf32>
    %285 = arith.divf %283, %284 : vector<8x1xf32>
    %cst_126 = arith.constant 9.99999974E-6 : f32
    %286 = vector.broadcast %cst_126 : f32 to vector<8x1xf32>
    %287 = arith.addf %285, %286 : vector<8x1xf32>
    %288 = math.rsqrt %287 : vector<8x1xf32>
    %289 = vector.broadcast %288 : vector<8x1xf32> to vector<8x32xf32>
    %290 = arith.mulf %280, %289 : vector<8x32xf32>
    %291 = vector.broadcast %192 : vector<1x32xf32> to vector<8x32xf32>
    %292 = arith.mulf %290, %291 : vector<8x32xf32>
    %293 = vector.broadcast %194 : vector<1x32xf32> to vector<8x32xf32>
    %294 = arith.addf %292, %293 : vector<8x32xf32>
    %c1_127 = arith.constant 1 : index
    %c0_128 = arith.constant 0 : index
    %c0_129 = arith.constant 0 : index
    %295 = vector.load %arg13[%c1_127, %c0_128, %c0_129] : memref<2x32x64xf32, #tpu.memory_space<vmem>>, vector<1x32x64xf32>
    %296 = vector.shape_cast %295 : vector<1x32x64xf32> to vector<32x64xf32>
    %c1_130 = arith.constant 1 : index
    %c0_131 = arith.constant 0 : index
    %c0_132 = arith.constant 0 : index
    %297 = vector.load %arg14[%c1_130, %c0_131, %c0_132] : memref<2x1x64xf32, #tpu.memory_space<vmem>>, vector<1x1x64xf32>
    %298 = vector.shape_cast %297 : vector<1x1x64xf32> to vector<1x64xf32>
    %c1_133 = arith.constant 1 : index
    %c0_134 = arith.constant 0 : index
    %c0_135 = arith.constant 0 : index
    %299 = vector.load %arg15[%c1_133, %c0_134, %c0_135] : memref<2x64x32xf32, #tpu.memory_space<vmem>>, vector<1x64x32xf32>
    %300 = vector.shape_cast %299 : vector<1x64x32xf32> to vector<64x32xf32>
    %c1_136 = arith.constant 1 : index
    %c0_137 = arith.constant 0 : index
    %c0_138 = arith.constant 0 : index
    %301 = vector.load %arg16[%c1_136, %c0_137, %c0_138] : memref<2x1x32xf32, #tpu.memory_space<vmem>>, vector<1x1x32xf32>
    %302 = vector.shape_cast %301 : vector<1x1x32xf32> to vector<1x32xf32>
    %c1_139 = arith.constant 1 : index
    %c0_140 = arith.constant 0 : index
    %c0_141 = arith.constant 0 : index
    %303 = vector.load %arg17[%c1_139, %c0_140, %c0_141] : memref<2x1x32xf32, #tpu.memory_space<vmem>>, vector<1x1x32xf32>
    %304 = vector.shape_cast %303 : vector<1x1x32xf32> to vector<1x32xf32>
    %c1_142 = arith.constant 1 : index
    %c0_143 = arith.constant 0 : index
    %c0_144 = arith.constant 0 : index
    %305 = vector.load %arg18[%c1_142, %c0_143, %c0_144] : memref<2x1x32xf32, #tpu.memory_space<vmem>>, vector<1x1x32xf32>
    %306 = vector.shape_cast %305 : vector<1x1x32xf32> to vector<1x32xf32>
    %cst_145 = arith.constant dense<0.000000e+00> : vector<8x64xf32>
    %307 = tpu.matmul %294, %296, %cst_145 {dimension_numbers = #tpu.dot_dimension_numbers<[1], [0], [0], [1], [0, 0, 1, 1], [], []>} : vector<8x32xf32>, vector<32x64xf32>, vector<8x64xf32> -> vector<8x64xf32>
    %308 = vector.broadcast %298 : vector<1x64xf32> to vector<8x64xf32>
    %309 = arith.addf %307, %308 : vector<8x64xf32>
    %cst_146 = arith.constant 5.000000e-01 : f32
    %310 = vector.broadcast %cst_146 : f32 to vector<8x64xf32>
    %311 = arith.mulf %310, %309 : vector<8x64xf32>
    %cst_147 = arith.constant 0.707106769 : f32
    %312 = vector.broadcast %cst_147 : f32 to vector<8x64xf32>
    %313 = arith.mulf %309, %312 : vector<8x64xf32>
    %314 = math.erf %313 : vector<8x64xf32>
    %cst_148 = arith.constant 1.000000e+00 : f32
    %315 = vector.broadcast %cst_148 : f32 to vector<8x64xf32>
    %316 = arith.addf %315, %314 : vector<8x64xf32>
    %317 = arith.mulf %311, %316 : vector<8x64xf32>
    %cst_149 = arith.constant dense<0.000000e+00> : vector<8x32xf32>
    %318 = tpu.matmul %317, %300, %cst_149 {dimension_numbers = #tpu.dot_dimension_numbers<[1], [0], [0], [1], [0, 0, 1, 1], [], []>} : vector<8x64xf32>, vector<64x32xf32>, vector<8x32xf32> -> vector<8x32xf32>
    %319 = vector.broadcast %302 : vector<1x32xf32> to vector<8x32xf32>
    %320 = arith.addf %318, %319 : vector<8x32xf32>
    %321 = arith.addf %294, %320 : vector<8x32xf32>
    %cst_150 = arith.constant dense<0.000000e+00> : vector<8xf32>
    %322 = vector.multi_reduction <add>, %321, %cst_150 [1] : vector<8x32xf32> to vector<8xf32>
    %323 = vector.shape_cast %322 : vector<8xf32> to vector<8x1xf32>
    %cst_151 = arith.constant 3.200000e+01 : f32
    %324 = vector.broadcast %cst_151 : f32 to vector<8x1xf32>
    %325 = arith.divf %323, %324 : vector<8x1xf32>
    %326 = vector.broadcast %325 : vector<8x1xf32> to vector<8x32xf32>
    %327 = arith.subf %321, %326 : vector<8x32xf32>
    %328 = arith.mulf %327, %327 : vector<8x32xf32>
    %cst_152 = arith.constant dense<0.000000e+00> : vector<8xf32>
    %329 = vector.multi_reduction <add>, %328, %cst_152 [1] : vector<8x32xf32> to vector<8xf32>
    %330 = vector.shape_cast %329 : vector<8xf32> to vector<8x1xf32>
    %cst_153 = arith.constant 3.200000e+01 : f32
    %331 = vector.broadcast %cst_153 : f32 to vector<8x1xf32>
    %332 = arith.divf %330, %331 : vector<8x1xf32>
    %cst_154 = arith.constant 9.99999974E-6 : f32
    %333 = vector.broadcast %cst_154 : f32 to vector<8x1xf32>
    %334 = arith.addf %332, %333 : vector<8x1xf32>
    %335 = math.rsqrt %334 : vector<8x1xf32>
    %336 = vector.broadcast %335 : vector<8x1xf32> to vector<8x32xf32>
    %337 = arith.mulf %327, %336 : vector<8x32xf32>
    %338 = vector.broadcast %304 : vector<1x32xf32> to vector<8x32xf32>
    %339 = arith.mulf %337, %338 : vector<8x32xf32>
    %340 = vector.broadcast %306 : vector<1x32xf32> to vector<8x32xf32>
    %341 = arith.addf %339, %340 : vector<8x32xf32>
    %c0_155 = arith.constant 0 : index
    %c0_156 = arith.constant 0 : index
    %c0_157 = arith.constant 0 : index
    %342 = vector.load %arg39[%c0_155, %c0_156, %c0_157] : memref<1x8x32xf32, #tpu.memory_space<vmem>>, vector<1x8x32xf32>
    %343 = vector.shape_cast %342 : vector<1x8x32xf32> to vector<8x32xf32>
    %344 = vector.shape_cast %341 : vector<8x32xf32> to vector<1x8x32xf32>
    tpu.vector_store %arg39[%c0_155, %c0_156, %c0_157], %344 {strides = array<i32>} : memref<1x8x32xf32, #tpu.memory_space<vmem>>, vector<1x8x32xf32>,
    %c0_158 = arith.constant 0 : index
    %c0_159 = arith.constant 0 : index
    %c0_160 = arith.constant 0 : index
    %345 = vector.load %arg2[%c0_158, %c0_159, %c0_160] : memref<1x8x32xf32, #tpu.memory_space<vmem>>, vector<1x8x32xf32>
    %346 = vector.shape_cast %345 : vector<1x8x32xf32> to vector<8x32xf32>
    %c0_161 = arith.constant 0 : index
    %c0_162 = arith.constant 0 : index
    %347 = vector.load %arg5[%c0_161, %c0_162] : memref<1x32xf32, #tpu.memory_space<vmem>>, vector<1x32xf32>
    %c0_163 = arith.constant 0 : index
    %c0_164 = arith.constant 0 : index
    %348 = vector.load %arg6[%c0_163, %c0_164] : memref<1x32xf32, #tpu.memory_space<vmem>>, vector<1x32xf32>
    %cst_165 = arith.constant dense<0.000000e+00> : vector<8xf32>
    %349 = vector.multi_reduction <add>, %346, %cst_165 [1] : vector<8x32xf32> to vector<8xf32>
    %350 = vector.shape_cast %349 : vector<8xf32> to vector<8x1xf32>
    %cst_166 = arith.constant 3.200000e+01 : f32
    %351 = vector.broadcast %cst_166 : f32 to vector<8x1xf32>
    %352 = arith.divf %350, %351 : vector<8x1xf32>
    %353 = vector.broadcast %352 : vector<8x1xf32> to vector<8x32xf32>
    %354 = arith.subf %346, %353 : vector<8x32xf32>
    %355 = arith.mulf %354, %354 : vector<8x32xf32>
    %cst_167 = arith.constant dense<0.000000e+00> : vector<8xf32>
    %356 = vector.multi_reduction <add>, %355, %cst_167 [1] : vector<8x32xf32> to vector<8xf32>
    %357 = vector.shape_cast %356 : vector<8xf32> to vector<8x1xf32>
    %cst_168 = arith.constant 3.200000e+01 : f32
    %358 = vector.broadcast %cst_168 : f32 to vector<8x1xf32>
    %359 = arith.divf %357, %358 : vector<8x1xf32>
    %cst_169 = arith.constant 9.99999974E-6 : f32
    %360 = vector.broadcast %cst_169 : f32 to vector<8x1xf32>
    %361 = arith.addf %359, %360 : vector<8x1xf32>
    %362 = math.rsqrt %361 : vector<8x1xf32>
    %363 = vector.broadcast %362 : vector<8x1xf32> to vector<8x32xf32>
    %364 = arith.mulf %354, %363 : vector<8x32xf32>
    %365 = vector.broadcast %347 : vector<1x32xf32> to vector<8x32xf32>
    %366 = arith.mulf %364, %365 : vector<8x32xf32>
    %367 = vector.broadcast %348 : vector<1x32xf32> to vector<8x32xf32>
    %368 = arith.addf %366, %367 : vector<8x32xf32>
    %c0_170 = arith.constant 0 : index
    %c0_171 = arith.constant 0 : index
    %c0_172 = arith.constant 0 : index
    %369 = vector.load %arg19[%c0_170, %c0_171, %c0_172] : memref<2x32x96xf32, #tpu.memory_space<vmem>>, vector<1x32x96xf32>
    %370 = vector.shape_cast %369 : vector<1x32x96xf32> to vector<32x96xf32>
    %c0_173 = arith.constant 0 : index
    %c0_174 = arith.constant 0 : index
    %c0_175 = arith.constant 0 : index
    %371 = vector.load %arg20[%c0_173, %c0_174, %c0_175] : memref<2x1x96xf32, #tpu.memory_space<vmem>>, vector<1x1x96xf32>
    %372 = vector.shape_cast %371 : vector<1x1x96xf32> to vector<1x96xf32>
    %c0_176 = arith.constant 0 : index
    %c0_177 = arith.constant 0 : index
    %c0_178 = arith.constant 0 : index
    %373 = vector.load %arg21[%c0_176, %c0_177, %c0_178] : memref<2x32x32xf32, #tpu.memory_space<vmem>>, vector<1x32x32xf32>
    %374 = vector.shape_cast %373 : vector<1x32x32xf32> to vector<32x32xf32>
    %c0_179 = arith.constant 0 : index
    %c0_180 = arith.constant 0 : index
    %c0_181 = arith.constant 0 : index
    %375 = vector.load %arg22[%c0_179, %c0_180, %c0_181] : memref<2x1x32xf32, #tpu.memory_space<vmem>>, vector<1x1x32xf32>
    %376 = vector.shape_cast %375 : vector<1x1x32xf32> to vector<1x32xf32>
    %c0_182 = arith.constant 0 : index
    %c0_183 = arith.constant 0 : index
    %c0_184 = arith.constant 0 : index
    %377 = vector.load %arg23[%c0_182, %c0_183, %c0_184] : memref<2x1x32xf32, #tpu.memory_space<vmem>>, vector<1x1x32xf32>
    %378 = vector.shape_cast %377 : vector<1x1x32xf32> to vector<1x32xf32>
    %c0_185 = arith.constant 0 : index
    %c0_186 = arith.constant 0 : index
    %c0_187 = arith.constant 0 : index
    %379 = vector.load %arg24[%c0_185, %c0_186, %c0_187] : memref<2x1x32xf32, #tpu.memory_space<vmem>>, vector<1x1x32xf32>
    %380 = vector.shape_cast %379 : vector<1x1x32xf32> to vector<1x32xf32>
    %cst_188 = arith.constant dense<0.000000e+00> : vector<8x96xf32>
    %381 = tpu.matmul %368, %370, %cst_188 {dimension_numbers = #tpu.dot_dimension_numbers<[1], [0], [0], [1], [0, 0, 1, 1], [], []>} : vector<8x32xf32>, vector<32x96xf32>, vector<8x96xf32> -> vector<8x96xf32>
    %382 = vector.broadcast %372 : vector<1x96xf32> to vector<8x96xf32>
    %383 = arith.addf %381, %382 : vector<8x96xf32>
    %384 = vector.extract_strided_slice %383 {offsets = [0, 0], sizes = [8, 32], strides = [1, 1]} : vector<8x96xf32> to vector<8x32xf32>
    %385 = vector.extract_strided_slice %383 {offsets = [0, 32], sizes = [8, 32], strides = [1, 1]} : vector<8x96xf32> to vector<8x32xf32>
    %386 = vector.extract_strided_slice %383 {offsets = [0, 64], sizes = [8, 32], strides = [1, 1]} : vector<8x96xf32> to vector<8x32xf32>
    %387 = tpu.iota {dimensions = array<i32: 0>} : vector<8x8xi32>
    %388 = tpu.iota {dimensions = array<i32: 1>} : vector<8x8xi32>
    %389 = arith.cmpi sge, %387, %388 : vector<8x8xi32>
    %cst_189 = arith.constant 0.000000e+00 : f32
    %cst_190 = arith.constant -1.000000e+09 : f32
    %390 = vector.broadcast %cst_189 : f32 to vector<8x8xf32>
    %391 = vector.broadcast %cst_190 : f32 to vector<8x8xf32>
    %392 = arith.select %389, %390, %391 : vector<8x8xi1>, vector<8x8xf32>
    %393 = tpu.transpose %385, [1, 0] : vector<8x32xf32> -> vector<32x8xf32>
    %394 = vector.extract_strided_slice %384 {offsets = [0, 0], sizes = [8, 8], strides = [1, 1]} : vector<8x32xf32> to vector<8x8xf32>
    %395 = vector.extract_strided_slice %393 {offsets = [0, 0], sizes = [8, 8], strides = [1, 1]} : vector<32x8xf32> to vector<8x8xf32>
    %cst_191 = arith.constant dense<0.000000e+00> : vector<8x8xf32>
    %396 = tpu.matmul %394, %395, %cst_191 {dimension_numbers = #tpu.dot_dimension_numbers<[1], [0], [0], [1], [0, 0, 1, 1], [], []>} : vector<8x8xf32>, vector<8x8xf32>, vector<8x8xf32> -> vector<8x8xf32>
    %cst_192 = arith.constant 0.353553385 : f32
    %397 = vector.broadcast %cst_192 : f32 to vector<8x8xf32>
    %398 = arith.mulf %396, %397 : vector<8x8xf32>
    %399 = arith.addf %398, %392 : vector<8x8xf32>
    %cst_193 = arith.constant dense<0xFF800000> : vector<8xf32>
    %400 = vector.multi_reduction <maximumf>, %399, %cst_193 [1] : vector<8x8xf32> to vector<8xf32>
    %401 = vector.shape_cast %400 : vector<8xf32> to vector<8x1xf32>
    %402 = vector.broadcast %401 : vector<8x1xf32> to vector<8x8xf32>
    %403 = arith.subf %399, %402 : vector<8x8xf32>
    %404 = math.exp %403 : vector<8x8xf32>
    %cst_194 = arith.constant dense<0.000000e+00> : vector<8xf32>
    %405 = vector.multi_reduction <add>, %404, %cst_194 [1] : vector<8x8xf32> to vector<8xf32>
    %406 = vector.shape_cast %405 : vector<8xf32> to vector<8x1xf32>
    %407 = tpu.reciprocal %406 {approx = true} : vector<8x1xf32> -> vector<8x1xf32>
    %408 = vector.broadcast %407 : vector<8x1xf32> to vector<8x8xf32>
    %409 = arith.mulf %404, %408 : vector<8x8xf32>
    %410 = vector.extract_strided_slice %386 {offsets = [0, 0], sizes = [8, 8], strides = [1, 1]} : vector<8x32xf32> to vector<8x8xf32>
    %cst_195 = arith.constant dense<0.000000e+00> : vector<8x8xf32>
    %411 = tpu.matmul %409, %410, %cst_195 {dimension_numbers = #tpu.dot_dimension_numbers<[1], [0], [0], [1], [0, 0, 1, 1], [], []>} : vector<8x8xf32>, vector<8x8xf32>, vector<8x8xf32> -> vector<8x8xf32>
    %412 = vector.extract_strided_slice %384 {offsets = [0, 8], sizes = [8, 8], strides = [1, 1]} : vector<8x32xf32> to vector<8x8xf32>
    %413 = vector.extract_strided_slice %393 {offsets = [8, 0], sizes = [8, 8], strides = [1, 1]} : vector<32x8xf32> to vector<8x8xf32>
    %cst_196 = arith.constant dense<0.000000e+00> : vector<8x8xf32>
    %414 = tpu.matmul %412, %413, %cst_196 {dimension_numbers = #tpu.dot_dimension_numbers<[1], [0], [0], [1], [0, 0, 1, 1], [], []>} : vector<8x8xf32>, vector<8x8xf32>, vector<8x8xf32> -> vector<8x8xf32>
    %cst_197 = arith.constant 0.353553385 : f32
    %415 = vector.broadcast %cst_197 : f32 to vector<8x8xf32>
    %416 = arith.mulf %414, %415 : vector<8x8xf32>
    %417 = arith.addf %416, %392 : vector<8x8xf32>
    %cst_198 = arith.constant dense<0xFF800000> : vector<8xf32>
    %418 = vector.multi_reduction <maximumf>, %417, %cst_198 [1] : vector<8x8xf32> to vector<8xf32>
    %419 = vector.shape_cast %418 : vector<8xf32> to vector<8x1xf32>
    %420 = vector.broadcast %419 : vector<8x1xf32> to vector<8x8xf32>
    %421 = arith.subf %417, %420 : vector<8x8xf32>
    %422 = math.exp %421 : vector<8x8xf32>
    %cst_199 = arith.constant dense<0.000000e+00> : vector<8xf32>
    %423 = vector.multi_reduction <add>, %422, %cst_199 [1] : vector<8x8xf32> to vector<8xf32>
    %424 = vector.shape_cast %423 : vector<8xf32> to vector<8x1xf32>
    %425 = tpu.reciprocal %424 {approx = true} : vector<8x1xf32> -> vector<8x1xf32>
    %426 = vector.broadcast %425 : vector<8x1xf32> to vector<8x8xf32>
    %427 = arith.mulf %422, %426 : vector<8x8xf32>
    %428 = vector.extract_strided_slice %386 {offsets = [0, 8], sizes = [8, 8], strides = [1, 1]} : vector<8x32xf32> to vector<8x8xf32>
    %cst_200 = arith.constant dense<0.000000e+00> : vector<8x8xf32>
    %429 = tpu.matmul %427, %428, %cst_200 {dimension_numbers = #tpu.dot_dimension_numbers<[1], [0], [0], [1], [0, 0, 1, 1], [], []>} : vector<8x8xf32>, vector<8x8xf32>, vector<8x8xf32> -> vector<8x8xf32>
    %430 = vector.extract_strided_slice %384 {offsets = [0, 16], sizes = [8, 8], strides = [1, 1]} : vector<8x32xf32> to vector<8x8xf32>
    %431 = vector.extract_strided_slice %393 {offsets = [16, 0], sizes = [8, 8], strides = [1, 1]} : vector<32x8xf32> to vector<8x8xf32>
    %cst_201 = arith.constant dense<0.000000e+00> : vector<8x8xf32>
    %432 = tpu.matmul %430, %431, %cst_201 {dimension_numbers = #tpu.dot_dimension_numbers<[1], [0], [0], [1], [0, 0, 1, 1], [], []>} : vector<8x8xf32>, vector<8x8xf32>, vector<8x8xf32> -> vector<8x8xf32>
    %cst_202 = arith.constant 0.353553385 : f32
    %433 = vector.broadcast %cst_202 : f32 to vector<8x8xf32>
    %434 = arith.mulf %432, %433 : vector<8x8xf32>
    %435 = arith.addf %434, %392 : vector<8x8xf32>
    %cst_203 = arith.constant dense<0xFF800000> : vector<8xf32>
    %436 = vector.multi_reduction <maximumf>, %435, %cst_203 [1] : vector<8x8xf32> to vector<8xf32>
    %437 = vector.shape_cast %436 : vector<8xf32> to vector<8x1xf32>
    %438 = vector.broadcast %437 : vector<8x1xf32> to vector<8x8xf32>
    %439 = arith.subf %435, %438 : vector<8x8xf32>
    %440 = math.exp %439 : vector<8x8xf32>
    %cst_204 = arith.constant dense<0.000000e+00> : vector<8xf32>
    %441 = vector.multi_reduction <add>, %440, %cst_204 [1] : vector<8x8xf32> to vector<8xf32>
    %442 = vector.shape_cast %441 : vector<8xf32> to vector<8x1xf32>
    %443 = tpu.reciprocal %442 {approx = true} : vector<8x1xf32> -> vector<8x1xf32>
    %444 = vector.broadcast %443 : vector<8x1xf32> to vector<8x8xf32>
    %445 = arith.mulf %440, %444 : vector<8x8xf32>
    %446 = vector.extract_strided_slice %386 {offsets = [0, 16], sizes = [8, 8], strides = [1, 1]} : vector<8x32xf32> to vector<8x8xf32>
    %cst_205 = arith.constant dense<0.000000e+00> : vector<8x8xf32>
    %447 = tpu.matmul %445, %446, %cst_205 {dimension_numbers = #tpu.dot_dimension_numbers<[1], [0], [0], [1], [0, 0, 1, 1], [], []>} : vector<8x8xf32>, vector<8x8xf32>, vector<8x8xf32> -> vector<8x8xf32>
    %448 = vector.extract_strided_slice %384 {offsets = [0, 24], sizes = [8, 8], strides = [1, 1]} : vector<8x32xf32> to vector<8x8xf32>
    %449 = vector.extract_strided_slice %393 {offsets = [24, 0], sizes = [8, 8], strides = [1, 1]} : vector<32x8xf32> to vector<8x8xf32>
    %cst_206 = arith.constant dense<0.000000e+00> : vector<8x8xf32>
    %450 = tpu.matmul %448, %449, %cst_206 {dimension_numbers = #tpu.dot_dimension_numbers<[1], [0], [0], [1], [0, 0, 1, 1], [], []>} : vector<8x8xf32>, vector<8x8xf32>, vector<8x8xf32> -> vector<8x8xf32>
    %cst_207 = arith.constant 0.353553385 : f32
    %451 = vector.broadcast %cst_207 : f32 to vector<8x8xf32>
    %452 = arith.mulf %450, %451 : vector<8x8xf32>
    %453 = arith.addf %452, %392 : vector<8x8xf32>
    %cst_208 = arith.constant dense<0xFF800000> : vector<8xf32>
    %454 = vector.multi_reduction <maximumf>, %453, %cst_208 [1] : vector<8x8xf32> to vector<8xf32>
    %455 = vector.shape_cast %454 : vector<8xf32> to vector<8x1xf32>
    %456 = vector.broadcast %455 : vector<8x1xf32> to vector<8x8xf32>
    %457 = arith.subf %453, %456 : vector<8x8xf32>
    %458 = math.exp %457 : vector<8x8xf32>
    %cst_209 = arith.constant dense<0.000000e+00> : vector<8xf32>
    %459 = vector.multi_reduction <add>, %458, %cst_209 [1] : vector<8x8xf32> to vector<8xf32>
    %460 = vector.shape_cast %459 : vector<8xf32> to vector<8x1xf32>
    %461 = tpu.reciprocal %460 {approx = true} : vector<8x1xf32> -> vector<8x1xf32>
    %462 = vector.broadcast %461 : vector<8x1xf32> to vector<8x8xf32>
    %463 = arith.mulf %458, %462 : vector<8x8xf32>
    %464 = vector.extract_strided_slice %386 {offsets = [0, 24], sizes = [8, 8], strides = [1, 1]} : vector<8x32xf32> to vector<8x8xf32>
    %cst_210 = arith.constant dense<0.000000e+00> : vector<8x8xf32>
    %465 = tpu.matmul %463, %464, %cst_210 {dimension_numbers = #tpu.dot_dimension_numbers<[1], [0], [0], [1], [0, 0, 1, 1], [], []>} : vector<8x8xf32>, vector<8x8xf32>, vector<8x8xf32> -> vector<8x8xf32>
    %466 = tpu.concatenate %411, %429, %447, %465 in 1 : vector<8x8xf32>, vector<8x8xf32>, vector<8x8xf32>, vector<8x8xf32> -> vector<8x32xf32>
    %cst_211 = arith.constant dense<0.000000e+00> : vector<8x32xf32>
    %467 = tpu.matmul %466, %374, %cst_211 {dimension_numbers = #tpu.dot_dimension_numbers<[1], [0], [0], [1], [0, 0, 1, 1], [], []>} : vector<8x32xf32>, vector<32x32xf32>, vector<8x32xf32> -> vector<8x32xf32>
    %468 = vector.broadcast %376 : vector<1x32xf32> to vector<8x32xf32>
    %469 = arith.addf %467, %468 : vector<8x32xf32>
    %470 = arith.addf %368, %469 : vector<8x32xf32>
    %cst_212 = arith.constant dense<0.000000e+00> : vector<8xf32>
    %471 = vector.multi_reduction <add>, %470, %cst_212 [1] : vector<8x32xf32> to vector<8xf32>
    %472 = vector.shape_cast %471 : vector<8xf32> to vector<8x1xf32>
    %cst_213 = arith.constant 3.200000e+01 : f32
    %473 = vector.broadcast %cst_213 : f32 to vector<8x1xf32>
    %474 = arith.divf %472, %473 : vector<8x1xf32>
    %475 = vector.broadcast %474 : vector<8x1xf32> to vector<8x32xf32>
    %476 = arith.subf %470, %475 : vector<8x32xf32>
    %477 = arith.mulf %476, %476 : vector<8x32xf32>
    %cst_214 = arith.constant dense<0.000000e+00> : vector<8xf32>
    %478 = vector.multi_reduction <add>, %477, %cst_214 [1] : vector<8x32xf32> to vector<8xf32>
    %479 = vector.shape_cast %478 : vector<8xf32> to vector<8x1xf32>
    %cst_215 = arith.constant 3.200000e+01 : f32
    %480 = vector.broadcast %cst_215 : f32 to vector<8x1xf32>
    %481 = arith.divf %479, %480 : vector<8x1xf32>
    %cst_216 = arith.constant 9.99999974E-6 : f32
    %482 = vector.broadcast %cst_216 : f32 to vector<8x1xf32>
    %483 = arith.addf %481, %482 : vector<8x1xf32>
    %484 = math.rsqrt %483 : vector<8x1xf32>
    %485 = vector.broadcast %484 : vector<8x1xf32> to vector<8x32xf32>
    %486 = arith.mulf %476, %485 : vector<8x32xf32>
    %487 = vector.broadcast %378 : vector<1x32xf32> to vector<8x32xf32>
    %488 = arith.mulf %486, %487 : vector<8x32xf32>
    %489 = vector.broadcast %380 : vector<1x32xf32> to vector<8x32xf32>
    %490 = arith.addf %488, %489 : vector<8x32xf32>
    %c0_217 = arith.constant 0 : index
    %c0_218 = arith.constant 0 : index
    %c0_219 = arith.constant 0 : index
    %491 = vector.load %arg25[%c0_217, %c0_218, %c0_219] : memref<2x32x32xf32, #tpu.memory_space<vmem>>, vector<1x32x32xf32>
    %492 = vector.shape_cast %491 : vector<1x32x32xf32> to vector<32x32xf32>
    %c0_220 = arith.constant 0 : index
    %c0_221 = arith.constant 0 : index
    %c0_222 = arith.constant 0 : index
    %493 = vector.load %arg26[%c0_220, %c0_221, %c0_222] : memref<2x1x32xf32, #tpu.memory_space<vmem>>, vector<1x1x32xf32>
    %494 = vector.shape_cast %493 : vector<1x1x32xf32> to vector<1x32xf32>
    %c0_223 = arith.constant 0 : index
    %c0_224 = arith.constant 0 : index
    %c0_225 = arith.constant 0 : index
    %495 = vector.load %arg27[%c0_223, %c0_224, %c0_225] : memref<2x32x64xf32, #tpu.memory_space<vmem>>, vector<1x32x64xf32>
    %496 = vector.shape_cast %495 : vector<1x32x64xf32> to vector<32x64xf32>
    %c0_226 = arith.constant 0 : index
    %c0_227 = arith.constant 0 : index
    %c0_228 = arith.constant 0 : index
    %497 = vector.load %arg28[%c0_226, %c0_227, %c0_228] : memref<2x1x64xf32, #tpu.memory_space<vmem>>, vector<1x1x64xf32>
    %498 = vector.shape_cast %497 : vector<1x1x64xf32> to vector<1x64xf32>
    %c0_229 = arith.constant 0 : index
    %c0_230 = arith.constant 0 : index
    %c0_231 = arith.constant 0 : index
    %499 = vector.load %arg29[%c0_229, %c0_230, %c0_231] : memref<2x32x32xf32, #tpu.memory_space<vmem>>, vector<1x32x32xf32>
    %500 = vector.shape_cast %499 : vector<1x32x32xf32> to vector<32x32xf32>
    %c0_232 = arith.constant 0 : index
    %c0_233 = arith.constant 0 : index
    %c0_234 = arith.constant 0 : index
    %501 = vector.load %arg30[%c0_232, %c0_233, %c0_234] : memref<2x1x32xf32, #tpu.memory_space<vmem>>, vector<1x1x32xf32>
    %502 = vector.shape_cast %501 : vector<1x1x32xf32> to vector<1x32xf32>
    %c0_235 = arith.constant 0 : index
    %c0_236 = arith.constant 0 : index
    %c0_237 = arith.constant 0 : index
    %503 = vector.load %arg31[%c0_235, %c0_236, %c0_237] : memref<2x1x32xf32, #tpu.memory_space<vmem>>, vector<1x1x32xf32>
    %504 = vector.shape_cast %503 : vector<1x1x32xf32> to vector<1x32xf32>
    %c0_238 = arith.constant 0 : index
    %c0_239 = arith.constant 0 : index
    %c0_240 = arith.constant 0 : index
    %505 = vector.load %arg32[%c0_238, %c0_239, %c0_240] : memref<2x1x32xf32, #tpu.memory_space<vmem>>, vector<1x1x32xf32>
    %506 = vector.shape_cast %505 : vector<1x1x32xf32> to vector<1x32xf32>
    %cst_241 = arith.constant dense<0.000000e+00> : vector<8x32xf32>
    %507 = tpu.matmul %490, %492, %cst_241 {dimension_numbers = #tpu.dot_dimension_numbers<[1], [0], [0], [1], [0, 0, 1, 1], [], []>} : vector<8x32xf32>, vector<32x32xf32>, vector<8x32xf32> -> vector<8x32xf32>
    %508 = vector.broadcast %494 : vector<1x32xf32> to vector<8x32xf32>
    %509 = arith.addf %507, %508 : vector<8x32xf32>
    %cst_242 = arith.constant dense<0.000000e+00> : vector<8x64xf32>
    %510 = tpu.matmul %341, %496, %cst_242 {dimension_numbers = #tpu.dot_dimension_numbers<[1], [0], [0], [1], [0, 0, 1, 1], [], []>} : vector<8x32xf32>, vector<32x64xf32>, vector<8x64xf32> -> vector<8x64xf32>
    %511 = vector.broadcast %498 : vector<1x64xf32> to vector<8x64xf32>
    %512 = arith.addf %510, %511 : vector<8x64xf32>
    %513 = vector.extract_strided_slice %512 {offsets = [0, 0], sizes = [8, 32], strides = [1, 1]} : vector<8x64xf32> to vector<8x32xf32>
    %514 = vector.extract_strided_slice %512 {offsets = [0, 32], sizes = [8, 32], strides = [1, 1]} : vector<8x64xf32> to vector<8x32xf32>
    %515 = tpu.transpose %513, [1, 0] : vector<8x32xf32> -> vector<32x8xf32>
    %516 = vector.extract_strided_slice %509 {offsets = [0, 0], sizes = [8, 8], strides = [1, 1]} : vector<8x32xf32> to vector<8x8xf32>
    %517 = vector.extract_strided_slice %515 {offsets = [0, 0], sizes = [8, 8], strides = [1, 1]} : vector<32x8xf32> to vector<8x8xf32>
    %cst_243 = arith.constant dense<0.000000e+00> : vector<8x8xf32>
    %518 = tpu.matmul %516, %517, %cst_243 {dimension_numbers = #tpu.dot_dimension_numbers<[1], [0], [0], [1], [0, 0, 1, 1], [], []>} : vector<8x8xf32>, vector<8x8xf32>, vector<8x8xf32> -> vector<8x8xf32>
    %cst_244 = arith.constant 0.353553385 : f32
    %519 = vector.broadcast %cst_244 : f32 to vector<8x8xf32>
    %520 = arith.mulf %518, %519 : vector<8x8xf32>
    %cst_245 = arith.constant dense<0xFF800000> : vector<8xf32>
    %521 = vector.multi_reduction <maximumf>, %520, %cst_245 [1] : vector<8x8xf32> to vector<8xf32>
    %522 = vector.shape_cast %521 : vector<8xf32> to vector<8x1xf32>
    %523 = vector.broadcast %522 : vector<8x1xf32> to vector<8x8xf32>
    %524 = arith.subf %520, %523 : vector<8x8xf32>
    %525 = math.exp %524 : vector<8x8xf32>
    %cst_246 = arith.constant dense<0.000000e+00> : vector<8xf32>
    %526 = vector.multi_reduction <add>, %525, %cst_246 [1] : vector<8x8xf32> to vector<8xf32>
    %527 = vector.shape_cast %526 : vector<8xf32> to vector<8x1xf32>
    %528 = tpu.reciprocal %527 {approx = true} : vector<8x1xf32> -> vector<8x1xf32>
    %529 = vector.broadcast %528 : vector<8x1xf32> to vector<8x8xf32>
    %530 = arith.mulf %525, %529 : vector<8x8xf32>
    %531 = vector.extract_strided_slice %514 {offsets = [0, 0], sizes = [8, 8], strides = [1, 1]} : vector<8x32xf32> to vector<8x8xf32>
    %cst_247 = arith.constant dense<0.000000e+00> : vector<8x8xf32>
    %532 = tpu.matmul %530, %531, %cst_247 {dimension_numbers = #tpu.dot_dimension_numbers<[1], [0], [0], [1], [0, 0, 1, 1], [], []>} : vector<8x8xf32>, vector<8x8xf32>, vector<8x8xf32> -> vector<8x8xf32>
    %533 = vector.extract_strided_slice %509 {offsets = [0, 8], sizes = [8, 8], strides = [1, 1]} : vector<8x32xf32> to vector<8x8xf32>
    %534 = vector.extract_strided_slice %515 {offsets = [8, 0], sizes = [8, 8], strides = [1, 1]} : vector<32x8xf32> to vector<8x8xf32>
    %cst_248 = arith.constant dense<0.000000e+00> : vector<8x8xf32>
    %535 = tpu.matmul %533, %534, %cst_248 {dimension_numbers = #tpu.dot_dimension_numbers<[1], [0], [0], [1], [0, 0, 1, 1], [], []>} : vector<8x8xf32>, vector<8x8xf32>, vector<8x8xf32> -> vector<8x8xf32>
    %cst_249 = arith.constant 0.353553385 : f32
    %536 = vector.broadcast %cst_249 : f32 to vector<8x8xf32>
    %537 = arith.mulf %535, %536 : vector<8x8xf32>
    %cst_250 = arith.constant dense<0xFF800000> : vector<8xf32>
    %538 = vector.multi_reduction <maximumf>, %537, %cst_250 [1] : vector<8x8xf32> to vector<8xf32>
    %539 = vector.shape_cast %538 : vector<8xf32> to vector<8x1xf32>
    %540 = vector.broadcast %539 : vector<8x1xf32> to vector<8x8xf32>
    %541 = arith.subf %537, %540 : vector<8x8xf32>
    %542 = math.exp %541 : vector<8x8xf32>
    %cst_251 = arith.constant dense<0.000000e+00> : vector<8xf32>
    %543 = vector.multi_reduction <add>, %542, %cst_251 [1] : vector<8x8xf32> to vector<8xf32>
    %544 = vector.shape_cast %543 : vector<8xf32> to vector<8x1xf32>
    %545 = tpu.reciprocal %544 {approx = true} : vector<8x1xf32> -> vector<8x1xf32>
    %546 = vector.broadcast %545 : vector<8x1xf32> to vector<8x8xf32>
    %547 = arith.mulf %542, %546 : vector<8x8xf32>
    %548 = vector.extract_strided_slice %514 {offsets = [0, 8], sizes = [8, 8], strides = [1, 1]} : vector<8x32xf32> to vector<8x8xf32>
    %cst_252 = arith.constant dense<0.000000e+00> : vector<8x8xf32>
    %549 = tpu.matmul %547, %548, %cst_252 {dimension_numbers = #tpu.dot_dimension_numbers<[1], [0], [0], [1], [0, 0, 1, 1], [], []>} : vector<8x8xf32>, vector<8x8xf32>, vector<8x8xf32> -> vector<8x8xf32>
    %550 = vector.extract_strided_slice %509 {offsets = [0, 16], sizes = [8, 8], strides = [1, 1]} : vector<8x32xf32> to vector<8x8xf32>
    %551 = vector.extract_strided_slice %515 {offsets = [16, 0], sizes = [8, 8], strides = [1, 1]} : vector<32x8xf32> to vector<8x8xf32>
    %cst_253 = arith.constant dense<0.000000e+00> : vector<8x8xf32>
    %552 = tpu.matmul %550, %551, %cst_253 {dimension_numbers = #tpu.dot_dimension_numbers<[1], [0], [0], [1], [0, 0, 1, 1], [], []>} : vector<8x8xf32>, vector<8x8xf32>, vector<8x8xf32> -> vector<8x8xf32>
    %cst_254 = arith.constant 0.353553385 : f32
    %553 = vector.broadcast %cst_254 : f32 to vector<8x8xf32>
    %554 = arith.mulf %552, %553 : vector<8x8xf32>
    %cst_255 = arith.constant dense<0xFF800000> : vector<8xf32>
    %555 = vector.multi_reduction <maximumf>, %554, %cst_255 [1] : vector<8x8xf32> to vector<8xf32>
    %556 = vector.shape_cast %555 : vector<8xf32> to vector<8x1xf32>
    %557 = vector.broadcast %556 : vector<8x1xf32> to vector<8x8xf32>
    %558 = arith.subf %554, %557 : vector<8x8xf32>
    %559 = math.exp %558 : vector<8x8xf32>
    %cst_256 = arith.constant dense<0.000000e+00> : vector<8xf32>
    %560 = vector.multi_reduction <add>, %559, %cst_256 [1] : vector<8x8xf32> to vector<8xf32>
    %561 = vector.shape_cast %560 : vector<8xf32> to vector<8x1xf32>
    %562 = tpu.reciprocal %561 {approx = true} : vector<8x1xf32> -> vector<8x1xf32>
    %563 = vector.broadcast %562 : vector<8x1xf32> to vector<8x8xf32>
    %564 = arith.mulf %559, %563 : vector<8x8xf32>
    %565 = vector.extract_strided_slice %514 {offsets = [0, 16], sizes = [8, 8], strides = [1, 1]} : vector<8x32xf32> to vector<8x8xf32>
    %cst_257 = arith.constant dense<0.000000e+00> : vector<8x8xf32>
    %566 = tpu.matmul %564, %565, %cst_257 {dimension_numbers = #tpu.dot_dimension_numbers<[1], [0], [0], [1], [0, 0, 1, 1], [], []>} : vector<8x8xf32>, vector<8x8xf32>, vector<8x8xf32> -> vector<8x8xf32>
    %567 = vector.extract_strided_slice %509 {offsets = [0, 24], sizes = [8, 8], strides = [1, 1]} : vector<8x32xf32> to vector<8x8xf32>
    %568 = vector.extract_strided_slice %515 {offsets = [24, 0], sizes = [8, 8], strides = [1, 1]} : vector<32x8xf32> to vector<8x8xf32>
    %cst_258 = arith.constant dense<0.000000e+00> : vector<8x8xf32>
    %569 = tpu.matmul %567, %568, %cst_258 {dimension_numbers = #tpu.dot_dimension_numbers<[1], [0], [0], [1], [0, 0, 1, 1], [], []>} : vector<8x8xf32>, vector<8x8xf32>, vector<8x8xf32> -> vector<8x8xf32>
    %cst_259 = arith.constant 0.353553385 : f32
    %570 = vector.broadcast %cst_259 : f32 to vector<8x8xf32>
    %571 = arith.mulf %569, %570 : vector<8x8xf32>
    %cst_260 = arith.constant dense<0xFF800000> : vector<8xf32>
    %572 = vector.multi_reduction <maximumf>, %571, %cst_260 [1] : vector<8x8xf32> to vector<8xf32>
    %573 = vector.shape_cast %572 : vector<8xf32> to vector<8x1xf32>
    %574 = vector.broadcast %573 : vector<8x1xf32> to vector<8x8xf32>
    %575 = arith.subf %571, %574 : vector<8x8xf32>
    %576 = math.exp %575 : vector<8x8xf32>
    %cst_261 = arith.constant dense<0.000000e+00> : vector<8xf32>
    %577 = vector.multi_reduction <add>, %576, %cst_261 [1] : vector<8x8xf32> to vector<8xf32>
    %578 = vector.shape_cast %577 : vector<8xf32> to vector<8x1xf32>
    %579 = tpu.reciprocal %578 {approx = true} : vector<8x1xf32> -> vector<8x1xf32>
    %580 = vector.broadcast %579 : vector<8x1xf32> to vector<8x8xf32>
    %581 = arith.mulf %576, %580 : vector<8x8xf32>
    %582 = vector.extract_strided_slice %514 {offsets = [0, 24], sizes = [8, 8], strides = [1, 1]} : vector<8x32xf32> to vector<8x8xf32>
    %cst_262 = arith.constant dense<0.000000e+00> : vector<8x8xf32>
    %583 = tpu.matmul %581, %582, %cst_262 {dimension_numbers = #tpu.dot_dimension_numbers<[1], [0], [0], [1], [0, 0, 1, 1], [], []>} : vector<8x8xf32>, vector<8x8xf32>, vector<8x8xf32> -> vector<8x8xf32>
    %584 = tpu.concatenate %532, %549, %566, %583 in 1 : vector<8x8xf32>, vector<8x8xf32>, vector<8x8xf32>, vector<8x8xf32> -> vector<8x32xf32>
    %cst_263 = arith.constant dense<0.000000e+00> : vector<8x32xf32>
    %585 = tpu.matmul %584, %500, %cst_263 {dimension_numbers = #tpu.dot_dimension_numbers<[1], [0], [0], [1], [0, 0, 1, 1], [], []>} : vector<8x32xf32>, vector<32x32xf32>, vector<8x32xf32> -> vector<8x32xf32>
    %586 = vector.broadcast %502 : vector<1x32xf32> to vector<8x32xf32>
    %587 = arith.addf %585, %586 : vector<8x32xf32>
    %588 = arith.addf %490, %587 : vector<8x32xf32>
    %cst_264 = arith.constant dense<0.000000e+00> : vector<8xf32>
    %589 = vector.multi_reduction <add>, %588, %cst_264 [1] : vector<8x32xf32> to vector<8xf32>
    %590 = vector.shape_cast %589 : vector<8xf32> to vector<8x1xf32>
    %cst_265 = arith.constant 3.200000e+01 : f32
    %591 = vector.broadcast %cst_265 : f32 to vector<8x1xf32>
    %592 = arith.divf %590, %591 : vector<8x1xf32>
    %593 = vector.broadcast %592 : vector<8x1xf32> to vector<8x32xf32>
    %594 = arith.subf %588, %593 : vector<8x32xf32>
    %595 = arith.mulf %594, %594 : vector<8x32xf32>
    %cst_266 = arith.constant dense<0.000000e+00> : vector<8xf32>
    %596 = vector.multi_reduction <add>, %595, %cst_266 [1] : vector<8x32xf32> to vector<8xf32>
    %597 = vector.shape_cast %596 : vector<8xf32> to vector<8x1xf32>
    %cst_267 = arith.constant 3.200000e+01 : f32
    %598 = vector.broadcast %cst_267 : f32 to vector<8x1xf32>
    %599 = arith.divf %597, %598 : vector<8x1xf32>
    %cst_268 = arith.constant 9.99999974E-6 : f32
    %600 = vector.broadcast %cst_268 : f32 to vector<8x1xf32>
    %601 = arith.addf %599, %600 : vector<8x1xf32>
    %602 = math.rsqrt %601 : vector<8x1xf32>
    %603 = vector.broadcast %602 : vector<8x1xf32> to vector<8x32xf32>
    %604 = arith.mulf %594, %603 : vector<8x32xf32>
    %605 = vector.broadcast %504 : vector<1x32xf32> to vector<8x32xf32>
    %606 = arith.mulf %604, %605 : vector<8x32xf32>
    %607 = vector.broadcast %506 : vector<1x32xf32> to vector<8x32xf32>
    %608 = arith.addf %606, %607 : vector<8x32xf32>
    %c0_269 = arith.constant 0 : index
    %c0_270 = arith.constant 0 : index
    %c0_271 = arith.constant 0 : index
    %609 = vector.load %arg33[%c0_269, %c0_270, %c0_271] : memref<2x32x64xf32, #tpu.memory_space<vmem>>, vector<1x32x64xf32>
    %610 = vector.shape_cast %609 : vector<1x32x64xf32> to vector<32x64xf32>
    %c0_272 = arith.constant 0 : index
    %c0_273 = arith.constant 0 : index
    %c0_274 = arith.constant 0 : index
    %611 = vector.load %arg34[%c0_272, %c0_273, %c0_274] : memref<2x1x64xf32, #tpu.memory_space<vmem>>, vector<1x1x64xf32>
    %612 = vector.shape_cast %611 : vector<1x1x64xf32> to vector<1x64xf32>
    %c0_275 = arith.constant 0 : index
    %c0_276 = arith.constant 0 : index
    %c0_277 = arith.constant 0 : index
    %613 = vector.load %arg35[%c0_275, %c0_276, %c0_277] : memref<2x64x32xf32, #tpu.memory_space<vmem>>, vector<1x64x32xf32>
    %614 = vector.shape_cast %613 : vector<1x64x32xf32> to vector<64x32xf32>
    %c0_278 = arith.constant 0 : index
    %c0_279 = arith.constant 0 : index
    %c0_280 = arith.constant 0 : index
    %615 = vector.load %arg36[%c0_278, %c0_279, %c0_280] : memref<2x1x32xf32, #tpu.memory_space<vmem>>, vector<1x1x32xf32>
    %616 = vector.shape_cast %615 : vector<1x1x32xf32> to vector<1x32xf32>
    %c0_281 = arith.constant 0 : index
    %c0_282 = arith.constant 0 : index
    %c0_283 = arith.constant 0 : index
    %617 = vector.load %arg37[%c0_281, %c0_282, %c0_283] : memref<2x1x32xf32, #tpu.memory_space<vmem>>, vector<1x1x32xf32>
    %618 = vector.shape_cast %617 : vector<1x1x32xf32> to vector<1x32xf32>
    %c0_284 = arith.constant 0 : index
    %c0_285 = arith.constant 0 : index
    %c0_286 = arith.constant 0 : index
    %619 = vector.load %arg38[%c0_284, %c0_285, %c0_286] : memref<2x1x32xf32, #tpu.memory_space<vmem>>, vector<1x1x32xf32>
    %620 = vector.shape_cast %619 : vector<1x1x32xf32> to vector<1x32xf32>
    %cst_287 = arith.constant dense<0.000000e+00> : vector<8x64xf32>
    %621 = tpu.matmul %608, %610, %cst_287 {dimension_numbers = #tpu.dot_dimension_numbers<[1], [0], [0], [1], [0, 0, 1, 1], [], []>} : vector<8x32xf32>, vector<32x64xf32>, vector<8x64xf32> -> vector<8x64xf32>
    %622 = vector.broadcast %612 : vector<1x64xf32> to vector<8x64xf32>
    %623 = arith.addf %621, %622 : vector<8x64xf32>
    %cst_288 = arith.constant 5.000000e-01 : f32
    %624 = vector.broadcast %cst_288 : f32 to vector<8x64xf32>
    %625 = arith.mulf %624, %623 : vector<8x64xf32>
    %cst_289 = arith.constant 0.707106769 : f32
    %626 = vector.broadcast %cst_289 : f32 to vector<8x64xf32>
    %627 = arith.mulf %623, %626 : vector<8x64xf32>
    %628 = math.erf %627 : vector<8x64xf32>
    %cst_290 = arith.constant 1.000000e+00 : f32
    %629 = vector.broadcast %cst_290 : f32 to vector<8x64xf32>
    %630 = arith.addf %629, %628 : vector<8x64xf32>
    %631 = arith.mulf %625, %630 : vector<8x64xf32>
    %cst_291 = arith.constant dense<0.000000e+00> : vector<8x32xf32>
    %632 = tpu.matmul %631, %614, %cst_291 {dimension_numbers = #tpu.dot_dimension_numbers<[1], [0], [0], [1], [0, 0, 1, 1], [], []>} : vector<8x64xf32>, vector<64x32xf32>, vector<8x32xf32> -> vector<8x32xf32>
    %633 = vector.broadcast %616 : vector<1x32xf32> to vector<8x32xf32>
    %634 = arith.addf %632, %633 : vector<8x32xf32>
    %635 = arith.addf %608, %634 : vector<8x32xf32>
    %cst_292 = arith.constant dense<0.000000e+00> : vector<8xf32>
    %636 = vector.multi_reduction <add>, %635, %cst_292 [1] : vector<8x32xf32> to vector<8xf32>
    %637 = vector.shape_cast %636 : vector<8xf32> to vector<8x1xf32>
    %cst_293 = arith.constant 3.200000e+01 : f32
    %638 = vector.broadcast %cst_293 : f32 to vector<8x1xf32>
    %639 = arith.divf %637, %638 : vector<8x1xf32>
    %640 = vector.broadcast %639 : vector<8x1xf32> to vector<8x32xf32>
    %641 = arith.subf %635, %640 : vector<8x32xf32>
    %642 = arith.mulf %641, %641 : vector<8x32xf32>
    %cst_294 = arith.constant dense<0.000000e+00> : vector<8xf32>
    %643 = vector.multi_reduction <add>, %642, %cst_294 [1] : vector<8x32xf32> to vector<8xf32>
    %644 = vector.shape_cast %643 : vector<8xf32> to vector<8x1xf32>
    %cst_295 = arith.constant 3.200000e+01 : f32
    %645 = vector.broadcast %cst_295 : f32 to vector<8x1xf32>
    %646 = arith.divf %644, %645 : vector<8x1xf32>
    %cst_296 = arith.constant 9.99999974E-6 : f32
    %647 = vector.broadcast %cst_296 : f32 to vector<8x1xf32>
    %648 = arith.addf %646, %647 : vector<8x1xf32>
    %649 = math.rsqrt %648 : vector<8x1xf32>
    %650 = vector.broadcast %649 : vector<8x1xf32> to vector<8x32xf32>
    %651 = arith.mulf %641, %650 : vector<8x32xf32>
    %652 = vector.broadcast %618 : vector<1x32xf32> to vector<8x32xf32>
    %653 = arith.mulf %651, %652 : vector<8x32xf32>
    %654 = vector.broadcast %620 : vector<1x32xf32> to vector<8x32xf32>
    %655 = arith.addf %653, %654 : vector<8x32xf32>
    %c1_297 = arith.constant 1 : index
    %c0_298 = arith.constant 0 : index
    %c0_299 = arith.constant 0 : index
    %656 = vector.load %arg19[%c1_297, %c0_298, %c0_299] : memref<2x32x96xf32, #tpu.memory_space<vmem>>, vector<1x32x96xf32>
    %657 = vector.shape_cast %656 : vector<1x32x96xf32> to vector<32x96xf32>
    %c1_300 = arith.constant 1 : index
    %c0_301 = arith.constant 0 : index
    %c0_302 = arith.constant 0 : index
    %658 = vector.load %arg20[%c1_300, %c0_301, %c0_302] : memref<2x1x96xf32, #tpu.memory_space<vmem>>, vector<1x1x96xf32>
    %659 = vector.shape_cast %658 : vector<1x1x96xf32> to vector<1x96xf32>
    %c1_303 = arith.constant 1 : index
    %c0_304 = arith.constant 0 : index
    %c0_305 = arith.constant 0 : index
    %660 = vector.load %arg21[%c1_303, %c0_304, %c0_305] : memref<2x32x32xf32, #tpu.memory_space<vmem>>, vector<1x32x32xf32>
    %661 = vector.shape_cast %660 : vector<1x32x32xf32> to vector<32x32xf32>
    %c1_306 = arith.constant 1 : index
    %c0_307 = arith.constant 0 : index
    %c0_308 = arith.constant 0 : index
    %662 = vector.load %arg22[%c1_306, %c0_307, %c0_308] : memref<2x1x32xf32, #tpu.memory_space<vmem>>, vector<1x1x32xf32>
    %663 = vector.shape_cast %662 : vector<1x1x32xf32> to vector<1x32xf32>
    %c1_309 = arith.constant 1 : index
    %c0_310 = arith.constant 0 : index
    %c0_311 = arith.constant 0 : index
    %664 = vector.load %arg23[%c1_309, %c0_310, %c0_311] : memref<2x1x32xf32, #tpu.memory_space<vmem>>, vector<1x1x32xf32>
    %665 = vector.shape_cast %664 : vector<1x1x32xf32> to vector<1x32xf32>
    %c1_312 = arith.constant 1 : index
    %c0_313 = arith.constant 0 : index
    %c0_314 = arith.constant 0 : index
    %666 = vector.load %arg24[%c1_312, %c0_313, %c0_314] : memref<2x1x32xf32, #tpu.memory_space<vmem>>, vector<1x1x32xf32>
    %667 = vector.shape_cast %666 : vector<1x1x32xf32> to vector<1x32xf32>
    %cst_315 = arith.constant dense<0.000000e+00> : vector<8x96xf32>
    %668 = tpu.matmul %655, %657, %cst_315 {dimension_numbers = #tpu.dot_dimension_numbers<[1], [0], [0], [1], [0, 0, 1, 1], [], []>} : vector<8x32xf32>, vector<32x96xf32>, vector<8x96xf32> -> vector<8x96xf32>
    %669 = vector.broadcast %659 : vector<1x96xf32> to vector<8x96xf32>
    %670 = arith.addf %668, %669 : vector<8x96xf32>
    %671 = vector.extract_strided_slice %670 {offsets = [0, 0], sizes = [8, 32], strides = [1, 1]} : vector<8x96xf32> to vector<8x32xf32>
    %672 = vector.extract_strided_slice %670 {offsets = [0, 32], sizes = [8, 32], strides = [1, 1]} : vector<8x96xf32> to vector<8x32xf32>
    %673 = vector.extract_strided_slice %670 {offsets = [0, 64], sizes = [8, 32], strides = [1, 1]} : vector<8x96xf32> to vector<8x32xf32>
    %674 = tpu.iota {dimensions = array<i32: 0>} : vector<8x8xi32>
    %675 = tpu.iota {dimensions = array<i32: 1>} : vector<8x8xi32>
    %676 = arith.cmpi sge, %674, %675 : vector<8x8xi32>
    %cst_316 = arith.constant 0.000000e+00 : f32
    %cst_317 = arith.constant -1.000000e+09 : f32
    %677 = vector.broadcast %cst_316 : f32 to vector<8x8xf32>
    %678 = vector.broadcast %cst_317 : f32 to vector<8x8xf32>
    %679 = arith.select %676, %677, %678 : vector<8x8xi1>, vector<8x8xf32>
    %680 = tpu.transpose %672, [1, 0] : vector<8x32xf32> -> vector<32x8xf32>
    %681 = vector.extract_strided_slice %671 {offsets = [0, 0], sizes = [8, 8], strides = [1, 1]} : vector<8x32xf32> to vector<8x8xf32>
    %682 = vector.extract_strided_slice %680 {offsets = [0, 0], sizes = [8, 8], strides = [1, 1]} : vector<32x8xf32> to vector<8x8xf32>
    %cst_318 = arith.constant dense<0.000000e+00> : vector<8x8xf32>
    %683 = tpu.matmul %681, %682, %cst_318 {dimension_numbers = #tpu.dot_dimension_numbers<[1], [0], [0], [1], [0, 0, 1, 1], [], []>} : vector<8x8xf32>, vector<8x8xf32>, vector<8x8xf32> -> vector<8x8xf32>
    %cst_319 = arith.constant 0.353553385 : f32
    %684 = vector.broadcast %cst_319 : f32 to vector<8x8xf32>
    %685 = arith.mulf %683, %684 : vector<8x8xf32>
    %686 = arith.addf %685, %679 : vector<8x8xf32>
    %cst_320 = arith.constant dense<0xFF800000> : vector<8xf32>
    %687 = vector.multi_reduction <maximumf>, %686, %cst_320 [1] : vector<8x8xf32> to vector<8xf32>
    %688 = vector.shape_cast %687 : vector<8xf32> to vector<8x1xf32>
    %689 = vector.broadcast %688 : vector<8x1xf32> to vector<8x8xf32>
    %690 = arith.subf %686, %689 : vector<8x8xf32>
    %691 = math.exp %690 : vector<8x8xf32>
    %cst_321 = arith.constant dense<0.000000e+00> : vector<8xf32>
    %692 = vector.multi_reduction <add>, %691, %cst_321 [1] : vector<8x8xf32> to vector<8xf32>
    %693 = vector.shape_cast %692 : vector<8xf32> to vector<8x1xf32>
    %694 = tpu.reciprocal %693 {approx = true} : vector<8x1xf32> -> vector<8x1xf32>
    %695 = vector.broadcast %694 : vector<8x1xf32> to vector<8x8xf32>
    %696 = arith.mulf %691, %695 : vector<8x8xf32>
    %697 = vector.extract_strided_slice %673 {offsets = [0, 0], sizes = [8, 8], strides = [1, 1]} : vector<8x32xf32> to vector<8x8xf32>
    %cst_322 = arith.constant dense<0.000000e+00> : vector<8x8xf32>
    %698 = tpu.matmul %696, %697, %cst_322 {dimension_numbers = #tpu.dot_dimension_numbers<[1], [0], [0], [1], [0, 0, 1, 1], [], []>} : vector<8x8xf32>, vector<8x8xf32>, vector<8x8xf32> -> vector<8x8xf32>
    %699 = vector.extract_strided_slice %671 {offsets = [0, 8], sizes = [8, 8], strides = [1, 1]} : vector<8x32xf32> to vector<8x8xf32>
    %700 = vector.extract_strided_slice %680 {offsets = [8, 0], sizes = [8, 8], strides = [1, 1]} : vector<32x8xf32> to vector<8x8xf32>
    %cst_323 = arith.constant dense<0.000000e+00> : vector<8x8xf32>
    %701 = tpu.matmul %699, %700, %cst_323 {dimension_numbers = #tpu.dot_dimension_numbers<[1], [0], [0], [1], [0, 0, 1, 1], [], []>} : vector<8x8xf32>, vector<8x8xf32>, vector<8x8xf32> -> vector<8x8xf32>
    %cst_324 = arith.constant 0.353553385 : f32
    %702 = vector.broadcast %cst_324 : f32 to vector<8x8xf32>
    %703 = arith.mulf %701, %702 : vector<8x8xf32>
    %704 = arith.addf %703, %679 : vector<8x8xf32>
    %cst_325 = arith.constant dense<0xFF800000> : vector<8xf32>
    %705 = vector.multi_reduction <maximumf>, %704, %cst_325 [1] : vector<8x8xf32> to vector<8xf32>
    %706 = vector.shape_cast %705 : vector<8xf32> to vector<8x1xf32>
    %707 = vector.broadcast %706 : vector<8x1xf32> to vector<8x8xf32>
    %708 = arith.subf %704, %707 : vector<8x8xf32>
    %709 = math.exp %708 : vector<8x8xf32>
    %cst_326 = arith.constant dense<0.000000e+00> : vector<8xf32>
    %710 = vector.multi_reduction <add>, %709, %cst_326 [1] : vector<8x8xf32> to vector<8xf32>
    %711 = vector.shape_cast %710 : vector<8xf32> to vector<8x1xf32>
    %712 = tpu.reciprocal %711 {approx = true} : vector<8x1xf32> -> vector<8x1xf32>
    %713 = vector.broadcast %712 : vector<8x1xf32> to vector<8x8xf32>
    %714 = arith.mulf %709, %713 : vector<8x8xf32>
    %715 = vector.extract_strided_slice %673 {offsets = [0, 8], sizes = [8, 8], strides = [1, 1]} : vector<8x32xf32> to vector<8x8xf32>
    %cst_327 = arith.constant dense<0.000000e+00> : vector<8x8xf32>
    %716 = tpu.matmul %714, %715, %cst_327 {dimension_numbers = #tpu.dot_dimension_numbers<[1], [0], [0], [1], [0, 0, 1, 1], [], []>} : vector<8x8xf32>, vector<8x8xf32>, vector<8x8xf32> -> vector<8x8xf32>
    %717 = vector.extract_strided_slice %671 {offsets = [0, 16], sizes = [8, 8], strides = [1, 1]} : vector<8x32xf32> to vector<8x8xf32>
    %718 = vector.extract_strided_slice %680 {offsets = [16, 0], sizes = [8, 8], strides = [1, 1]} : vector<32x8xf32> to vector<8x8xf32>
    %cst_328 = arith.constant dense<0.000000e+00> : vector<8x8xf32>
    %719 = tpu.matmul %717, %718, %cst_328 {dimension_numbers = #tpu.dot_dimension_numbers<[1], [0], [0], [1], [0, 0, 1, 1], [], []>} : vector<8x8xf32>, vector<8x8xf32>, vector<8x8xf32> -> vector<8x8xf32>
    %cst_329 = arith.constant 0.353553385 : f32
    %720 = vector.broadcast %cst_329 : f32 to vector<8x8xf32>
    %721 = arith.mulf %719, %720 : vector<8x8xf32>
    %722 = arith.addf %721, %679 : vector<8x8xf32>
    %cst_330 = arith.constant dense<0xFF800000> : vector<8xf32>
    %723 = vector.multi_reduction <maximumf>, %722, %cst_330 [1] : vector<8x8xf32> to vector<8xf32>
    %724 = vector.shape_cast %723 : vector<8xf32> to vector<8x1xf32>
    %725 = vector.broadcast %724 : vector<8x1xf32> to vector<8x8xf32>
    %726 = arith.subf %722, %725 : vector<8x8xf32>
    %727 = math.exp %726 : vector<8x8xf32>
    %cst_331 = arith.constant dense<0.000000e+00> : vector<8xf32>
    %728 = vector.multi_reduction <add>, %727, %cst_331 [1] : vector<8x8xf32> to vector<8xf32>
    %729 = vector.shape_cast %728 : vector<8xf32> to vector<8x1xf32>
    %730 = tpu.reciprocal %729 {approx = true} : vector<8x1xf32> -> vector<8x1xf32>
    %731 = vector.broadcast %730 : vector<8x1xf32> to vector<8x8xf32>
    %732 = arith.mulf %727, %731 : vector<8x8xf32>
    %733 = vector.extract_strided_slice %673 {offsets = [0, 16], sizes = [8, 8], strides = [1, 1]} : vector<8x32xf32> to vector<8x8xf32>
    %cst_332 = arith.constant dense<0.000000e+00> : vector<8x8xf32>
    %734 = tpu.matmul %732, %733, %cst_332 {dimension_numbers = #tpu.dot_dimension_numbers<[1], [0], [0], [1], [0, 0, 1, 1], [], []>} : vector<8x8xf32>, vector<8x8xf32>, vector<8x8xf32> -> vector<8x8xf32>
    %735 = vector.extract_strided_slice %671 {offsets = [0, 24], sizes = [8, 8], strides = [1, 1]} : vector<8x32xf32> to vector<8x8xf32>
    %736 = vector.extract_strided_slice %680 {offsets = [24, 0], sizes = [8, 8], strides = [1, 1]} : vector<32x8xf32> to vector<8x8xf32>
    %cst_333 = arith.constant dense<0.000000e+00> : vector<8x8xf32>
    %737 = tpu.matmul %735, %736, %cst_333 {dimension_numbers = #tpu.dot_dimension_numbers<[1], [0], [0], [1], [0, 0, 1, 1], [], []>} : vector<8x8xf32>, vector<8x8xf32>, vector<8x8xf32> -> vector<8x8xf32>
    %cst_334 = arith.constant 0.353553385 : f32
    %738 = vector.broadcast %cst_334 : f32 to vector<8x8xf32>
    %739 = arith.mulf %737, %738 : vector<8x8xf32>
    %740 = arith.addf %739, %679 : vector<8x8xf32>
    %cst_335 = arith.constant dense<0xFF800000> : vector<8xf32>
    %741 = vector.multi_reduction <maximumf>, %740, %cst_335 [1] : vector<8x8xf32> to vector<8xf32>
    %742 = vector.shape_cast %741 : vector<8xf32> to vector<8x1xf32>
    %743 = vector.broadcast %742 : vector<8x1xf32> to vector<8x8xf32>
    %744 = arith.subf %740, %743 : vector<8x8xf32>
    %745 = math.exp %744 : vector<8x8xf32>
    %cst_336 = arith.constant dense<0.000000e+00> : vector<8xf32>
    %746 = vector.multi_reduction <add>, %745, %cst_336 [1] : vector<8x8xf32> to vector<8xf32>
    %747 = vector.shape_cast %746 : vector<8xf32> to vector<8x1xf32>
    %748 = tpu.reciprocal %747 {approx = true} : vector<8x1xf32> -> vector<8x1xf32>
    %749 = vector.broadcast %748 : vector<8x1xf32> to vector<8x8xf32>
    %750 = arith.mulf %745, %749 : vector<8x8xf32>
    %751 = vector.extract_strided_slice %673 {offsets = [0, 24], sizes = [8, 8], strides = [1, 1]} : vector<8x32xf32> to vector<8x8xf32>
    %cst_337 = arith.constant dense<0.000000e+00> : vector<8x8xf32>
    %752 = tpu.matmul %750, %751, %cst_337 {dimension_numbers = #tpu.dot_dimension_numbers<[1], [0], [0], [1], [0, 0, 1, 1], [], []>} : vector<8x8xf32>, vector<8x8xf32>, vector<8x8xf32> -> vector<8x8xf32>
    %753 = tpu.concatenate %698, %716, %734, %752 in 1 : vector<8x8xf32>, vector<8x8xf32>, vector<8x8xf32>, vector<8x8xf32> -> vector<8x32xf32>
    %cst_338 = arith.constant dense<0.000000e+00> : vector<8x32xf32>
    %754 = tpu.matmul %753, %661, %cst_338 {dimension_numbers = #tpu.dot_dimension_numbers<[1], [0], [0], [1], [0, 0, 1, 1], [], []>} : vector<8x32xf32>, vector<32x32xf32>, vector<8x32xf32> -> vector<8x32xf32>
    %755 = vector.broadcast %663 : vector<1x32xf32> to vector<8x32xf32>
    %756 = arith.addf %754, %755 : vector<8x32xf32>
    %757 = arith.addf %655, %756 : vector<8x32xf32>
    %cst_339 = arith.constant dense<0.000000e+00> : vector<8xf32>
    %758 = vector.multi_reduction <add>, %757, %cst_339 [1] : vector<8x32xf32> to vector<8xf32>
    %759 = vector.shape_cast %758 : vector<8xf32> to vector<8x1xf32>
    %cst_340 = arith.constant 3.200000e+01 : f32
    %760 = vector.broadcast %cst_340 : f32 to vector<8x1xf32>
    %761 = arith.divf %759, %760 : vector<8x1xf32>
    %762 = vector.broadcast %761 : vector<8x1xf32> to vector<8x32xf32>
    %763 = arith.subf %757, %762 : vector<8x32xf32>
    %764 = arith.mulf %763, %763 : vector<8x32xf32>
    %cst_341 = arith.constant dense<0.000000e+00> : vector<8xf32>
    %765 = vector.multi_reduction <add>, %764, %cst_341 [1] : vector<8x32xf32> to vector<8xf32>
    %766 = vector.shape_cast %765 : vector<8xf32> to vector<8x1xf32>
    %cst_342 = arith.constant 3.200000e+01 : f32
    %767 = vector.broadcast %cst_342 : f32 to vector<8x1xf32>
    %768 = arith.divf %766, %767 : vector<8x1xf32>
    %cst_343 = arith.constant 9.99999974E-6 : f32
    %769 = vector.broadcast %cst_343 : f32 to vector<8x1xf32>
    %770 = arith.addf %768, %769 : vector<8x1xf32>
    %771 = math.rsqrt %770 : vector<8x1xf32>
    %772 = vector.broadcast %771 : vector<8x1xf32> to vector<8x32xf32>
    %773 = arith.mulf %763, %772 : vector<8x32xf32>
    %774 = vector.broadcast %665 : vector<1x32xf32> to vector<8x32xf32>
    %775 = arith.mulf %773, %774 : vector<8x32xf32>
    %776 = vector.broadcast %667 : vector<1x32xf32> to vector<8x32xf32>
    %777 = arith.addf %775, %776 : vector<8x32xf32>
    %c1_344 = arith.constant 1 : index
    %c0_345 = arith.constant 0 : index
    %c0_346 = arith.constant 0 : index
    %778 = vector.load %arg25[%c1_344, %c0_345, %c0_346] : memref<2x32x32xf32, #tpu.memory_space<vmem>>, vector<1x32x32xf32>
    %779 = vector.shape_cast %778 : vector<1x32x32xf32> to vector<32x32xf32>
    %c1_347 = arith.constant 1 : index
    %c0_348 = arith.constant 0 : index
    %c0_349 = arith.constant 0 : index
    %780 = vector.load %arg26[%c1_347, %c0_348, %c0_349] : memref<2x1x32xf32, #tpu.memory_space<vmem>>, vector<1x1x32xf32>
    %781 = vector.shape_cast %780 : vector<1x1x32xf32> to vector<1x32xf32>
    %c1_350 = arith.constant 1 : index
    %c0_351 = arith.constant 0 : index
    %c0_352 = arith.constant 0 : index
    %782 = vector.load %arg27[%c1_350, %c0_351, %c0_352] : memref<2x32x64xf32, #tpu.memory_space<vmem>>, vector<1x32x64xf32>
    %783 = vector.shape_cast %782 : vector<1x32x64xf32> to vector<32x64xf32>
    %c1_353 = arith.constant 1 : index
    %c0_354 = arith.constant 0 : index
    %c0_355 = arith.constant 0 : index
    %784 = vector.load %arg28[%c1_353, %c0_354, %c0_355] : memref<2x1x64xf32, #tpu.memory_space<vmem>>, vector<1x1x64xf32>
    %785 = vector.shape_cast %784 : vector<1x1x64xf32> to vector<1x64xf32>
    %c1_356 = arith.constant 1 : index
    %c0_357 = arith.constant 0 : index
    %c0_358 = arith.constant 0 : index
    %786 = vector.load %arg29[%c1_356, %c0_357, %c0_358] : memref<2x32x32xf32, #tpu.memory_space<vmem>>, vector<1x32x32xf32>
    %787 = vector.shape_cast %786 : vector<1x32x32xf32> to vector<32x32xf32>
    %c1_359 = arith.constant 1 : index
    %c0_360 = arith.constant 0 : index
    %c0_361 = arith.constant 0 : index
    %788 = vector.load %arg30[%c1_359, %c0_360, %c0_361] : memref<2x1x32xf32, #tpu.memory_space<vmem>>, vector<1x1x32xf32>
    %789 = vector.shape_cast %788 : vector<1x1x32xf32> to vector<1x32xf32>
    %c1_362 = arith.constant 1 : index
    %c0_363 = arith.constant 0 : index
    %c0_364 = arith.constant 0 : index
    %790 = vector.load %arg31[%c1_362, %c0_363, %c0_364] : memref<2x1x32xf32, #tpu.memory_space<vmem>>, vector<1x1x32xf32>
    %791 = vector.shape_cast %790 : vector<1x1x32xf32> to vector<1x32xf32>
    %c1_365 = arith.constant 1 : index
    %c0_366 = arith.constant 0 : index
    %c0_367 = arith.constant 0 : index
    %792 = vector.load %arg32[%c1_365, %c0_366, %c0_367] : memref<2x1x32xf32, #tpu.memory_space<vmem>>, vector<1x1x32xf32>
    %793 = vector.shape_cast %792 : vector<1x1x32xf32> to vector<1x32xf32>
    %cst_368 = arith.constant dense<0.000000e+00> : vector<8x32xf32>
    %794 = tpu.matmul %777, %779, %cst_368 {dimension_numbers = #tpu.dot_dimension_numbers<[1], [0], [0], [1], [0, 0, 1, 1], [], []>} : vector<8x32xf32>, vector<32x32xf32>, vector<8x32xf32> -> vector<8x32xf32>
    %795 = vector.broadcast %781 : vector<1x32xf32> to vector<8x32xf32>
    %796 = arith.addf %794, %795 : vector<8x32xf32>
    %cst_369 = arith.constant dense<0.000000e+00> : vector<8x64xf32>
    %797 = tpu.matmul %341, %783, %cst_369 {dimension_numbers = #tpu.dot_dimension_numbers<[1], [0], [0], [1], [0, 0, 1, 1], [], []>} : vector<8x32xf32>, vector<32x64xf32>, vector<8x64xf32> -> vector<8x64xf32>
    %798 = vector.broadcast %785 : vector<1x64xf32> to vector<8x64xf32>
    %799 = arith.addf %797, %798 : vector<8x64xf32>
    %800 = vector.extract_strided_slice %799 {offsets = [0, 0], sizes = [8, 32], strides = [1, 1]} : vector<8x64xf32> to vector<8x32xf32>
    %801 = vector.extract_strided_slice %799 {offsets = [0, 32], sizes = [8, 32], strides = [1, 1]} : vector<8x64xf32> to vector<8x32xf32>
    %802 = tpu.transpose %800, [1, 0] : vector<8x32xf32> -> vector<32x8xf32>
    %803 = vector.extract_strided_slice %796 {offsets = [0, 0], sizes = [8, 8], strides = [1, 1]} : vector<8x32xf32> to vector<8x8xf32>
    %804 = vector.extract_strided_slice %802 {offsets = [0, 0], sizes = [8, 8], strides = [1, 1]} : vector<32x8xf32> to vector<8x8xf32>
    %cst_370 = arith.constant dense<0.000000e+00> : vector<8x8xf32>
    %805 = tpu.matmul %803, %804, %cst_370 {dimension_numbers = #tpu.dot_dimension_numbers<[1], [0], [0], [1], [0, 0, 1, 1], [], []>} : vector<8x8xf32>, vector<8x8xf32>, vector<8x8xf32> -> vector<8x8xf32>
    %cst_371 = arith.constant 0.353553385 : f32
    %806 = vector.broadcast %cst_371 : f32 to vector<8x8xf32>
    %807 = arith.mulf %805, %806 : vector<8x8xf32>
    %cst_372 = arith.constant dense<0xFF800000> : vector<8xf32>
    %808 = vector.multi_reduction <maximumf>, %807, %cst_372 [1] : vector<8x8xf32> to vector<8xf32>
    %809 = vector.shape_cast %808 : vector<8xf32> to vector<8x1xf32>
    %810 = vector.broadcast %809 : vector<8x1xf32> to vector<8x8xf32>
    %811 = arith.subf %807, %810 : vector<8x8xf32>
    %812 = math.exp %811 : vector<8x8xf32>
    %cst_373 = arith.constant dense<0.000000e+00> : vector<8xf32>
    %813 = vector.multi_reduction <add>, %812, %cst_373 [1] : vector<8x8xf32> to vector<8xf32>
    %814 = vector.shape_cast %813 : vector<8xf32> to vector<8x1xf32>
    %815 = tpu.reciprocal %814 {approx = true} : vector<8x1xf32> -> vector<8x1xf32>
    %816 = vector.broadcast %815 : vector<8x1xf32> to vector<8x8xf32>
    %817 = arith.mulf %812, %816 : vector<8x8xf32>
    %818 = vector.extract_strided_slice %801 {offsets = [0, 0], sizes = [8, 8], strides = [1, 1]} : vector<8x32xf32> to vector<8x8xf32>
    %cst_374 = arith.constant dense<0.000000e+00> : vector<8x8xf32>
    %819 = tpu.matmul %817, %818, %cst_374 {dimension_numbers = #tpu.dot_dimension_numbers<[1], [0], [0], [1], [0, 0, 1, 1], [], []>} : vector<8x8xf32>, vector<8x8xf32>, vector<8x8xf32> -> vector<8x8xf32>
    %820 = vector.extract_strided_slice %796 {offsets = [0, 8], sizes = [8, 8], strides = [1, 1]} : vector<8x32xf32> to vector<8x8xf32>
    %821 = vector.extract_strided_slice %802 {offsets = [8, 0], sizes = [8, 8], strides = [1, 1]} : vector<32x8xf32> to vector<8x8xf32>
    %cst_375 = arith.constant dense<0.000000e+00> : vector<8x8xf32>
    %822 = tpu.matmul %820, %821, %cst_375 {dimension_numbers = #tpu.dot_dimension_numbers<[1], [0], [0], [1], [0, 0, 1, 1], [], []>} : vector<8x8xf32>, vector<8x8xf32>, vector<8x8xf32> -> vector<8x8xf32>
    %cst_376 = arith.constant 0.353553385 : f32
    %823 = vector.broadcast %cst_376 : f32 to vector<8x8xf32>
    %824 = arith.mulf %822, %823 : vector<8x8xf32>
    %cst_377 = arith.constant dense<0xFF800000> : vector<8xf32>
    %825 = vector.multi_reduction <maximumf>, %824, %cst_377 [1] : vector<8x8xf32> to vector<8xf32>
    %826 = vector.shape_cast %825 : vector<8xf32> to vector<8x1xf32>
    %827 = vector.broadcast %826 : vector<8x1xf32> to vector<8x8xf32>
    %828 = arith.subf %824, %827 : vector<8x8xf32>
    %829 = math.exp %828 : vector<8x8xf32>
    %cst_378 = arith.constant dense<0.000000e+00> : vector<8xf32>
    %830 = vector.multi_reduction <add>, %829, %cst_378 [1] : vector<8x8xf32> to vector<8xf32>
    %831 = vector.shape_cast %830 : vector<8xf32> to vector<8x1xf32>
    %832 = tpu.reciprocal %831 {approx = true} : vector<8x1xf32> -> vector<8x1xf32>
    %833 = vector.broadcast %832 : vector<8x1xf32> to vector<8x8xf32>
    %834 = arith.mulf %829, %833 : vector<8x8xf32>
    %835 = vector.extract_strided_slice %801 {offsets = [0, 8], sizes = [8, 8], strides = [1, 1]} : vector<8x32xf32> to vector<8x8xf32>
    %cst_379 = arith.constant dense<0.000000e+00> : vector<8x8xf32>
    %836 = tpu.matmul %834, %835, %cst_379 {dimension_numbers = #tpu.dot_dimension_numbers<[1], [0], [0], [1], [0, 0, 1, 1], [], []>} : vector<8x8xf32>, vector<8x8xf32>, vector<8x8xf32> -> vector<8x8xf32>
    %837 = vector.extract_strided_slice %796 {offsets = [0, 16], sizes = [8, 8], strides = [1, 1]} : vector<8x32xf32> to vector<8x8xf32>
    %838 = vector.extract_strided_slice %802 {offsets = [16, 0], sizes = [8, 8], strides = [1, 1]} : vector<32x8xf32> to vector<8x8xf32>
    %cst_380 = arith.constant dense<0.000000e+00> : vector<8x8xf32>
    %839 = tpu.matmul %837, %838, %cst_380 {dimension_numbers = #tpu.dot_dimension_numbers<[1], [0], [0], [1], [0, 0, 1, 1], [], []>} : vector<8x8xf32>, vector<8x8xf32>, vector<8x8xf32> -> vector<8x8xf32>
    %cst_381 = arith.constant 0.353553385 : f32
    %840 = vector.broadcast %cst_381 : f32 to vector<8x8xf32>
    %841 = arith.mulf %839, %840 : vector<8x8xf32>
    %cst_382 = arith.constant dense<0xFF800000> : vector<8xf32>
    %842 = vector.multi_reduction <maximumf>, %841, %cst_382 [1] : vector<8x8xf32> to vector<8xf32>
    %843 = vector.shape_cast %842 : vector<8xf32> to vector<8x1xf32>
    %844 = vector.broadcast %843 : vector<8x1xf32> to vector<8x8xf32>
    %845 = arith.subf %841, %844 : vector<8x8xf32>
    %846 = math.exp %845 : vector<8x8xf32>
    %cst_383 = arith.constant dense<0.000000e+00> : vector<8xf32>
    %847 = vector.multi_reduction <add>, %846, %cst_383 [1] : vector<8x8xf32> to vector<8xf32>
    %848 = vector.shape_cast %847 : vector<8xf32> to vector<8x1xf32>
    %849 = tpu.reciprocal %848 {approx = true} : vector<8x1xf32> -> vector<8x1xf32>
    %850 = vector.broadcast %849 : vector<8x1xf32> to vector<8x8xf32>
    %851 = arith.mulf %846, %850 : vector<8x8xf32>
    %852 = vector.extract_strided_slice %801 {offsets = [0, 16], sizes = [8, 8], strides = [1, 1]} : vector<8x32xf32> to vector<8x8xf32>
    %cst_384 = arith.constant dense<0.000000e+00> : vector<8x8xf32>
    %853 = tpu.matmul %851, %852, %cst_384 {dimension_numbers = #tpu.dot_dimension_numbers<[1], [0], [0], [1], [0, 0, 1, 1], [], []>} : vector<8x8xf32>, vector<8x8xf32>, vector<8x8xf32> -> vector<8x8xf32>
    %854 = vector.extract_strided_slice %796 {offsets = [0, 24], sizes = [8, 8], strides = [1, 1]} : vector<8x32xf32> to vector<8x8xf32>
    %855 = vector.extract_strided_slice %802 {offsets = [24, 0], sizes = [8, 8], strides = [1, 1]} : vector<32x8xf32> to vector<8x8xf32>
    %cst_385 = arith.constant dense<0.000000e+00> : vector<8x8xf32>
    %856 = tpu.matmul %854, %855, %cst_385 {dimension_numbers = #tpu.dot_dimension_numbers<[1], [0], [0], [1], [0, 0, 1, 1], [], []>} : vector<8x8xf32>, vector<8x8xf32>, vector<8x8xf32> -> vector<8x8xf32>
    %cst_386 = arith.constant 0.353553385 : f32
    %857 = vector.broadcast %cst_386 : f32 to vector<8x8xf32>
    %858 = arith.mulf %856, %857 : vector<8x8xf32>
    %cst_387 = arith.constant dense<0xFF800000> : vector<8xf32>
    %859 = vector.multi_reduction <maximumf>, %858, %cst_387 [1] : vector<8x8xf32> to vector<8xf32>
    %860 = vector.shape_cast %859 : vector<8xf32> to vector<8x1xf32>
    %861 = vector.broadcast %860 : vector<8x1xf32> to vector<8x8xf32>
    %862 = arith.subf %858, %861 : vector<8x8xf32>
    %863 = math.exp %862 : vector<8x8xf32>
    %cst_388 = arith.constant dense<0.000000e+00> : vector<8xf32>
    %864 = vector.multi_reduction <add>, %863, %cst_388 [1] : vector<8x8xf32> to vector<8xf32>
    %865 = vector.shape_cast %864 : vector<8xf32> to vector<8x1xf32>
    %866 = tpu.reciprocal %865 {approx = true} : vector<8x1xf32> -> vector<8x1xf32>
    %867 = vector.broadcast %866 : vector<8x1xf32> to vector<8x8xf32>
    %868 = arith.mulf %863, %867 : vector<8x8xf32>
    %869 = vector.extract_strided_slice %801 {offsets = [0, 24], sizes = [8, 8], strides = [1, 1]} : vector<8x32xf32> to vector<8x8xf32>
    %cst_389 = arith.constant dense<0.000000e+00> : vector<8x8xf32>
    %870 = tpu.matmul %868, %869, %cst_389 {dimension_numbers = #tpu.dot_dimension_numbers<[1], [0], [0], [1], [0, 0, 1, 1], [], []>} : vector<8x8xf32>, vector<8x8xf32>, vector<8x8xf32> -> vector<8x8xf32>
    %871 = tpu.concatenate %819, %836, %853, %870 in 1 : vector<8x8xf32>, vector<8x8xf32>, vector<8x8xf32>, vector<8x8xf32> -> vector<8x32xf32>
    %cst_390 = arith.constant dense<0.000000e+00> : vector<8x32xf32>
    %872 = tpu.matmul %871, %787, %cst_390 {dimension_numbers = #tpu.dot_dimension_numbers<[1], [0], [0], [1], [0, 0, 1, 1], [], []>} : vector<8x32xf32>, vector<32x32xf32>, vector<8x32xf32> -> vector<8x32xf32>
    %873 = vector.broadcast %789 : vector<1x32xf32> to vector<8x32xf32>
    %874 = arith.addf %872, %873 : vector<8x32xf32>
    %875 = arith.addf %777, %874 : vector<8x32xf32>
    %cst_391 = arith.constant dense<0.000000e+00> : vector<8xf32>
    %876 = vector.multi_reduction <add>, %875, %cst_391 [1] : vector<8x32xf32> to vector<8xf32>
    %877 = vector.shape_cast %876 : vector<8xf32> to vector<8x1xf32>
    %cst_392 = arith.constant 3.200000e+01 : f32
    %878 = vector.broadcast %cst_392 : f32 to vector<8x1xf32>
    %879 = arith.divf %877, %878 : vector<8x1xf32>
    %880 = vector.broadcast %879 : vector<8x1xf32> to vector<8x32xf32>
    %881 = arith.subf %875, %880 : vector<8x32xf32>
    %882 = arith.mulf %881, %881 : vector<8x32xf32>
    %cst_393 = arith.constant dense<0.000000e+00> : vector<8xf32>
    %883 = vector.multi_reduction <add>, %882, %cst_393 [1] : vector<8x32xf32> to vector<8xf32>
    %884 = vector.shape_cast %883 : vector<8xf32> to vector<8x1xf32>
    %cst_394 = arith.constant 3.200000e+01 : f32
    %885 = vector.broadcast %cst_394 : f32 to vector<8x1xf32>
    %886 = arith.divf %884, %885 : vector<8x1xf32>
    %cst_395 = arith.constant 9.99999974E-6 : f32
    %887 = vector.broadcast %cst_395 : f32 to vector<8x1xf32>
    %888 = arith.addf %886, %887 : vector<8x1xf32>
    %889 = math.rsqrt %888 : vector<8x1xf32>
    %890 = vector.broadcast %889 : vector<8x1xf32> to vector<8x32xf32>
    %891 = arith.mulf %881, %890 : vector<8x32xf32>
    %892 = vector.broadcast %791 : vector<1x32xf32> to vector<8x32xf32>
    %893 = arith.mulf %891, %892 : vector<8x32xf32>
    %894 = vector.broadcast %793 : vector<1x32xf32> to vector<8x32xf32>
    %895 = arith.addf %893, %894 : vector<8x32xf32>
    %c1_396 = arith.constant 1 : index
    %c0_397 = arith.constant 0 : index
    %c0_398 = arith.constant 0 : index
    %896 = vector.load %arg33[%c1_396, %c0_397, %c0_398] : memref<2x32x64xf32, #tpu.memory_space<vmem>>, vector<1x32x64xf32>
    %897 = vector.shape_cast %896 : vector<1x32x64xf32> to vector<32x64xf32>
    %c1_399 = arith.constant 1 : index
    %c0_400 = arith.constant 0 : index
    %c0_401 = arith.constant 0 : index
    %898 = vector.load %arg34[%c1_399, %c0_400, %c0_401] : memref<2x1x64xf32, #tpu.memory_space<vmem>>, vector<1x1x64xf32>
    %899 = vector.shape_cast %898 : vector<1x1x64xf32> to vector<1x64xf32>
    %c1_402 = arith.constant 1 : index
    %c0_403 = arith.constant 0 : index
    %c0_404 = arith.constant 0 : index
    %900 = vector.load %arg35[%c1_402, %c0_403, %c0_404] : memref<2x64x32xf32, #tpu.memory_space<vmem>>, vector<1x64x32xf32>
    %901 = vector.shape_cast %900 : vector<1x64x32xf32> to vector<64x32xf32>
    %c1_405 = arith.constant 1 : index
    %c0_406 = arith.constant 0 : index
    %c0_407 = arith.constant 0 : index
    %902 = vector.load %arg36[%c1_405, %c0_406, %c0_407] : memref<2x1x32xf32, #tpu.memory_space<vmem>>, vector<1x1x32xf32>
    %903 = vector.shape_cast %902 : vector<1x1x32xf32> to vector<1x32xf32>
    %c1_408 = arith.constant 1 : index
    %c0_409 = arith.constant 0 : index
    %c0_410 = arith.constant 0 : index
    %904 = vector.load %arg37[%c1_408, %c0_409, %c0_410] : memref<2x1x32xf32, #tpu.memory_space<vmem>>, vector<1x1x32xf32>
    %905 = vector.shape_cast %904 : vector<1x1x32xf32> to vector<1x32xf32>
    %c1_411 = arith.constant 1 : index
    %c0_412 = arith.constant 0 : index
    %c0_413 = arith.constant 0 : index
    %906 = vector.load %arg38[%c1_411, %c0_412, %c0_413] : memref<2x1x32xf32, #tpu.memory_space<vmem>>, vector<1x1x32xf32>
    %907 = vector.shape_cast %906 : vector<1x1x32xf32> to vector<1x32xf32>
    %cst_414 = arith.constant dense<0.000000e+00> : vector<8x64xf32>
    %908 = tpu.matmul %895, %897, %cst_414 {dimension_numbers = #tpu.dot_dimension_numbers<[1], [0], [0], [1], [0, 0, 1, 1], [], []>} : vector<8x32xf32>, vector<32x64xf32>, vector<8x64xf32> -> vector<8x64xf32>
    %909 = vector.broadcast %899 : vector<1x64xf32> to vector<8x64xf32>
    %910 = arith.addf %908, %909 : vector<8x64xf32>
    %cst_415 = arith.constant 5.000000e-01 : f32
    %911 = vector.broadcast %cst_415 : f32 to vector<8x64xf32>
    %912 = arith.mulf %911, %910 : vector<8x64xf32>
    %cst_416 = arith.constant 0.707106769 : f32
    %913 = vector.broadcast %cst_416 : f32 to vector<8x64xf32>
    %914 = arith.mulf %910, %913 : vector<8x64xf32>
    %915 = math.erf %914 : vector<8x64xf32>
    %cst_417 = arith.constant 1.000000e+00 : f32
    %916 = vector.broadcast %cst_417 : f32 to vector<8x64xf32>
    %917 = arith.addf %916, %915 : vector<8x64xf32>
    %918 = arith.mulf %912, %917 : vector<8x64xf32>
    %cst_418 = arith.constant dense<0.000000e+00> : vector<8x32xf32>
    %919 = tpu.matmul %918, %901, %cst_418 {dimension_numbers = #tpu.dot_dimension_numbers<[1], [0], [0], [1], [0, 0, 1, 1], [], []>} : vector<8x64xf32>, vector<64x32xf32>, vector<8x32xf32> -> vector<8x32xf32>
    %920 = vector.broadcast %903 : vector<1x32xf32> to vector<8x32xf32>
    %921 = arith.addf %919, %920 : vector<8x32xf32>
    %922 = arith.addf %895, %921 : vector<8x32xf32>
    %cst_419 = arith.constant dense<0.000000e+00> : vector<8xf32>
    %923 = vector.multi_reduction <add>, %922, %cst_419 [1] : vector<8x32xf32> to vector<8xf32>
    %924 = vector.shape_cast %923 : vector<8xf32> to vector<8x1xf32>
    %cst_420 = arith.constant 3.200000e+01 : f32
    %925 = vector.broadcast %cst_420 : f32 to vector<8x1xf32>
    %926 = arith.divf %924, %925 : vector<8x1xf32>
    %927 = vector.broadcast %926 : vector<8x1xf32> to vector<8x32xf32>
    %928 = arith.subf %922, %927 : vector<8x32xf32>
    %929 = arith.mulf %928, %928 : vector<8x32xf32>
    %cst_421 = arith.constant dense<0.000000e+00> : vector<8xf32>
    %930 = vector.multi_reduction <add>, %929, %cst_421 [1] : vector<8x32xf32> to vector<8xf32>
    %931 = vector.shape_cast %930 : vector<8xf32> to vector<8x1xf32>
    %cst_422 = arith.constant 3.200000e+01 : f32
    %932 = vector.broadcast %cst_422 : f32 to vector<8x1xf32>
    %933 = arith.divf %931, %932 : vector<8x1xf32>
    %cst_423 = arith.constant 9.99999974E-6 : f32
    %934 = vector.broadcast %cst_423 : f32 to vector<8x1xf32>
    %935 = arith.addf %933, %934 : vector<8x1xf32>
    %936 = math.rsqrt %935 : vector<8x1xf32>
    %937 = vector.broadcast %936 : vector<8x1xf32> to vector<8x32xf32>
    %938 = arith.mulf %928, %937 : vector<8x32xf32>
    %939 = vector.broadcast %905 : vector<1x32xf32> to vector<8x32xf32>
    %940 = arith.mulf %938, %939 : vector<8x32xf32>
    %941 = vector.broadcast %907 : vector<1x32xf32> to vector<8x32xf32>
    %942 = arith.addf %940, %941 : vector<8x32xf32>
    %c0_424 = arith.constant 0 : index
    %c0_425 = arith.constant 0 : index
    %c0_426 = arith.constant 0 : index
    %943 = vector.load %arg40[%c0_424, %c0_425, %c0_426] : memref<1x8x32xf32, #tpu.memory_space<vmem>>, vector<1x8x32xf32>
    %944 = vector.shape_cast %943 : vector<1x8x32xf32> to vector<8x32xf32>
    %945 = vector.shape_cast %942 : vector<8x32xf32> to vector<1x8x32xf32>
    tpu.vector_store %arg40[%c0_424, %c0_425, %c0_426], %945 {strides = array<i32>} : memref<1x8x32xf32, #tpu.memory_space<vmem>>, vector<1x8x32xf32>,
    return
  }
  func.func @transform_0(%arg0: i32) -> (i32, i32, i32) {
    %c0_i32 = arith.constant 0 : i32
    %c0_i32_0 = arith.constant 0 : i32
    %c0_i32_1 = arith.constant 0 : i32
    return %arg0, %c0_i32, %c0_i32_0 : i32, i32, i32
  }
  func.func @transform_1(%arg0: i32) -> (i32, i32, i32) {
    %c0_i32 = arith.constant 0 : i32
    %c0_i32_0 = arith.constant 0 : i32
    %c0_i32_1 = arith.constant 0 : i32
    return %arg0, %c0_i32, %c0_i32_0 : i32, i32, i32
  }
  func.func @transform_2(%arg0: i32) -> (i32, i32) {
    %c0_i32 = arith.constant 0 : i32
    %c0_i32_0 = arith.constant 0 : i32
    %c0_i32_1 = arith.constant 0 : i32
    return %c0_i32, %c0_i32_0 : i32, i32
  }
  func.func @transform_3(%arg0: i32) -> (i32, i32) {
    %c0_i32 = arith.constant 0 : i32
    %c0_i32_0 = arith.constant 0 : i32
    %c0_i32_1 = arith.constant 0 : i32
    return %c0_i32, %c0_i32_0 : i32, i32
  }
  func.func @transform_4(%arg0: i32) -> (i32, i32) {
    %c0_i32 = arith.constant 0 : i32
    %c0_i32_0 = arith.constant 0 : i32
    %c0_i32_1 = arith.constant 0 : i32
    return %c0_i32, %c0_i32_0 : i32, i32
  }
  func.func @transform_5(%arg0: i32) -> (i32, i32) {
    %c0_i32 = arith.constant 0 : i32
    %c0_i32_0 = arith.constant 0 : i32
    %c0_i32_1 = arith.constant 0 : i32
    return %c0_i32, %c0_i32_0 : i32, i32
  }
  func.func @transform_6(%arg0: i32) -> (i32, i32, i32) {
    %c0_i32 = arith.constant 0 : i32
    %c0_i32_0 = arith.constant 0 : i32
    %c0_i32_1 = arith.constant 0 : i32
    %c0_i32_2 = arith.constant 0 : i32
    return %c0_i32, %c0_i32_0, %c0_i32_1 : i32, i32, i32
  }
  func.func @transform_7(%arg0: i32) -> (i32, i32, i32) {
    %c0_i32 = arith.constant 0 : i32
    %c0_i32_0 = arith.constant 0 : i32
    %c0_i32_1 = arith.constant 0 : i32
    %c0_i32_2 = arith.constant 0 : i32
    return %c0_i32, %c0_i32_0, %c0_i32_1 : i32, i32, i32
  }
  func.func @transform_8(%arg0: i32) -> (i32, i32, i32) {
    %c0_i32 = arith.constant 0 : i32
    %c0_i32_0 = arith.constant 0 : i32
    %c0_i32_1 = arith.constant 0 : i32
    %c0_i32_2 = arith.constant 0 : i32
    return %c0_i32, %c0_i32_0, %c0_i32_1 : i32, i32, i32
  }
  func.func @transform_9(%arg0: i32) -> (i32, i32, i32) {
    %c0_i32 = arith.constant 0 : i32
    %c0_i32_0 = arith.constant 0 : i32
    %c0_i32_1 = arith.constant 0 : i32
    %c0_i32_2 = arith.constant 0 : i32
    return %c0_i32, %c0_i32_0, %c0_i32_1 : i32, i32, i32
  }
  func.func @transform_10(%arg0: i32) -> (i32, i32, i32) {
    %c0_i32 = arith.constant 0 : i32
    %c0_i32_0 = arith.constant 0 : i32
    %c0_i32_1 = arith.constant 0 : i32
    %c0_i32_2 = arith.constant 0 : i32
    return %c0_i32, %c0_i32_0, %c0_i32_1 : i32, i32, i32
  }
  func.func @transform_11(%arg0: i32) -> (i32, i32, i32) {
    %c0_i32 = arith.constant 0 : i32
    %c0_i32_0 = arith.constant 0 : i32
    %c0_i32_1 = arith.constant 0 : i32
    %c0_i32_2 = arith.constant 0 : i32
    return %c0_i32, %c0_i32_0, %c0_i32_1 : i32, i32, i32
  }
  func.func @transform_12(%arg0: i32) -> (i32, i32, i32) {
    %c0_i32 = arith.constant 0 : i32
    %c0_i32_0 = arith.constant 0 : i32
    %c0_i32_1 = arith.constant 0 : i32
    %c0_i32_2 = arith.constant 0 : i32
    return %c0_i32, %c0_i32_0, %c0_i32_1 : i32, i32, i32
  }
  func.func @transform_13(%arg0: i32) -> (i32, i32, i32) {
    %c0_i32 = arith.constant 0 : i32
    %c0_i32_0 = arith.constant 0 : i32
    %c0_i32_1 = arith.constant 0 : i32
    %c0_i32_2 = arith.constant 0 : i32
    return %c0_i32, %c0_i32_0, %c0_i32_1 : i32, i32, i32
  }
  func.func @transform_14(%arg0: i32) -> (i32, i32, i32) {
    %c0_i32 = arith.constant 0 : i32
    %c0_i32_0 = arith.constant 0 : i32
    %c0_i32_1 = arith.constant 0 : i32
    %c0_i32_2 = arith.constant 0 : i32
    return %c0_i32, %c0_i32_0, %c0_i32_1 : i32, i32, i32
  }
  func.func @transform_15(%arg0: i32) -> (i32, i32, i32) {
    %c0_i32 = arith.constant 0 : i32
    %c0_i32_0 = arith.constant 0 : i32
    %c0_i32_1 = arith.constant 0 : i32
    %c0_i32_2 = arith.constant 0 : i32
    return %c0_i32, %c0_i32_0, %c0_i32_1 : i32, i32, i32
  }
  func.func @transform_16(%arg0: i32) -> (i32, i32, i32) {
    %c0_i32 = arith.constant 0 : i32
    %c0_i32_0 = arith.constant 0 : i32
    %c0_i32_1 = arith.constant 0 : i32
    %c0_i32_2 = arith.constant 0 : i32
    return %c0_i32, %c0_i32_0, %c0_i32_1 : i32, i32, i32
  }
  func.func @transform_17(%arg0: i32) -> (i32, i32, i32) {
    %c0_i32 = arith.constant 0 : i32
    %c0_i32_0 = arith.constant 0 : i32
    %c0_i32_1 = arith.constant 0 : i32
    %c0_i32_2 = arith.constant 0 : i32
    return %c0_i32, %c0_i32_0, %c0_i32_1 : i32, i32, i32
  }
  func.func @transform_18(%arg0: i32) -> (i32, i32, i32) {
    %c0_i32 = arith.constant 0 : i32
    %c0_i32_0 = arith.constant 0 : i32
    %c0_i32_1 = arith.constant 0 : i32
    %c0_i32_2 = arith.constant 0 : i32
    return %c0_i32, %c0_i32_0, %c0_i32_1 : i32, i32, i32
  }
  func.func @transform_19(%arg0: i32) -> (i32, i32, i32) {
    %c0_i32 = arith.constant 0 : i32
    %c0_i32_0 = arith.constant 0 : i32
    %c0_i32_1 = arith.constant 0 : i32
    %c0_i32_2 = arith.constant 0 : i32
    return %c0_i32, %c0_i32_0, %c0_i32_1 : i32, i32, i32
  }
  func.func @transform_20(%arg0: i32) -> (i32, i32, i32) {
    %c0_i32 = arith.constant 0 : i32
    %c0_i32_0 = arith.constant 0 : i32
    %c0_i32_1 = arith.constant 0 : i32
    %c0_i32_2 = arith.constant 0 : i32
    return %c0_i32, %c0_i32_0, %c0_i32_1 : i32, i32, i32
  }
  func.func @transform_21(%arg0: i32) -> (i32, i32, i32) {
    %c0_i32 = arith.constant 0 : i32
    %c0_i32_0 = arith.constant 0 : i32
    %c0_i32_1 = arith.constant 0 : i32
    %c0_i32_2 = arith.constant 0 : i32
    return %c0_i32, %c0_i32_0, %c0_i32_1 : i32, i32, i32
  }
  func.func @transform_22(%arg0: i32) -> (i32, i32, i32) {
    %c0_i32 = arith.constant 0 : i32
    %c0_i32_0 = arith.constant 0 : i32
    %c0_i32_1 = arith.constant 0 : i32
    %c0_i32_2 = arith.constant 0 : i32
    return %c0_i32, %c0_i32_0, %c0_i32_1 : i32, i32, i32
  }
  func.func @transform_23(%arg0: i32) -> (i32, i32, i32) {
    %c0_i32 = arith.constant 0 : i32
    %c0_i32_0 = arith.constant 0 : i32
    %c0_i32_1 = arith.constant 0 : i32
    %c0_i32_2 = arith.constant 0 : i32
    return %c0_i32, %c0_i32_0, %c0_i32_1 : i32, i32, i32
  }
  func.func @transform_24(%arg0: i32) -> (i32, i32, i32) {
    %c0_i32 = arith.constant 0 : i32
    %c0_i32_0 = arith.constant 0 : i32
    %c0_i32_1 = arith.constant 0 : i32
    %c0_i32_2 = arith.constant 0 : i32
    return %c0_i32, %c0_i32_0, %c0_i32_1 : i32, i32, i32
  }
  func.func @transform_25(%arg0: i32) -> (i32, i32, i32) {
    %c0_i32 = arith.constant 0 : i32
    %c0_i32_0 = arith.constant 0 : i32
    %c0_i32_1 = arith.constant 0 : i32
    %c0_i32_2 = arith.constant 0 : i32
    return %c0_i32, %c0_i32_0, %c0_i32_1 : i32, i32, i32
  }
  func.func @transform_26(%arg0: i32) -> (i32, i32, i32) {
    %c0_i32 = arith.constant 0 : i32
    %c0_i32_0 = arith.constant 0 : i32
    %c0_i32_1 = arith.constant 0 : i32
    %c0_i32_2 = arith.constant 0 : i32
    return %c0_i32, %c0_i32_0, %c0_i32_1 : i32, i32, i32
  }
  func.func @transform_27(%arg0: i32) -> (i32, i32, i32) {
    %c0_i32 = arith.constant 0 : i32
    %c0_i32_0 = arith.constant 0 : i32
    %c0_i32_1 = arith.constant 0 : i32
    %c0_i32_2 = arith.constant 0 : i32
    return %c0_i32, %c0_i32_0, %c0_i32_1 : i32, i32, i32
  }
  func.func @transform_28(%arg0: i32) -> (i32, i32, i32) {
    %c0_i32 = arith.constant 0 : i32
    %c0_i32_0 = arith.constant 0 : i32
    %c0_i32_1 = arith.constant 0 : i32
    %c0_i32_2 = arith.constant 0 : i32
    return %c0_i32, %c0_i32_0, %c0_i32_1 : i32, i32, i32
  }
  func.func @transform_29(%arg0: i32) -> (i32, i32, i32) {
    %c0_i32 = arith.constant 0 : i32
    %c0_i32_0 = arith.constant 0 : i32
    %c0_i32_1 = arith.constant 0 : i32
    %c0_i32_2 = arith.constant 0 : i32
    return %c0_i32, %c0_i32_0, %c0_i32_1 : i32, i32, i32
  }
  func.func @transform_30(%arg0: i32) -> (i32, i32, i32) {
    %c0_i32 = arith.constant 0 : i32
    %c0_i32_0 = arith.constant 0 : i32
    %c0_i32_1 = arith.constant 0 : i32
    %c0_i32_2 = arith.constant 0 : i32
    return %c0_i32, %c0_i32_0, %c0_i32_1 : i32, i32, i32
  }
  func.func @transform_31(%arg0: i32) -> (i32, i32, i32) {
    %c0_i32 = arith.constant 0 : i32
    %c0_i32_0 = arith.constant 0 : i32
    %c0_i32_1 = arith.constant 0 : i32
    %c0_i32_2 = arith.constant 0 : i32
    return %c0_i32, %c0_i32_0, %c0_i32_1 : i32, i32, i32
  }
  func.func @transform_32(%arg0: i32) -> (i32, i32, i32) {
    %c0_i32 = arith.constant 0 : i32
    %c0_i32_0 = arith.constant 0 : i32
    %c0_i32_1 = arith.constant 0 : i32
    %c0_i32_2 = arith.constant 0 : i32
    return %c0_i32, %c0_i32_0, %c0_i32_1 : i32, i32, i32
  }
  func.func @transform_33(%arg0: i32) -> (i32, i32, i32) {
    %c0_i32 = arith.constant 0 : i32
    %c0_i32_0 = arith.constant 0 : i32
    %c0_i32_1 = arith.constant 0 : i32
    %c0_i32_2 = arith.constant 0 : i32
    return %c0_i32, %c0_i32_0, %c0_i32_1 : i32, i32, i32
  }
  func.func @transform_34(%arg0: i32) -> (i32, i32, i32) {
    %c0_i32 = arith.constant 0 : i32
    %c0_i32_0 = arith.constant 0 : i32
    %c0_i32_1 = arith.constant 0 : i32
    %c0_i32_2 = arith.constant 0 : i32
    return %c0_i32, %c0_i32_0, %c0_i32_1 : i32, i32, i32
  }
  func.func @transform_35(%arg0: i32) -> (i32, i32, i32) {
    %c0_i32 = arith.constant 0 : i32
    %c0_i32_0 = arith.constant 0 : i32
    %c0_i32_1 = arith.constant 0 : i32
    %c0_i32_2 = arith.constant 0 : i32
    return %c0_i32, %c0_i32_0, %c0_i32_1 : i32, i32, i32
  }
  func.func @transform_36(%arg0: i32) -> (i32, i32, i32) {
    %c0_i32 = arith.constant 0 : i32
    %c0_i32_0 = arith.constant 0 : i32
    %c0_i32_1 = arith.constant 0 : i32
    %c0_i32_2 = arith.constant 0 : i32
    return %c0_i32, %c0_i32_0, %c0_i32_1 : i32, i32, i32
  }
  func.func @transform_37(%arg0: i32) -> (i32, i32, i32) {
    %c0_i32 = arith.constant 0 : i32
    %c0_i32_0 = arith.constant 0 : i32
    %c0_i32_1 = arith.constant 0 : i32
    %c0_i32_2 = arith.constant 0 : i32
    return %c0_i32, %c0_i32_0, %c0_i32_1 : i32, i32, i32
  }
  func.func @transform_38(%arg0: i32) -> (i32, i32, i32) {
    %c0_i32 = arith.constant 0 : i32
    %c0_i32_0 = arith.constant 0 : i32
    %c0_i32_1 = arith.constant 0 : i32
    return %arg0, %c0_i32, %c0_i32_0 : i32, i32, i32
  }
  func.func @transform_39(%arg0: i32) -> (i32, i32, i32) {
    %c0_i32 = arith.constant 0 : i32
    %c0_i32_0 = arith.constant 0 : i32
    %c0_i32_1 = arith.constant 0 : i32
    return %arg0, %c0_i32, %c0_i32_0 : i32, i32, i32
  }
}

</mosaic_0001>

<llo_original>
// kernel: bart_forward.1
$region0: #{bart_forward.1}
  #allocation0 [shape = 'u32[]', space=smem, size = 0x4, offset = 0x4, fixed_abs, tag = 'smem constant byte address 0x4 - core index']
  #allocation1 [shape = 'u32[144,128]{1,0:T(1,128)}', space=vmem, size = 0x12000, scoped, tag = 'internal scratch']
  %s0 = inlined_call_operand.smem [shape: u32[40], index: -1, kind: input, shape index: {}]
  %s1 = sld [smem:[%s0]]
  %s2 = scalar_lea.smem %s0, 1
  %s3 = sld [smem:[%s2]]
  %s4 = scalar_lea.smem %s0, 2
  %s5 = sld [smem:[%s4]]
  %s6 = scalar_lea.smem %s0, 3
  %s7 = sld [smem:[%s6]]
  %s8 = scalar_lea.smem %s0, 4
  %s9 = sld [smem:[%s8]]
  %s10 = scalar_lea.smem %s0, 5
  %s11 = sld [smem:[%s10]]
  %s12 = scalar_lea.smem %s0, 6
  %s13 = sld [smem:[%s12]]
  %s14 = scalar_lea.smem %s0, 7
  %s15 = sld [smem:[%s14]]
  %s16 = scalar_lea.smem %s0, 8
  %s17 = sld [smem:[%s16]]
  %s18 = scalar_lea.smem %s0, 9
  %s19 = sld [smem:[%s18]]
  %s20 = scalar_lea.smem %s0, 10
  %s21 = sld [smem:[%s20]]
  %s22 = scalar_lea.smem %s0, 11
  %s23 = sld [smem:[%s22]]
  %s24 = scalar_lea.smem %s0, 12
  %s25 = sld [smem:[%s24]]
  %s26 = scalar_lea.smem %s0, 13
  %s27 = sld [smem:[%s26]]
  %s28 = scalar_lea.smem %s0, 14
  %s29 = sld [smem:[%s28]]
  %s30 = scalar_lea.smem %s0, 15
  %s31 = sld [smem:[%s30]]
  %s32 = scalar_lea.smem %s0, 16
  %s33 = sld [smem:[%s32]]
  %s34 = scalar_lea.smem %s0, 17
  %s35 = sld [smem:[%s34]]
  %s36 = scalar_lea.smem %s0, 18
  %s37 = sld [smem:[%s36]]
  %s38 = scalar_lea.smem %s0, 19
  %s39 = sld [smem:[%s38]]
  %s40 = scalar_lea.smem %s0, 20
  %s41 = sld [smem:[%s40]]
  %s42 = scalar_lea.smem %s0, 21
  %s43 = sld [smem:[%s42]]
  %s44 = scalar_lea.smem %s0, 22
  %s45 = sld [smem:[%s44]]
  %s46 = scalar_lea.smem %s0, 23
  %s47 = sld [smem:[%s46]]
  %s48 = scalar_lea.smem %s0, 24
  %s49 = sld [smem:[%s48]]
  %s50 = scalar_lea.smem %s0, 25
  %s51 = sld [smem:[%s50]]
  %s52 = scalar_lea.smem %s0, 26
  %s53 = sld [smem:[%s52]]
  %s54 = scalar_lea.smem %s0, 27
  %s55 = sld [smem:[%s54]]
  %s56 = scalar_lea.smem %s0, 28
  %s57 = sld [smem:[%s56]]
  %s58 = scalar_lea.smem %s0, 29
  %s59 = sld [smem:[%s58]]
  %s60 = scalar_lea.smem %s0, 30
  %s61 = sld [smem:[%s60]]
  %s62 = scalar_lea.smem %s0, 31
  %s63 = sld [smem:[%s62]]
  %s64 = scalar_lea.smem %s0, 32
  %s65 = sld [smem:[%s64]]
  %s66 = scalar_lea.smem %s0, 33
  %s67 = sld [smem:[%s66]]
  %s68 = scalar_lea.smem %s0, 34
  %s69 = sld [smem:[%s68]]
  %s70 = scalar_lea.smem %s0, 35
  %s71 = sld [smem:[%s70]]
  %s72 = scalar_lea.smem %s0, 36
  %s73 = sld [smem:[%s72]]
  %s74 = scalar_lea.smem %s0, 37
  %s75 = sld [smem:[%s74]]
  %s76 = scalar_lea.smem %s0, 38
  %s77 = sld [smem:[%s76]]
  %s78 = scalar_lea.smem %s0, 39
  %s79 = sld [smem:[%s78]]
  %80 = xla_tuple %s77, %s79
  %s81 = sld [smem:[#allocation0]]
  $region213: #{bart_forward.1} parent=0
    _
  %s83 = ssub.s32 1, %s81
  %s84 = scalar_select 0, %s83, %s81
  $region1: #{bart_forward.1} parent=0
    #allocation2 [shape = 'u8[32768]{0}', space=vmem, size = 0x8000, scoped, tag = 'input window, operand 20, single buffered']
    #allocation3 [shape = 's32[2]{0}', space=sflag, size = 0x8, scoped, tag = 'scoped memory for bart_forward.1']
    #allocation4 [shape = 's32[2]{0}', space=sflag, size = 0x8, scoped, tag = 'scoped memory for bart_forward.1']
    #allocation5 [shape = 'u8[32768]{0}', space=vmem, size = 0x8000, scoped, tag = 'input window, operand 24, single buffered']
    #allocation6 [shape = 's32[1]{0}', space=sflag, size = 0x4, scoped, tag = 'scoped memory for bart_forward.1']
    #allocation7 [shape = 'u8[32768]{0}', space=vmem, size = 0x8000, scoped, tag = 'input window, operand 26, single buffered']
    #allocation8 [shape = 'u8[32768]{0}', space=vmem, size = 0x8000, scoped, tag = 'input window, operand 28, single buffered']
    #allocation9 [shape = 's32[1]{0}', space=sflag, size = 0x4, scoped, tag = 'scoped memory for bart_forward.1']
    #allocation10 [shape = 'u8[32768]{0}', space=vmem, size = 0x8000, scoped, tag = 'input window, operand 32, single buffered']
    #allocation11 [shape = 'u8[8192]{0}', space=vmem, size = 0x2000, scoped, tag = 'output window, operand 0']
    #allocation12 [shape = 'u8[8192]{0}', space=vmem, size = 0x2000, scoped, tag = 'output window, operand 1']
    #allocation13 [shape = 's32[2]{0}', space=sflag, size = 0x8, scoped, tag = 'scoped memory for bart_forward.1']
    %85 = vsyncpa [#allocation3], 0
    %86 = vsyncpa [#allocation6], 0
    %87 = vsyncpa [#allocation9], 0
    %88 = vsyncpa [#allocation4], 0
    %s89 = scalar_lea.sflag [#allocation4], 1
    %90 = vsyncpa %s89, 0
    %91 = vsyncpa [#allocation13], 0
    %s92 = scalar_lea.sflag [#allocation13], 1
    %93 = vsyncpa %s92, 0
    loop: start=0, step=1, limit=4
    $region2: #{bart_forward.1} parent=1 // loop_pre_header
      _
    $region3: #{bart_forward.1} parent=1 // loop_header
      %s95 = sphi 0, %s99
      %p96 = scmp.ge.s32.totalorder %s95, 4
      %s105 = sphi 0, %s107
      %s108 = sphi 0, %s105
      %s109 = sphi 0, %s108
      %s125 = sphi 0, %s109
      %s131 = sphi 0, %s133
      %s134 = sphi 0, %s131
      %s135 = sphi 0, %s134
      %s151 = sphi 0, %s135
      %s155 = sphi 0, %s155
      %s157 = sphi 0, %s155
      %s158 = sphi 0, %s157
      %s172 = sphi 0, %s158
      %s176 = sphi 0, %s176
      %s178 = sphi 0, %s176
      %s179 = sphi 0, %s178
      %s193 = sphi 0, %s179
      %s197 = sphi 0, %s197
      %s199 = sphi 0, %s197
      %s200 = sphi 0, %s199
      %s214 = sphi 0, %s200
      %s218 = sphi 0, %s218
      %s220 = sphi 0, %s218
      %s221 = sphi 0, %s220
      %s235 = sphi 0, %s221
      %s239 = sphi 0, %s239
      %s241 = sphi 0, %s239
      %s242 = sphi 0, %s241
      %s256 = sphi 0, %s242
      %s260 = sphi 0, %s260
      %s262 = sphi 0, %s260
      %s263 = sphi 0, %s262
      %s277 = sphi 0, %s263
      %s281 = sphi 0, %s281
      %s283 = sphi 0, %s281
      %s284 = sphi 0, %s283
      %s298 = sphi 0, %s284
      %s302 = sphi 0, %s302
      %s304 = sphi 0, %s302
      %s305 = sphi 0, %s304
      %s319 = sphi 0, %s305
      %s323 = sphi 0, %s323
      %s325 = sphi 0, %s323
      %s326 = sphi 0, %s325
      %s340 = sphi 0, %s326
      %s344 = sphi 0, %s344
      %s346 = sphi 0, %s344
      %s347 = sphi 0, %s346
      %s361 = sphi 0, %s347
      %s365 = sphi 0, %s365
      %s367 = sphi 0, %s365
      %s368 = sphi 0, %s367
      %s382 = sphi 0, %s368
      %s386 = sphi 0, %s386
      %s388 = sphi 0, %s386
      %s389 = sphi 0, %s388
      %s403 = sphi 0, %s389
      %s407 = sphi 0, %s407
      %s409 = sphi 0, %s407
      %s410 = sphi 0, %s409
      %s424 = sphi 0, %s410
      %s428 = sphi 0, %s428
      %s430 = sphi 0, %s428
      %s431 = sphi 0, %s430
      %s445 = sphi 0, %s431
      %s449 = sphi 0, %s449
      %s451 = sphi 0, %s449
      %s452 = sphi 0, %s451
      %s466 = sphi 0, %s452
      %s470 = sphi 0, %s470
      %s472 = sphi 0, %s470
      %s473 = sphi 0, %s472
      %s487 = sphi 0, %s473
      %s491 = sphi 0, %s491
      %s493 = sphi 0, %s491
      %s494 = sphi 0, %s493
      %s508 = sphi 0, %s494
      %s512 = sphi 0, %s512
      %s514 = sphi 0, %s512
      %s515 = sphi 0, %s514
      %s529 = sphi 0, %s515
      %s533 = sphi 0, %s533
      %s535 = sphi 0, %s533
      %s536 = sphi 0, %s535
      %s550 = sphi 0, %s536
      %s554 = sphi 0, %s554
      %s556 = sphi 0, %s554
      %s557 = sphi 0, %s556
      %s571 = sphi 0, %s557
      %s575 = sphi 0, %s575
      %s577 = sphi 0, %s575
      %s578 = sphi 0, %s577
      %s592 = sphi 0, %s578
      %s596 = sphi 0, %s596
      %s598 = sphi 0, %s596
      %s599 = sphi 0, %s598
      %s613 = sphi 0, %s599
      %s617 = sphi 0, %s617
      %s619 = sphi 0, %s617
      %s620 = sphi 0, %s619
      %s634 = sphi 0, %s620
      %s638 = sphi 0, %s638
      %s640 = sphi 0, %s638
      %s641 = sphi 0, %s640
      %s655 = sphi 0, %s641
      %s659 = sphi 0, %s659
      %s661 = sphi 0, %s659
      %s662 = sphi 0, %s661
      %s676 = sphi 0, %s662
      %s680 = sphi 0, %s680
      %s682 = sphi 0, %s680
      %s683 = sphi 0, %s682
      %s697 = sphi 0, %s683
      %s701 = sphi 0, %s701
      %s703 = sphi 0, %s701
      %s704 = sphi 0, %s703
      %s718 = sphi 0, %s704
      %s722 = sphi 0, %s722
      %s724 = sphi 0, %s722
      %s725 = sphi 0, %s724
      %s739 = sphi 0, %s725
      %s743 = sphi 0, %s743
      %s745 = sphi 0, %s743
      %s746 = sphi 0, %s745
      %s760 = sphi 0, %s746
      %s764 = sphi 0, %s764
      %s766 = sphi 0, %s764
      %s767 = sphi 0, %s766
      %s781 = sphi 0, %s767
      %s785 = sphi 0, %s785
      %s787 = sphi 0, %s785
      %s788 = sphi 0, %s787
      %s802 = sphi 0, %s788
      %s806 = sphi 0, %s806
      %s808 = sphi 0, %s806
      %s809 = sphi 0, %s808
      %s823 = sphi 0, %s809
      %s827 = sphi 0, %s827
      %s829 = sphi 0, %s827
      %s830 = sphi 0, %s829
      %s844 = sphi 0, %s830
      %s848 = sphi 0, %s848
      %s850 = sphi 0, %s848
      %s851 = sphi 0, %s850
      %s865 = sphi 0, %s851
      %s869 = sphi 0, %s869
      %s871 = sphi 0, %s869
      %s872 = sphi 0, %s871
      %s886 = sphi 0, %s872
      %s890 = sphi 0, %s890
      %s892 = sphi 0, %s890
      %s893 = sphi 0, %s892
      %s907 = sphi 0, %s893
      %s913 = sphi 0, %s915
      %s916 = sphi 0, %s913
      %s917 = sphi 0, %s916
      %s933 = sphi 0, %s917
      %s939 = sphi 0, %s941
      %s942 = sphi 0, %s939
      %s943 = sphi 0, %s942
      %s959 = sphi 0, %s943
    $region4: #{bart_forward.1} parent=1 // loop_header_branch
      %98 = sbr.rel (%p96) target = $region8
    $region5: #{bart_forward.1} parent=1 // loop_body
      %s100 = ssub.s32 %s95, 1
      %s101 = ssub.s32 %s95, 2
      %s102 = sadd.s32 %s95, 1
      %s103 = ssub.s32 %s95, %s102
      %p104 = scmp.eq.s32.totalorder %s103, 0
      %s106 = sadd.s32 %s105, 1
      %s107 = scalar_select %p104, %s105, %s106
      %p110 = pneg %p104
      %p111 = scmp.eq.s32.totalorder %s95, 1
      %p112 = por %p110, %p111
      %p113 = scmp.ne.s32.totalorder %s105, %s108
      %p114 = scmp.eq.s32.totalorder %s95, 0
      %p115 = por %p113, %p114
      %p116 = scmp.ne.s32.totalorder %s105, %s108
      %p117 = scmp.eq.s32.totalorder %s100, 1
      %p118 = por %p116, %p117
      %p119 = scmp.ne.s32.totalorder %s108, %s109
      %p120 = scmp.eq.s32.totalorder %s100, 0
      %p121 = por %p119, %p120
      %p122 = scmp.ne.s32.totalorder %s108, %s109
      %p123 = scmp.eq.s32.totalorder %s101, 1
      %p124 = por %p122, %p123
      %p126 = scmp.ne.s32.totalorder %s109, %s125
      %p127 = scmp.eq.s32.totalorder %s101, 0
      %p128 = por %p126, %p127
      %s129 = ssub.s32 %s95, %s102
      %p130 = scmp.eq.s32.totalorder %s129, 0
      %s132 = sadd.s32 %s131, 1
      %s133 = scalar_select %p130, %s131, %s132
      %p136 = pneg %p130
      %p137 = scmp.eq.s32.totalorder %s95, 1
      %p138 = por %p136, %p137
      %p139 = scmp.ne.s32.totalorder %s131, %s134
      %p140 = scmp.eq.s32.totalorder %s95, 0
      %p141 = por %p139, %p140
      %p142 = scmp.ne.s32.totalorder %s131, %s134
      %p143 = scmp.eq.s32.totalorder %s100, 1
      %p144 = por %p142, %p143
      %p145 = scmp.ne.s32.totalorder %s134, %s135
      %p146 = scmp.eq.s32.totalorder %s100, 0
      %p147 = por %p145, %p146
      %p148 = scmp.ne.s32.totalorder %s134, %s135
      %p149 = scmp.eq.s32.totalorder %s101, 1
      %p150 = por %p148, %p149
      %p152 = scmp.ne.s32.totalorder %s135, %s151
      %p153 = scmp.eq.s32.totalorder %s101, 0
      %p154 = por %p152, %p153
      %s156 = sadd.s32 %s155, 1
      %p159 = scmp.eq.s32.totalorder %s95, 1
      %p160 = scmp.ne.s32.totalorder %s155, %s157
      %p161 = scmp.eq.s32.totalorder %s95, 0
      %p162 = por %p160, %p161
      %p163 = scmp.ne.s32.totalorder %s155, %s157
      %p164 = scmp.eq.s32.totalorder %s100, 1
      %p165 = por %p163, %p164
      %p166 = scmp.ne.s32.totalorder %s157, %s158
      %p167 = scmp.eq.s32.totalorder %s100, 0
      %p168 = por %p166, %p167
      %p169 = scmp.ne.s32.totalorder %s157, %s158
      %p170 = scmp.eq.s32.totalorder %s101, 1
      %p171 = por %p169, %p170
      %p173 = scmp.ne.s32.totalorder %s158, %s172
      %p174 = scmp.eq.s32.totalorder %s101, 0
      %p175 = por %p173, %p174
      %s177 = sadd.s32 %s176, 1
      %p180 = scmp.eq.s32.totalorder %s95, 1
      %p181 = scmp.ne.s32.totalorder %s176, %s178
      %p182 = scmp.eq.s32.totalorder %s95, 0
      %p183 = por %p181, %p182
      %p184 = scmp.ne.s32.totalorder %s176, %s178
      %p185 = scmp.eq.s32.totalorder %s100, 1
      %p186 = por %p184, %p185
      %p187 = scmp.ne.s32.totalorder %s178, %s179
      %p188 = scmp.eq.s32.totalorder %s100, 0
      %p189 = por %p187, %p188
      %p190 = scmp.ne.s32.totalorder %s178, %s179
      %p191 = scmp.eq.s32.totalorder %s101, 1
      %p192 = por %p190, %p191
      %p194 = scmp.ne.s32.totalorder %s179, %s193
      %p195 = scmp.eq.s32.totalorder %s101, 0
      %p196 = por %p194, %p195
      %s198 = sadd.s32 %s197, 1
      %p201 = scmp.eq.s32.totalorder %s95, 1
      %p202 = scmp.ne.s32.totalorder %s197, %s199
      %p203 = scmp.eq.s32.totalorder %s95, 0
      %p204 = por %p202, %p203
      %p205 = scmp.ne.s32.totalorder %s197, %s199
      %p206 = scmp.eq.s32.totalorder %s100, 1
      %p207 = por %p205, %p206
      %p208 = scmp.ne.s32.totalorder %s199, %s200
      %p209 = scmp.eq.s32.totalorder %s100, 0
      %p210 = por %p208, %p209
      %p211 = scmp.ne.s32.totalorder %s199, %s200
      %p212 = scmp.eq.s32.totalorder %s101, 1
      %p213 = por %p211, %p212
      %p215 = scmp.ne.s32.totalorder %s200, %s214
      %p216 = scmp.eq.s32.totalorder %s101, 0
      %p217 = por %p215, %p216
      %s219 = sadd.s32 %s218, 1
      %p222 = scmp.eq.s32.totalorder %s95, 1
      %p223 = scmp.ne.s32.totalorder %s218, %s220
      %p224 = scmp.eq.s32.totalorder %s95, 0
      %p225 = por %p223, %p224
      %p226 = scmp.ne.s32.totalorder %s218, %s220
      %p227 = scmp.eq.s32.totalorder %s100, 1
      %p228 = por %p226, %p227
      %p229 = scmp.ne.s32.totalorder %s220, %s221
      %p230 = scmp.eq.s32.totalorder %s100, 0
      %p231 = por %p229, %p230
      %p232 = scmp.ne.s32.totalorder %s220, %s221
      %p233 = scmp.eq.s32.totalorder %s101, 1
      %p234 = por %p232, %p233
      %p236 = scmp.ne.s32.totalorder %s221, %s235
      %p237 = scmp.eq.s32.totalorder %s101, 0
      %p238 = por %p236, %p237
      %s240 = sadd.s32 %s239, 1
      %p243 = scmp.eq.s32.totalorder %s95, 1
      %p244 = scmp.ne.s32.totalorder %s239, %s241
      %p245 = scmp.eq.s32.totalorder %s95, 0
      %p246 = por %p244, %p245
      %p247 = scmp.ne.s32.totalorder %s239, %s241
      %p248 = scmp.eq.s32.totalorder %s100, 1
      %p249 = por %p247, %p248
      %p250 = scmp.ne.s32.totalorder %s241, %s242
      %p251 = scmp.eq.s32.totalorder %s100, 0
      %p252 = por %p250, %p251
      %p253 = scmp.ne.s32.totalorder %s241, %s242
      %p254 = scmp.eq.s32.totalorder %s101, 1
      %p255 = por %p253, %p254
      %p257 = scmp.ne.s32.totalorder %s242, %s256
      %p258 = scmp.eq.s32.totalorder %s101, 0
      %p259 = por %p257, %p258
      %s261 = sadd.s32 %s260, 1
      %p264 = scmp.eq.s32.totalorder %s95, 1
      %p265 = scmp.ne.s32.totalorder %s260, %s262
      %p266 = scmp.eq.s32.totalorder %s95, 0
      %p267 = por %p265, %p266
      %p268 = scmp.ne.s32.totalorder %s260, %s262
      %p269 = scmp.eq.s32.totalorder %s100, 1
      %p270 = por %p268, %p269
      %p271 = scmp.ne.s32.totalorder %s262, %s263
      %p272 = scmp.eq.s32.totalorder %s100, 0
      %p273 = por %p271, %p272
      %p274 = scmp.ne.s32.totalorder %s262, %s263
      %p275 = scmp.eq.s32.totalorder %s101, 1
      %p276 = por %p274, %p275
      %p278 = scmp.ne.s32.totalorder %s263, %s277
      %p279 = scmp.eq.s32.totalorder %s101, 0
      %p280 = por %p278, %p279
      %s282 = sadd.s32 %s281, 1
      %p285 = scmp.eq.s32.totalorder %s95, 1
      %p286 = scmp.ne.s32.totalorder %s281, %s283
      %p287 = scmp.eq.s32.totalorder %s95, 0
      %p288 = por %p286, %p287
      %p289 = scmp.ne.s32.totalorder %s281, %s283
      %p290 = scmp.eq.s32.totalorder %s100, 1
      %p291 = por %p289, %p290
      %p292 = scmp.ne.s32.totalorder %s283, %s284
      %p293 = scmp.eq.s32.totalorder %s100, 0
      %p294 = por %p292, %p293
      %p295 = scmp.ne.s32.totalorder %s283, %s284
      %p296 = scmp.eq.s32.totalorder %s101, 1
      %p297 = por %p295, %p296
      %p299 = scmp.ne.s32.totalorder %s284, %s298
      %p300 = scmp.eq.s32.totalorder %s101, 0
      %p301 = por %p299, %p300
      %s303 = sadd.s32 %s302, 1
      %p306 = scmp.eq.s32.totalorder %s95, 1
      %p307 = scmp.ne.s32.totalorder %s302, %s304
      %p308 = scmp.eq.s32.totalorder %s95, 0
      %p309 = por %p307, %p308
      %p310 = scmp.ne.s32.totalorder %s302, %s304
      %p311 = scmp.eq.s32.totalorder %s100, 1
      %p312 = por %p310, %p311
      %p313 = scmp.ne.s32.totalorder %s304, %s305
      %p314 = scmp.eq.s32.totalorder %s100, 0
      %p315 = por %p313, %p314
      %p316 = scmp.ne.s32.totalorder %s304, %s305
      %p317 = scmp.eq.s32.totalorder %s101, 1
      %p318 = por %p316, %p317
      %p320 = scmp.ne.s32.totalorder %s305, %s319
      %p321 = scmp.eq.s32.totalorder %s101, 0
      %p322 = por %p320, %p321
      %s324 = sadd.s32 %s323, 1
      %p327 = scmp.eq.s32.totalorder %s95, 1
      %p328 = scmp.ne.s32.totalorder %s323, %s325
      %p329 = scmp.eq.s32.totalorder %s95, 0
      %p330 = por %p328, %p329
      %p331 = scmp.ne.s32.totalorder %s323, %s325
      %p332 = scmp.eq.s32.totalorder %s100, 1
      %p333 = por %p331, %p332
      %p334 = scmp.ne.s32.totalorder %s325, %s326
      %p335 = scmp.eq.s32.totalorder %s100, 0
      %p336 = por %p334, %p335
      %p337 = scmp.ne.s32.totalorder %s325, %s326
      %p338 = scmp.eq.s32.totalorder %s101, 1
      %p339 = por %p337, %p338
      %p341 = scmp.ne.s32.totalorder %s326, %s340
      %p342 = scmp.eq.s32.totalorder %s101, 0
      %p343 = por %p341, %p342
      %s345 = sadd.s32 %s344, 1
      %p348 = scmp.eq.s32.totalorder %s95, 1
      %p349 = scmp.ne.s32.totalorder %s344, %s346
      %p350 = scmp.eq.s32.totalorder %s95, 0
      %p351 = por %p349, %p350
      %p352 = scmp.ne.s32.totalorder %s344, %s346
      %p353 = scmp.eq.s32.totalorder %s100, 1
      %p354 = por %p352, %p353
      %p355 = scmp.ne.s32.totalorder %s346, %s347
      %p356 = scmp.eq.s32.totalorder %s100, 0
      %p357 = por %p355, %p356
      %p358 = scmp.ne.s32.totalorder %s346, %s347
      %p359 = scmp.eq.s32.totalorder %s101, 1
      %p360 = por %p358, %p359
      %p362 = scmp.ne.s32.totalorder %s347, %s361
      %p363 = scmp.eq.s32.totalorder %s101, 0
      %p364 = por %p362, %p363
      %s366 = sadd.s32 %s365, 1
      %p369 = scmp.eq.s32.totalorder %s95, 1
      %p370 = scmp.ne.s32.totalorder %s365, %s367
      %p371 = scmp.eq.s32.totalorder %s95, 0
      %p372 = por %p370, %p371
      %p373 = scmp.ne.s32.totalorder %s365, %s367
      %p374 = scmp.eq.s32.totalorder %s100, 1
      %p375 = por %p373, %p374
      %p376 = scmp.ne.s32.totalorder %s367, %s368
      %p377 = scmp.eq.s32.totalorder %s100, 0
      %p378 = por %p376, %p377
      %p379 = scmp.ne.s32.totalorder %s367, %s368
      %p380 = scmp.eq.s32.totalorder %s101, 1
      %p381 = por %p379, %p380
      %p383 = scmp.ne.s32.totalorder %s368, %s382
      %p384 = scmp.eq.s32.totalorder %s101, 0
      %p385 = por %p383, %p384
      %s387 = sadd.s32 %s386, 1
      %p390 = scmp.eq.s32.totalorder %s95, 1
      %p391 = scmp.ne.s32.totalorder %s386, %s388
      %p392 = scmp.eq.s32.totalorder %s95, 0
      %p393 = por %p391, %p392
      %p394 = scmp.ne.s32.totalorder %s386, %s388
      %p395 = scmp.eq.s32.totalorder %s100, 1
      %p396 = por %p394, %p395
      %p397 = scmp.ne.s32.totalorder %s388, %s389
      %p398 = scmp.eq.s32.totalorder %s100, 0
      %p399 = por %p397, %p398
      %p400 = scmp.ne.s32.totalorder %s388, %s389
      %p401 = scmp.eq.s32.totalorder %s101, 1
      %p402 = por %p400, %p401
      %p404 = scmp.ne.s32.totalorder %s389, %s403
      %p405 = scmp.eq.s32.totalorder %s101, 0
      %p406 = por %p404, %p405
      %s408 = sadd.s32 %s407, 1
      %p411 = scmp.eq.s32.totalorder %s95, 1
      %p412 = scmp.ne.s32.totalorder %s407, %s409
      %p413 = scmp.eq.s32.totalorder %s95, 0
      %p414 = por %p412, %p413
      %p415 = scmp.ne.s32.totalorder %s407, %s409
      %p416 = scmp.eq.s32.totalorder %s100, 1
      %p417 = por %p415, %p416
      %p418 = scmp.ne.s32.totalorder %s409, %s410
      %p419 = scmp.eq.s32.totalorder %s100, 0
      %p420 = por %p418, %p419
      %p421 = scmp.ne.s32.totalorder %s409, %s410
      %p422 = scmp.eq.s32.totalorder %s101, 1
      %p423 = por %p421, %p422
      %p425 = scmp.ne.s32.totalorder %s410, %s424
      %p426 = scmp.eq.s32.totalorder %s101, 0
      %p427 = por %p425, %p426
      %s429 = sadd.s32 %s428, 1
      %p432 = scmp.eq.s32.totalorder %s95, 1
      %p433 = scmp.ne.s32.totalorder %s428, %s430
      %p434 = scmp.eq.s32.totalorder %s95, 0
      %p435 = por %p433, %p434
      %p436 = scmp.ne.s32.totalorder %s428, %s430
      %p437 = scmp.eq.s32.totalorder %s100, 1
      %p438 = por %p436, %p437
      %p439 = scmp.ne.s32.totalorder %s430, %s431
      %p440 = scmp.eq.s32.totalorder %s100, 0
      %p441 = por %p439, %p440
      %p442 = scmp.ne.s32.totalorder %s430, %s431
      %p443 = scmp.eq.s32.totalorder %s101, 1
      %p444 = por %p442, %p443
      %p446 = scmp.ne.s32.totalorder %s431, %s445
      %p447 = scmp.eq.s32.totalorder %s101, 0
      %p448 = por %p446, %p447
      %s450 = sadd.s32 %s449, 1
      %p453 = scmp.eq.s32.totalorder %s95, 1
      %p454 = scmp.ne.s32.totalorder %s449, %s451
      %p455 = scmp.eq.s32.totalorder %s95, 0
      %p456 = por %p454, %p455
      %p457 = scmp.ne.s32.totalorder %s449, %s451
      %p458 = scmp.eq.s32.totalorder %s100, 1
      %p459 = por %p457, %p458
      %p460 = scmp.ne.s32.totalorder %s451, %s452
      %p461 = scmp.eq.s32.totalorder %s100, 0
      %p462 = por %p460, %p461
      %p463 = scmp.ne.s32.totalorder %s451, %s452
      %p464 = scmp.eq.s32.totalorder %s101, 1
      %p465 = por %p463, %p464
      %p467 = scmp.ne.s32.totalorder %s452, %s466
      %p468 = scmp.eq.s32.totalorder %s101, 0
      %p469 = por %p467, %p468
      %s471 = sadd.s32 %s470, 1
      %p474 = scmp.eq.s32.totalorder %s95, 1
      %p475 = scmp.ne.s32.totalorder %s470, %s472
      %p476 = scmp.eq.s32.totalorder %s95, 0
      %p477 = por %p475, %p476
      %p478 = scmp.ne.s32.totalorder %s470, %s472
      %p479 = scmp.eq.s32.totalorder %s100, 1
      %p480 = por %p478, %p479
      %p481 = scmp.ne.s32.totalorder %s472, %s473
      %p482 = scmp.eq.s32.totalorder %s100, 0
      %p483 = por %p481, %p482
      %p484 = scmp.ne.s32.totalorder %s472, %s473
      %p485 = scmp.eq.s32.totalorder %s101, 1
      %p486 = por %p484, %p485
      %p488 = scmp.ne.s32.totalorder %s473, %s487
      %p489 = scmp.eq.s32.totalorder %s101, 0
      %p490 = por %p488, %p489
      %s492 = sadd.s32 %s491, 1
      %p495 = scmp.eq.s32.totalorder %s95, 1
      %p496 = scmp.ne.s32.totalorder %s491, %s493
      %p497 = scmp.eq.s32.totalorder %s95, 0
      %p498 = por %p496, %p497
      %p499 = scmp.ne.s32.totalorder %s491, %s493
      %p500 = scmp.eq.s32.totalorder %s100, 1
      %p501 = por %p499, %p500
      %p502 = scmp.ne.s32.totalorder %s493, %s494
      %p503 = scmp.eq.s32.totalorder %s100, 0
      %p504 = por %p502, %p503
      %p505 = scmp.ne.s32.totalorder %s493, %s494
      %p506 = scmp.eq.s32.totalorder %s101, 1
      %p507 = por %p505, %p506
      %p509 = scmp.ne.s32.totalorder %s494, %s508
      %p510 = scmp.eq.s32.totalorder %s101, 0
      %p511 = por %p509, %p510
      %s513 = sadd.s32 %s512, 1
      %p516 = scmp.eq.s32.totalorder %s95, 1
      %p517 = scmp.ne.s32.totalorder %s512, %s514
      %p518 = scmp.eq.s32.totalorder %s95, 0
      %p519 = por %p517, %p518
      %p520 = scmp.ne.s32.totalorder %s512, %s514
      %p521 = scmp.eq.s32.totalorder %s100, 1
      %p522 = por %p520, %p521
      %p523 = scmp.ne.s32.totalorder %s514, %s515
      %p524 = scmp.eq.s32.totalorder %s100, 0
      %p525 = por %p523, %p524
      %p526 = scmp.ne.s32.totalorder %s514, %s515
      %p527 = scmp.eq.s32.totalorder %s101, 1
      %p528 = por %p526, %p527
      %p530 = scmp.ne.s32.totalorder %s515, %s529
      %p531 = scmp.eq.s32.totalorder %s101, 0
      %p532 = por %p530, %p531
      %s534 = sadd.s32 %s533, 1
      %p537 = scmp.eq.s32.totalorder %s95, 1
      %p538 = scmp.ne.s32.totalorder %s533, %s535
      %p539 = scmp.eq.s32.totalorder %s95, 0
      %p540 = por %p538, %p539
      %p541 = scmp.ne.s32.totalorder %s533, %s535
      %p542 = scmp.eq.s32.totalorder %s100, 1
      %p543 = por %p541, %p542
      %p544 = scmp.ne.s32.totalorder %s535, %s536
      %p545 = scmp.eq.s32.totalorder %s100, 0
      %p546 = por %p544, %p545
      %p547 = scmp.ne.s32.totalorder %s535, %s536
      %p548 = scmp.eq.s32.totalorder %s101, 1
      %p549 = por %p547, %p548
      %p551 = scmp.ne.s32.totalorder %s536, %s550
      %p552 = scmp.eq.s32.totalorder %s101, 0
      %p553 = por %p551, %p552
      %s555 = sadd.s32 %s554, 1
      %p558 = scmp.eq.s32.totalorder %s95, 1
      %p559 = scmp.ne.s32.totalorder %s554, %s556
      %p560 = scmp.eq.s32.totalorder %s95, 0
      %p561 = por %p559, %p560
      %p562 = scmp.ne.s32.totalorder %s554, %s556
      %p563 = scmp.eq.s32.totalorder %s100, 1
      %p564 = por %p562, %p563
      %p565 = scmp.ne.s32.totalorder %s556, %s557
      %p566 = scmp.eq.s32.totalorder %s100, 0
      %p567 = por %p565, %p566
      %p568 = scmp.ne.s32.totalorder %s556, %s557
      %p569 = scmp.eq.s32.totalorder %s101, 1
      %p570 = por %p568, %p569
      %p572 = scmp.ne.s32.totalorder %s557, %s571
      %p573 = scmp.eq.s32.totalorder %s101, 0
      %p574 = por %p572, %p573
      %s576 = sadd.s32 %s575, 1
      %p579 = scmp.eq.s32.totalorder %s95, 1
      %p580 = scmp.ne.s32.totalorder %s575, %s577
      %p581 = scmp.eq.s32.totalorder %s95, 0
      %p582 = por %p580, %p581
      %p583 = scmp.ne.s32.totalorder %s575, %s577
      %p584 = scmp.eq.s32.totalorder %s100, 1
      %p585 = por %p583, %p584
      %p586 = scmp.ne.s32.totalorder %s577, %s578
      %p587 = scmp.eq.s32.totalorder %s100, 0
      %p588 = por %p586, %p587
      %p589 = scmp.ne.s32.totalorder %s577, %s578
      %p590 = scmp.eq.s32.totalorder %s101, 1
      %p591 = por %p589, %p590
      %p593 = scmp.ne.s32.totalorder %s578, %s592
      %p594 = scmp.eq.s32.totalorder %s101, 0
      %p595 = por %p593, %p594
      %s597 = sadd.s32 %s596, 1
      %p600 = scmp.eq.s32.totalorder %s95, 1
      %p601 = scmp.ne.s32.totalorder %s596, %s598
      %p602 = scmp.eq.s32.totalorder %s95, 0
      %p603 = por %p601, %p602
      %p604 = scmp.ne.s32.totalorder %s596, %s598
      %p605 = scmp.eq.s32.totalorder %s100, 1
      %p606 = por %p604, %p605
      %p607 = scmp.ne.s32.totalorder %s598, %s599
      %p608 = scmp.eq.s32.totalorder %s100, 0
      %p609 = por %p607, %p608
      %p610 = scmp.ne.s32.totalorder %s598, %s599
      %p611 = scmp.eq.s32.totalorder %s101, 1
      %p612 = por %p610, %p611
      %p614 = scmp.ne.s32.totalorder %s599, %s613
      %p615 = scmp.eq.s32.totalorder %s101, 0
      %p616 = por %p614, %p615
      %s618 = sadd.s32 %s617, 1
      %p621 = scmp.eq.s32.totalorder %s95, 1
      %p622 = scmp.ne.s32.totalorder %s617, %s619
      %p623 = scmp.eq.s32.totalorder %s95, 0
      %p624 = por %p622, %p623
      %p625 = scmp.ne.s32.totalorder %s617, %s619
      %p626 = scmp.eq.s32.totalorder %s100, 1
      %p627 = por %p625, %p626
      %p628 = scmp.ne.s32.totalorder %s619, %s620
      %p629 = scmp.eq.s32.totalorder %s100, 0
      %p630 = por %p628, %p629
      %p631 = scmp.ne.s32.totalorder %s619, %s620
      %p632 = scmp.eq.s32.totalorder %s101, 1
      %p633 = por %p631, %p632
      %p635 = scmp.ne.s32.totalorder %s620, %s634
      %p636 = scmp.eq.s32.totalorder %s101, 0
      %p637 = por %p635, %p636
      %s639 = sadd.s32 %s638, 1
      %p642 = scmp.eq.s32.totalorder %s95, 1
      %p643 = scmp.ne.s32.totalorder %s638, %s640
      %p644 = scmp.eq.s32.totalorder %s95, 0
      %p645 = por %p643, %p644
      %p646 = scmp.ne.s32.totalorder %s638, %s640
      %p647 = scmp.eq.s32.totalorder %s100, 1
      %p648 = por %p646, %p647
      %p649 = scmp.ne.s32.totalorder %s640, %s641
      %p650 = scmp.eq.s32.totalorder %s100, 0
      %p651 = por %p649, %p650
      %p652 = scmp.ne.s32.totalorder %s640, %s641
      %p653 = scmp.eq.s32.totalorder %s101, 1
      %p654 = por %p652, %p653
      %p656 = scmp.ne.s32.totalorder %s641, %s655
      %p657 = scmp.eq.s32.totalorder %s101, 0
      %p658 = por %p656, %p657
      %s660 = sadd.s32 %s659, 1
      %p663 = scmp.eq.s32.totalorder %s95, 1
      %p664 = scmp.ne.s32.totalorder %s659, %s661
      %p665 = scmp.eq.s32.totalorder %s95, 0
      %p666 = por %p664, %p665
      %p667 = scmp.ne.s32.totalorder %s659, %s661
      %p668 = scmp.eq.s32.totalorder %s100, 1
      %p669 = por %p667, %p668
      %p670 = scmp.ne.s32.totalorder %s661, %s662
      %p671 = scmp.eq.s32.totalorder %s100, 0
      %p672 = por %p670, %p671
      %p673 = scmp.ne.s32.totalorder %s661, %s662
      %p674 = scmp.eq.s32.totalorder %s101, 1
      %p675 = por %p673, %p674
      %p677 = scmp.ne.s32.totalorder %s662, %s676
      %p678 = scmp.eq.s32.totalorder %s101, 0
      %p679 = por %p677, %p678
      %s681 = sadd.s32 %s680, 1
      %p684 = scmp.eq.s32.totalorder %s95, 1
      %p685 = scmp.ne.s32.totalorder %s680, %s682
      %p686 = scmp.eq.s32.totalorder %s95, 0
      %p687 = por %p685, %p686
      %p688 = scmp.ne.s32.totalorder %s680, %s682
      %p689 = scmp.eq.s32.totalorder %s100, 1
      %p690 = por %p688, %p689
      %p691 = scmp.ne.s32.totalorder %s682, %s683
      %p692 = scmp.eq.s32.totalorder %s100, 0
      %p693 = por %p691, %p692
      %p694 = scmp.ne.s32.totalorder %s682, %s683
      %p695 = scmp.eq.s32.totalorder %s101, 1
      %p696 = por %p694, %p695
      %p698 = scmp.ne.s32.totalorder %s683, %s697
      %p699 = scmp.eq.s32.totalorder %s101, 0
      %p700 = por %p698, %p699
      %s702 = sadd.s32 %s701, 1
      %p705 = scmp.eq.s32.totalorder %s95, 1
      %p706 = scmp.ne.s32.totalorder %s701, %s703
      %p707 = scmp.eq.s32.totalorder %s95, 0
      %p708 = por %p706, %p707
      %p709 = scmp.ne.s32.totalorder %s701, %s703
      %p710 = scmp.eq.s32.totalorder %s100, 1
      %p711 = por %p709, %p710
      %p712 = scmp.ne.s32.totalorder %s703, %s704
      %p713 = scmp.eq.s32.totalorder %s100, 0
      %p714 = por %p712, %p713
      %p715 = scmp.ne.s32.totalorder %s703, %s704
      %p716 = scmp.eq.s32.totalorder %s101, 1
      %p717 = por %p715, %p716
      %p719 = scmp.ne.s32.totalorder %s704, %s718
      %p720 = scmp.eq.s32.totalorder %s101, 0
      %p721 = por %p719, %p720
      %s723 = sadd.s32 %s722, 1
      %p726 = scmp.eq.s32.totalorder %s95, 1
      %p727 = scmp.ne.s32.totalorder %s722, %s724
      %p728 = scmp.eq.s32.totalorder %s95, 0
      %p729 = por %p727, %p728
      %p730 = scmp.ne.s32.totalorder %s722, %s724
      %p731 = scmp.eq.s32.totalorder %s100, 1
      %p732 = por %p730, %p731
      %p733 = scmp.ne.s32.totalorder %s724, %s725
      %p734 = scmp.eq.s32.totalorder %s100, 0
      %p735 = por %p733, %p734
      %p736 = scmp.ne.s32.totalorder %s724, %s725
      %p737 = scmp.eq.s32.totalorder %s101, 1
      %p738 = por %p736, %p737
      %p740 = scmp.ne.s32.totalorder %s725, %s739
      %p741 = scmp.eq.s32.totalorder %s101, 0
      %p742 = por %p740, %p741
      %s744 = sadd.s32 %s743, 1
      %p747 = scmp.eq.s32.totalorder %s95, 1
      %p748 = scmp.ne.s32.totalorder %s743, %s745
      %p749 = scmp.eq.s32.totalorder %s95, 0
      %p750 = por %p748, %p749
      %p751 = scmp.ne.s32.totalorder %s743, %s745
      %p752 = scmp.eq.s32.totalorder %s100, 1
      %p753 = por %p751, %p752
      %p754 = scmp.ne.s32.totalorder %s745, %s746
      %p755 = scmp.eq.s32.totalorder %s100, 0
      %p756 = por %p754, %p755
      %p757 = scmp.ne.s32.totalorder %s745, %s746
      %p758 = scmp.eq.s32.totalorder %s101, 1
      %p759 = por %p757, %p758
      %p761 = scmp.ne.s32.totalorder %s746, %s760
      %p762 = scmp.eq.s32.totalorder %s101, 0
      %p763 = por %p761, %p762
      %s765 = sadd.s32 %s764, 1
      %p768 = scmp.eq.s32.totalorder %s95, 1
      %p769 = scmp.ne.s32.totalorder %s764, %s766
      %p770 = scmp.eq.s32.totalorder %s95, 0
      %p771 = por %p769, %p770
      %p772 = scmp.ne.s32.totalorder %s764, %s766
      %p773 = scmp.eq.s32.totalorder %s100, 1
      %p774 = por %p772, %p773
      %p775 = scmp.ne.s32.totalorder %s766, %s767
      %p776 = scmp.eq.s32.totalorder %s100, 0
      %p777 = por %p775, %p776
      %p778 = scmp.ne.s32.totalorder %s766, %s767
      %p779 = scmp.eq.s32.totalorder %s101, 1
      %p780 = por %p778, %p779
      %p782 = scmp.ne.s32.totalorder %s767, %s781
      %p783 = scmp.eq.s32.totalorder %s101, 0
      %p784 = por %p782, %p783
      %s786 = sadd.s32 %s785, 1
      %p789 = scmp.eq.s32.totalorder %s95, 1
      %p790 = scmp.ne.s32.totalorder %s785, %s787
      %p791 = scmp.eq.s32.totalorder %s95, 0
      %p792 = por %p790, %p791
      %p793 = scmp.ne.s32.totalorder %s785, %s787
      %p794 = scmp.eq.s32.totalorder %s100, 1
      %p795 = por %p793, %p794
      %p796 = scmp.ne.s32.totalorder %s787, %s788
      %p797 = scmp.eq.s32.totalorder %s100, 0
      %p798 = por %p796, %p797
      %p799 = scmp.ne.s32.totalorder %s787, %s788
      %p800 = scmp.eq.s32.totalorder %s101, 1
      %p801 = por %p799, %p800
      %p803 = scmp.ne.s32.totalorder %s788, %s802
      %p804 = scmp.eq.s32.totalorder %s101, 0
      %p805 = por %p803, %p804
      %s807 = sadd.s32 %s806, 1
      %p810 = scmp.eq.s32.totalorder %s95, 1
      %p811 = scmp.ne.s32.totalorder %s806, %s808
      %p812 = scmp.eq.s32.totalorder %s95, 0
      %p813 = por %p811, %p812
      %p814 = scmp.ne.s32.totalorder %s806, %s808
      %p815 = scmp.eq.s32.totalorder %s100, 1
      %p816 = por %p814, %p815
      %p817 = scmp.ne.s32.totalorder %s808, %s809
      %p818 = scmp.eq.s32.totalorder %s100, 0
      %p819 = por %p817, %p818
      %p820 = scmp.ne.s32.totalorder %s808, %s809
      %p821 = scmp.eq.s32.totalorder %s101, 1
      %p822 = por %p820, %p821
      %p824 = scmp.ne.s32.totalorder %s809, %s823
      %p825 = scmp.eq.s32.totalorder %s101, 0
      %p826 = por %p824, %p825
      %s828 = sadd.s32 %s827, 1
      %p831 = scmp.eq.s32.totalorder %s95, 1
      %p832 = scmp.ne.s32.totalorder %s827, %s829
      %p833 = scmp.eq.s32.totalorder %s95, 0
      %p834 = por %p832, %p833
      %p835 = scmp.ne.s32.totalorder %s827, %s829
      %p836 = scmp.eq.s32.totalorder %s100, 1
      %p837 = por %p835, %p836
      %p838 = scmp.ne.s32.totalorder %s829, %s830
      %p839 = scmp.eq.s32.totalorder %s100, 0
      %p840 = por %p838, %p839
      %p841 = scmp.ne.s32.totalorder %s829, %s830
      %p842 = scmp.eq.s32.totalorder %s101, 1
      %p843 = por %p841, %p842
      %p845 = scmp.ne.s32.totalorder %s830, %s844
      %p846 = scmp.eq.s32.totalorder %s101, 0
      %p847 = por %p845, %p846
      %s849 = sadd.s32 %s848, 1
      %p852 = scmp.eq.s32.totalorder %s95, 1
      %p853 = scmp.ne.s32.totalorder %s848, %s850
      %p854 = scmp.eq.s32.totalorder %s95, 0
      %p855 = por %p853, %p854
      %p856 = scmp.ne.s32.totalorder %s848, %s850
      %p857 = scmp.eq.s32.totalorder %s100, 1
      %p858 = por %p856, %p857
      %p859 = scmp.ne.s32.totalorder %s850, %s851
      %p860 = scmp.eq.s32.totalorder %s100, 0
      %p861 = por %p859, %p860
      %p862 = scmp.ne.s32.totalorder %s850, %s851
      %p863 = scmp.eq.s32.totalorder %s101, 1
      %p864 = por %p862, %p863
      %p866 = scmp.ne.s32.totalorder %s851, %s865
      %p867 = scmp.eq.s32.totalorder %s101, 0
      %p868 = por %p866, %p867
      %s870 = sadd.s32 %s869, 1
      %p873 = scmp.eq.s32.totalorder %s95, 1
      %p874 = scmp.ne.s32.totalorder %s869, %s871
      %p875 = scmp.eq.s32.totalorder %s95, 0
      %p876 = por %p874, %p875
      %p877 = scmp.ne.s32.totalorder %s869, %s871
      %p878 = scmp.eq.s32.totalorder %s100, 1
      %p879 = por %p877, %p878
      %p880 = scmp.ne.s32.totalorder %s871, %s872
      %p881 = scmp.eq.s32.totalorder %s100, 0
      %p882 = por %p880, %p881
      %p883 = scmp.ne.s32.totalorder %s871, %s872
      %p884 = scmp.eq.s32.totalorder %s101, 1
      %p885 = por %p883, %p884
      %p887 = scmp.ne.s32.totalorder %s872, %s886
      %p888 = scmp.eq.s32.totalorder %s101, 0
      %p889 = por %p887, %p888
      %s891 = sadd.s32 %s890, 1
      %p894 = scmp.eq.s32.totalorder %s95, 1
      %p895 = scmp.ne.s32.totalorder %s890, %s892
      %p896 = scmp.eq.s32.totalorder %s95, 0
      %p897 = por %p895, %p896
      %p898 = scmp.ne.s32.totalorder %s890, %s892
      %p899 = scmp.eq.s32.totalorder %s100, 1
      %p900 = por %p898, %p899
      %p901 = scmp.ne.s32.totalorder %s892, %s893
      %p902 = scmp.eq.s32.totalorder %s100, 0
      %p903 = por %p901, %p902
      %p904 = scmp.ne.s32.totalorder %s892, %s893
      %p905 = scmp.eq.s32.totalorder %s101, 1
      %p906 = por %p904, %p905
      %p908 = scmp.ne.s32.totalorder %s893, %s907
      %p909 = scmp.eq.s32.totalorder %s101, 0
      %p910 = por %p908, %p909
      %s911 = ssub.s32 %s95, %s102
      %p912 = scmp.eq.s32.totalorder %s911, 0
      %s914 = sadd.s32 %s913, 1
      %s915 = scalar_select %p912, %s913, %s914
      %p918 = pneg %p912
      %p919 = scmp.eq.s32.totalorder %s95, 1
      %p920 = por %p918, %p919
      %p921 = scmp.ne.s32.totalorder %s913, %s916
      %p922 = scmp.eq.s32.totalorder %s95, 0
      %p923 = por %p921, %p922
      %p924 = scmp.ne.s32.totalorder %s913, %s916
      %p925 = scmp.eq.s32.totalorder %s100, 1
      %p926 = por %p924, %p925
      %p927 = scmp.ne.s32.totalorder %s916, %s917
      %p928 = scmp.eq.s32.totalorder %s100, 0
      %p929 = por %p927, %p928
      %p930 = scmp.ne.s32.totalorder %s916, %s917
      %p931 = scmp.eq.s32.totalorder %s101, 1
      %p932 = por %p930, %p931
      %p934 = scmp.ne.s32.totalorder %s917, %s933
      %p935 = scmp.eq.s32.totalorder %s101, 0
      %p936 = por %p934, %p935
      %s937 = ssub.s32 %s95, %s102
      %p938 = scmp.eq.s32.totalorder %s937, 0
      %s940 = sadd.s32 %s939, 1
      %s941 = scalar_select %p938, %s939, %s940
      %p944 = pneg %p938
      %p945 = scmp.eq.s32.totalorder %s95, 1
      %p946 = por %p944, %p945
      %p947 = scmp.ne.s32.totalorder %s939, %s942
      %p948 = scmp.eq.s32.totalorder %s95, 0
      %p949 = por %p947, %p948
      %p950 = scmp.ne.s32.totalorder %s939, %s942
      %p951 = scmp.eq.s32.totalorder %s100, 1
      %p952 = por %p950, %p951
      %p953 = scmp.ne.s32.totalorder %s942, %s943
      %p954 = scmp.eq.s32.totalorder %s100, 0
      %p955 = por %p953, %p954
      %p956 = scmp.ne.s32.totalorder %s942, %s943
      %p957 = scmp.eq.s32.totalorder %s101, 1
      %p958 = por %p956, %p957
      %p960 = scmp.ne.s32.totalorder %s943, %s959
      %p961 = scmp.eq.s32.totalorder %s101, 0
      %p962 = por %p960, %p961
      %p963 = scmp.le.s32.totalorder 1, %s95
      %p964 = scmp.lt.s32.totalorder %s95, 3
      %p965 = pnand %p963, %p964
      %p966 = pneg %p965
      // Predicated region
      $region9: #{bart_forward.1} parent=5 // pred_check
        _
      $region10: #{bart_forward.1} parent=5 // pred_check_branch
        %968 = sbr.rel (%p965) target = $region12
      $region11: #{bart_forward.1} parent=5 // pred_region
        %s969 = ssub.s32 %s95, 1
        // Predicated region
        $region13: #{bart_forward.1} parent=11 // pred_check
          %p970 = pneg %p168
        $region14: #{bart_forward.1} parent=11 // pred_check_branch
          %972 = sbr.rel (%p970) target = $region16
        $region15: #{bart_forward.1} parent=11 // pred_region
          _
        $region16: #{bart_forward.1} parent=11 // pred_fallthru
          _
        // Predicated region
        $region17: #{bart_forward.1} parent=11 // pred_check
          %p973 = pneg %p189
        $region18: #{bart_forward.1} parent=11 // pred_check_branch
          %975 = sbr.rel (%p973) target = $region20
        $region19: #{bart_forward.1} parent=11 // pred_region
          _
        $region20: #{bart_forward.1} parent=11 // pred_fallthru
          _
        // Predicated region
        $region21: #{bart_forward.1} parent=11 // pred_check
          %p976 = pneg %p210
        $region22: #{bart_forward.1} parent=11 // pred_check_branch
          %978 = sbr.rel (%p976) target = $region24
        $region23: #{bart_forward.1} parent=11 // pred_region
          _
        $region24: #{bart_forward.1} parent=11 // pred_fallthru
          _
        // Predicated region
        $region25: #{bart_forward.1} parent=11 // pred_check
          %p979 = pneg %p231
        $region26: #{bart_forward.1} parent=11 // pred_check_branch
          %981 = sbr.rel (%p979) target = $region28
        $region27: #{bart_forward.1} parent=11 // pred_region
          _
        $region28: #{bart_forward.1} parent=11 // pred_fallthru
          _
        // Predicated region
        $region29: #{bart_forward.1} parent=11 // pred_check
          %p982 = pneg %p252
        $region30: #{bart_forward.1} parent=11 // pred_check_branch
          %984 = sbr.rel (%p982) target = $region32
        $region31: #{bart_forward.1} parent=11 // pred_region
          _
        $region32: #{bart_forward.1} parent=11 // pred_fallthru
          _
        // Predicated region
        $region33: #{bart_forward.1} parent=11 // pred_check
          %p985 = pneg %p273
        $region34: #{bart_forward.1} parent=11 // pred_check_branch
          %987 = sbr.rel (%p985) target = $region36
        $region35: #{bart_forward.1} parent=11 // pred_region
          _
        $region36: #{bart_forward.1} parent=11 // pred_fallthru
          _
        // Predicated region
        $region37: #{bart_forward.1} parent=11 // pred_check
          %p988 = pneg %p294
        $region38: #{bart_forward.1} parent=11 // pred_check_branch
          %990 = sbr.rel (%p988) target = $region40
        $region39: #{bart_forward.1} parent=11 // pred_region
          _
        $region40: #{bart_forward.1} parent=11 // pred_fallthru
          _
        // Predicated region
        $region41: #{bart_forward.1} parent=11 // pred_check
          %p991 = pneg %p315
        $region42: #{bart_forward.1} parent=11 // pred_check_branch
          %993 = sbr.rel (%p991) target = $region44
        $region43: #{bart_forward.1} parent=11 // pred_region
          _
        $region44: #{bart_forward.1} parent=11 // pred_fallthru
          _
        // Predicated region
        $region45: #{bart_forward.1} parent=11 // pred_check
          %p994 = pneg %p336
        $region46: #{bart_forward.1} parent=11 // pred_check_branch
          %996 = sbr.rel (%p994) target = $region48
        $region47: #{bart_forward.1} parent=11 // pred_region
          _
        $region48: #{bart_forward.1} parent=11 // pred_fallthru
          _
        // Predicated region
        $region49: #{bart_forward.1} parent=11 // pred_check
          %p997 = pneg %p357
        $region50: #{bart_forward.1} parent=11 // pred_check_branch
          %999 = sbr.rel (%p997) target = $region52
        $region51: #{bart_forward.1} parent=11 // pred_region
          _
        $region52: #{bart_forward.1} parent=11 // pred_fallthru
          _
        // Predicated region
        $region53: #{bart_forward.1} parent=11 // pred_check
          %p1000 = pneg %p378
        $region54: #{bart_forward.1} parent=11 // pred_check_branch
          %1002 = sbr.rel (%p1000) target = $region56
        $region55: #{bart_forward.1} parent=11 // pred_region
          _
        $region56: #{bart_forward.1} parent=11 // pred_fallthru
          _
        // Predicated region
        $region57: #{bart_forward.1} parent=11 // pred_check
          %p1003 = pneg %p399
        $region58: #{bart_forward.1} parent=11 // pred_check_branch
          %1005 = sbr.rel (%p1003) target = $region60
        $region59: #{bart_forward.1} parent=11 // pred_region
          _
        $region60: #{bart_forward.1} parent=11 // pred_fallthru
          _
        // Predicated region
        $region61: #{bart_forward.1} parent=11 // pred_check
          %p1006 = pneg %p420
        $region62: #{bart_forward.1} parent=11 // pred_check_branch
          %1008 = sbr.rel (%p1006) target = $region64
        $region63: #{bart_forward.1} parent=11 // pred_region
          _
        $region64: #{bart_forward.1} parent=11 // pred_fallthru
          _
        // Predicated region
        $region65: #{bart_forward.1} parent=11 // pred_check
          %p1009 = pneg %p441
        $region66: #{bart_forward.1} parent=11 // pred_check_branch
          %1011 = sbr.rel (%p1009) target = $region68
        $region67: #{bart_forward.1} parent=11 // pred_region
          _
        $region68: #{bart_forward.1} parent=11 // pred_fallthru
          _
        // Predicated region
        $region69: #{bart_forward.1} parent=11 // pred_check
          %p1012 = pneg %p462
        $region70: #{bart_forward.1} parent=11 // pred_check_branch
          %1014 = sbr.rel (%p1012) target = $region72
        $region71: #{bart_forward.1} parent=11 // pred_region
          _
        $region72: #{bart_forward.1} parent=11 // pred_fallthru
          _
        // Predicated region
        $region73: #{bart_forward.1} parent=11 // pred_check
          %p1015 = pneg %p483
        $region74: #{bart_forward.1} parent=11 // pred_check_branch
          %1017 = sbr.rel (%p1015) target = $region76
        $region75: #{bart_forward.1} parent=11 // pred_region
          _
        $region76: #{bart_forward.1} parent=11 // pred_fallthru
          _
        // Predicated region
        $region77: #{bart_forward.1} parent=11 // pred_check
          %p1018 = pneg %p504
        $region78: #{bart_forward.1} parent=11 // pred_check_branch
          %1020 = sbr.rel (%p1018) target = $region80
        $region79: #{bart_forward.1} parent=11 // pred_region
          _
        $region80: #{bart_forward.1} parent=11 // pred_fallthru
          _
        // Predicated region
        $region81: #{bart_forward.1} parent=11 // pred_check
          %p1021 = pneg %p525
        $region82: #{bart_forward.1} parent=11 // pred_check_branch
          %1023 = sbr.rel (%p1021) target = $region84
        $region83: #{bart_forward.1} parent=11 // pred_region
          _
        $region84: #{bart_forward.1} parent=11 // pred_fallthru
          _
        // Predicated region
        $region85: #{bart_forward.1} parent=11 // pred_check
          %p1024 = pneg %p546
        $region86: #{bart_forward.1} parent=11 // pred_check_branch
          %1026 = sbr.rel (%p1024) target = $region88
        $region87: #{bart_forward.1} parent=11 // pred_region
          %s1028 = ssub.s32 1024, 1024
          %1029 = vsyncadd [#allocation3], %s1028
          %s1030 = sshll.u32 [#allocation2], 4
          %s1031 = int_to_ptr.vmem [resolvable:$true] %s1030
          %1036 = dma.hbm_to_vmem [thread:$0]  %s41, 1024, %s1031, [#allocation3], 128, 128, 8
        $region88: #{bart_forward.1} parent=11 // pred_fallthru
          _
        // Predicated region
        $region89: #{bart_forward.1} parent=11 // pred_check
          %p1037 = pneg %p567
        $region90: #{bart_forward.1} parent=11 // pred_check_branch
          %1039 = sbr.rel (%p1037) target = $region92
        $region91: #{bart_forward.1} parent=11 // pred_region
          _
        $region92: #{bart_forward.1} parent=11 // pred_fallthru
          _
        // Predicated region
        $region93: #{bart_forward.1} parent=11 // pred_check
          %p1040 = pneg %p588
        $region94: #{bart_forward.1} parent=11 // pred_check_branch
          %1042 = sbr.rel (%p1040) target = $region96
        $region95: #{bart_forward.1} parent=11 // pred_region
          _
        $region96: #{bart_forward.1} parent=11 // pred_fallthru
          _
        // Predicated region
        $region97: #{bart_forward.1} parent=11 // pred_check
          %p1043 = pneg %p609
        $region98: #{bart_forward.1} parent=11 // pred_check_branch
          %1045 = sbr.rel (%p1043) target = $region100
        $region99: #{bart_forward.1} parent=11 // pred_region
          _
        $region100: #{bart_forward.1} parent=11 // pred_fallthru
          _
        // Predicated region
        $region101: #{bart_forward.1} parent=11 // pred_check
          %p1046 = pneg %p630
        $region102: #{bart_forward.1} parent=11 // pred_check_branch
          %1048 = sbr.rel (%p1046) target = $region104
        $region103: #{bart_forward.1} parent=11 // pred_region
          %s1050 = ssub.s32 1024, 1024
          %1051 = vsyncadd [#allocation6], %s1050
          %s1052 = sshll.u32 [#allocation5], 4
          %s1053 = int_to_ptr.vmem [resolvable:$true] %s1052
          %1058 = dma.hbm_to_vmem [thread:$0]  %s49, 1024, %s1053, [#allocation6], 128, 128, 8
        $region104: #{bart_forward.1} parent=11 // pred_fallthru
          _
        // Predicated region
        $region105: #{bart_forward.1} parent=11 // pred_check
          %p1059 = pneg %p651
        $region106: #{bart_forward.1} parent=11 // pred_check_branch
          %1061 = sbr.rel (%p1059) target = $region108
        $region107: #{bart_forward.1} parent=11 // pred_region
          _
        $region108: #{bart_forward.1} parent=11 // pred_fallthru
          _
        // Predicated region
        $region109: #{bart_forward.1} parent=11 // pred_check
          %p1062 = pneg %p672
        $region110: #{bart_forward.1} parent=11 // pred_check_branch
          %1064 = sbr.rel (%p1062) target = $region112
        $region111: #{bart_forward.1} parent=11 // pred_region
          %s1066 = ssub.s32 1024, 1024
          %1067 = vsyncadd [#allocation6], %s1066
          %s1068 = sshll.u32 [#allocation7], 4
          %s1069 = int_to_ptr.vmem [resolvable:$true] %s1068
          %1074 = dma.hbm_to_vmem [thread:$0]  %s53, 1024, %s1069, [#allocation6], 128, 128, 8
        $region112: #{bart_forward.1} parent=11 // pred_fallthru
          _
        // Predicated region
        $region113: #{bart_forward.1} parent=11 // pred_check
          %p1075 = pneg %p693
        $region114: #{bart_forward.1} parent=11 // pred_check_branch
          %1077 = sbr.rel (%p1075) target = $region116
        $region115: #{bart_forward.1} parent=11 // pred_region
          _
        $region116: #{bart_forward.1} parent=11 // pred_fallthru
          _
        // Predicated region
        $region117: #{bart_forward.1} parent=11 // pred_check
          %p1078 = pneg %p714
        $region118: #{bart_forward.1} parent=11 // pred_check_branch
          %1080 = sbr.rel (%p1078) target = $region120
        $region119: #{bart_forward.1} parent=11 // pred_region
          %s1082 = ssub.s32 1024, 1024
          %1083 = vsyncadd [#allocation9], %s1082
          %s1084 = sshll.u32 [#allocation8], 4
          %s1085 = int_to_ptr.vmem [resolvable:$true] %s1084
          %1090 = dma.hbm_to_vmem [thread:$0]  %s57, 1024, %s1085, [#allocation9], 128, 128, 8
        $region120: #{bart_forward.1} parent=11 // pred_fallthru
          _
        // Predicated region
        $region121: #{bart_forward.1} parent=11 // pred_check
          %p1091 = pneg %p735
        $region122: #{bart_forward.1} parent=11 // pred_check_branch
          %1093 = sbr.rel (%p1091) target = $region124
        $region123: #{bart_forward.1} parent=11 // pred_region
          _
        $region124: #{bart_forward.1} parent=11 // pred_fallthru
          _
        // Predicated region
        $region125: #{bart_forward.1} parent=11 // pred_check
          %p1094 = pneg %p756
        $region126: #{bart_forward.1} parent=11 // pred_check_branch
          %1096 = sbr.rel (%p1094) target = $region128
        $region127: #{bart_forward.1} parent=11 // pred_region
          _
        $region128: #{bart_forward.1} parent=11 // pred_fallthru
          _
        // Predicated region
        $region129: #{bart_forward.1} parent=11 // pred_check
          %p1097 = pneg %p777
        $region130: #{bart_forward.1} parent=11 // pred_check_branch
          %1099 = sbr.rel (%p1097) target = $region132
        $region131: #{bart_forward.1} parent=11 // pred_region
          _
        $region132: #{bart_forward.1} parent=11 // pred_fallthru
          _
        // Predicated region
        $region133: #{bart_forward.1} parent=11 // pred_check
          %p1100 = pneg %p798
        $region134: #{bart_forward.1} parent=11 // pred_check_branch
          %1102 = sbr.rel (%p1100) target = $region136
        $region135: #{bart_forward.1} parent=11 // pred_region
          %s1104 = ssub.s32 1024, 1024
          %1105 = vsyncadd [#allocation9], %s1104
          %s1106 = sshll.u32 [#allocation10], 4
          %s1107 = int_to_ptr.vmem [resolvable:$true] %s1106
          %1112 = dma.hbm_to_vmem [thread:$0]  %s65, 1024, %s1107, [#allocation9], 128, 128, 8
        $region136: #{bart_forward.1} parent=11 // pred_fallthru
          _
        // Predicated region
        $region137: #{bart_forward.1} parent=11 // pred_check
          %p1113 = pneg %p819
        $region138: #{bart_forward.1} parent=11 // pred_check_branch
          %1115 = sbr.rel (%p1113) target = $region140
        $region139: #{bart_forward.1} parent=11 // pred_region
          _
        $region140: #{bart_forward.1} parent=11 // pred_fallthru
          _
        // Predicated region
        $region141: #{bart_forward.1} parent=11 // pred_check
          %p1116 = pneg %p840
        $region142: #{bart_forward.1} parent=11 // pred_check_branch
          %1118 = sbr.rel (%p1116) target = $region144
        $region143: #{bart_forward.1} parent=11 // pred_region
          _
        $region144: #{bart_forward.1} parent=11 // pred_fallthru
          _
        // Predicated region
        $region145: #{bart_forward.1} parent=11 // pred_check
          %p1119 = pneg %p861
        $region146: #{bart_forward.1} parent=11 // pred_check_branch
          %1121 = sbr.rel (%p1119) target = $region148
        $region147: #{bart_forward.1} parent=11 // pred_region
          _
        $region148: #{bart_forward.1} parent=11 // pred_fallthru
          _
        // Predicated region
        $region149: #{bart_forward.1} parent=11 // pred_check
          %p1122 = pneg %p882
        $region150: #{bart_forward.1} parent=11 // pred_check_branch
          %1124 = sbr.rel (%p1122) target = $region152
        $region151: #{bart_forward.1} parent=11 // pred_region
          _
        $region152: #{bart_forward.1} parent=11 // pred_fallthru
          _
        // Predicated region
        $region153: #{bart_forward.1} parent=11 // pred_check
          %p1125 = pneg %p903
        $region154: #{bart_forward.1} parent=11 // pred_check_branch
          %1127 = sbr.rel (%p1125) target = $region156
        $region155: #{bart_forward.1} parent=11 // pred_region
          _
        $region156: #{bart_forward.1} parent=11 // pred_fallthru
          _
      $region12: #{bart_forward.1} parent=5 // pred_fallthru
        _
      %p1128 = scmp.lt.s32.totalorder %s95, 2
      // Predicated region
      $region157: #{bart_forward.1} parent=5 // pred_check
        %p1129 = pneg %p1128
      $region158: #{bart_forward.1} parent=5 // pred_check_branch
        %1131 = sbr.rel (%p1129) target = $region160
      $region159: #{bart_forward.1} parent=5 // pred_region
        // Predicated region
        $region161: #{bart_forward.1} parent=159 // pred_check
          %p1132 = pneg %p115
        $region162: #{bart_forward.1} parent=159 // pred_check_branch
          %1134 = sbr.rel (%p1132) target = $region164
        $region163: #{bart_forward.1} parent=159 // pred_region
          %p1135 = scmp.lt.s32.totalorder %s95, 1
          %s1136 = scalar_select %p1135, %s95, 1
          %s1137 = smul.addr %s1136, 8
          %s1138 = scalar_lea.vmem %s1, %s1137
        $region164: #{bart_forward.1} parent=159 // pred_fallthru
          _
        // Predicated region
        $region165: #{bart_forward.1} parent=159 // pred_check
          %p1139 = pneg %p141
        $region166: #{bart_forward.1} parent=159 // pred_check_branch
          %1141 = sbr.rel (%p1139) target = $region168
        $region167: #{bart_forward.1} parent=159 // pred_region
          %p1142 = scmp.lt.s32.totalorder %s95, 1
          %s1143 = scalar_select %p1142, %s95, 1
          %s1144 = smul.addr %s1143, 8
          %s1145 = scalar_lea.vmem %s3, %s1144
        $region168: #{bart_forward.1} parent=159 // pred_fallthru
          _
      $region160: #{bart_forward.1} parent=5 // pred_fallthru
        _
      %p1146 = scmp.le.s32.totalorder 1, %s95
      %p1147 = scmp.lt.s32.totalorder %s95, 3
      %p1148 = pnand %p1146, %p1147
      %p1149 = pneg %p1148
      // Predicated region
      $region169: #{bart_forward.1} parent=5 // pred_check
        _
      $region170: #{bart_forward.1} parent=5 // pred_check_branch
        %1151 = sbr.rel (%p1148) target = $region172
      $region171: #{bart_forward.1} parent=5 // pred_region
        %s1152 = ssub.s32 %s95, 1
        // Predicated region
        $region173: #{bart_forward.1} parent=171 // pred_check
          %p1153 = pneg %p546
        $region174: #{bart_forward.1} parent=171 // pred_check_branch
          %1155 = sbr.rel (%p1153) target = $region176
        $region175: #{bart_forward.1} parent=171 // pred_region
          %1156 = dma.done [#allocation3], 1024
        $region176: #{bart_forward.1} parent=171 // pred_fallthru
          _
        // Predicated region
        $region177: #{bart_forward.1} parent=171 // pred_check
          %p1157 = pneg %p630
        $region178: #{bart_forward.1} parent=171 // pred_check_branch
          %1159 = sbr.rel (%p1157) target = $region180
        $region179: #{bart_forward.1} parent=171 // pred_region
          %1160 = dma.done [#allocation6], 1024
        $region180: #{bart_forward.1} parent=171 // pred_fallthru
          _
        // Predicated region
        $region181: #{bart_forward.1} parent=171 // pred_check
          %p1161 = pneg %p672
        $region182: #{bart_forward.1} parent=171 // pred_check_branch
          %1163 = sbr.rel (%p1161) target = $region184
        $region183: #{bart_forward.1} parent=171 // pred_region
          %1164 = dma.done [#allocation6], 1024
        $region184: #{bart_forward.1} parent=171 // pred_fallthru
          _
        // Predicated region
        $region185: #{bart_forward.1} parent=171 // pred_check
          %p1165 = pneg %p714
        $region186: #{bart_forward.1} parent=171 // pred_check_branch
          %1167 = sbr.rel (%p1165) target = $region188
        $region187: #{bart_forward.1} parent=171 // pred_region
          %1168 = dma.done [#allocation9], 1024
        $region188: #{bart_forward.1} parent=171 // pred_fallthru
          _
        // Predicated region
        $region189: #{bart_forward.1} parent=171 // pred_check
          %p1169 = pneg %p798
        $region190: #{bart_forward.1} parent=171 // pred_check_branch
          %1171 = sbr.rel (%p1169) target = $region192
        $region191: #{bart_forward.1} parent=171 // pred_region
          %1172 = dma.done [#allocation9], 1024
        $region192: #{bart_forward.1} parent=171 // pred_fallthru
          _
        %p1173 = scmp.lt.s32.totalorder %s100, 1
        %s1174 = scalar_select %p1173, %s100, 1
        %s1175 = smul.addr %s1174, 8
        %s1176 = scalar_lea.vmem %s1, %s1175
        %p1177 = pneg %p121
        %p1178 = pneg %p118
        %p1179 = scmp.lt.s32.totalorder %s100, 1
        %s1180 = scalar_select %p1179, %s100, 1
        %s1181 = smul.addr %s1180, 8
        %s1182 = scalar_lea.vmem %s3, %s1181
        %p1183 = pneg %p147
        %p1184 = pneg %p144
        %p1185 = pneg %p168
        %p1186 = pneg %p165
        %p1187 = pneg %p189
        %p1188 = pneg %p186
        %p1189 = pneg %p210
        %p1190 = pneg %p207
        %p1191 = pneg %p231
        %p1192 = pneg %p228
        %p1193 = pneg %p252
        %p1194 = pneg %p249
        %p1195 = pneg %p273
        %p1196 = pneg %p270
        %p1197 = pneg %p294
        %p1198 = pneg %p291
        %p1199 = pneg %p315
        %p1200 = pneg %p312
        %p1201 = pneg %p336
        %p1202 = pneg %p333
        %p1203 = pneg %p357
        %p1204 = pneg %p354
        %p1205 = pneg %p378
        %p1206 = pneg %p375
        %p1207 = pneg %p399
        %p1208 = pneg %p396
        %p1209 = pneg %p420
        %p1210 = pneg %p417
        %p1211 = pneg %p441
        %p1212 = pneg %p438
        %p1213 = pneg %p462
        %p1214 = pneg %p459
        %p1215 = pneg %p483
        %p1216 = pneg %p480
        %p1217 = pneg %p504
        %p1218 = pneg %p501
        %p1219 = pneg %p525
        %p1220 = pneg %p522
        %p1221 = pneg %p546
        %p1222 = pneg %p543
        %p1223 = pneg %p567
        %p1224 = pneg %p564
        %p1225 = pneg %p588
        %p1226 = pneg %p585
        %p1227 = pneg %p609
        %p1228 = pneg %p606
        %p1229 = pneg %p630
        %p1230 = pneg %p627
        %p1231 = pneg %p651
        %p1232 = pneg %p648
        %p1233 = pneg %p672
        %p1234 = pneg %p669
        %p1235 = pneg %p693
        %p1236 = pneg %p690
        %p1237 = pneg %p714
        %p1238 = pneg %p711
        %p1239 = pneg %p735
        %p1240 = pneg %p732
        %p1241 = pneg %p756
        %p1242 = pneg %p753
        %p1243 = pneg %p777
        %p1244 = pneg %p774
        %p1245 = pneg %p798
        %p1246 = pneg %p795
        %p1247 = pneg %p819
        %p1248 = pneg %p816
        %p1249 = pneg %p840
        %p1250 = pneg %p837
        %p1251 = pneg %p861
        %p1252 = pneg %p858
        %p1253 = pneg %p882
        %p1254 = pneg %p879
        %p1255 = pneg %p903
        %p1256 = pneg %p900
        %p1257 = pneg %p929
        %p1258 = pneg %p926
        %s1259 = sand.u32 %s916, 1
        %s1260 = scalar_lea.sflag [#allocation4], %s1259
        %s1261 = sand.u32 %s916, 1
        %s1262 = smul.addr %s1261, 8
        %s1263 = scalar_lea.vmem [#allocation11], %s1262
        %p1264 = pneg %p955
        %p1265 = pneg %p952
        %s1266 = sand.u32 %s942, 1
        %s1267 = scalar_lea.sflag [#allocation13], %s1266
        %s1268 = sand.u32 %s942, 1
        %s1269 = smul.addr %s1268, 8
        %s1270 = scalar_lea.vmem [#allocation12], %s1269
        %p1271 = scmp.lt.s32.totalorder %s100, 1
        %s1272 = scalar_select %p1271, %s100, 1
        %s1273 = smul.addr %s1272, 8
        %s1274 = scalar_lea.vmem %s1, %s1273
        %p1275 = scmp.lt.s32.totalorder %s100, 1
        %s1276 = scalar_select %p1275, %s100, 1
        %s1277 = smul.addr %s1276, 8
        %s1278 = scalar_lea.vmem %s3, %s1277
        %v1279 = vld [vmem:[%s1274] sm:$0xff]
        %v1280 = vld [vmem:[%s5] sm:$0x1]
        %v1281 = vld [vmem:[%s7] sm:$0x1]
        %vm1282 = vcmask 261120
        %v1283 = vsel %vm1282, %v1279, 0.0
        %1284 = vadd.xlane.f32.xlu0 %v1283
        %v1285 = vpop.xlane.xlu0 %1284
        %v1286 = vrcp.pop 32.0
        %v1287 = vmul.f32 %v1285, %v1286
        %v1288 = vsub.f32 %v1279, %v1287
        %v1289 = vmul.f32 %v1288, %v1288
        %v1290 = vsel %vm1282, %v1289, 0.0
        %1291 = vadd.xlane.f32.xlu0 %v1290
        %v1292 = vpop.xlane.xlu0 %1291
        %v1293 = vmul.f32 %v1292, %v1286
        %v1294 = vadd.f32 %v1293, 1e-05
        %v1295 = vrsqrt.pop %v1294
        %v1296 = vmul.f32 %v1288, %v1295
        %v1298 = vlaneseq
        %v1299 = vshrl.u32 %v1298, 7
        %v1300 = vsub.s32 0, %v1299
        %v1301 = vrot.slane %v1280, %v1300
        %v1303 = vmul.f32 %v1296, %v1301
        %v1305 = vlaneseq
        %v1306 = vshrl.u32 %v1305, 7
        %v1307 = vsub.s32 0, %v1306
        %v1308 = vrot.slane %v1281, %v1307
        %v1310 = vadd.f32 %v1303, %v1308
        %v1311 = vld [vmem:[%s13] sm:$0xff]
        %v1312 = vld [vmem:[%s13 + $0x8] sm:$0xff]
        %v1313 = vld [vmem:[%s13 + $0x10] sm:$0xff]
        %v1314 = vld [vmem:[%s13 + $0x18] sm:$0xff]
        %v1315 = vld [vmem:[%s15] sm:$0x1]
        %v1316 = vld [vmem:[%s17] sm:$0xff]
        %v1317 = vld [vmem:[%s17 + $0x8] sm:$0xff]
        %v1318 = vld [vmem:[%s17 + $0x10] sm:$0xff]
        %v1319 = vld [vmem:[%s17 + $0x18] sm:$0xff]
        %v1320 = vld [vmem:[%s19] sm:$0x1]
        %v1321 = vld [vmem:[%s21] sm:$0x1]
        %v1322 = vld [vmem:[%s23] sm:$0x1]
        %v1324 = vlaneseq
        %v1325 = vshrl.u32 %v1324, 7
        %v1326 = vsub.s32 0, %v1325
        %v1327 = vrot.slane %v1315, %v1326
        %v1330 = vsel %vm1282, %v1310, 0
        %1332 = vmatprep.subr.mxu0 0.0
        %1333 = vmatpush1.msra.mxu0 %v1311
        %1334 = vmatprep.subr.mxu0 0.0
        %1335 = vmatpush1.msra.mxu0 %v1312
        %1336 = vmatprep.subr.mxu0 0.0
        %1337 = vmatpush1.msra.mxu0 %v1313
        %1338 = vmatprep.subr.mxu0 0.0
        %1339 = vmatpush1.msra.mxu0 %v1314
        %1340 = vmatprep.subr.mxu0 0.0
        %1341 = vmatpush1.msra.mxu0 0.0
        %1342 = vmatprep.subr.mxu0 0.0
        %1343 = vmatpush1.msra.mxu0 0.0
        %1344 = vmatprep.subr.mxu0 0.0
        %1345 = vmatpush1.msra.mxu0 0.0
        %1346 = vmatprep.subr.mxu0 0.0
        %1347 = vmatpush1.msra.mxu0 0.0
        %1348 = vmatprep.subr.mxu0 0.0
        %1349 = vmatpush1.msra.mxu0 0.0
        %1350 = vmatprep.subr.mxu0 0.0
        %1351 = vmatpush1.msra.mxu0 0.0
        %1352 = vmatprep.subr.mxu0 0.0
        %1353 = vmatpush1.msra.mxu0 0.0
        %1354 = vmatprep.subr.mxu0 0.0
        %1355 = vmatpush1.msra.mxu0 0.0
        %1356 = vmatprep.subr.mxu0 0.0
        %1357 = vmatpush1.msra.mxu0 0.0
        %1358 = vmatprep.subr.mxu0 0.0
        %1359 = vmatpush1.msra.mxu0 0.0
        %1360 = vmatprep.subr.mxu0 0.0
        %1361 = vmatpush1.msra.mxu0 0.0
        %1362 = vmatprep.subr.mxu0 0.0
        %1363 = vmatpush1.msra.mxu0 0.0
        %1364 = vmatprep.subr.mxu0 0.0
        %1365 = vmatpush1.msra.mxu0 0.0
        %1366 = vmatprep.subr.mxu0 0.0
        %1367 = vmatpush1.msra.mxu0 0.0
        %1368 = vmatprep.subr.mxu0 0.0
        %1369 = vmatpush1.msra.mxu0 0.0
        %1370 = vmatprep.subr.mxu0 0.0
        %1371 = vmatpush1.msra.mxu0 0.0
        %1372 = vmatprep.subr.mxu0 0.0
        %1373 = vmatpush1.msra.mxu0 0.0
        %1374 = vmatprep.subr.mxu0 0.0
        %1375 = vmatpush1.msra.mxu0 0.0
        %1376 = vmatprep.subr.mxu0 0.0
        %1377 = vmatpush1.msra.mxu0 0.0
        %1378 = vmatprep.subr.mxu0 0.0
        %1379 = vmatpush1.msra.mxu0 0.0
        %1380 = vmatprep.subr.mxu0 0.0
        %1381 = vmatpush1.msra.mxu0 0.0
        %1382 = vmatprep.subr.mxu0 0.0
        %1383 = vmatpush1.msra.mxu0 0.0
        %1384 = vmatprep.subr.mxu0 0.0
        %1385 = vmatpush1.msra.mxu0 0.0
        %1386 = vmatprep.subr.mxu0 0.0
        %1387 = vmatpush1.msra.mxu0 0.0
        %1388 = vmatprep.subr.mxu0 0.0
        %1389 = vmatpush1.msra.mxu0 0.0
        %1390 = vmatprep.subr.mxu0 0.0
        %1391 = vmatpush1.msra.mxu0 0.0
        %1392 = vmatprep.subr.mxu0 0.0
        %1393 = vmatpush1.msra.mxu0 0.0
        %1394 = vmatprep.subr.mxu0 0.0
        %1395 = vmatpush1.msra.mxu0 0.0
        %1396 = vmatprep.mubr.f32.mxu0 0.0
        %1397 = vmatmul.mubr.f32.gmra.mrb[0].mxu0 %v1330
        %v1398 = vpop.f32.mrb[0].mxu0
        %v1399 = vadd.f32 %v1327, %v1398
        %v1400 = vpop.f32.mrb[0].mxu0
        %1401 = vdwg.mxu0
        %1403 = vrot.lane.b32.xlu0 %v1399, 96
        %v1404 = vpop.permute.xlu0 %1403
        %vm1405 = vcmask 64512
        %v1406 = vsel %vm1405, %v1399, 0
        %v1408 = vsel %vm1405, %v1404, 0
        %1410 = vmatprep.subr.mxu0 0.0
        %1411 = vmatpush1.xpose.msra.mxu0 %v1408
        %1412 = vmatprep.subr.mxu0 0.0
        %1413 = vmatpush1.xpose.msra.mxu0 0.0
        %1414 = vmatprep.subr.mxu0 0.0
        %1415 = vmatpush1.xpose.msra.mxu0 0.0
        %1416 = vmatprep.subr.mxu0 0.0
        %1417 = vmatpush1.xpose.msra.mxu0 0.0
        %1418 = vmatprep.subr.mxu0 0.0
        %1419 = vmatpush1.xpose.msra.mxu0 0.0
        %1420 = vmatprep.subr.mxu0 0.0
        %1421 = vmatpush1.xpose.msra.mxu0 0.0
        %1422 = vmatprep.subr.mxu0 0.0
        %1423 = vmatpush1.xpose.msra.mxu0 0.0
        %1424 = vmatprep.subr.mxu0 0.0
        %1425 = vmatpush1.xpose.msra.mxu0 0.0
        %1426 = vmatprep.subr.mxu0 0.0
        %1427 = vmatpush1.xpose.msra.mxu0 0.0
        %1428 = vmatprep.subr.mxu0 0.0
        %1429 = vmatpush1.xpose.msra.mxu0 0.0
        %1430 = vmatprep.subr.mxu0 0.0
        %1431 = vmatpush1.xpose.msra.mxu0 0.0
        %1432 = vmatprep.subr.mxu0 0.0
        %1433 = vmatpush1.xpose.msra.mxu0 0.0
        %1434 = vmatprep.subr.mxu0 0.0
        %1435 = vmatpush1.xpose.msra.mxu0 0.0
        %1436 = vmatprep.subr.mxu0 0.0
        %1437 = vmatpush1.xpose.msra.mxu0 0.0
        %1438 = vmatprep.subr.mxu0 0.0
        %1439 = vmatpush1.xpose.msra.mxu0 0.0
        %1440 = vmatprep.subr.mxu0 0.0
        %1441 = vmatpush1.xpose.msra.mxu0 0.0
        %1442 = vmatprep.subr.mxu0 0.0
        %1443 = vmatpush1.xpose.msra.mxu0 0.0
        %1444 = vmatprep.subr.mxu0 0.0
        %1445 = vmatpush1.xpose.msra.mxu0 0.0
        %1446 = vmatprep.subr.mxu0 0.0
        %1447 = vmatpush1.xpose.msra.mxu0 0.0
        %1448 = vmatprep.subr.mxu0 0.0
        %1449 = vmatpush1.xpose.msra.mxu0 0.0
        %1450 = vmatprep.subr.mxu0 0.0
        %1451 = vmatpush1.xpose.msra.mxu0 0.0
        %1452 = vmatprep.subr.mxu0 0.0
        %1453 = vmatpush1.xpose.msra.mxu0 0.0
        %1454 = vmatprep.subr.mxu0 0.0
        %1455 = vmatpush1.xpose.msra.mxu0 0.0
        %1456 = vmatprep.subr.mxu0 0.0
        %1457 = vmatpush1.xpose.msra.mxu0 0.0
        %1458 = vmatprep.subr.mxu0 0.0
        %1459 = vmatpush1.xpose.msra.mxu0 0.0
        %1460 = vmatprep.subr.mxu0 0.0
        %1461 = vmatpush1.xpose.msra.mxu0 0.0
        %1462 = vmatprep.subr.mxu0 0.0
        %1463 = vmatpush1.xpose.msra.mxu0 0.0
        %1464 = vmatprep.subr.mxu0 0.0
        %1465 = vmatpush1.xpose.msra.mxu0 0.0
        %1466 = vmatprep.subr.mxu0 0.0
        %1467 = vmatpush1.xpose.msra.mxu0 0.0
        %1468 = vmatprep.subr.mxu0 0.0
        %1469 = vmatpush1.xpose.msra.mxu0 0.0
        %1470 = vmatprep.subr.mxu0 0.0
        %1471 = vmatpush1.xpose.msra.mxu0 0.0
        %1472 = vmatprep.subr.mxu0 0.0
        %1473 = vmatpush1.xpose.msra.mxu0 0.0
        %1474 = vmatprep.mubr.f32.mxu0 0.0
        %1475 = vmatmul.mubr.f32.gmra.mrb[0].mxu0 %v1406
        %v1476 = vpop.f32.mrb[0].mxu0
        %v1477 = vadd.f32 0.0, %v1476
        %v1478 = vpop.f32.mrb[0].mxu0
        %1479 = vdwg.mxu0
        %v1480 = vmul.f32 %v1477, 0.35355338
        %v1481 = vsel %vm1405, %v1480, -inf
        %1482 = vmax.xlane.f32.xlu0 %v1481
        %v1483 = vpop.xlane.xlu0 %1482
        %v1484 = vsub.f32 %v1480, %v1483
        %v1485 = vmul.f32 %v1484, 1.442695
        %v1486 = vpow.pop %v1485
        %v1487 = vsel %vm1405, %v1486, 0.0
        %1488 = vadd.xlane.f32.xlu0 %v1487
        %v1489 = vpop.xlane.xlu0 %1488
        %v1490 = vrcp.pop %v1489
        %v1491 = vmul.f32 %v1486, %v1490
        %1492 = vrot.lane.b32.xlu0 %v1399, 64
        %v1493 = vpop.permute.xlu0 %1492
        %v1496 = vsel %vm1405, %v1491, 0
        %1498 = vmatprep.subr.mxu0 0.0
        %1499 = vmatpush1.msra.mxu0 %v1493
        %1500 = vmatprep.subr.mxu0 0.0
        %1501 = vmatpush1.msra.mxu0 0.0
        %1502 = vmatprep.subr.mxu0 0.0
        %1503 = vmatpush1.msra.mxu0 0.0
        %1504 = vmatprep.subr.mxu0 0.0
        %1505 = vmatpush1.msra.mxu0 0.0
        %1506 = vmatprep.subr.mxu0 0.0
        %1507 = vmatpush1.msra.mxu0 0.0
        %1508 = vmatprep.subr.mxu0 0.0
        %1509 = vmatpush1.msra.mxu0 0.0
        %1510 = vmatprep.subr.mxu0 0.0
        %1511 = vmatpush1.msra.mxu0 0.0
        %1512 = vmatprep.subr.mxu0 0.0
        %1513 = vmatpush1.msra.mxu0 0.0
        %1514 = vmatprep.subr.mxu0 0.0
        %1515 = vmatpush1.msra.mxu0 0.0
        %1516 = vmatprep.subr.mxu0 0.0
        %1517 = vmatpush1.msra.mxu0 0.0
        %1518 = vmatprep.subr.mxu0 0.0
        %1519 = vmatpush1.msra.mxu0 0.0
        %1520 = vmatprep.subr.mxu0 0.0
        %1521 = vmatpush1.msra.mxu0 0.0
        %1522 = vmatprep.subr.mxu0 0.0
        %1523 = vmatpush1.msra.mxu0 0.0
        %1524 = vmatprep.subr.mxu0 0.0
        %1525 = vmatpush1.msra.mxu0 0.0
        %1526 = vmatprep.subr.mxu0 0.0
        %1527 = vmatpush1.msra.mxu0 0.0
        %1528 = vmatprep.subr.mxu0 0.0
        %1529 = vmatpush1.msra.mxu0 0.0
        %1530 = vmatprep.subr.mxu0 0.0
        %1531 = vmatpush1.msra.mxu0 0.0
        %1532 = vmatprep.subr.mxu0 0.0
        %1533 = vmatpush1.msra.mxu0 0.0
        %1534 = vmatprep.subr.mxu0 0.0
        %1535 = vmatpush1.msra.mxu0 0.0
        %1536 = vmatprep.subr.mxu0 0.0
        %1537 = vmatpush1.msra.mxu0 0.0
        %1538 = vmatprep.subr.mxu0 0.0
        %1539 = vmatpush1.msra.mxu0 0.0
        %1540 = vmatprep.subr.mxu0 0.0
        %1541 = vmatpush1.msra.mxu0 0.0
        %1542 = vmatprep.subr.mxu0 0.0
        %1543 = vmatpush1.msra.mxu0 0.0
        %1544 = vmatprep.subr.mxu0 0.0
        %1545 = vmatpush1.msra.mxu0 0.0
        %1546 = vmatprep.subr.mxu0 0.0
        %1547 = vmatpush1.msra.mxu0 0.0
        %1548 = vmatprep.subr.mxu0 0.0
        %1549 = vmatpush1.msra.mxu0 0.0
        %1550 = vmatprep.subr.mxu0 0.0
        %1551 = vmatpush1.msra.mxu0 0.0
        %1552 = vmatprep.subr.mxu0 0.0
        %1553 = vmatpush1.msra.mxu0 0.0
        %1554 = vmatprep.subr.mxu0 0.0
        %1555 = vmatpush1.msra.mxu0 0.0
        %1556 = vmatprep.subr.mxu0 0.0
        %1557 = vmatpush1.msra.mxu0 0.0
        %1558 = vmatprep.subr.mxu0 0.0
        %1559 = vmatpush1.msra.mxu0 0.0
        %1560 = vmatprep.subr.mxu0 0.0
        %1561 = vmatpush1.msra.mxu0 0.0
        %1562 = vmatprep.mubr.f32.mxu0 0.0
        %1563 = vmatmul.mubr.f32.gmra.mrb[0].mxu0 %v1496
        %v1564 = vpop.f32.mrb[0].mxu0
        %v1565 = vadd.f32 0.0, %v1564
        %v1566 = vpop.f32.mrb[0].mxu0
        %1567 = vdwg.mxu0
        %1568 = vrot.lane.b32.xlu0 %v1399, 120
        %v1569 = vpop.permute.xlu0 %1568
        %1570 = vrot.lane.b32.xlu0 %v1399, 88
        %v1571 = vpop.permute.xlu0 %1570
        %v1572 = vsel %vm1405, %v1569, 0
        %v1574 = vsel %vm1405, %v1571, 0
        %1576 = vmatprep.subr.mxu0 0.0
        %1577 = vmatpush1.xpose.msra.mxu0 %v1574
        %1578 = vmatprep.subr.mxu0 0.0
        %1579 = vmatpush1.xpose.msra.mxu0 0.0
        %1580 = vmatprep.subr.mxu0 0.0
        %1581 = vmatpush1.xpose.msra.mxu0 0.0
        %1582 = vmatprep.subr.mxu0 0.0
        %1583 = vmatpush1.xpose.msra.mxu0 0.0
        %1584 = vmatprep.subr.mxu0 0.0
        %1585 = vmatpush1.xpose.msra.mxu0 0.0
        %1586 = vmatprep.subr.mxu0 0.0
        %1587 = vmatpush1.xpose.msra.mxu0 0.0
        %1588 = vmatprep.subr.mxu0 0.0
        %1589 = vmatpush1.xpose.msra.mxu0 0.0
        %1590 = vmatprep.subr.mxu0 0.0
        %1591 = vmatpush1.xpose.msra.mxu0 0.0
        %1592 = vmatprep.subr.mxu0 0.0
        %1593 = vmatpush1.xpose.msra.mxu0 0.0
        %1594 = vmatprep.subr.mxu0 0.0
        %1595 = vmatpush1.xpose.msra.mxu0 0.0
        %1596 = vmatprep.subr.mxu0 0.0
        %1597 = vmatpush1.xpose.msra.mxu0 0.0
        %1598 = vmatprep.subr.mxu0 0.0
        %1599 = vmatpush1.xpose.msra.mxu0 0.0
        %1600 = vmatprep.subr.mxu0 0.0
        %1601 = vmatpush1.xpose.msra.mxu0 0.0
        %1602 = vmatprep.subr.mxu0 0.0
        %1603 = vmatpush1.xpose.msra.mxu0 0.0
        %1604 = vmatprep.subr.mxu0 0.0
        %1605 = vmatpush1.xpose.msra.mxu0 0.0
        %1606 = vmatprep.subr.mxu0 0.0
        %1607 = vmatpush1.xpose.msra.mxu0 0.0
        %1608 = vmatprep.subr.mxu0 0.0
        %1609 = vmatpush1.xpose.msra.mxu0 0.0
        %1610 = vmatprep.subr.mxu0 0.0
        %1611 = vmatpush1.xpose.msra.mxu0 0.0
        %1612 = vmatprep.subr.mxu0 0.0
        %1613 = vmatpush1.xpose.msra.mxu0 0.0
        %1614 = vmatprep.subr.mxu0 0.0
        %1615 = vmatpush1.xpose.msra.mxu0 0.0
        %1616 = vmatprep.subr.mxu0 0.0
        %1617 = vmatpush1.xpose.msra.mxu0 0.0
        %1618 = vmatprep.subr.mxu0 0.0
        %1619 = vmatpush1.xpose.msra.mxu0 0.0
        %1620 = vmatprep.subr.mxu0 0.0
        %1621 = vmatpush1.xpose.msra.mxu0 0.0
        %1622 = vmatprep.subr.mxu0 0.0
        %1623 = vmatpush1.xpose.msra.mxu0 0.0
        %1624 = vmatprep.subr.mxu0 0.0
        %1625 = vmatpush1.xpose.msra.mxu0 0.0
        %1626 = vmatprep.subr.mxu0 0.0
        %1627 = vmatpush1.xpose.msra.mxu0 0.0
        %1628 = vmatprep.subr.mxu0 0.0
        %1629 = vmatpush1.xpose.msra.mxu0 0.0
        %1630 = vmatprep.subr.mxu0 0.0
        %1631 = vmatpush1.xpose.msra.mxu0 0.0
        %1632 = vmatprep.subr.mxu0 0.0
        %1633 = vmatpush1.xpose.msra.mxu0 0.0
        %1634 = vmatprep.subr.mxu0 0.0
        %1635 = vmatpush1.xpose.msra.mxu0 0.0
        %1636 = vmatprep.subr.mxu0 0.0
        %1637 = vmatpush1.xpose.msra.mxu0 0.0
        %1638 = vmatprep.subr.mxu0 0.0
        %1639 = vmatpush1.xpose.msra.mxu0 0.0
        %1640 = vmatprep.mubr.f32.mxu0 0.0
        %1641 = vmatmul.mubr.f32.gmra.mrb[0].mxu0 %v1572
        %v1642 = vpop.f32.mrb[0].mxu0
        %v1643 = vadd.f32 0.0, %v1642
        %v1644 = vpop.f32.mrb[0].mxu0
        %1645 = vdwg.mxu0
        %v1646 = vmul.f32 %v1643, 0.35355338
        %v1647 = vsel %vm1405, %v1646, -inf
        %1648 = vmax.xlane.f32.xlu0 %v1647
        %v1649 = vpop.xlane.xlu0 %1648
        %v1650 = vsub.f32 %v1646, %v1649
        %v1651 = vmul.f32 %v1650, 1.442695
        %v1652 = vpow.pop %v1651
        %v1653 = vsel %vm1405, %v1652, 0.0
        %1654 = vadd.xlane.f32.xlu0 %v1653
        %v1655 = vpop.xlane.xlu0 %1654
        %v1656 = vrcp.pop %v1655
        %v1657 = vmul.f32 %v1652, %v1656
        %1658 = vrot.lane.b32.xlu0 %v1399, 56
        %v1659 = vpop.permute.xlu0 %1658
        %v1662 = vsel %vm1405, %v1657, 0
        %1664 = vmatprep.subr.mxu0 0.0
        %1665 = vmatpush1.msra.mxu0 %v1659
        %1666 = vmatprep.subr.mxu0 0.0
        %1667 = vmatpush1.msra.mxu0 0.0
        %1668 = vmatprep.subr.mxu0 0.0
        %1669 = vmatpush1.msra.mxu0 0.0
        %1670 = vmatprep.subr.mxu0 0.0
        %1671 = vmatpush1.msra.mxu0 0.0
        %1672 = vmatprep.subr.mxu0 0.0
        %1673 = vmatpush1.msra.mxu0 0.0
        %1674 = vmatprep.subr.mxu0 0.0
        %1675 = vmatpush1.msra.mxu0 0.0
        %1676 = vmatprep.subr.mxu0 0.0
        %1677 = vmatpush1.msra.mxu0 0.0
        %1678 = vmatprep.subr.mxu0 0.0
        %1679 = vmatpush1.msra.mxu0 0.0
        %1680 = vmatprep.subr.mxu0 0.0
        %1681 = vmatpush1.msra.mxu0 0.0
        %1682 = vmatprep.subr.mxu0 0.0
        %1683 = vmatpush1.msra.mxu0 0.0
        %1684 = vmatprep.subr.mxu0 0.0
        %1685 = vmatpush1.msra.mxu0 0.0
        %1686 = vmatprep.subr.mxu0 0.0
        %1687 = vmatpush1.msra.mxu0 0.0
        %1688 = vmatprep.subr.mxu0 0.0
        %1689 = vmatpush1.msra.mxu0 0.0
        %1690 = vmatprep.subr.mxu0 0.0
        %1691 = vmatpush1.msra.mxu0 0.0
        %1692 = vmatprep.subr.mxu0 0.0
        %1693 = vmatpush1.msra.mxu0 0.0
        %1694 = vmatprep.subr.mxu0 0.0
        %1695 = vmatpush1.msra.mxu0 0.0
        %1696 = vmatprep.subr.mxu0 0.0
        %1697 = vmatpush1.msra.mxu0 0.0
        %1698 = vmatprep.subr.mxu0 0.0
        %1699 = vmatpush1.msra.mxu0 0.0
        %1700 = vmatprep.subr.mxu0 0.0
        %1701 = vmatpush1.msra.mxu0 0.0
        %1702 = vmatprep.subr.mxu0 0.0
        %1703 = vmatpush1.msra.mxu0 0.0
        %1704 = vmatprep.subr.mxu0 0.0
        %1705 = vmatpush1.msra.mxu0 0.0
        %1706 = vmatprep.subr.mxu0 0.0
        %1707 = vmatpush1.msra.mxu0 0.0
        %1708 = vmatprep.subr.mxu0 0.0
        %1709 = vmatpush1.msra.mxu0 0.0
        %1710 = vmatprep.subr.mxu0 0.0
        %1711 = vmatpush1.msra.mxu0 0.0
        %1712 = vmatprep.subr.mxu0 0.0
        %1713 = vmatpush1.msra.mxu0 0.0
        %1714 = vmatprep.subr.mxu0 0.0
        %1715 = vmatpush1.msra.mxu0 0.0
        %1716 = vmatprep.subr.mxu0 0.0
        %1717 = vmatpush1.msra.mxu0 0.0
        %1718 = vmatprep.subr.mxu0 0.0
        %1719 = vmatpush1.msra.mxu0 0.0
        %1720 = vmatprep.subr.mxu0 0.0
        %1721 = vmatpush1.msra.mxu0 0.0
        %1722 = vmatprep.subr.mxu0 0.0
        %1723 = vmatpush1.msra.mxu0 0.0
        %1724 = vmatprep.subr.mxu0 0.0
        %1725 = vmatpush1.msra.mxu0 0.0
        %1726 = vmatprep.subr.mxu0 0.0
        %1727 = vmatpush1.msra.mxu0 0.0
        %1728 = vmatprep.mubr.f32.mxu0 0.0
        %1729 = vmatmul.mubr.f32.gmra.mrb[0].mxu0 %v1662
        %v1730 = vpop.f32.mrb[0].mxu0
        %v1731 = vadd.f32 0.0, %v1730
        %v1732 = vpop.f32.mrb[0].mxu0
        %1733 = vdwg.mxu0
        %1734 = vrot.lane.b32.xlu0 %v1399, 112
        %v1735 = vpop.permute.xlu0 %1734
        %1736 = vrot.lane.b32.xlu0 %v1399, 80
        %v1737 = vpop.permute.xlu0 %1736
        %v1738 = vsel %vm1405, %v1735, 0
        %v1740 = vsel %vm1405, %v1737, 0
        %1742 = vmatprep.subr.mxu0 0.0
        %1743 = vmatpush1.xpose.msra.mxu0 %v1740
        %1744 = vmatprep.subr.mxu0 0.0
        %1745 = vmatpush1.xpose.msra.mxu0 0.0
        %1746 = vmatprep.subr.mxu0 0.0
        %1747 = vmatpush1.xpose.msra.mxu0 0.0
        %1748 = vmatprep.subr.mxu0 0.0
        %1749 = vmatpush1.xpose.msra.mxu0 0.0
        %1750 = vmatprep.subr.mxu0 0.0
        %1751 = vmatpush1.xpose.msra.mxu0 0.0
        %1752 = vmatprep.subr.mxu0 0.0
        %1753 = vmatpush1.xpose.msra.mxu0 0.0
        %1754 = vmatprep.subr.mxu0 0.0
        %1755 = vmatpush1.xpose.msra.mxu0 0.0
        %1756 = vmatprep.subr.mxu0 0.0
        %1757 = vmatpush1.xpose.msra.mxu0 0.0
        %1758 = vmatprep.subr.mxu0 0.0
        %1759 = vmatpush1.xpose.msra.mxu0 0.0
        %1760 = vmatprep.subr.mxu0 0.0
        %1761 = vmatpush1.xpose.msra.mxu0 0.0
        %1762 = vmatprep.subr.mxu0 0.0
        %1763 = vmatpush1.xpose.msra.mxu0 0.0
        %1764 = vmatprep.subr.mxu0 0.0
        %1765 = vmatpush1.xpose.msra.mxu0 0.0
        %1766 = vmatprep.subr.mxu0 0.0
        %1767 = vmatpush1.xpose.msra.mxu0 0.0
        %1768 = vmatprep.subr.mxu0 0.0
        %1769 = vmatpush1.xpose.msra.mxu0 0.0
        %1770 = vmatprep.subr.mxu0 0.0
        %1771 = vmatpush1.xpose.msra.mxu0 0.0
        %1772 = vmatprep.subr.mxu0 0.0
        %1773 = vmatpush1.xpose.msra.mxu0 0.0
        %1774 = vmatprep.subr.mxu0 0.0
        %1775 = vmatpush1.xpose.msra.mxu0 0.0
        %1776 = vmatprep.subr.mxu0 0.0
        %1777 = vmatpush1.xpose.msra.mxu0 0.0
        %1778 = vmatprep.subr.mxu0 0.0
        %1779 = vmatpush1.xpose.msra.mxu0 0.0
        %1780 = vmatprep.subr.mxu0 0.0
        %1781 = vmatpush1.xpose.msra.mxu0 0.0
        %1782 = vmatprep.subr.mxu0 0.0
        %1783 = vmatpush1.xpose.msra.mxu0 0.0
        %1784 = vmatprep.subr.mxu0 0.0
        %1785 = vmatpush1.xpose.msra.mxu0 0.0
        %1786 = vmatprep.subr.mxu0 0.0
        %1787 = vmatpush1.xpose.msra.mxu0 0.0
        %1788 = vmatprep.subr.mxu0 0.0
        %1789 = vmatpush1.xpose.msra.mxu0 0.0
        %1790 = vmatprep.subr.mxu0 0.0
        %1791 = vmatpush1.xpose.msra.mxu0 0.0
        %1792 = vmatprep.subr.mxu0 0.0
        %1793 = vmatpush1.xpose.msra.mxu0 0.0
        %1794 = vmatprep.subr.mxu0 0.0
        %1795 = vmatpush1.xpose.msra.mxu0 0.0
        %1796 = vmatprep.subr.mxu0 0.0
        %1797 = vmatpush1.xpose.msra.mxu0 0.0
        %1798 = vmatprep.subr.mxu0 0.0
        %1799 = vmatpush1.xpose.msra.mxu0 0.0
        %1800 = vmatprep.subr.mxu0 0.0
        %1801 = vmatpush1.xpose.msra.mxu0 0.0
        %1802 = vmatprep.subr.mxu0 0.0
        %1803 = vmatpush1.xpose.msra.mxu0 0.0
        %1804 = vmatprep.subr.mxu0 0.0
        %1805 = vmatpush1.xpose.msra.mxu0 0.0
        %1806 = vmatprep.mubr.f32.mxu0 0.0
        %1807 = vmatmul.mubr.f32.gmra.mrb[0].mxu0 %v1738
        %v1808 = vpop.f32.mrb[0].mxu0
        %v1809 = vadd.f32 0.0, %v1808
        %v1810 = vpop.f32.mrb[0].mxu0
        %1811 = vdwg.mxu0
        %v1812 = vmul.f32 %v1809, 0.35355338
        %v1813 = vsel %vm1405, %v1812, -inf
        %1814 = vmax.xlane.f32.xlu0 %v1813
        %v1815 = vpop.xlane.xlu0 %1814
        %v1816 = vsub.f32 %v1812, %v1815
        %v1817 = vmul.f32 %v1816, 1.442695
        %v1818 = vpow.pop %v1817
        %v1819 = vsel %vm1405, %v1818, 0.0
        %1820 = vadd.xlane.f32.xlu0 %v1819
        %v1821 = vpop.xlane.xlu0 %1820
        %v1822 = vrcp.pop %v1821
        %v1823 = vmul.f32 %v1818, %v1822
        %1824 = vrot.lane.b32.xlu0 %v1399, 48
        %v1825 = vpop.permute.xlu0 %1824
        %v1828 = vsel %vm1405, %v1823, 0
        %1830 = vmatprep.subr.mxu0 0.0
        %1831 = vmatpush1.msra.mxu0 %v1825
        %1832 = vmatprep.subr.mxu0 0.0
        %1833 = vmatpush1.msra.mxu0 0.0
        %1834 = vmatprep.subr.mxu0 0.0
        %1835 = vmatpush1.msra.mxu0 0.0
        %1836 = vmatprep.subr.mxu0 0.0
        %1837 = vmatpush1.msra.mxu0 0.0
        %1838 = vmatprep.subr.mxu0 0.0
        %1839 = vmatpush1.msra.mxu0 0.0
        %1840 = vmatprep.subr.mxu0 0.0
        %1841 = vmatpush1.msra.mxu0 0.0
        %1842 = vmatprep.subr.mxu0 0.0
        %1843 = vmatpush1.msra.mxu0 0.0
        %1844 = vmatprep.subr.mxu0 0.0
        %1845 = vmatpush1.msra.mxu0 0.0
        %1846 = vmatprep.subr.mxu0 0.0
        %1847 = vmatpush1.msra.mxu0 0.0
        %1848 = vmatprep.subr.mxu0 0.0
        %1849 = vmatpush1.msra.mxu0 0.0
        %1850 = vmatprep.subr.mxu0 0.0
        %1851 = vmatpush1.msra.mxu0 0.0
        %1852 = vmatprep.subr.mxu0 0.0
        %1853 = vmatpush1.msra.mxu0 0.0
        %1854 = vmatprep.subr.mxu0 0.0
        %1855 = vmatpush1.msra.mxu0 0.0
        %1856 = vmatprep.subr.mxu0 0.0
        %1857 = vmatpush1.msra.mxu0 0.0
        %1858 = vmatprep.subr.mxu0 0.0
        %1859 = vmatpush1.msra.mxu0 0.0
        %1860 = vmatprep.subr.mxu0 0.0
        %1861 = vmatpush1.msra.mxu0 0.0
        %1862 = vmatprep.subr.mxu0 0.0
        %1863 = vmatpush1.msra.mxu0 0.0
        %1864 = vmatprep.subr.mxu0 0.0
        %1865 = vmatpush1.msra.mxu0 0.0
        %1866 = vmatprep.subr.mxu0 0.0
        %1867 = vmatpush1.msra.mxu0 0.0
        %1868 = vmatprep.subr.mxu0 0.0
        %1869 = vmatpush1.msra.mxu0 0.0
        %1870 = vmatprep.subr.mxu0 0.0
        %1871 = vmatpush1.msra.mxu0 0.0
        %1872 = vmatprep.subr.mxu0 0.0
        %1873 = vmatpush1.msra.mxu0 0.0
        %1874 = vmatprep.subr.mxu0 0.0
        %1875 = vmatpush1.msra.mxu0 0.0
        %1876 = vmatprep.subr.mxu0 0.0
        %1877 = vmatpush1.msra.mxu0 0.0
        %1878 = vmatprep.subr.mxu0 0.0
        %1879 = vmatpush1.msra.mxu0 0.0
        %1880 = vmatprep.subr.mxu0 0.0
        %1881 = vmatpush1.msra.mxu0 0.0
        %1882 = vmatprep.subr.mxu0 0.0
        %1883 = vmatpush1.msra.mxu0 0.0
        %1884 = vmatprep.subr.mxu0 0.0
        %1885 = vmatpush1.msra.mxu0 0.0
        %1886 = vmatprep.subr.mxu0 0.0
        %1887 = vmatpush1.msra.mxu0 0.0
        %1888 = vmatprep.subr.mxu0 0.0
        %1889 = vmatpush1.msra.mxu0 0.0
        %1890 = vmatprep.subr.mxu0 0.0
        %1891 = vmatpush1.msra.mxu0 0.0
        %1892 = vmatprep.subr.mxu0 0.0
        %1893 = vmatpush1.msra.mxu0 0.0
        %1894 = vmatprep.mubr.f32.mxu0 0.0
        %1895 = vmatmul.mubr.f32.gmra.mrb[0].mxu0 %v1828
        %v1896 = vpop.f32.mrb[0].mxu0
        %v1897 = vadd.f32 0.0, %v1896
        %v1898 = vpop.f32.mrb[0].mxu0
        %1899 = vdwg.mxu0
        %1900 = vrot.lane.b32.xlu0 %v1399, 104
        %v1901 = vpop.permute.xlu0 %1900
        %1902 = vrot.lane.b32.xlu0 %v1399, 72
        %v1903 = vpop.permute.xlu0 %1902
        %v1904 = vsel %vm1405, %v1901, 0
        %v1906 = vsel %vm1405, %v1903, 0
        %1908 = vmatprep.subr.mxu0 0.0
        %1909 = vmatpush1.xpose.msra.mxu0 %v1906
        %1910 = vmatprep.subr.mxu0 0.0
        %1911 = vmatpush1.xpose.msra.mxu0 0.0
        %1912 = vmatprep.subr.mxu0 0.0
        %1913 = vmatpush1.xpose.msra.mxu0 0.0
        %1914 = vmatprep.subr.mxu0 0.0
        %1915 = vmatpush1.xpose.msra.mxu0 0.0
        %1916 = vmatprep.subr.mxu0 0.0
        %1917 = vmatpush1.xpose.msra.mxu0 0.0
        %1918 = vmatprep.subr.mxu0 0.0
        %1919 = vmatpush1.xpose.msra.mxu0 0.0
        %1920 = vmatprep.subr.mxu0 0.0
        %1921 = vmatpush1.xpose.msra.mxu0 0.0
        %1922 = vmatprep.subr.mxu0 0.0
        %1923 = vmatpush1.xpose.msra.mxu0 0.0
        %1924 = vmatprep.subr.mxu0 0.0
        %1925 = vmatpush1.xpose.msra.mxu0 0.0
        %1926 = vmatprep.subr.mxu0 0.0
        %1927 = vmatpush1.xpose.msra.mxu0 0.0
        %1928 = vmatprep.subr.mxu0 0.0
        %1929 = vmatpush1.xpose.msra.mxu0 0.0
        %1930 = vmatprep.subr.mxu0 0.0
        %1931 = vmatpush1.xpose.msra.mxu0 0.0
        %1932 = vmatprep.subr.mxu0 0.0
        %1933 = vmatpush1.xpose.msra.mxu0 0.0
        %1934 = vmatprep.subr.mxu0 0.0
        %1935 = vmatpush1.xpose.msra.mxu0 0.0
        %1936 = vmatprep.subr.mxu0 0.0
        %1937 = vmatpush1.xpose.msra.mxu0 0.0
        %1938 = vmatprep.subr.mxu0 0.0
        %1939 = vmatpush1.xpose.msra.mxu0 0.0
        %1940 = vmatprep.subr.mxu0 0.0
        %1941 = vmatpush1.xpose.msra.mxu0 0.0
        %1942 = vmatprep.subr.mxu0 0.0
        %1943 = vmatpush1.xpose.msra.mxu0 0.0
        %1944 = vmatprep.subr.mxu0 0.0
        %1945 = vmatpush1.xpose.msra.mxu0 0.0
        %1946 = vmatprep.subr.mxu0 0.0
        %1947 = vmatpush1.xpose.msra.mxu0 0.0
        %1948 = vmatprep.subr.mxu0 0.0
        %1949 = vmatpush1.xpose.msra.mxu0 0.0
        %1950 = vmatprep.subr.mxu0 0.0
        %1951 = vmatpush1.xpose.msra.mxu0 0.0
        %1952 = vmatprep.subr.mxu0 0.0
        %1953 = vmatpush1.xpose.msra.mxu0 0.0
        %1954 = vmatprep.subr.mxu0 0.0
        %1955 = vmatpush1.xpose.msra.mxu0 0.0
        %1956 = vmatprep.subr.mxu0 0.0
        %1957 = vmatpush1.xpose.msra.mxu0 0.0
        %1958 = vmatprep.subr.mxu0 0.0
        %1959 = vmatpush1.xpose.msra.mxu0 0.0
        %1960 = vmatprep.subr.mxu0 0.0
        %1961 = vmatpush1.xpose.msra.mxu0 0.0
        %1962 = vmatprep.subr.mxu0 0.0
        %1963 = vmatpush1.xpose.msra.mxu0 0.0
        %1964 = vmatprep.subr.mxu0 0.0
        %1965 = vmatpush1.xpose.msra.mxu0 0.0
        %1966 = vmatprep.subr.mxu0 0.0
        %1967 = vmatpush1.xpose.msra.mxu0 0.0
        %1968 = vmatprep.subr.mxu0 0.0
        %1969 = vmatpush1.xpose.msra.mxu0 0.0
        %1970 = vmatprep.subr.mxu0 0.0
        %1971 = vmatpush1.xpose.msra.mxu0 0.0
        %1972 = vmatprep.mubr.f32.mxu0 0.0
        %1973 = vmatmul.mubr.f32.gmra.mrb[0].mxu0 %v1904
        %v1974 = vpop.f32.mrb[0].mxu0
        %v1975 = vadd.f32 0.0, %v1974
        %v1976 = vpop.f32.mrb[0].mxu0
        %1977 = vdwg.mxu0
        %v1978 = vmul.f32 %v1975, 0.35355338
        %v1979 = vsel %vm1405, %v1978, -inf
        %1980 = vmax.xlane.f32.xlu0 %v1979
        %v1981 = vpop.xlane.xlu0 %1980
        %v1982 = vsub.f32 %v1978, %v1981
        %v1983 = vmul.f32 %v1982, 1.442695
        %v1984 = vpow.pop %v1983
        %v1985 = vsel %vm1405, %v1984, 0.0
        %1986 = vadd.xlane.f32.xlu0 %v1985
        %v1987 = vpop.xlane.xlu0 %1986
        %v1988 = vrcp.pop %v1987
        %v1989 = vmul.f32 %v1984, %v1988
        %1990 = vrot.lane.b32.xlu0 %v1399, 40
        %v1991 = vpop.permute.xlu0 %1990
        %v1994 = vsel %vm1405, %v1989, 0
        %1996 = vmatprep.subr.mxu0 0.0
        %1997 = vmatpush1.msra.mxu0 %v1991
        %1998 = vmatprep.subr.mxu0 0.0
        %1999 = vmatpush1.msra.mxu0 0.0
        %2000 = vmatprep.subr.mxu0 0.0
        %2001 = vmatpush1.msra.mxu0 0.0
        %2002 = vmatprep.subr.mxu0 0.0
        %2003 = vmatpush1.msra.mxu0 0.0
        %2004 = vmatprep.subr.mxu0 0.0
        %2005 = vmatpush1.msra.mxu0 0.0
        %2006 = vmatprep.subr.mxu0 0.0
        %2007 = vmatpush1.msra.mxu0 0.0
        %2008 = vmatprep.subr.mxu0 0.0
        %2009 = vmatpush1.msra.mxu0 0.0
        %2010 = vmatprep.subr.mxu0 0.0
        %2011 = vmatpush1.msra.mxu0 0.0
        %2012 = vmatprep.subr.mxu0 0.0
        %2013 = vmatpush1.msra.mxu0 0.0
        %2014 = vmatprep.subr.mxu0 0.0
        %2015 = vmatpush1.msra.mxu0 0.0
        %2016 = vmatprep.subr.mxu0 0.0
        %2017 = vmatpush1.msra.mxu0 0.0
        %2018 = vmatprep.subr.mxu0 0.0
        %2019 = vmatpush1.msra.mxu0 0.0
        %2020 = vmatprep.subr.mxu0 0.0
        %2021 = vmatpush1.msra.mxu0 0.0
        %2022 = vmatprep.subr.mxu0 0.0
        %2023 = vmatpush1.msra.mxu0 0.0
        %2024 = vmatprep.subr.mxu0 0.0
        %2025 = vmatpush1.msra.mxu0 0.0
        %2026 = vmatprep.subr.mxu0 0.0
        %2027 = vmatpush1.msra.mxu0 0.0
        %2028 = vmatprep.subr.mxu0 0.0
        %2029 = vmatpush1.msra.mxu0 0.0
        %2030 = vmatprep.subr.mxu0 0.0
        %2031 = vmatpush1.msra.mxu0 0.0
        %2032 = vmatprep.subr.mxu0 0.0
        %2033 = vmatpush1.msra.mxu0 0.0
        %2034 = vmatprep.subr.mxu0 0.0
        %2035 = vmatpush1.msra.mxu0 0.0
        %2036 = vmatprep.subr.mxu0 0.0
        %2037 = vmatpush1.msra.mxu0 0.0
        %2038 = vmatprep.subr.mxu0 0.0
        %2039 = vmatpush1.msra.mxu0 0.0
        %2040 = vmatprep.subr.mxu0 0.0
        %2041 = vmatpush1.msra.mxu0 0.0
        %2042 = vmatprep.subr.mxu0 0.0
        %2043 = vmatpush1.msra.mxu0 0.0
        %2044 = vmatprep.subr.mxu0 0.0
        %2045 = vmatpush1.msra.mxu0 0.0
        %2046 = vmatprep.subr.mxu0 0.0
        %2047 = vmatpush1.msra.mxu0 0.0
        %2048 = vmatprep.subr.mxu0 0.0
        %2049 = vmatpush1.msra.mxu0 0.0
        %2050 = vmatprep.subr.mxu0 0.0
        %2051 = vmatpush1.msra.mxu0 0.0
        %2052 = vmatprep.subr.mxu0 0.0
        %2053 = vmatpush1.msra.mxu0 0.0
        %2054 = vmatprep.subr.mxu0 0.0
        %2055 = vmatpush1.msra.mxu0 0.0
        %2056 = vmatprep.subr.mxu0 0.0
        %2057 = vmatpush1.msra.mxu0 0.0
        %2058 = vmatprep.subr.mxu0 0.0
        %2059 = vmatpush1.msra.mxu0 0.0
        %2060 = vmatprep.mubr.f32.mxu0 0.0
        %2061 = vmatmul.mubr.f32.gmra.mrb[0].mxu0 %v1994
        %v2062 = vpop.f32.mrb[0].mxu0
        %v2063 = vadd.f32 0.0, %v2062
        %v2064 = vpop.f32.mrb[0].mxu0
        %2065 = vdwg.mxu0
        %2067 = vrot.lane.b32.xlu0 %v1731, 8
        %v2068 = vpop.permute.xlu0 %2067
        %2071 = vrot.lane.b32.xlu0 %v1897, 16
        %v2072 = vpop.permute.xlu0 %2071
        %2075 = vrot.lane.b32.xlu0 %v2063, 24
        %v2076 = vpop.permute.xlu0 %2075
        %v2078 = vsel %vm1405, %v1565, %v2068
        %vm2079 = vcmask 130048
        %v2080 = vsel %vm2079, %v2078, %v2072
        %vm2081 = vcmask 195584
        %v2082 = vsel %vm2081, %v2080, %v2076
        %v2084 = vlaneseq
        %v2085 = vshrl.u32 %v2084, 7
        %v2086 = vsub.s32 0, %v2085
        %v2087 = vrot.slane %v1320, %v2086
        %v2090 = vsel %vm1282, %v2082, 0
        %2092 = vmatprep.subr.mxu0 0.0
        %2093 = vmatpush1.msra.mxu0 %v1316
        %2094 = vmatprep.subr.mxu0 0.0
        %2095 = vmatpush1.msra.mxu0 %v1317
        %2096 = vmatprep.subr.mxu0 0.0
        %2097 = vmatpush1.msra.mxu0 %v1318
        %2098 = vmatprep.subr.mxu0 0.0
        %2099 = vmatpush1.msra.mxu0 %v1319
        %2100 = vmatprep.subr.mxu0 0.0
        %2101 = vmatpush1.msra.mxu0 0.0
        %2102 = vmatprep.subr.mxu0 0.0
        %2103 = vmatpush1.msra.mxu0 0.0
        %2104 = vmatprep.subr.mxu0 0.0
        %2105 = vmatpush1.msra.mxu0 0.0
        %2106 = vmatprep.subr.mxu0 0.0
        %2107 = vmatpush1.msra.mxu0 0.0
        %2108 = vmatprep.subr.mxu0 0.0
        %2109 = vmatpush1.msra.mxu0 0.0
        %2110 = vmatprep.subr.mxu0 0.0
        %2111 = vmatpush1.msra.mxu0 0.0
        %2112 = vmatprep.subr.mxu0 0.0
        %2113 = vmatpush1.msra.mxu0 0.0
        %2114 = vmatprep.subr.mxu0 0.0
        %2115 = vmatpush1.msra.mxu0 0.0
        %2116 = vmatprep.subr.mxu0 0.0
        %2117 = vmatpush1.msra.mxu0 0.0
        %2118 = vmatprep.subr.mxu0 0.0
        %2119 = vmatpush1.msra.mxu0 0.0
        %2120 = vmatprep.subr.mxu0 0.0
        %2121 = vmatpush1.msra.mxu0 0.0
        %2122 = vmatprep.subr.mxu0 0.0
        %2123 = vmatpush1.msra.mxu0 0.0
        %2124 = vmatprep.subr.mxu0 0.0
        %2125 = vmatpush1.msra.mxu0 0.0
        %2126 = vmatprep.subr.mxu0 0.0
        %2127 = vmatpush1.msra.mxu0 0.0
        %2128 = vmatprep.subr.mxu0 0.0
        %2129 = vmatpush1.msra.mxu0 0.0
        %2130 = vmatprep.subr.mxu0 0.0
        %2131 = vmatpush1.msra.mxu0 0.0
        %2132 = vmatprep.subr.mxu0 0.0
        %2133 = vmatpush1.msra.mxu0 0.0
        %2134 = vmatprep.subr.mxu0 0.0
        %2135 = vmatpush1.msra.mxu0 0.0
        %2136 = vmatprep.subr.mxu0 0.0
        %2137 = vmatpush1.msra.mxu0 0.0
        %2138 = vmatprep.subr.mxu0 0.0
        %2139 = vmatpush1.msra.mxu0 0.0
        %2140 = vmatprep.subr.mxu0 0.0
        %2141 = vmatpush1.msra.mxu0 0.0
        %2142 = vmatprep.subr.mxu0 0.0
        %2143 = vmatpush1.msra.mxu0 0.0
        %2144 = vmatprep.subr.mxu0 0.0
        %2145 = vmatpush1.msra.mxu0 0.0
        %2146 = vmatprep.subr.mxu0 0.0
        %2147 = vmatpush1.msra.mxu0 0.0
        %2148 = vmatprep.subr.mxu0 0.0
        %2149 = vmatpush1.msra.mxu0 0.0
        %2150 = vmatprep.subr.mxu0 0.0
        %2151 = vmatpush1.msra.mxu0 0.0
        %2152 = vmatprep.subr.mxu0 0.0
        %2153 = vmatpush1.msra.mxu0 0.0
        %2154 = vmatprep.subr.mxu0 0.0
        %2155 = vmatpush1.msra.mxu0 0.0
        %2156 = vmatprep.mubr.f32.mxu0 0.0
        %2157 = vmatmul.mubr.f32.gmra.mrb[0].mxu0 %v2090
        %v2158 = vpop.f32.mrb[0].mxu0
        %v2159 = vadd.f32 %v2087, %v2158
        %v2160 = vpop.f32.mrb[0].mxu0
        %2161 = vdwg.mxu0
        %v2162 = vadd.f32 %v1310, %v2159
        %v2163 = vsel %vm1282, %v2162, 0.0
        %2164 = vadd.xlane.f32.xlu0 %v2163
        %v2165 = vpop.xlane.xlu0 %2164
        %v2166 = vmul.f32 %v2165, %v1286
        %v2167 = vsub.f32 %v2162, %v2166
        %v2168 = vmul.f32 %v2167, %v2167
        %v2169 = vsel %vm1282, %v2168, 0.0
        %2170 = vadd.xlane.f32.xlu0 %v2169
        %v2171 = vpop.xlane.xlu0 %2170
        %v2172 = vmul.f32 %v2171, %v1286
        %v2173 = vadd.f32 %v2172, 1e-05
        %v2174 = vrsqrt.pop %v2173
        %v2175 = vmul.f32 %v2167, %v2174
        %v2177 = vlaneseq
        %v2178 = vshrl.u32 %v2177, 7
        %v2179 = vsub.s32 0, %v2178
        %v2180 = vrot.slane %v1321, %v2179
        %v2182 = vmul.f32 %v2175, %v2180
        %v2184 = vlaneseq
        %v2185 = vshrl.u32 %v2184, 7
        %v2186 = vsub.s32 0, %v2185
        %v2187 = vrot.slane %v1322, %v2186
        %v2189 = vadd.f32 %v2182, %v2187
        %v2190 = vld [vmem:[%s25] sm:$0xff]
        %v2191 = vld [vmem:[%s25 + $0x8] sm:$0xff]
        %v2192 = vld [vmem:[%s25 + $0x10] sm:$0xff]
        %v2193 = vld [vmem:[%s25 + $0x18] sm:$0xff]
        %v2194 = vld [vmem:[%s27] sm:$0x1]
        %v2195 = vld [vmem:[%s29] sm:$0xff]
        %v2196 = vld [vmem:[%s29 + $0x8] sm:$0xff]
        %v2197 = vld [vmem:[%s29 + $0x10] sm:$0xff]
        %v2198 = vld [vmem:[%s29 + $0x18] sm:$0xff]
        %v2199 = vld [vmem:[%s29 + $0x20] sm:$0xff]
        %v2200 = vld [vmem:[%s29 + $0x28] sm:$0xff]
        %v2201 = vld [vmem:[%s29 + $0x30] sm:$0xff]
        %v2202 = vld [vmem:[%s29 + $0x38] sm:$0xff]
        %v2203 = vld [vmem:[%s31] sm:$0x1]
        %v2204 = vld [vmem:[%s33] sm:$0x1]
        %v2205 = vld [vmem:[%s35] sm:$0x1]
        %v2207 = vlaneseq
        %v2208 = vshrl.u32 %v2207, 7
        %v2209 = vsub.s32 0, %v2208
        %v2210 = vrot.slane %v2194, %v2209
        %v2213 = vsel %vm1282, %v2189, 0
        %2215 = vmatprep.subr.mxu0 0.0
        %2216 = vmatpush1.msra.mxu0 %v2190
        %2217 = vmatprep.subr.mxu0 0.0
        %2218 = vmatpush1.msra.mxu0 %v2191
        %2219 = vmatprep.subr.mxu0 0.0
        %2220 = vmatpush1.msra.mxu0 %v2192
        %2221 = vmatprep.subr.mxu0 0.0
        %2222 = vmatpush1.msra.mxu0 %v2193
        %2223 = vmatprep.subr.mxu0 0.0
        %2224 = vmatpush1.msra.mxu0 0.0
        %2225 = vmatprep.subr.mxu0 0.0
        %2226 = vmatpush1.msra.mxu0 0.0
        %2227 = vmatprep.subr.mxu0 0.0
        %2228 = vmatpush1.msra.mxu0 0.0
        %2229 = vmatprep.subr.mxu0 0.0
        %2230 = vmatpush1.msra.mxu0 0.0
        %2231 = vmatprep.subr.mxu0 0.0
        %2232 = vmatpush1.msra.mxu0 0.0
        %2233 = vmatprep.subr.mxu0 0.0
        %2234 = vmatpush1.msra.mxu0 0.0
        %2235 = vmatprep.subr.mxu0 0.0
        %2236 = vmatpush1.msra.mxu0 0.0
        %2237 = vmatprep.subr.mxu0 0.0
        %2238 = vmatpush1.msra.mxu0 0.0
        %2239 = vmatprep.subr.mxu0 0.0
        %2240 = vmatpush1.msra.mxu0 0.0
        %2241 = vmatprep.subr.mxu0 0.0
        %2242 = vmatpush1.msra.mxu0 0.0
        %2243 = vmatprep.subr.mxu0 0.0
        %2244 = vmatpush1.msra.mxu0 0.0
        %2245 = vmatprep.subr.mxu0 0.0
        %2246 = vmatpush1.msra.mxu0 0.0
        %2247 = vmatprep.subr.mxu0 0.0
        %2248 = vmatpush1.msra.mxu0 0.0
        %2249 = vmatprep.subr.mxu0 0.0
        %2250 = vmatpush1.msra.mxu0 0.0
        %2251 = vmatprep.subr.mxu0 0.0
        %2252 = vmatpush1.msra.mxu0 0.0
        %2253 = vmatprep.subr.mxu0 0.0
        %2254 = vmatpush1.msra.mxu0 0.0
        %2255 = vmatprep.subr.mxu0 0.0
        %2256 = vmatpush1.msra.mxu0 0.0
        %2257 = vmatprep.subr.mxu0 0.0
        %2258 = vmatpush1.msra.mxu0 0.0
        %2259 = vmatprep.subr.mxu0 0.0
        %2260 = vmatpush1.msra.mxu0 0.0
        %2261 = vmatprep.subr.mxu0 0.0
        %2262 = vmatpush1.msra.mxu0 0.0
        %2263 = vmatprep.subr.mxu0 0.0
        %2264 = vmatpush1.msra.mxu0 0.0
        %2265 = vmatprep.subr.mxu0 0.0
        %2266 = vmatpush1.msra.mxu0 0.0
        %2267 = vmatprep.subr.mxu0 0.0
        %2268 = vmatpush1.msra.mxu0 0.0
        %2269 = vmatprep.subr.mxu0 0.0
        %2270 = vmatpush1.msra.mxu0 0.0
        %2271 = vmatprep.subr.mxu0 0.0
        %2272 = vmatpush1.msra.mxu0 0.0
        %2273 = vmatprep.subr.mxu0 0.0
        %2274 = vmatpush1.msra.mxu0 0.0
        %2275 = vmatprep.subr.mxu0 0.0
        %2276 = vmatpush1.msra.mxu0 0.0
        %2277 = vmatprep.subr.mxu0 0.0
        %2278 = vmatpush1.msra.mxu0 0.0
        %2279 = vmatprep.mubr.f32.mxu0 0.0
        %2280 = vmatmul.mubr.f32.gmra.mrb[0].mxu0 %v2213
        %v2281 = vpop.f32.mrb[0].mxu0
        %v2282 = vadd.f32 %v2210, %v2281
        %v2283 = vpop.f32.mrb[0].mxu0
        %2284 = vdwg.mxu0
        %v2285 = vmul.f32 %v2282, 0.5
        %v2286 = vmul.f32 %v2282, 0.70710677
        %v2287 = verf.f32.pop %v2286
        %v2288 = vadd.f32 %v2287, 1.0
        %v2289 = vmul.f32 %v2285, %v2288
        %v2291 = vlaneseq
        %v2292 = vshrl.u32 %v2291, 7
        %v2293 = vsub.s32 0, %v2292
        %v2294 = vrot.slane %v2203, %v2293
        %vm2296 = vcmask 523264
        %v2298 = vsel %vm2296, %v2289, 0
        %2300 = vmatprep.subr.mxu0 0.0
        %2301 = vmatpush1.msra.mxu0 %v2195
        %2302 = vmatprep.subr.mxu0 0.0
        %2303 = vmatpush1.msra.mxu0 %v2196
        %2304 = vmatprep.subr.mxu0 0.0
        %2305 = vmatpush1.msra.mxu0 %v2197
        %2306 = vmatprep.subr.mxu0 0.0
        %2307 = vmatpush1.msra.mxu0 %v2198
        %2308 = vmatprep.subr.mxu0 0.0
        %2309 = vmatpush1.msra.mxu0 %v2199
        %2310 = vmatprep.subr.mxu0 0.0
        %2311 = vmatpush1.msra.mxu0 %v2200
        %2312 = vmatprep.subr.mxu0 0.0
        %2313 = vmatpush1.msra.mxu0 %v2201
        %2314 = vmatprep.subr.mxu0 0.0
        %2315 = vmatpush1.msra.mxu0 %v2202
        %2316 = vmatprep.subr.mxu0 0.0
        %2317 = vmatpush1.msra.mxu0 0.0
        %2318 = vmatprep.subr.mxu0 0.0
        %2319 = vmatpush1.msra.mxu0 0.0
        %2320 = vmatprep.subr.mxu0 0.0
        %2321 = vmatpush1.msra.mxu0 0.0
        %2322 = vmatprep.subr.mxu0 0.0
        %2323 = vmatpush1.msra.mxu0 0.0
        %2324 = vmatprep.subr.mxu0 0.0
        %2325 = vmatpush1.msra.mxu0 0.0
        %2326 = vmatprep.subr.mxu0 0.0
        %2327 = vmatpush1.msra.mxu0 0.0
        %2328 = vmatprep.subr.mxu0 0.0
        %2329 = vmatpush1.msra.mxu0 0.0
        %2330 = vmatprep.subr.mxu0 0.0
        %2331 = vmatpush1.msra.mxu0 0.0
        %2332 = vmatprep.subr.mxu0 0.0
        %2333 = vmatpush1.msra.mxu0 0.0
        %2334 = vmatprep.subr.mxu0 0.0
        %2335 = vmatpush1.msra.mxu0 0.0
        %2336 = vmatprep.subr.mxu0 0.0
        %2337 = vmatpush1.msra.mxu0 0.0
        %2338 = vmatprep.subr.mxu0 0.0
        %2339 = vmatpush1.msra.mxu0 0.0
        %2340 = vmatprep.subr.mxu0 0.0
        %2341 = vmatpush1.msra.mxu0 0.0
        %2342 = vmatprep.subr.mxu0 0.0
        %2343 = vmatpush1.msra.mxu0 0.0
        %2344 = vmatprep.subr.mxu0 0.0
        %2345 = vmatpush1.msra.mxu0 0.0
        %2346 = vmatprep.subr.mxu0 0.0
        %2347 = vmatpush1.msra.mxu0 0.0
        %2348 = vmatprep.subr.mxu0 0.0
        %2349 = vmatpush1.msra.mxu0 0.0
        %2350 = vmatprep.subr.mxu0 0.0
        %2351 = vmatpush1.msra.mxu0 0.0
        %2352 = vmatprep.subr.mxu0 0.0
        %2353 = vmatpush1.msra.mxu0 0.0
        %2354 = vmatprep.subr.mxu0 0.0
        %2355 = vmatpush1.msra.mxu0 0.0
        %2356 = vmatprep.subr.mxu0 0.0
        %2357 = vmatpush1.msra.mxu0 0.0
        %2358 = vmatprep.subr.mxu0 0.0
        %2359 = vmatpush1.msra.mxu0 0.0
        %2360 = vmatprep.subr.mxu0 0.0
        %2361 = vmatpush1.msra.mxu0 0.0
        %2362 = vmatprep.subr.mxu0 0.0
        %2363 = vmatpush1.msra.mxu0 0.0
        %2364 = vmatprep.mubr.f32.mxu0 0.0
        %2365 = vmatmul.mubr.f32.gmra.mrb[0].mxu0 %v2298
        %v2366 = vpop.f32.mrb[0].mxu0
        %v2367 = vadd.f32 %v2294, %v2366
        %v2368 = vpop.f32.mrb[0].mxu0
        %2369 = vdwg.mxu0
        %v2370 = vadd.f32 %v2189, %v2367
        %v2371 = vsel %vm1282, %v2370, 0.0
        %2372 = vadd.xlane.f32.xlu0 %v2371
        %v2373 = vpop.xlane.xlu0 %2372
        %v2374 = vmul.f32 %v2373, %v1286
        %v2375 = vsub.f32 %v2370, %v2374
        %v2376 = vmul.f32 %v2375, %v2375
        %v2377 = vsel %vm1282, %v2376, 0.0
        %2378 = vadd.xlane.f32.xlu0 %v2377
        %v2379 = vpop.xlane.xlu0 %2378
        %v2380 = vmul.f32 %v2379, %v1286
        %v2381 = vadd.f32 %v2380, 1e-05
        %v2382 = vrsqrt.pop %v2381
        %v2383 = vmul.f32 %v2375, %v2382
        %v2385 = vlaneseq
        %v2386 = vshrl.u32 %v2385, 7
        %v2387 = vsub.s32 0, %v2386
        %v2388 = vrot.slane %v2204, %v2387
        %v2390 = vmul.f32 %v2383, %v2388
        %v2392 = vlaneseq
        %v2393 = vshrl.u32 %v2392, 7
        %v2394 = vsub.s32 0, %v2393
        %v2395 = vrot.slane %v2205, %v2394
        %v2397 = vadd.f32 %v2390, %v2395
        %s2398 = scalar_lea.vmem %s13, 32
        %v2399 = vld [vmem:[%s2398] sm:$0xff]
        %v2400 = vld [vmem:[%s2398 + $0x8] sm:$0xff]
        %v2401 = vld [vmem:[%s2398 + $0x10] sm:$0xff]
        %v2402 = vld [vmem:[%s2398 + $0x18] sm:$0xff]
        %s2403 = scalar_lea.vmem %s15, 1
        %v2404 = vld [vmem:[%s2403] sm:$0x1]
        %s2405 = scalar_lea.vmem %s17, 32
        %v2406 = vld [vmem:[%s2405] sm:$0xff]
        %v2407 = vld [vmem:[%s2405 + $0x8] sm:$0xff]
        %v2408 = vld [vmem:[%s2405 + $0x10] sm:$0xff]
        %v2409 = vld [vmem:[%s2405 + $0x18] sm:$0xff]
        %s2410 = scalar_lea.vmem %s19, 1
        %v2411 = vld [vmem:[%s2410] sm:$0x1]
        %s2412 = scalar_lea.vmem %s21, 1
        %v2413 = vld [vmem:[%s2412] sm:$0x1]
        %s2414 = scalar_lea.vmem %s23, 1
        %v2415 = vld [vmem:[%s2414] sm:$0x1]
        %v2417 = vlaneseq
        %v2418 = vshrl.u32 %v2417, 7
        %v2419 = vsub.s32 0, %v2418
        %v2420 = vrot.slane %v2404, %v2419
        %v2423 = vsel %vm1282, %v2397, 0
        %2425 = vmatprep.subr.mxu0 0.0
        %2426 = vmatpush1.msra.mxu0 %v2399
        %2427 = vmatprep.subr.mxu0 0.0
        %2428 = vmatpush1.msra.mxu0 %v2400
        %2429 = vmatprep.subr.mxu0 0.0
        %2430 = vmatpush1.msra.mxu0 %v2401
        %2431 = vmatprep.subr.mxu0 0.0
        %2432 = vmatpush1.msra.mxu0 %v2402
        %2433 = vmatprep.subr.mxu0 0.0
        %2434 = vmatpush1.msra.mxu0 0.0
        %2435 = vmatprep.subr.mxu0 0.0
        %2436 = vmatpush1.msra.mxu0 0.0
        %2437 = vmatprep.subr.mxu0 0.0
        %2438 = vmatpush1.msra.mxu0 0.0
        %2439 = vmatprep.subr.mxu0 0.0
        %2440 = vmatpush1.msra.mxu0 0.0
        %2441 = vmatprep.subr.mxu0 0.0
        %2442 = vmatpush1.msra.mxu0 0.0
        %2443 = vmatprep.subr.mxu0 0.0
        %2444 = vmatpush1.msra.mxu0 0.0
        %2445 = vmatprep.subr.mxu0 0.0
        %2446 = vmatpush1.msra.mxu0 0.0
        %2447 = vmatprep.subr.mxu0 0.0
        %2448 = vmatpush1.msra.mxu0 0.0
        %2449 = vmatprep.subr.mxu0 0.0
        %2450 = vmatpush1.msra.mxu0 0.0
        %2451 = vmatprep.subr.mxu0 0.0
        %2452 = vmatpush1.msra.mxu0 0.0
        %2453 = vmatprep.subr.mxu0 0.0
        %2454 = vmatpush1.msra.mxu0 0.0
        %2455 = vmatprep.subr.mxu0 0.0
        %2456 = vmatpush1.msra.mxu0 0.0
        %2457 = vmatprep.subr.mxu0 0.0
        %2458 = vmatpush1.msra.mxu0 0.0
        %2459 = vmatprep.subr.mxu0 0.0
        %2460 = vmatpush1.msra.mxu0 0.0
        %2461 = vmatprep.subr.mxu0 0.0
        %2462 = vmatpush1.msra.mxu0 0.0
        %2463 = vmatprep.subr.mxu0 0.0
        %2464 = vmatpush1.msra.mxu0 0.0
        %2465 = vmatprep.subr.mxu0 0.0
        %2466 = vmatpush1.msra.mxu0 0.0
        %2467 = vmatprep.subr.mxu0 0.0
        %2468 = vmatpush1.msra.mxu0 0.0
        %2469 = vmatprep.subr.mxu0 0.0
        %2470 = vmatpush1.msra.mxu0 0.0
        %2471 = vmatprep.subr.mxu0 0.0
        %2472 = vmatpush1.msra.mxu0 0.0
        %2473 = vmatprep.subr.mxu0 0.0
        %2474 = vmatpush1.msra.mxu0 0.0
        %2475 = vmatprep.subr.mxu0 0.0
        %2476 = vmatpush1.msra.mxu0 0.0
        %2477 = vmatprep.subr.mxu0 0.0
        %2478 = vmatpush1.msra.mxu0 0.0
        %2479 = vmatprep.subr.mxu0 0.0
        %2480 = vmatpush1.msra.mxu0 0.0
        %2481 = vmatprep.subr.mxu0 0.0
        %2482 = vmatpush1.msra.mxu0 0.0
        %2483 = vmatprep.subr.mxu0 0.0
        %2484 = vmatpush1.msra.mxu0 0.0
        %2485 = vmatprep.subr.mxu0 0.0
        %2486 = vmatpush1.msra.mxu0 0.0
        %2487 = vmatprep.subr.mxu0 0.0
        %2488 = vmatpush1.msra.mxu0 0.0
        %2489 = vmatprep.mubr.f32.mxu0 0.0
        %2490 = vmatmul.mubr.f32.gmra.mrb[0].mxu0 %v2423
        %v2491 = vpop.f32.mrb[0].mxu0
        %v2492 = vadd.f32 %v2420, %v2491
        %v2493 = vpop.f32.mrb[0].mxu0
        %2494 = vdwg.mxu0
        %2496 = vrot.lane.b32.xlu0 %v2492, 96
        %v2497 = vpop.permute.xlu0 %2496
        %v2498 = vsel %vm1405, %v2492, 0
        %v2500 = vsel %vm1405, %v2497, 0
        %2502 = vmatprep.subr.mxu0 0.0
        %2503 = vmatpush1.xpose.msra.mxu0 %v2500
        %2504 = vmatprep.subr.mxu0 0.0
        %2505 = vmatpush1.xpose.msra.mxu0 0.0
        %2506 = vmatprep.subr.mxu0 0.0
        %2507 = vmatpush1.xpose.msra.mxu0 0.0
        %2508 = vmatprep.subr.mxu0 0.0
        %2509 = vmatpush1.xpose.msra.mxu0 0.0
        %2510 = vmatprep.subr.mxu0 0.0
        %2511 = vmatpush1.xpose.msra.mxu0 0.0
        %2512 = vmatprep.subr.mxu0 0.0
        %2513 = vmatpush1.xpose.msra.mxu0 0.0
        %2514 = vmatprep.subr.mxu0 0.0
        %2515 = vmatpush1.xpose.msra.mxu0 0.0
        %2516 = vmatprep.subr.mxu0 0.0
        %2517 = vmatpush1.xpose.msra.mxu0 0.0
        %2518 = vmatprep.subr.mxu0 0.0
        %2519 = vmatpush1.xpose.msra.mxu0 0.0
        %2520 = vmatprep.subr.mxu0 0.0
        %2521 = vmatpush1.xpose.msra.mxu0 0.0
        %2522 = vmatprep.subr.mxu0 0.0
        %2523 = vmatpush1.xpose.msra.mxu0 0.0
        %2524 = vmatprep.subr.mxu0 0.0
        %2525 = vmatpush1.xpose.msra.mxu0 0.0
        %2526 = vmatprep.subr.mxu0 0.0
        %2527 = vmatpush1.xpose.msra.mxu0 0.0
        %2528 = vmatprep.subr.mxu0 0.0
        %2529 = vmatpush1.xpose.msra.mxu0 0.0
        %2530 = vmatprep.subr.mxu0 0.0
        %2531 = vmatpush1.xpose.msra.mxu0 0.0
        %2532 = vmatprep.subr.mxu0 0.0
        %2533 = vmatpush1.xpose.msra.mxu0 0.0
        %2534 = vmatprep.subr.mxu0 0.0
        %2535 = vmatpush1.xpose.msra.mxu0 0.0
        %2536 = vmatprep.subr.mxu0 0.0
        %2537 = vmatpush1.xpose.msra.mxu0 0.0
        %2538 = vmatprep.subr.mxu0 0.0
        %2539 = vmatpush1.xpose.msra.mxu0 0.0
        %2540 = vmatprep.subr.mxu0 0.0
        %2541 = vmatpush1.xpose.msra.mxu0 0.0
        %2542 = vmatprep.subr.mxu0 0.0
        %2543 = vmatpush1.xpose.msra.mxu0 0.0
        %2544 = vmatprep.subr.mxu0 0.0
        %2545 = vmatpush1.xpose.msra.mxu0 0.0
        %2546 = vmatprep.subr.mxu0 0.0
        %2547 = vmatpush1.xpose.msra.mxu0 0.0
        %2548 = vmatprep.subr.mxu0 0.0
        %2549 = vmatpush1.xpose.msra.mxu0 0.0
        %2550 = vmatprep.subr.mxu0 0.0
        %2551 = vmatpush1.xpose.msra.mxu0 0.0
        %2552 = vmatprep.subr.mxu0 0.0
        %2553 = vmatpush1.xpose.msra.mxu0 0.0
        %2554 = vmatprep.subr.mxu0 0.0
        %2555 = vmatpush1.xpose.msra.mxu0 0.0
        %2556 = vmatprep.subr.mxu0 0.0
        %2557 = vmatpush1.xpose.msra.mxu0 0.0
        %2558 = vmatprep.subr.mxu0 0.0
        %2559 = vmatpush1.xpose.msra.mxu0 0.0
        %2560 = vmatprep.subr.mxu0 0.0
        %2561 = vmatpush1.xpose.msra.mxu0 0.0
        %2562 = vmatprep.subr.mxu0 0.0
        %2563 = vmatpush1.xpose.msra.mxu0 0.0
        %2564 = vmatprep.subr.mxu0 0.0
        %2565 = vmatpush1.xpose.msra.mxu0 0.0
        %2566 = vmatprep.mubr.f32.mxu0 0.0
        %2567 = vmatmul.mubr.f32.gmra.mrb[0].mxu0 %v2498
        %v2568 = vpop.f32.mrb[0].mxu0
        %v2569 = vadd.f32 0.0, %v2568
        %v2570 = vpop.f32.mrb[0].mxu0
        %2571 = vdwg.mxu0
        %v2572 = vmul.f32 %v2569, 0.35355338
        %v2573 = vsel %vm1405, %v2572, -inf
        %2574 = vmax.xlane.f32.xlu0 %v2573
        %v2575 = vpop.xlane.xlu0 %2574
        %v2576 = vsub.f32 %v2572, %v2575
        %v2577 = vmul.f32 %v2576, 1.442695
        %v2578 = vpow.pop %v2577
        %v2579 = vsel %vm1405, %v2578, 0.0
        %2580 = vadd.xlane.f32.xlu0 %v2579
        %v2581 = vpop.xlane.xlu0 %2580
        %v2582 = vrcp.pop %v2581
        %v2583 = vmul.f32 %v2578, %v2582
        %2584 = vrot.lane.b32.xlu0 %v2492, 64
        %v2585 = vpop.permute.xlu0 %2584
        %v2588 = vsel %vm1405, %v2583, 0
        %2590 = vmatprep.subr.mxu0 0.0
        %2591 = vmatpush1.msra.mxu0 %v2585
        %2592 = vmatprep.subr.mxu0 0.0
        %2593 = vmatpush1.msra.mxu0 0.0
        %2594 = vmatprep.subr.mxu0 0.0
        %2595 = vmatpush1.msra.mxu0 0.0
        %2596 = vmatprep.subr.mxu0 0.0
        %2597 = vmatpush1.msra.mxu0 0.0
        %2598 = vmatprep.subr.mxu0 0.0
        %2599 = vmatpush1.msra.mxu0 0.0
        %2600 = vmatprep.subr.mxu0 0.0
        %2601 = vmatpush1.msra.mxu0 0.0
        %2602 = vmatprep.subr.mxu0 0.0
        %2603 = vmatpush1.msra.mxu0 0.0
        %2604 = vmatprep.subr.mxu0 0.0
        %2605 = vmatpush1.msra.mxu0 0.0
        %2606 = vmatprep.subr.mxu0 0.0
        %2607 = vmatpush1.msra.mxu0 0.0
        %2608 = vmatprep.subr.mxu0 0.0
        %2609 = vmatpush1.msra.mxu0 0.0
        %2610 = vmatprep.subr.mxu0 0.0
        %2611 = vmatpush1.msra.mxu0 0.0
        %2612 = vmatprep.subr.mxu0 0.0
        %2613 = vmatpush1.msra.mxu0 0.0
        %2614 = vmatprep.subr.mxu0 0.0
        %2615 = vmatpush1.msra.mxu0 0.0
        %2616 = vmatprep.subr.mxu0 0.0
        %2617 = vmatpush1.msra.mxu0 0.0
        %2618 = vmatprep.subr.mxu0 0.0
        %2619 = vmatpush1.msra.mxu0 0.0
        %2620 = vmatprep.subr.mxu0 0.0
        %2621 = vmatpush1.msra.mxu0 0.0
        %2622 = vmatprep.subr.mxu0 0.0
        %2623 = vmatpush1.msra.mxu0 0.0
        %2624 = vmatprep.subr.mxu0 0.0
        %2625 = vmatpush1.msra.mxu0 0.0
        %2626 = vmatprep.subr.mxu0 0.0
        %2627 = vmatpush1.msra.mxu0 0.0
        %2628 = vmatprep.subr.mxu0 0.0
        %2629 = vmatpush1.msra.mxu0 0.0
        %2630 = vmatprep.subr.mxu0 0.0
        %2631 = vmatpush1.msra.mxu0 0.0
        %2632 = vmatprep.subr.mxu0 0.0
        %2633 = vmatpush1.msra.mxu0 0.0
        %2634 = vmatprep.subr.mxu0 0.0
        %2635 = vmatpush1.msra.mxu0 0.0
        %2636 = vmatprep.subr.mxu0 0.0
        %2637 = vmatpush1.msra.mxu0 0.0
        %2638 = vmatprep.subr.mxu0 0.0
        %2639 = vmatpush1.msra.mxu0 0.0
        %2640 = vmatprep.subr.mxu0 0.0
        %2641 = vmatpush1.msra.mxu0 0.0
        %2642 = vmatprep.subr.mxu0 0.0
        %2643 = vmatpush1.msra.mxu0 0.0
        %2644 = vmatprep.subr.mxu0 0.0
        %2645 = vmatpush1.msra.mxu0 0.0
        %2646 = vmatprep.subr.mxu0 0.0
        %2647 = vmatpush1.msra.mxu0 0.0
        %2648 = vmatprep.subr.mxu0 0.0
        %2649 = vmatpush1.msra.mxu0 0.0
        %2650 = vmatprep.subr.mxu0 0.0
        %2651 = vmatpush1.msra.mxu0 0.0
        %2652 = vmatprep.subr.mxu0 0.0
        %2653 = vmatpush1.msra.mxu0 0.0
        %2654 = vmatprep.mubr.f32.mxu0 0.0
        %2655 = vmatmul.mubr.f32.gmra.mrb[0].mxu0 %v2588
        %v2656 = vpop.f32.mrb[0].mxu0
        %v2657 = vadd.f32 0.0, %v2656
        %v2658 = vpop.f32.mrb[0].mxu0
        %2659 = vdwg.mxu0
        %2660 = vrot.lane.b32.xlu0 %v2492, 120
        %v2661 = vpop.permute.xlu0 %2660
        %2662 = vrot.lane.b32.xlu0 %v2492, 88
        %v2663 = vpop.permute.xlu0 %2662
        %v2664 = vsel %vm1405, %v2661, 0
        %v2666 = vsel %vm1405, %v2663, 0
        %2668 = vmatprep.subr.mxu0 0.0
        %2669 = vmatpush1.xpose.msra.mxu0 %v2666
        %2670 = vmatprep.subr.mxu0 0.0
        %2671 = vmatpush1.xpose.msra.mxu0 0.0
        %2672 = vmatprep.subr.mxu0 0.0
        %2673 = vmatpush1.xpose.msra.mxu0 0.0
        %2674 = vmatprep.subr.mxu0 0.0
        %2675 = vmatpush1.xpose.msra.mxu0 0.0
        %2676 = vmatprep.subr.mxu0 0.0
        %2677 = vmatpush1.xpose.msra.mxu0 0.0
        %2678 = vmatprep.subr.mxu0 0.0
        %2679 = vmatpush1.xpose.msra.mxu0 0.0
        %2680 = vmatprep.subr.mxu0 0.0
        %2681 = vmatpush1.xpose.msra.mxu0 0.0
        %2682 = vmatprep.subr.mxu0 0.0
        %2683 = vmatpush1.xpose.msra.mxu0 0.0
        %2684 = vmatprep.subr.mxu0 0.0
        %2685 = vmatpush1.xpose.msra.mxu0 0.0
        %2686 = vmatprep.subr.mxu0 0.0
        %2687 = vmatpush1.xpose.msra.mxu0 0.0
        %2688 = vmatprep.subr.mxu0 0.0
        %2689 = vmatpush1.xpose.msra.mxu0 0.0
        %2690 = vmatprep.subr.mxu0 0.0
        %2691 = vmatpush1.xpose.msra.mxu0 0.0
        %2692 = vmatprep.subr.mxu0 0.0
        %2693 = vmatpush1.xpose.msra.mxu0 0.0
        %2694 = vmatprep.subr.mxu0 0.0
        %2695 = vmatpush1.xpose.msra.mxu0 0.0
        %2696 = vmatprep.subr.mxu0 0.0
        %2697 = vmatpush1.xpose.msra.mxu0 0.0
        %2698 = vmatprep.subr.mxu0 0.0
        %2699 = vmatpush1.xpose.msra.mxu0 0.0
        %2700 = vmatprep.subr.mxu0 0.0
        %2701 = vmatpush1.xpose.msra.mxu0 0.0
        %2702 = vmatprep.subr.mxu0 0.0
        %2703 = vmatpush1.xpose.msra.mxu0 0.0
        %2704 = vmatprep.subr.mxu0 0.0
        %2705 = vmatpush1.xpose.msra.mxu0 0.0
        %2706 = vmatprep.subr.mxu0 0.0
        %2707 = vmatpush1.xpose.msra.mxu0 0.0
        %2708 = vmatprep.subr.mxu0 0.0
        %2709 = vmatpush1.xpose.msra.mxu0 0.0
        %2710 = vmatprep.subr.mxu0 0.0
        %2711 = vmatpush1.xpose.msra.mxu0 0.0
        %2712 = vmatprep.subr.mxu0 0.0
        %2713 = vmatpush1.xpose.msra.mxu0 0.0
        %2714 = vmatprep.subr.mxu0 0.0
        %2715 = vmatpush1.xpose.msra.mxu0 0.0
        %2716 = vmatprep.subr.mxu0 0.0
        %2717 = vmatpush1.xpose.msra.mxu0 0.0
        %2718 = vmatprep.subr.mxu0 0.0
        %2719 = vmatpush1.xpose.msra.mxu0 0.0
        %2720 = vmatprep.subr.mxu0 0.0
        %2721 = vmatpush1.xpose.msra.mxu0 0.0
        %2722 = vmatprep.subr.mxu0 0.0
        %2723 = vmatpush1.xpose.msra.mxu0 0.0
        %2724 = vmatprep.subr.mxu0 0.0
        %2725 = vmatpush1.xpose.msra.mxu0 0.0
        %2726 = vmatprep.subr.mxu0 0.0
        %2727 = vmatpush1.xpose.msra.mxu0 0.0
        %2728 = vmatprep.subr.mxu0 0.0
        %2729 = vmatpush1.xpose.msra.mxu0 0.0
        %2730 = vmatprep.subr.mxu0 0.0
        %2731 = vmatpush1.xpose.msra.mxu0 0.0
        %2732 = vmatprep.mubr.f32.mxu0 0.0
        %2733 = vmatmul.mubr.f32.gmra.mrb[0].mxu0 %v2664
        %v2734 = vpop.f32.mrb[0].mxu0
        %v2735 = vadd.f32 0.0, %v2734
        %v2736 = vpop.f32.mrb[0].mxu0
        %2737 = vdwg.mxu0
        %v2738 = vmul.f32 %v2735, 0.35355338
        %v2739 = vsel %vm1405, %v2738, -inf
        %2740 = vmax.xlane.f32.xlu0 %v2739
        %v2741 = vpop.xlane.xlu0 %2740
        %v2742 = vsub.f32 %v2738, %v2741
        %v2743 = vmul.f32 %v2742, 1.442695
        %v2744 = vpow.pop %v2743
        %v2745 = vsel %vm1405, %v2744, 0.0
        %2746 = vadd.xlane.f32.xlu0 %v2745
        %v2747 = vpop.xlane.xlu0 %2746
        %v2748 = vrcp.pop %v2747
        %v2749 = vmul.f32 %v2744, %v2748
        %2750 = vrot.lane.b32.xlu0 %v2492, 56
        %v2751 = vpop.permute.xlu0 %2750
        %v2754 = vsel %vm1405, %v2749, 0
        %2756 = vmatprep.subr.mxu0 0.0
        %2757 = vmatpush1.msra.mxu0 %v2751
        %2758 = vmatprep.subr.mxu0 0.0
        %2759 = vmatpush1.msra.mxu0 0.0
        %2760 = vmatprep.subr.mxu0 0.0
        %2761 = vmatpush1.msra.mxu0 0.0
        %2762 = vmatprep.subr.mxu0 0.0
        %2763 = vmatpush1.msra.mxu0 0.0
        %2764 = vmatprep.subr.mxu0 0.0
        %2765 = vmatpush1.msra.mxu0 0.0
        %2766 = vmatprep.subr.mxu0 0.0
        %2767 = vmatpush1.msra.mxu0 0.0
        %2768 = vmatprep.subr.mxu0 0.0
        %2769 = vmatpush1.msra.mxu0 0.0
        %2770 = vmatprep.subr.mxu0 0.0
        %2771 = vmatpush1.msra.mxu0 0.0
        %2772 = vmatprep.subr.mxu0 0.0
        %2773 = vmatpush1.msra.mxu0 0.0
        %2774 = vmatprep.subr.mxu0 0.0
        %2775 = vmatpush1.msra.mxu0 0.0
        %2776 = vmatprep.subr.mxu0 0.0
        %2777 = vmatpush1.msra.mxu0 0.0
        %2778 = vmatprep.subr.mxu0 0.0
        %2779 = vmatpush1.msra.mxu0 0.0
        %2780 = vmatprep.subr.mxu0 0.0
        %2781 = vmatpush1.msra.mxu0 0.0
        %2782 = vmatprep.subr.mxu0 0.0
        %2783 = vmatpush1.msra.mxu0 0.0
        %2784 = vmatprep.subr.mxu0 0.0
        %2785 = vmatpush1.msra.mxu0 0.0
        %2786 = vmatprep.subr.mxu0 0.0
        %2787 = vmatpush1.msra.mxu0 0.0
        %2788 = vmatprep.subr.mxu0 0.0
        %2789 = vmatpush1.msra.mxu0 0.0
        %2790 = vmatprep.subr.mxu0 0.0
        %2791 = vmatpush1.msra.mxu0 0.0
        %2792 = vmatprep.subr.mxu0 0.0
        %2793 = vmatpush1.msra.mxu0 0.0
        %2794 = vmatprep.subr.mxu0 0.0
        %2795 = vmatpush1.msra.mxu0 0.0
        %2796 = vmatprep.subr.mxu0 0.0
        %2797 = vmatpush1.msra.mxu0 0.0
        %2798 = vmatprep.subr.mxu0 0.0
        %2799 = vmatpush1.msra.mxu0 0.0
        %2800 = vmatprep.subr.mxu0 0.0
        %2801 = vmatpush1.msra.mxu0 0.0
        %2802 = vmatprep.subr.mxu0 0.0
        %2803 = vmatpush1.msra.mxu0 0.0
        %2804 = vmatprep.subr.mxu0 0.0
        %2805 = vmatpush1.msra.mxu0 0.0
        %2806 = vmatprep.subr.mxu0 0.0
        %2807 = vmatpush1.msra.mxu0 0.0
        %2808 = vmatprep.subr.mxu0 0.0
        %2809 = vmatpush1.msra.mxu0 0.0
        %2810 = vmatprep.subr.mxu0 0.0
        %2811 = vmatpush1.msra.mxu0 0.0
        %2812 = vmatprep.subr.mxu0 0.0
        %2813 = vmatpush1.msra.mxu0 0.0
        %2814 = vmatprep.subr.mxu0 0.0
        %2815 = vmatpush1.msra.mxu0 0.0
        %2816 = vmatprep.subr.mxu0 0.0
        %2817 = vmatpush1.msra.mxu0 0.0
        %2818 = vmatprep.subr.mxu0 0.0
        %2819 = vmatpush1.msra.mxu0 0.0
        %2820 = vmatprep.mubr.f32.mxu0 0.0
        %2821 = vmatmul.mubr.f32.gmra.mrb[0].mxu0 %v2754
        %v2822 = vpop.f32.mrb[0].mxu0
        %v2823 = vadd.f32 0.0, %v2822
        %v2824 = vpop.f32.mrb[0].mxu0
        %2825 = vdwg.mxu0
        %2826 = vrot.lane.b32.xlu0 %v2492, 112
        %v2827 = vpop.permute.xlu0 %2826
        %2828 = vrot.lane.b32.xlu0 %v2492, 80
        %v2829 = vpop.permute.xlu0 %2828
        %v2830 = vsel %vm1405, %v2827, 0
        %v2832 = vsel %vm1405, %v2829, 0
        %2834 = vmatprep.subr.mxu0 0.0
        %2835 = vmatpush1.xpose.msra.mxu0 %v2832
        %2836 = vmatprep.subr.mxu0 0.0
        %2837 = vmatpush1.xpose.msra.mxu0 0.0
        %2838 = vmatprep.subr.mxu0 0.0
        %2839 = vmatpush1.xpose.msra.mxu0 0.0
        %2840 = vmatprep.subr.mxu0 0.0
        %2841 = vmatpush1.xpose.msra.mxu0 0.0
        %2842 = vmatprep.subr.mxu0 0.0
        %2843 = vmatpush1.xpose.msra.mxu0 0.0
        %2844 = vmatprep.subr.mxu0 0.0
        %2845 = vmatpush1.xpose.msra.mxu0 0.0
        %2846 = vmatprep.subr.mxu0 0.0
        %2847 = vmatpush1.xpose.msra.mxu0 0.0
        %2848 = vmatprep.subr.mxu0 0.0
        %2849 = vmatpush1.xpose.msra.mxu0 0.0
        %2850 = vmatprep.subr.mxu0 0.0
        %2851 = vmatpush1.xpose.msra.mxu0 0.0
        %2852 = vmatprep.subr.mxu0 0.0
        %2853 = vmatpush1.xpose.msra.mxu0 0.0
        %2854 = vmatprep.subr.mxu0 0.0
        %2855 = vmatpush1.xpose.msra.mxu0 0.0
        %2856 = vmatprep.subr.mxu0 0.0
        %2857 = vmatpush1.xpose.msra.mxu0 0.0
        %2858 = vmatprep.subr.mxu0 0.0
        %2859 = vmatpush1.xpose.msra.mxu0 0.0
        %2860 = vmatprep.subr.mxu0 0.0
        %2861 = vmatpush1.xpose.msra.mxu0 0.0
        %2862 = vmatprep.subr.mxu0 0.0
        %2863 = vmatpush1.xpose.msra.mxu0 0.0
        %2864 = vmatprep.subr.mxu0 0.0
        %2865 = vmatpush1.xpose.msra.mxu0 0.0
        %2866 = vmatprep.subr.mxu0 0.0
        %2867 = vmatpush1.xpose.msra.mxu0 0.0
        %2868 = vmatprep.subr.mxu0 0.0
        %2869 = vmatpush1.xpose.msra.mxu0 0.0
        %2870 = vmatprep.subr.mxu0 0.0
        %2871 = vmatpush1.xpose.msra.mxu0 0.0
        %2872 = vmatprep.subr.mxu0 0.0
        %2873 = vmatpush1.xpose.msra.mxu0 0.0
        %2874 = vmatprep.subr.mxu0 0.0
        %2875 = vmatpush1.xpose.msra.mxu0 0.0
        %2876 = vmatprep.subr.mxu0 0.0
        %2877 = vmatpush1.xpose.msra.mxu0 0.0
        %2878 = vmatprep.subr.mxu0 0.0
        %2879 = vmatpush1.xpose.msra.mxu0 0.0
        %2880 = vmatprep.subr.mxu0 0.0
        %2881 = vmatpush1.xpose.msra.mxu0 0.0
        %2882 = vmatprep.subr.mxu0 0.0
        %2883 = vmatpush1.xpose.msra.mxu0 0.0
        %2884 = vmatprep.subr.mxu0 0.0
        %2885 = vmatpush1.xpose.msra.mxu0 0.0
        %2886 = vmatprep.subr.mxu0 0.0
        %2887 = vmatpush1.xpose.msra.mxu0 0.0
        %2888 = vmatprep.subr.mxu0 0.0
        %2889 = vmatpush1.xpose.msra.mxu0 0.0
        %2890 = vmatprep.subr.mxu0 0.0
        %2891 = vmatpush1.xpose.msra.mxu0 0.0
        %2892 = vmatprep.subr.mxu0 0.0
        %2893 = vmatpush1.xpose.msra.mxu0 0.0
        %2894 = vmatprep.subr.mxu0 0.0
        %2895 = vmatpush1.xpose.msra.mxu0 0.0
        %2896 = vmatprep.subr.mxu0 0.0
        %2897 = vmatpush1.xpose.msra.mxu0 0.0
        %2898 = vmatprep.mubr.f32.mxu0 0.0
        %2899 = vmatmul.mubr.f32.gmra.mrb[0].mxu0 %v2830
        %v2900 = vpop.f32.mrb[0].mxu0
        %v2901 = vadd.f32 0.0, %v2900
        %v2902 = vpop.f32.mrb[0].mxu0
        %2903 = vdwg.mxu0
        %v2904 = vmul.f32 %v2901, 0.35355338
        %v2905 = vsel %vm1405, %v2904, -inf
        %2906 = vmax.xlane.f32.xlu0 %v2905
        %v2907 = vpop.xlane.xlu0 %2906
        %v2908 = vsub.f32 %v2904, %v2907
        %v2909 = vmul.f32 %v2908, 1.442695
        %v2910 = vpow.pop %v2909
        %v2911 = vsel %vm1405, %v2910, 0.0
        %2912 = vadd.xlane.f32.xlu0 %v2911
        %v2913 = vpop.xlane.xlu0 %2912
        %v2914 = vrcp.pop %v2913
        %v2915 = vmul.f32 %v2910, %v2914
        %2916 = vrot.lane.b32.xlu0 %v2492, 48
        %v2917 = vpop.permute.xlu0 %2916
        %v2920 = vsel %vm1405, %v2915, 0
        %2922 = vmatprep.subr.mxu0 0.0
        %2923 = vmatpush1.msra.mxu0 %v2917
        %2924 = vmatprep.subr.mxu0 0.0
        %2925 = vmatpush1.msra.mxu0 0.0
        %2926 = vmatprep.subr.mxu0 0.0
        %2927 = vmatpush1.msra.mxu0 0.0
        %2928 = vmatprep.subr.mxu0 0.0
        %2929 = vmatpush1.msra.mxu0 0.0
        %2930 = vmatprep.subr.mxu0 0.0
        %2931 = vmatpush1.msra.mxu0 0.0
        %2932 = vmatprep.subr.mxu0 0.0
        %2933 = vmatpush1.msra.mxu0 0.0
        %2934 = vmatprep.subr.mxu0 0.0
        %2935 = vmatpush1.msra.mxu0 0.0
        %2936 = vmatprep.subr.mxu0 0.0
        %2937 = vmatpush1.msra.mxu0 0.0
        %2938 = vmatprep.subr.mxu0 0.0
        %2939 = vmatpush1.msra.mxu0 0.0
        %2940 = vmatprep.subr.mxu0 0.0
        %2941 = vmatpush1.msra.mxu0 0.0
        %2942 = vmatprep.subr.mxu0 0.0
        %2943 = vmatpush1.msra.mxu0 0.0
        %2944 = vmatprep.subr.mxu0 0.0
        %2945 = vmatpush1.msra.mxu0 0.0
        %2946 = vmatprep.subr.mxu0 0.0
        %2947 = vmatpush1.msra.mxu0 0.0
        %2948 = vmatprep.subr.mxu0 0.0
        %2949 = vmatpush1.msra.mxu0 0.0
        %2950 = vmatprep.subr.mxu0 0.0
        %2951 = vmatpush1.msra.mxu0 0.0
        %2952 = vmatprep.subr.mxu0 0.0
        %2953 = vmatpush1.msra.mxu0 0.0
        %2954 = vmatprep.subr.mxu0 0.0
        %2955 = vmatpush1.msra.mxu0 0.0
        %2956 = vmatprep.subr.mxu0 0.0
        %2957 = vmatpush1.msra.mxu0 0.0
        %2958 = vmatprep.subr.mxu0 0.0
        %2959 = vmatpush1.msra.mxu0 0.0
        %2960 = vmatprep.subr.mxu0 0.0
        %2961 = vmatpush1.msra.mxu0 0.0
        %2962 = vmatprep.subr.mxu0 0.0
        %2963 = vmatpush1.msra.mxu0 0.0
        %2964 = vmatprep.subr.mxu0 0.0
        %2965 = vmatpush1.msra.mxu0 0.0
        %2966 = vmatprep.subr.mxu0 0.0
        %2967 = vmatpush1.msra.mxu0 0.0
        %2968 = vmatprep.subr.mxu0 0.0
        %2969 = vmatpush1.msra.mxu0 0.0
        %2970 = vmatprep.subr.mxu0 0.0
        %2971 = vmatpush1.msra.mxu0 0.0
        %2972 = vmatprep.subr.mxu0 0.0
        %2973 = vmatpush1.msra.mxu0 0.0
        %2974 = vmatprep.subr.mxu0 0.0
        %2975 = vmatpush1.msra.mxu0 0.0
        %2976 = vmatprep.subr.mxu0 0.0
        %2977 = vmatpush1.msra.mxu0 0.0
        %2978 = vmatprep.subr.mxu0 0.0
        %2979 = vmatpush1.msra.mxu0 0.0
        %2980 = vmatprep.subr.mxu0 0.0
        %2981 = vmatpush1.msra.mxu0 0.0
        %2982 = vmatprep.subr.mxu0 0.0
        %2983 = vmatpush1.msra.mxu0 0.0
        %2984 = vmatprep.subr.mxu0 0.0
        %2985 = vmatpush1.msra.mxu0 0.0
        %2986 = vmatprep.mubr.f32.mxu0 0.0
        %2987 = vmatmul.mubr.f32.gmra.mrb[0].mxu0 %v2920
        %v2988 = vpop.f32.mrb[0].mxu0
        %v2989 = vadd.f32 0.0, %v2988
        %v2990 = vpop.f32.mrb[0].mxu0
        %2991 = vdwg.mxu0
        %2992 = vrot.lane.b32.xlu0 %v2492, 104
        %v2993 = vpop.permute.xlu0 %2992
        %2994 = vrot.lane.b32.xlu0 %v2492, 72
        %v2995 = vpop.permute.xlu0 %2994
        %v2996 = vsel %vm1405, %v2993, 0
        %v2998 = vsel %vm1405, %v2995, 0
        %3000 = vmatprep.subr.mxu0 0.0
        %3001 = vmatpush1.xpose.msra.mxu0 %v2998
        %3002 = vmatprep.subr.mxu0 0.0
        %3003 = vmatpush1.xpose.msra.mxu0 0.0
        %3004 = vmatprep.subr.mxu0 0.0
        %3005 = vmatpush1.xpose.msra.mxu0 0.0
        %3006 = vmatprep.subr.mxu0 0.0
        %3007 = vmatpush1.xpose.msra.mxu0 0.0
        %3008 = vmatprep.subr.mxu0 0.0
        %3009 = vmatpush1.xpose.msra.mxu0 0.0
        %3010 = vmatprep.subr.mxu0 0.0
        %3011 = vmatpush1.xpose.msra.mxu0 0.0
        %3012 = vmatprep.subr.mxu0 0.0
        %3013 = vmatpush1.xpose.msra.mxu0 0.0
        %3014 = vmatprep.subr.mxu0 0.0
        %3015 = vmatpush1.xpose.msra.mxu0 0.0
        %3016 = vmatprep.subr.mxu0 0.0
        %3017 = vmatpush1.xpose.msra.mxu0 0.0
        %3018 = vmatprep.subr.mxu0 0.0
        %3019 = vmatpush1.xpose.msra.mxu0 0.0
        %3020 = vmatprep.subr.mxu0 0.0
        %3021 = vmatpush1.xpose.msra.mxu0 0.0
        %3022 = vmatprep.subr.mxu0 0.0
        %3023 = vmatpush1.xpose.msra.mxu0 0.0
        %3024 = vmatprep.subr.mxu0 0.0
        %3025 = vmatpush1.xpose.msra.mxu0 0.0
        %3026 = vmatprep.subr.mxu0 0.0
        %3027 = vmatpush1.xpose.msra.mxu0 0.0
        %3028 = vmatprep.subr.mxu0 0.0
        %3029 = vmatpush1.xpose.msra.mxu0 0.0
        %3030 = vmatprep.subr.mxu0 0.0
        %3031 = vmatpush1.xpose.msra.mxu0 0.0
        %3032 = vmatprep.subr.mxu0 0.0
        %3033 = vmatpush1.xpose.msra.mxu0 0.0
        %3034 = vmatprep.subr.mxu0 0.0
        %3035 = vmatpush1.xpose.msra.mxu0 0.0
        %3036 = vmatprep.subr.mxu0 0.0
        %3037 = vmatpush1.xpose.msra.mxu0 0.0
        %3038 = vmatprep.subr.mxu0 0.0
        %3039 = vmatpush1.xpose.msra.mxu0 0.0
        %3040 = vmatprep.subr.mxu0 0.0
        %3041 = vmatpush1.xpose.msra.mxu0 0.0
        %3042 = vmatprep.subr.mxu0 0.0
        %3043 = vmatpush1.xpose.msra.mxu0 0.0
        %3044 = vmatprep.subr.mxu0 0.0
        %3045 = vmatpush1.xpose.msra.mxu0 0.0
        %3046 = vmatprep.subr.mxu0 0.0
        %3047 = vmatpush1.xpose.msra.mxu0 0.0
        %3048 = vmatprep.subr.mxu0 0.0
        %3049 = vmatpush1.xpose.msra.mxu0 0.0
        %3050 = vmatprep.subr.mxu0 0.0
        %3051 = vmatpush1.xpose.msra.mxu0 0.0
        %3052 = vmatprep.subr.mxu0 0.0
        %3053 = vmatpush1.xpose.msra.mxu0 0.0
        %3054 = vmatprep.subr.mxu0 0.0
        %3055 = vmatpush1.xpose.msra.mxu0 0.0
        %3056 = vmatprep.subr.mxu0 0.0
        %3057 = vmatpush1.xpose.msra.mxu0 0.0
        %3058 = vmatprep.subr.mxu0 0.0
        %3059 = vmatpush1.xpose.msra.mxu0 0.0
        %3060 = vmatprep.subr.mxu0 0.0
        %3061 = vmatpush1.xpose.msra.mxu0 0.0
        %3062 = vmatprep.subr.mxu0 0.0
        %3063 = vmatpush1.xpose.msra.mxu0 0.0
        %3064 = vmatprep.mubr.f32.mxu0 0.0
        %3065 = vmatmul.mubr.f32.gmra.mrb[0].mxu0 %v2996
        %v3066 = vpop.f32.mrb[0].mxu0
        %v3067 = vadd.f32 0.0, %v3066
        %v3068 = vpop.f32.mrb[0].mxu0
        %3069 = vdwg.mxu0
        %v3070 = vmul.f32 %v3067, 0.35355338
        %v3071 = vsel %vm1405, %v3070, -inf
        %3072 = vmax.xlane.f32.xlu0 %v3071
        %v3073 = vpop.xlane.xlu0 %3072
        %v3074 = vsub.f32 %v3070, %v3073
        %v3075 = vmul.f32 %v3074, 1.442695
        %v3076 = vpow.pop %v3075
        %v3077 = vsel %vm1405, %v3076, 0.0
        %3078 = vadd.xlane.f32.xlu0 %v3077
        %v3079 = vpop.xlane.xlu0 %3078
        %v3080 = vrcp.pop %v3079
        %v3081 = vmul.f32 %v3076, %v3080
        %3082 = vrot.lane.b32.xlu0 %v2492, 40
        %v3083 = vpop.permute.xlu0 %3082
        %v3086 = vsel %vm1405, %v3081, 0
        %3088 = vmatprep.subr.mxu0 0.0
        %3089 = vmatpush1.msra.mxu0 %v3083
        %3090 = vmatprep.subr.mxu0 0.0
        %3091 = vmatpush1.msra.mxu0 0.0
        %3092 = vmatprep.subr.mxu0 0.0
        %3093 = vmatpush1.msra.mxu0 0.0
        %3094 = vmatprep.subr.mxu0 0.0
        %3095 = vmatpush1.msra.mxu0 0.0
        %3096 = vmatprep.subr.mxu0 0.0
        %3097 = vmatpush1.msra.mxu0 0.0
        %3098 = vmatprep.subr.mxu0 0.0
        %3099 = vmatpush1.msra.mxu0 0.0
        %3100 = vmatprep.subr.mxu0 0.0
        %3101 = vmatpush1.msra.mxu0 0.0
        %3102 = vmatprep.subr.mxu0 0.0
        %3103 = vmatpush1.msra.mxu0 0.0
        %3104 = vmatprep.subr.mxu0 0.0
        %3105 = vmatpush1.msra.mxu0 0.0
        %3106 = vmatprep.subr.mxu0 0.0
        %3107 = vmatpush1.msra.mxu0 0.0
        %3108 = vmatprep.subr.mxu0 0.0
        %3109 = vmatpush1.msra.mxu0 0.0
        %3110 = vmatprep.subr.mxu0 0.0
        %3111 = vmatpush1.msra.mxu0 0.0
        %3112 = vmatprep.subr.mxu0 0.0
        %3113 = vmatpush1.msra.mxu0 0.0
        %3114 = vmatprep.subr.mxu0 0.0
        %3115 = vmatpush1.msra.mxu0 0.0
        %3116 = vmatprep.subr.mxu0 0.0
        %3117 = vmatpush1.msra.mxu0 0.0
        %3118 = vmatprep.subr.mxu0 0.0
        %3119 = vmatpush1.msra.mxu0 0.0
        %3120 = vmatprep.subr.mxu0 0.0
        %3121 = vmatpush1.msra.mxu0 0.0
        %3122 = vmatprep.subr.mxu0 0.0
        %3123 = vmatpush1.msra.mxu0 0.0
        %3124 = vmatprep.subr.mxu0 0.0
        %3125 = vmatpush1.msra.mxu0 0.0
        %3126 = vmatprep.subr.mxu0 0.0
        %3127 = vmatpush1.msra.mxu0 0.0
        %3128 = vmatprep.subr.mxu0 0.0
        %3129 = vmatpush1.msra.mxu0 0.0
        %3130 = vmatprep.subr.mxu0 0.0
        %3131 = vmatpush1.msra.mxu0 0.0
        %3132 = vmatprep.subr.mxu0 0.0
        %3133 = vmatpush1.msra.mxu0 0.0
        %3134 = vmatprep.subr.mxu0 0.0
        %3135 = vmatpush1.msra.mxu0 0.0
        %3136 = vmatprep.subr.mxu0 0.0
        %3137 = vmatpush1.msra.mxu0 0.0
        %3138 = vmatprep.subr.mxu0 0.0
        %3139 = vmatpush1.msra.mxu0 0.0
        %3140 = vmatprep.subr.mxu0 0.0
        %3141 = vmatpush1.msra.mxu0 0.0
        %3142 = vmatprep.subr.mxu0 0.0
        %3143 = vmatpush1.msra.mxu0 0.0
        %3144 = vmatprep.subr.mxu0 0.0
        %3145 = vmatpush1.msra.mxu0 0.0
        %3146 = vmatprep.subr.mxu0 0.0
        %3147 = vmatpush1.msra.mxu0 0.0
        %3148 = vmatprep.subr.mxu0 0.0
        %3149 = vmatpush1.msra.mxu0 0.0
        %3150 = vmatprep.subr.mxu0 0.0
        %3151 = vmatpush1.msra.mxu0 0.0
        %3152 = vmatprep.mubr.f32.mxu0 0.0
        %3153 = vmatmul.mubr.f32.gmra.mrb[0].mxu0 %v3086
        %v3154 = vpop.f32.mrb[0].mxu0
        %v3155 = vadd.f32 0.0, %v3154
        %v3156 = vpop.f32.mrb[0].mxu0
        %3157 = vdwg.mxu0
        %3159 = vrot.lane.b32.xlu0 %v2823, 8
        %v3160 = vpop.permute.xlu0 %3159
        %3163 = vrot.lane.b32.xlu0 %v2989, 16
        %v3164 = vpop.permute.xlu0 %3163
        %3167 = vrot.lane.b32.xlu0 %v3155, 24
        %v3168 = vpop.permute.xlu0 %3167
        %v3170 = vsel %vm1405, %v2657, %v3160
        %v3171 = vsel %vm2079, %v3170, %v3164
        %v3172 = vsel %vm2081, %v3171, %v3168
        %v3174 = vlaneseq
        %v3175 = vshrl.u32 %v3174, 7
        %v3176 = vsub.s32 0, %v3175
        %v3177 = vrot.slane %v2411, %v3176
        %v3180 = vsel %vm1282, %v3172, 0
        %3182 = vmatprep.subr.mxu0 0.0
        %3183 = vmatpush1.msra.mxu0 %v2406
        %3184 = vmatprep.subr.mxu0 0.0
        %3185 = vmatpush1.msra.mxu0 %v2407
        %3186 = vmatprep.subr.mxu0 0.0
        %3187 = vmatpush1.msra.mxu0 %v2408
        %3188 = vmatprep.subr.mxu0 0.0
        %3189 = vmatpush1.msra.mxu0 %v2409
        %3190 = vmatprep.subr.mxu0 0.0
        %3191 = vmatpush1.msra.mxu0 0.0
        %3192 = vmatprep.subr.mxu0 0.0
        %3193 = vmatpush1.msra.mxu0 0.0
        %3194 = vmatprep.subr.mxu0 0.0
        %3195 = vmatpush1.msra.mxu0 0.0
        %3196 = vmatprep.subr.mxu0 0.0
        %3197 = vmatpush1.msra.mxu0 0.0
        %3198 = vmatprep.subr.mxu0 0.0
        %3199 = vmatpush1.msra.mxu0 0.0
        %3200 = vmatprep.subr.mxu0 0.0
        %3201 = vmatpush1.msra.mxu0 0.0
        %3202 = vmatprep.subr.mxu0 0.0
        %3203 = vmatpush1.msra.mxu0 0.0
        %3204 = vmatprep.subr.mxu0 0.0
        %3205 = vmatpush1.msra.mxu0 0.0
        %3206 = vmatprep.subr.mxu0 0.0
        %3207 = vmatpush1.msra.mxu0 0.0
        %3208 = vmatprep.subr.mxu0 0.0
        %3209 = vmatpush1.msra.mxu0 0.0
        %3210 = vmatprep.subr.mxu0 0.0
        %3211 = vmatpush1.msra.mxu0 0.0
        %3212 = vmatprep.subr.mxu0 0.0
        %3213 = vmatpush1.msra.mxu0 0.0
        %3214 = vmatprep.subr.mxu0 0.0
        %3215 = vmatpush1.msra.mxu0 0.0
        %3216 = vmatprep.subr.mxu0 0.0
        %3217 = vmatpush1.msra.mxu0 0.0
        %3218 = vmatprep.subr.mxu0 0.0
        %3219 = vmatpush1.msra.mxu0 0.0
        %3220 = vmatprep.subr.mxu0 0.0
        %3221 = vmatpush1.msra.mxu0 0.0
        %3222 = vmatprep.subr.mxu0 0.0
        %3223 = vmatpush1.msra.mxu0 0.0
        %3224 = vmatprep.subr.mxu0 0.0
        %3225 = vmatpush1.msra.mxu0 0.0
        %3226 = vmatprep.subr.mxu0 0.0
        %3227 = vmatpush1.msra.mxu0 0.0
        %3228 = vmatprep.subr.mxu0 0.0
        %3229 = vmatpush1.msra.mxu0 0.0
        %3230 = vmatprep.subr.mxu0 0.0
        %3231 = vmatpush1.msra.mxu0 0.0
        %3232 = vmatprep.subr.mxu0 0.0
        %3233 = vmatpush1.msra.mxu0 0.0
        %3234 = vmatprep.subr.mxu0 0.0
        %3235 = vmatpush1.msra.mxu0 0.0
        %3236 = vmatprep.subr.mxu0 0.0
        %3237 = vmatpush1.msra.mxu0 0.0
        %3238 = vmatprep.subr.mxu0 0.0
        %3239 = vmatpush1.msra.mxu0 0.0
        %3240 = vmatprep.subr.mxu0 0.0
        %3241 = vmatpush1.msra.mxu0 0.0
        %3242 = vmatprep.subr.mxu0 0.0
        %3243 = vmatpush1.msra.mxu0 0.0
        %3244 = vmatprep.subr.mxu0 0.0
        %3245 = vmatpush1.msra.mxu0 0.0
        %3246 = vmatprep.mubr.f32.mxu0 0.0
        %3247 = vmatmul.mubr.f32.gmra.mrb[0].mxu0 %v3180
        %v3248 = vpop.f32.mrb[0].mxu0
        %v3249 = vadd.f32 %v3177, %v3248
        %v3250 = vpop.f32.mrb[0].mxu0
        %3251 = vdwg.mxu0
        %v3252 = vadd.f32 %v2397, %v3249
        %v3253 = vsel %vm1282, %v3252, 0.0
        %3254 = vadd.xlane.f32.xlu0 %v3253
        %v3255 = vpop.xlane.xlu0 %3254
        %v3256 = vmul.f32 %v3255, %v1286
        %v3257 = vsub.f32 %v3252, %v3256
        %v3258 = vmul.f32 %v3257, %v3257
        %v3259 = vsel %vm1282, %v3258, 0.0
        %3260 = vadd.xlane.f32.xlu0 %v3259
        %v3261 = vpop.xlane.xlu0 %3260
        %v3262 = vmul.f32 %v3261, %v1286
        %v3263 = vadd.f32 %v3262, 1e-05
        %v3264 = vrsqrt.pop %v3263
        %v3265 = vmul.f32 %v3257, %v3264
        %v3267 = vlaneseq
        %v3268 = vshrl.u32 %v3267, 7
        %v3269 = vsub.s32 0, %v3268
        %v3270 = vrot.slane %v2413, %v3269
        %v3272 = vmul.f32 %v3265, %v3270
        %v3274 = vlaneseq
        %v3275 = vshrl.u32 %v3274, 7
        %v3276 = vsub.s32 0, %v3275
        %v3277 = vrot.slane %v2415, %v3276
        %v3279 = vadd.f32 %v3272, %v3277
        %s3280 = scalar_lea.vmem %s25, 32
        %v3281 = vld [vmem:[%s3280] sm:$0xff]
        %v3282 = vld [vmem:[%s3280 + $0x8] sm:$0xff]
        %v3283 = vld [vmem:[%s3280 + $0x10] sm:$0xff]
        %v3284 = vld [vmem:[%s3280 + $0x18] sm:$0xff]
        %s3285 = scalar_lea.vmem %s27, 1
        %v3286 = vld [vmem:[%s3285] sm:$0x1]
        %s3287 = scalar_lea.vmem %s29, 64
        %v3288 = vld [vmem:[%s3287] sm:$0xff]
        %v3289 = vld [vmem:[%s3287 + $0x8] sm:$0xff]
        %v3290 = vld [vmem:[%s3287 + $0x10] sm:$0xff]
        %v3291 = vld [vmem:[%s3287 + $0x18] sm:$0xff]
        %v3292 = vld [vmem:[%s3287 + $0x20] sm:$0xff]
        %v3293 = vld [vmem:[%s3287 + $0x28] sm:$0xff]
        %v3294 = vld [vmem:[%s3287 + $0x30] sm:$0xff]
        %v3295 = vld [vmem:[%s3287 + $0x38] sm:$0xff]
        %s3296 = scalar_lea.vmem %s31, 1
        %v3297 = vld [vmem:[%s3296] sm:$0x1]
        %s3298 = scalar_lea.vmem %s33, 1
        %v3299 = vld [vmem:[%s3298] sm:$0x1]
        %s3300 = scalar_lea.vmem %s35, 1
        %v3301 = vld [vmem:[%s3300] sm:$0x1]
        %v3303 = vlaneseq
        %v3304 = vshrl.u32 %v3303, 7
        %v3305 = vsub.s32 0, %v3304
        %v3306 = vrot.slane %v3286, %v3305
        %v3309 = vsel %vm1282, %v3279, 0
        %3311 = vmatprep.subr.mxu0 0.0
        %3312 = vmatpush1.msra.mxu0 %v3281
        %3313 = vmatprep.subr.mxu0 0.0
        %3314 = vmatpush1.msra.mxu0 %v3282
        %3315 = vmatprep.subr.mxu0 0.0
        %3316 = vmatpush1.msra.mxu0 %v3283
        %3317 = vmatprep.subr.mxu0 0.0
        %3318 = vmatpush1.msra.mxu0 %v3284
        %3319 = vmatprep.subr.mxu0 0.0
        %3320 = vmatpush1.msra.mxu0 0.0
        %3321 = vmatprep.subr.mxu0 0.0
        %3322 = vmatpush1.msra.mxu0 0.0
        %3323 = vmatprep.subr.mxu0 0.0
        %3324 = vmatpush1.msra.mxu0 0.0
        %3325 = vmatprep.subr.mxu0 0.0
        %3326 = vmatpush1.msra.mxu0 0.0
        %3327 = vmatprep.subr.mxu0 0.0
        %3328 = vmatpush1.msra.mxu0 0.0
        %3329 = vmatprep.subr.mxu0 0.0
        %3330 = vmatpush1.msra.mxu0 0.0
        %3331 = vmatprep.subr.mxu0 0.0
        %3332 = vmatpush1.msra.mxu0 0.0
        %3333 = vmatprep.subr.mxu0 0.0
        %3334 = vmatpush1.msra.mxu0 0.0
        %3335 = vmatprep.subr.mxu0 0.0
        %3336 = vmatpush1.msra.mxu0 0.0
        %3337 = vmatprep.subr.mxu0 0.0
        %3338 = vmatpush1.msra.mxu0 0.0
        %3339 = vmatprep.subr.mxu0 0.0
        %3340 = vmatpush1.msra.mxu0 0.0
        %3341 = vmatprep.subr.mxu0 0.0
        %3342 = vmatpush1.msra.mxu0 0.0
        %3343 = vmatprep.subr.mxu0 0.0
        %3344 = vmatpush1.msra.mxu0 0.0
        %3345 = vmatprep.subr.mxu0 0.0
        %3346 = vmatpush1.msra.mxu0 0.0
        %3347 = vmatprep.subr.mxu0 0.0
        %3348 = vmatpush1.msra.mxu0 0.0
        %3349 = vmatprep.subr.mxu0 0.0
        %3350 = vmatpush1.msra.mxu0 0.0
        %3351 = vmatprep.subr.mxu0 0.0
        %3352 = vmatpush1.msra.mxu0 0.0
        %3353 = vmatprep.subr.mxu0 0.0
        %3354 = vmatpush1.msra.mxu0 0.0
        %3355 = vmatprep.subr.mxu0 0.0
        %3356 = vmatpush1.msra.mxu0 0.0
        %3357 = vmatprep.subr.mxu0 0.0
        %3358 = vmatpush1.msra.mxu0 0.0
        %3359 = vmatprep.subr.mxu0 0.0
        %3360 = vmatpush1.msra.mxu0 0.0
        %3361 = vmatprep.subr.mxu0 0.0
        %3362 = vmatpush1.msra.mxu0 0.0
        %3363 = vmatprep.subr.mxu0 0.0
        %3364 = vmatpush1.msra.mxu0 0.0
        %3365 = vmatprep.subr.mxu0 0.0
        %3366 = vmatpush1.msra.mxu0 0.0
        %3367 = vmatprep.subr.mxu0 0.0
        %3368 = vmatpush1.msra.mxu0 0.0
        %3369 = vmatprep.subr.mxu0 0.0
        %3370 = vmatpush1.msra.mxu0 0.0
        %3371 = vmatprep.subr.mxu0 0.0
        %3372 = vmatpush1.msra.mxu0 0.0
        %3373 = vmatprep.subr.mxu0 0.0
        %3374 = vmatpush1.msra.mxu0 0.0
        %3375 = vmatprep.mubr.f32.mxu0 0.0
        %3376 = vmatmul.mubr.f32.gmra.mrb[0].mxu0 %v3309
        %v3377 = vpop.f32.mrb[0].mxu0
        %v3378 = vadd.f32 %v3306, %v3377
        %v3379 = vpop.f32.mrb[0].mxu0
        %3380 = vdwg.mxu0
        %v3381 = vmul.f32 %v3378, 0.5
        %v3382 = vmul.f32 %v3378, 0.70710677
        %v3383 = verf.f32.pop %v3382
        %v3384 = vadd.f32 %v3383, 1.0
        %v3385 = vmul.f32 %v3381, %v3384
        %v3387 = vlaneseq
        %v3388 = vshrl.u32 %v3387, 7
        %v3389 = vsub.s32 0, %v3388
        %v3390 = vrot.slane %v3297, %v3389
        %v3393 = vsel %vm2296, %v3385, 0
        %3395 = vmatprep.subr.mxu0 0.0
        %3396 = vmatpush1.msra.mxu0 %v3288
        %3397 = vmatprep.subr.mxu0 0.0
        %3398 = vmatpush1.msra.mxu0 %v3289
        %3399 = vmatprep.subr.mxu0 0.0
        %3400 = vmatpush1.msra.mxu0 %v3290
        %3401 = vmatprep.subr.mxu0 0.0
        %3402 = vmatpush1.msra.mxu0 %v3291
        %3403 = vmatprep.subr.mxu0 0.0
        %3404 = vmatpush1.msra.mxu0 %v3292
        %3405 = vmatprep.subr.mxu0 0.0
        %3406 = vmatpush1.msra.mxu0 %v3293
        %3407 = vmatprep.subr.mxu0 0.0
        %3408 = vmatpush1.msra.mxu0 %v3294
        %3409 = vmatprep.subr.mxu0 0.0
        %3410 = vmatpush1.msra.mxu0 %v3295
        %3411 = vmatprep.subr.mxu0 0.0
        %3412 = vmatpush1.msra.mxu0 0.0
        %3413 = vmatprep.subr.mxu0 0.0
        %3414 = vmatpush1.msra.mxu0 0.0
        %3415 = vmatprep.subr.mxu0 0.0
        %3416 = vmatpush1.msra.mxu0 0.0
        %3417 = vmatprep.subr.mxu0 0.0
        %3418 = vmatpush1.msra.mxu0 0.0
        %3419 = vmatprep.subr.mxu0 0.0
        %3420 = vmatpush1.msra.mxu0 0.0
        %3421 = vmatprep.subr.mxu0 0.0
        %3422 = vmatpush1.msra.mxu0 0.0
        %3423 = vmatprep.subr.mxu0 0.0
        %3424 = vmatpush1.msra.mxu0 0.0
        %3425 = vmatprep.subr.mxu0 0.0
        %3426 = vmatpush1.msra.mxu0 0.0
        %3427 = vmatprep.subr.mxu0 0.0
        %3428 = vmatpush1.msra.mxu0 0.0
        %3429 = vmatprep.subr.mxu0 0.0
        %3430 = vmatpush1.msra.mxu0 0.0
        %3431 = vmatprep.subr.mxu0 0.0
        %3432 = vmatpush1.msra.mxu0 0.0
        %3433 = vmatprep.subr.mxu0 0.0
        %3434 = vmatpush1.msra.mxu0 0.0
        %3435 = vmatprep.subr.mxu0 0.0
        %3436 = vmatpush1.msra.mxu0 0.0
        %3437 = vmatprep.subr.mxu0 0.0
        %3438 = vmatpush1.msra.mxu0 0.0
        %3439 = vmatprep.subr.mxu0 0.0
        %3440 = vmatpush1.msra.mxu0 0.0
        %3441 = vmatprep.subr.mxu0 0.0
        %3442 = vmatpush1.msra.mxu0 0.0
        %3443 = vmatprep.subr.mxu0 0.0
        %3444 = vmatpush1.msra.mxu0 0.0
        %3445 = vmatprep.subr.mxu0 0.0
        %3446 = vmatpush1.msra.mxu0 0.0
        %3447 = vmatprep.subr.mxu0 0.0
        %3448 = vmatpush1.msra.mxu0 0.0
        %3449 = vmatprep.subr.mxu0 0.0
        %3450 = vmatpush1.msra.mxu0 0.0
        %3451 = vmatprep.subr.mxu0 0.0
        %3452 = vmatpush1.msra.mxu0 0.0
        %3453 = vmatprep.subr.mxu0 0.0
        %3454 = vmatpush1.msra.mxu0 0.0
        %3455 = vmatprep.subr.mxu0 0.0
        %3456 = vmatpush1.msra.mxu0 0.0
        %3457 = vmatprep.subr.mxu0 0.0
        %3458 = vmatpush1.msra.mxu0 0.0
        %3459 = vmatprep.mubr.f32.mxu0 0.0
        %3460 = vmatmul.mubr.f32.gmra.mrb[0].mxu0 %v3393
        %v3461 = vpop.f32.mrb[0].mxu0
        %v3462 = vadd.f32 %v3390, %v3461
        %v3463 = vpop.f32.mrb[0].mxu0
        %3464 = vdwg.mxu0
        %v3465 = vadd.f32 %v3279, %v3462
        %v3466 = vsel %vm1282, %v3465, 0.0
        %3467 = vadd.xlane.f32.xlu0 %v3466
        %v3468 = vpop.xlane.xlu0 %3467
        %v3469 = vmul.f32 %v3468, %v1286
        %v3470 = vsub.f32 %v3465, %v3469
        %v3471 = vmul.f32 %v3470, %v3470
        %v3472 = vsel %vm1282, %v3471, 0.0
        %3473 = vadd.xlane.f32.xlu0 %v3472
        %v3474 = vpop.xlane.xlu0 %3473
        %v3475 = vmul.f32 %v3474, %v1286
        %v3476 = vadd.f32 %v3475, 1e-05
        %v3477 = vrsqrt.pop %v3476
        %v3478 = vmul.f32 %v3470, %v3477
        %v3480 = vlaneseq
        %v3481 = vshrl.u32 %v3480, 7
        %v3482 = vsub.s32 0, %v3481
        %v3483 = vrot.slane %v3299, %v3482
        %v3485 = vmul.f32 %v3478, %v3483
        %v3487 = vlaneseq
        %v3488 = vshrl.u32 %v3487, 7
        %v3489 = vsub.s32 0, %v3488
        %v3490 = vrot.slane %v3301, %v3489
        %v3492 = vadd.f32 %v3485, %v3490
        %3493 = vst.msk [vmem:[%s1263] sm:$0xff] %vm1282, %v3492
        %v3494 = vld [vmem:[%s1278] sm:$0xff]
        %v3495 = vld [vmem:[%s9] sm:$0x1]
        %v3496 = vld [vmem:[%s11] sm:$0x1]
        %v3497 = vsel %vm1282, %v3494, 0.0
        %3498 = vadd.xlane.f32.xlu0 %v3497
        %v3499 = vpop.xlane.xlu0 %3498
        %v3500 = vmul.f32 %v3499, %v1286
        %v3501 = vsub.f32 %v3494, %v3500
        %v3502 = vmul.f32 %v3501, %v3501
        %v3503 = vsel %vm1282, %v3502, 0.0
        %3504 = vadd.xlane.f32.xlu0 %v3503
        %v3505 = vpop.xlane.xlu0 %3504
        %v3506 = vmul.f32 %v3505, %v1286
        %v3507 = vadd.f32 %v3506, 1e-05
        %v3508 = vrsqrt.pop %v3507
        %v3509 = vmul.f32 %v3501, %v3508
        %v3511 = vlaneseq
        %v3512 = vshrl.u32 %v3511, 7
        %v3513 = vsub.s32 0, %v3512
        %v3514 = vrot.slane %v3495, %v3513
        %v3516 = vmul.f32 %v3509, %v3514
        %v3518 = vlaneseq
        %v3519 = vshrl.u32 %v3518, 7
        %v3520 = vsub.s32 0, %v3519
        %v3521 = vrot.slane %v3496, %v3520
        %v3523 = vadd.f32 %v3516, %v3521
        %v3524 = vld [vmem:[%s37] sm:$0xff]
        %v3525 = vld [vmem:[%s37 + $0x8] sm:$0xff]
        %v3526 = vld [vmem:[%s37 + $0x10] sm:$0xff]
        %v3527 = vld [vmem:[%s37 + $0x18] sm:$0xff]
        %v3528 = vld [vmem:[%s39] sm:$0x1]
        %v3529 = vld [vmem:[#allocation2] sm:$0xff]
        %v3530 = vld [vmem:[#allocation2 + $0x8] sm:$0xff]
        %v3531 = vld [vmem:[#allocation2 + $0x10] sm:$0xff]
        %v3532 = vld [vmem:[#allocation2 + $0x18] sm:$0xff]
        %v3533 = vld [vmem:[%s43] sm:$0x1]
        %v3534 = vld [vmem:[%s45] sm:$0x1]
        %v3535 = vld [vmem:[%s47] sm:$0x1]
        %v3537 = vlaneseq
        %v3538 = vshrl.u32 %v3537, 7
        %v3539 = vsub.s32 0, %v3538
        %v3540 = vrot.slane %v3528, %v3539
        %v3543 = vsel %vm1282, %v3523, 0
        %3545 = vmatprep.subr.mxu0 0.0
        %3546 = vmatpush1.msra.mxu0 %v3524
        %3547 = vmatprep.subr.mxu0 0.0
        %3548 = vmatpush1.msra.mxu0 %v3525
        %3549 = vmatprep.subr.mxu0 0.0
        %3550 = vmatpush1.msra.mxu0 %v3526
        %3551 = vmatprep.subr.mxu0 0.0
        %3552 = vmatpush1.msra.mxu0 %v3527
        %3553 = vmatprep.subr.mxu0 0.0
        %3554 = vmatpush1.msra.mxu0 0.0
        %3555 = vmatprep.subr.mxu0 0.0
        %3556 = vmatpush1.msra.mxu0 0.0
        %3557 = vmatprep.subr.mxu0 0.0
        %3558 = vmatpush1.msra.mxu0 0.0
        %3559 = vmatprep.subr.mxu0 0.0
        %3560 = vmatpush1.msra.mxu0 0.0
        %3561 = vmatprep.subr.mxu0 0.0
        %3562 = vmatpush1.msra.mxu0 0.0
        %3563 = vmatprep.subr.mxu0 0.0
        %3564 = vmatpush1.msra.mxu0 0.0
        %3565 = vmatprep.subr.mxu0 0.0
        %3566 = vmatpush1.msra.mxu0 0.0
        %3567 = vmatprep.subr.mxu0 0.0
        %3568 = vmatpush1.msra.mxu0 0.0
        %3569 = vmatprep.subr.mxu0 0.0
        %3570 = vmatpush1.msra.mxu0 0.0
        %3571 = vmatprep.subr.mxu0 0.0
        %3572 = vmatpush1.msra.mxu0 0.0
        %3573 = vmatprep.subr.mxu0 0.0
        %3574 = vmatpush1.msra.mxu0 0.0
        %3575 = vmatprep.subr.mxu0 0.0
        %3576 = vmatpush1.msra.mxu0 0.0
        %3577 = vmatprep.subr.mxu0 0.0
        %3578 = vmatpush1.msra.mxu0 0.0
        %3579 = vmatprep.subr.mxu0 0.0
        %3580 = vmatpush1.msra.mxu0 0.0
        %3581 = vmatprep.subr.mxu0 0.0
        %3582 = vmatpush1.msra.mxu0 0.0
        %3583 = vmatprep.subr.mxu0 0.0
        %3584 = vmatpush1.msra.mxu0 0.0
        %3585 = vmatprep.subr.mxu0 0.0
        %3586 = vmatpush1.msra.mxu0 0.0
        %3587 = vmatprep.subr.mxu0 0.0
        %3588 = vmatpush1.msra.mxu0 0.0
        %3589 = vmatprep.subr.mxu0 0.0
        %3590 = vmatpush1.msra.mxu0 0.0
        %3591 = vmatprep.subr.mxu0 0.0
        %3592 = vmatpush1.msra.mxu0 0.0
        %3593 = vmatprep.subr.mxu0 0.0
        %3594 = vmatpush1.msra.mxu0 0.0
        %3595 = vmatprep.subr.mxu0 0.0
        %3596 = vmatpush1.msra.mxu0 0.0
        %3597 = vmatprep.subr.mxu0 0.0
        %3598 = vmatpush1.msra.mxu0 0.0
        %3599 = vmatprep.subr.mxu0 0.0
        %3600 = vmatpush1.msra.mxu0 0.0
        %3601 = vmatprep.subr.mxu0 0.0
        %3602 = vmatpush1.msra.mxu0 0.0
        %3603 = vmatprep.subr.mxu0 0.0
        %3604 = vmatpush1.msra.mxu0 0.0
        %3605 = vmatprep.subr.mxu0 0.0
        %3606 = vmatpush1.msra.mxu0 0.0
        %3607 = vmatprep.subr.mxu0 0.0
        %3608 = vmatpush1.msra.mxu0 0.0
        %3609 = vmatprep.mubr.f32.mxu0 0.0
        %3610 = vmatmul.mubr.f32.gmra.mrb[0].mxu0 %v3543
        %v3611 = vpop.f32.mrb[0].mxu0
        %v3612 = vadd.f32 %v3540, %v3611
        %v3613 = vpop.f32.mrb[0].mxu0
        %3614 = vdwg.mxu0
        %v3615 = vlaneseq
        %v3616 = vshrl.u32 %v3615, 7
        %v3617 = vlaneseq
        %v3618 = vand.u32 %v3617, 127
        %vm3619 = vcmp.ge.s32.totalorder %v3616, %v3618
        %v3620 = vsel %vm3619, 0.0, -1e+09
        %3622 = vrot.lane.b32.xlu0 %v3612, 96
        %v3623 = vpop.permute.xlu0 %3622
        %v3624 = vsel %vm1405, %v3612, 0
        %v3626 = vsel %vm1405, %v3623, 0
        %3628 = vmatprep.subr.mxu0 0.0
        %3629 = vmatpush1.xpose.msra.mxu0 %v3626
        %3630 = vmatprep.subr.mxu0 0.0
        %3631 = vmatpush1.xpose.msra.mxu0 0.0
        %3632 = vmatprep.subr.mxu0 0.0
        %3633 = vmatpush1.xpose.msra.mxu0 0.0
        %3634 = vmatprep.subr.mxu0 0.0
        %3635 = vmatpush1.xpose.msra.mxu0 0.0
        %3636 = vmatprep.subr.mxu0 0.0
        %3637 = vmatpush1.xpose.msra.mxu0 0.0
        %3638 = vmatprep.subr.mxu0 0.0
        %3639 = vmatpush1.xpose.msra.mxu0 0.0
        %3640 = vmatprep.subr.mxu0 0.0
        %3641 = vmatpush1.xpose.msra.mxu0 0.0
        %3642 = vmatprep.subr.mxu0 0.0
        %3643 = vmatpush1.xpose.msra.mxu0 0.0
        %3644 = vmatprep.subr.mxu0 0.0
        %3645 = vmatpush1.xpose.msra.mxu0 0.0
        %3646 = vmatprep.subr.mxu0 0.0
        %3647 = vmatpush1.xpose.msra.mxu0 0.0
        %3648 = vmatprep.subr.mxu0 0.0
        %3649 = vmatpush1.xpose.msra.mxu0 0.0
        %3650 = vmatprep.subr.mxu0 0.0
        %3651 = vmatpush1.xpose.msra.mxu0 0.0
        %3652 = vmatprep.subr.mxu0 0.0
        %3653 = vmatpush1.xpose.msra.mxu0 0.0
        %3654 = vmatprep.subr.mxu0 0.0
        %3655 = vmatpush1.xpose.msra.mxu0 0.0
        %3656 = vmatprep.subr.mxu0 0.0
        %3657 = vmatpush1.xpose.msra.mxu0 0.0
        %3658 = vmatprep.subr.mxu0 0.0
        %3659 = vmatpush1.xpose.msra.mxu0 0.0
        %3660 = vmatprep.subr.mxu0 0.0
        %3661 = vmatpush1.xpose.msra.mxu0 0.0
        %3662 = vmatprep.subr.mxu0 0.0
        %3663 = vmatpush1.xpose.msra.mxu0 0.0
        %3664 = vmatprep.subr.mxu0 0.0
        %3665 = vmatpush1.xpose.msra.mxu0 0.0
        %3666 = vmatprep.subr.mxu0 0.0
        %3667 = vmatpush1.xpose.msra.mxu0 0.0
        %3668 = vmatprep.subr.mxu0 0.0
        %3669 = vmatpush1.xpose.msra.mxu0 0.0
        %3670 = vmatprep.subr.mxu0 0.0
        %3671 = vmatpush1.xpose.msra.mxu0 0.0
        %3672 = vmatprep.subr.mxu0 0.0
        %3673 = vmatpush1.xpose.msra.mxu0 0.0
        %3674 = vmatprep.subr.mxu0 0.0
        %3675 = vmatpush1.xpose.msra.mxu0 0.0
        %3676 = vmatprep.subr.mxu0 0.0
        %3677 = vmatpush1.xpose.msra.mxu0 0.0
        %3678 = vmatprep.subr.mxu0 0.0
        %3679 = vmatpush1.xpose.msra.mxu0 0.0
        %3680 = vmatprep.subr.mxu0 0.0
        %3681 = vmatpush1.xpose.msra.mxu0 0.0
        %3682 = vmatprep.subr.mxu0 0.0
        %3683 = vmatpush1.xpose.msra.mxu0 0.0
        %3684 = vmatprep.subr.mxu0 0.0
        %3685 = vmatpush1.xpose.msra.mxu0 0.0
        %3686 = vmatprep.subr.mxu0 0.0
        %3687 = vmatpush1.xpose.msra.mxu0 0.0
        %3688 = vmatprep.subr.mxu0 0.0
        %3689 = vmatpush1.xpose.msra.mxu0 0.0
        %3690 = vmatprep.subr.mxu0 0.0
        %3691 = vmatpush1.xpose.msra.mxu0 0.0
        %3692 = vmatprep.mubr.f32.mxu0 0.0
        %3693 = vmatmul.mubr.f32.gmra.mrb[0].mxu0 %v3624
        %v3694 = vpop.f32.mrb[0].mxu0
        %v3695 = vadd.f32 0.0, %v3694
        %v3696 = vpop.f32.mrb[0].mxu0
        %3697 = vdwg.mxu0
        %v3698 = vmul.f32 %v3695, 0.35355338
        %v3699 = vadd.f32 %v3698, %v3620
        %v3700 = vsel %vm1405, %v3699, -inf
        %3701 = vmax.xlane.f32.xlu0 %v3700
        %v3702 = vpop.xlane.xlu0 %3701
        %v3703 = vsub.f32 %v3699, %v3702
        %v3704 = vmul.f32 %v3703, 1.442695
        %v3705 = vpow.pop %v3704
        %v3706 = vsel %vm1405, %v3705, 0.0
        %3707 = vadd.xlane.f32.xlu0 %v3706
        %v3708 = vpop.xlane.xlu0 %3707
        %v3709 = vrcp.pop %v3708
        %v3710 = vmul.f32 %v3705, %v3709
        %3711 = vrot.lane.b32.xlu0 %v3612, 64
        %v3712 = vpop.permute.xlu0 %3711
        %v3715 = vsel %vm1405, %v3710, 0
        %3717 = vmatprep.subr.mxu0 0.0
        %3718 = vmatpush1.msra.mxu0 %v3712
        %3719 = vmatprep.subr.mxu0 0.0
        %3720 = vmatpush1.msra.mxu0 0.0
        %3721 = vmatprep.subr.mxu0 0.0
        %3722 = vmatpush1.msra.mxu0 0.0
        %3723 = vmatprep.subr.mxu0 0.0
        %3724 = vmatpush1.msra.mxu0 0.0
        %3725 = vmatprep.subr.mxu0 0.0
        %3726 = vmatpush1.msra.mxu0 0.0
        %3727 = vmatprep.subr.mxu0 0.0
        %3728 = vmatpush1.msra.mxu0 0.0
        %3729 = vmatprep.subr.mxu0 0.0
        %3730 = vmatpush1.msra.mxu0 0.0
        %3731 = vmatprep.subr.mxu0 0.0
        %3732 = vmatpush1.msra.mxu0 0.0
        %3733 = vmatprep.subr.mxu0 0.0
        %3734 = vmatpush1.msra.mxu0 0.0
        %3735 = vmatprep.subr.mxu0 0.0
        %3736 = vmatpush1.msra.mxu0 0.0
        %3737 = vmatprep.subr.mxu0 0.0
        %3738 = vmatpush1.msra.mxu0 0.0
        %3739 = vmatprep.subr.mxu0 0.0
        %3740 = vmatpush1.msra.mxu0 0.0
        %3741 = vmatprep.subr.mxu0 0.0
        %3742 = vmatpush1.msra.mxu0 0.0
        %3743 = vmatprep.subr.mxu0 0.0
        %3744 = vmatpush1.msra.mxu0 0.0
        %3745 = vmatprep.subr.mxu0 0.0
        %3746 = vmatpush1.msra.mxu0 0.0
        %3747 = vmatprep.subr.mxu0 0.0
        %3748 = vmatpush1.msra.mxu0 0.0
        %3749 = vmatprep.subr.mxu0 0.0
        %3750 = vmatpush1.msra.mxu0 0.0
        %3751 = vmatprep.subr.mxu0 0.0
        %3752 = vmatpush1.msra.mxu0 0.0
        %3753 = vmatprep.subr.mxu0 0.0
        %3754 = vmatpush1.msra.mxu0 0.0
        %3755 = vmatprep.subr.mxu0 0.0
        %3756 = vmatpush1.msra.mxu0 0.0
        %3757 = vmatprep.subr.mxu0 0.0
        %3758 = vmatpush1.msra.mxu0 0.0
        %3759 = vmatprep.subr.mxu0 0.0
        %3760 = vmatpush1.msra.mxu0 0.0
        %3761 = vmatprep.subr.mxu0 0.0
        %3762 = vmatpush1.msra.mxu0 0.0
        %3763 = vmatprep.subr.mxu0 0.0
        %3764 = vmatpush1.msra.mxu0 0.0
        %3765 = vmatprep.subr.mxu0 0.0
        %3766 = vmatpush1.msra.mxu0 0.0
        %3767 = vmatprep.subr.mxu0 0.0
        %3768 = vmatpush1.msra.mxu0 0.0
        %3769 = vmatprep.subr.mxu0 0.0
        %3770 = vmatpush1.msra.mxu0 0.0
        %3771 = vmatprep.subr.mxu0 0.0
        %3772 = vmatpush1.msra.mxu0 0.0
        %3773 = vmatprep.subr.mxu0 0.0
        %3774 = vmatpush1.msra.mxu0 0.0
        %3775 = vmatprep.subr.mxu0 0.0
        %3776 = vmatpush1.msra.mxu0 0.0
        %3777 = vmatprep.subr.mxu0 0.0
        %3778 = vmatpush1.msra.mxu0 0.0
        %3779 = vmatprep.subr.mxu0 0.0
        %3780 = vmatpush1.msra.mxu0 0.0
        %3781 = vmatprep.mubr.f32.mxu0 0.0
        %3782 = vmatmul.mubr.f32.gmra.mrb[0].mxu0 %v3715
        %v3783 = vpop.f32.mrb[0].mxu0
        %v3784 = vadd.f32 0.0, %v3783
        %v3785 = vpop.f32.mrb[0].mxu0
        %3786 = vdwg.mxu0
        %3787 = vrot.lane.b32.xlu0 %v3612, 120
        %v3788 = vpop.permute.xlu0 %3787
        %3789 = vrot.lane.b32.xlu0 %v3612, 88
        %v3790 = vpop.permute.xlu0 %3789
        %v3791 = vsel %vm1405, %v3788, 0
        %v3793 = vsel %vm1405, %v3790, 0
        %3795 = vmatprep.subr.mxu0 0.0
        %3796 = vmatpush1.xpose.msra.mxu0 %v3793
        %3797 = vmatprep.subr.mxu0 0.0
        %3798 = vmatpush1.xpose.msra.mxu0 0.0
        %3799 = vmatprep.subr.mxu0 0.0
        %3800 = vmatpush1.xpose.msra.mxu0 0.0
        %3801 = vmatprep.subr.mxu0 0.0
        %3802 = vmatpush1.xpose.msra.mxu0 0.0
        %3803 = vmatprep.subr.mxu0 0.0
        %3804 = vmatpush1.xpose.msra.mxu0 0.0
        %3805 = vmatprep.subr.mxu0 0.0
        %3806 = vmatpush1.xpose.msra.mxu0 0.0
        %3807 = vmatprep.subr.mxu0 0.0
        %3808 = vmatpush1.xpose.msra.mxu0 0.0
        %3809 = vmatprep.subr.mxu0 0.0
        %3810 = vmatpush1.xpose.msra.mxu0 0.0
        %3811 = vmatprep.subr.mxu0 0.0
        %3812 = vmatpush1.xpose.msra.mxu0 0.0
        %3813 = vmatprep.subr.mxu0 0.0
        %3814 = vmatpush1.xpose.msra.mxu0 0.0
        %3815 = vmatprep.subr.mxu0 0.0
        %3816 = vmatpush1.xpose.msra.mxu0 0.0
        %3817 = vmatprep.subr.mxu0 0.0
        %3818 = vmatpush1.xpose.msra.mxu0 0.0
        %3819 = vmatprep.subr.mxu0 0.0
        %3820 = vmatpush1.xpose.msra.mxu0 0.0
        %3821 = vmatprep.subr.mxu0 0.0
        %3822 = vmatpush1.xpose.msra.mxu0 0.0
        %3823 = vmatprep.subr.mxu0 0.0
        %3824 = vmatpush1.xpose.msra.mxu0 0.0
        %3825 = vmatprep.subr.mxu0 0.0
        %3826 = vmatpush1.xpose.msra.mxu0 0.0
        %3827 = vmatprep.subr.mxu0 0.0
        %3828 = vmatpush1.xpose.msra.mxu0 0.0
        %3829 = vmatprep.subr.mxu0 0.0
        %3830 = vmatpush1.xpose.msra.mxu0 0.0
        %3831 = vmatprep.subr.mxu0 0.0
        %3832 = vmatpush1.xpose.msra.mxu0 0.0
        %3833 = vmatprep.subr.mxu0 0.0
        %3834 = vmatpush1.xpose.msra.mxu0 0.0
        %3835 = vmatprep.subr.mxu0 0.0
        %3836 = vmatpush1.xpose.msra.mxu0 0.0
        %3837 = vmatprep.subr.mxu0 0.0
        %3838 = vmatpush1.xpose.msra.mxu0 0.0
        %3839 = vmatprep.subr.mxu0 0.0
        %3840 = vmatpush1.xpose.msra.mxu0 0.0
        %3841 = vmatprep.subr.mxu0 0.0
        %3842 = vmatpush1.xpose.msra.mxu0 0.0
        %3843 = vmatprep.subr.mxu0 0.0
        %3844 = vmatpush1.xpose.msra.mxu0 0.0
        %3845 = vmatprep.subr.mxu0 0.0
        %3846 = vmatpush1.xpose.msra.mxu0 0.0
        %3847 = vmatprep.subr.mxu0 0.0
        %3848 = vmatpush1.xpose.msra.mxu0 0.0
        %3849 = vmatprep.subr.mxu0 0.0
        %3850 = vmatpush1.xpose.msra.mxu0 0.0
        %3851 = vmatprep.subr.mxu0 0.0
        %3852 = vmatpush1.xpose.msra.mxu0 0.0
        %3853 = vmatprep.subr.mxu0 0.0
        %3854 = vmatpush1.xpose.msra.mxu0 0.0
        %3855 = vmatprep.subr.mxu0 0.0
        %3856 = vmatpush1.xpose.msra.mxu0 0.0
        %3857 = vmatprep.subr.mxu0 0.0
        %3858 = vmatpush1.xpose.msra.mxu0 0.0
        %3859 = vmatprep.mubr.f32.mxu0 0.0
        %3860 = vmatmul.mubr.f32.gmra.mrb[0].mxu0 %v3791
        %v3861 = vpop.f32.mrb[0].mxu0
        %v3862 = vadd.f32 0.0, %v3861
        %v3863 = vpop.f32.mrb[0].mxu0
        %3864 = vdwg.mxu0
        %v3865 = vmul.f32 %v3862, 0.35355338
        %v3866 = vadd.f32 %v3865, %v3620
        %v3867 = vsel %vm1405, %v3866, -inf
        %3868 = vmax.xlane.f32.xlu0 %v3867
        %v3869 = vpop.xlane.xlu0 %3868
        %v3870 = vsub.f32 %v3866, %v3869
        %v3871 = vmul.f32 %v3870, 1.442695
        %v3872 = vpow.pop %v3871
        %v3873 = vsel %vm1405, %v3872, 0.0
        %3874 = vadd.xlane.f32.xlu0 %v3873
        %v3875 = vpop.xlane.xlu0 %3874
        %v3876 = vrcp.pop %v3875
        %v3877 = vmul.f32 %v3872, %v3876
        %3878 = vrot.lane.b32.xlu0 %v3612, 56
        %v3879 = vpop.permute.xlu0 %3878
        %v3882 = vsel %vm1405, %v3877, 0
        %3884 = vmatprep.subr.mxu0 0.0
        %3885 = vmatpush1.msra.mxu0 %v3879
        %3886 = vmatprep.subr.mxu0 0.0
        %3887 = vmatpush1.msra.mxu0 0.0
        %3888 = vmatprep.subr.mxu0 0.0
        %3889 = vmatpush1.msra.mxu0 0.0
        %3890 = vmatprep.subr.mxu0 0.0
        %3891 = vmatpush1.msra.mxu0 0.0
        %3892 = vmatprep.subr.mxu0 0.0
        %3893 = vmatpush1.msra.mxu0 0.0
        %3894 = vmatprep.subr.mxu0 0.0
        %3895 = vmatpush1.msra.mxu0 0.0
        %3896 = vmatprep.subr.mxu0 0.0
        %3897 = vmatpush1.msra.mxu0 0.0
        %3898 = vmatprep.subr.mxu0 0.0
        %3899 = vmatpush1.msra.mxu0 0.0
        %3900 = vmatprep.subr.mxu0 0.0
        %3901 = vmatpush1.msra.mxu0 0.0
        %3902 = vmatprep.subr.mxu0 0.0
        %3903 = vmatpush1.msra.mxu0 0.0
        %3904 = vmatprep.subr.mxu0 0.0
        %3905 = vmatpush1.msra.mxu0 0.0
        %3906 = vmatprep.subr.mxu0 0.0
        %3907 = vmatpush1.msra.mxu0 0.0
        %3908 = vmatprep.subr.mxu0 0.0
        %3909 = vmatpush1.msra.mxu0 0.0
        %3910 = vmatprep.subr.mxu0 0.0
        %3911 = vmatpush1.msra.mxu0 0.0
        %3912 = vmatprep.subr.mxu0 0.0
        %3913 = vmatpush1.msra.mxu0 0.0
        %3914 = vmatprep.subr.mxu0 0.0
        %3915 = vmatpush1.msra.mxu0 0.0
        %3916 = vmatprep.subr.mxu0 0.0
        %3917 = vmatpush1.msra.mxu0 0.0
        %3918 = vmatprep.subr.mxu0 0.0
        %3919 = vmatpush1.msra.mxu0 0.0
        %3920 = vmatprep.subr.mxu0 0.0
        %3921 = vmatpush1.msra.mxu0 0.0
        %3922 = vmatprep.subr.mxu0 0.0
        %3923 = vmatpush1.msra.mxu0 0.0
        %3924 = vmatprep.subr.mxu0 0.0
        %3925 = vmatpush1.msra.mxu0 0.0
        %3926 = vmatprep.subr.mxu0 0.0
        %3927 = vmatpush1.msra.mxu0 0.0
        %3928 = vmatprep.subr.mxu0 0.0
        %3929 = vmatpush1.msra.mxu0 0.0
        %3930 = vmatprep.subr.mxu0 0.0
        %3931 = vmatpush1.msra.mxu0 0.0
        %3932 = vmatprep.subr.mxu0 0.0
        %3933 = vmatpush1.msra.mxu0 0.0
        %3934 = vmatprep.subr.mxu0 0.0
        %3935 = vmatpush1.msra.mxu0 0.0
        %3936 = vmatprep.subr.mxu0 0.0
        %3937 = vmatpush1.msra.mxu0 0.0
        %3938 = vmatprep.subr.mxu0 0.0
        %3939 = vmatpush1.msra.mxu0 0.0
        %3940 = vmatprep.subr.mxu0 0.0
        %3941 = vmatpush1.msra.mxu0 0.0
        %3942 = vmatprep.subr.mxu0 0.0
        %3943 = vmatpush1.msra.mxu0 0.0
        %3944 = vmatprep.subr.mxu0 0.0
        %3945 = vmatpush1.msra.mxu0 0.0
        %3946 = vmatprep.subr.mxu0 0.0
        %3947 = vmatpush1.msra.mxu0 0.0
        %3948 = vmatprep.mubr.f32.mxu0 0.0
        %3949 = vmatmul.mubr.f32.gmra.mrb[0].mxu0 %v3882
        %v3950 = vpop.f32.mrb[0].mxu0
        %v3951 = vadd.f32 0.0, %v3950
        %v3952 = vpop.f32.mrb[0].mxu0
        %3953 = vdwg.mxu0
        %3954 = vrot.lane.b32.xlu0 %v3612, 112
        %v3955 = vpop.permute.xlu0 %3954
        %3956 = vrot.lane.b32.xlu0 %v3612, 80
        %v3957 = vpop.permute.xlu0 %3956
        %v3958 = vsel %vm1405, %v3955, 0
        %v3960 = vsel %vm1405, %v3957, 0
        %3962 = vmatprep.subr.mxu0 0.0
        %3963 = vmatpush1.xpose.msra.mxu0 %v3960
        %3964 = vmatprep.subr.mxu0 0.0
        %3965 = vmatpush1.xpose.msra.mxu0 0.0
        %3966 = vmatprep.subr.mxu0 0.0
        %3967 = vmatpush1.xpose.msra.mxu0 0.0
        %3968 = vmatprep.subr.mxu0 0.0
        %3969 = vmatpush1.xpose.msra.mxu0 0.0
        %3970 = vmatprep.subr.mxu0 0.0
        %3971 = vmatpush1.xpose.msra.mxu0 0.0
        %3972 = vmatprep.subr.mxu0 0.0
        %3973 = vmatpush1.xpose.msra.mxu0 0.0
        %3974 = vmatprep.subr.mxu0 0.0
        %3975 = vmatpush1.xpose.msra.mxu0 0.0
        %3976 = vmatprep.subr.mxu0 0.0
        %3977 = vmatpush1.xpose.msra.mxu0 0.0
        %3978 = vmatprep.subr.mxu0 0.0
        %3979 = vmatpush1.xpose.msra.mxu0 0.0
        %3980 = vmatprep.subr.mxu0 0.0
        %3981 = vmatpush1.xpose.msra.mxu0 0.0
        %3982 = vmatprep.subr.mxu0 0.0
        %3983 = vmatpush1.xpose.msra.mxu0 0.0
        %3984 = vmatprep.subr.mxu0 0.0
        %3985 = vmatpush1.xpose.msra.mxu0 0.0
        %3986 = vmatprep.subr.mxu0 0.0
        %3987 = vmatpush1.xpose.msra.mxu0 0.0
        %3988 = vmatprep.subr.mxu0 0.0
        %3989 = vmatpush1.xpose.msra.mxu0 0.0
        %3990 = vmatprep.subr.mxu0 0.0
        %3991 = vmatpush1.xpose.msra.mxu0 0.0
        %3992 = vmatprep.subr.mxu0 0.0
        %3993 = vmatpush1.xpose.msra.mxu0 0.0
        %3994 = vmatprep.subr.mxu0 0.0
        %3995 = vmatpush1.xpose.msra.mxu0 0.0
        %3996 = vmatprep.subr.mxu0 0.0
        %3997 = vmatpush1.xpose.msra.mxu0 0.0
        %3998 = vmatprep.subr.mxu0 0.0
        %3999 = vmatpush1.xpose.msra.mxu0 0.0
        %4000 = vmatprep.subr.mxu0 0.0
        %4001 = vmatpush1.xpose.msra.mxu0 0.0
        %4002 = vmatprep.subr.mxu0 0.0
        %4003 = vmatpush1.xpose.msra.mxu0 0.0
        %4004 = vmatprep.subr.mxu0 0.0
        %4005 = vmatpush1.xpose.msra.mxu0 0.0
        %4006 = vmatprep.subr.mxu0 0.0
        %4007 = vmatpush1.xpose.msra.mxu0 0.0
        %4008 = vmatprep.subr.mxu0 0.0
        %4009 = vmatpush1.xpose.msra.mxu0 0.0
        %4010 = vmatprep.subr.mxu0 0.0
        %4011 = vmatpush1.xpose.msra.mxu0 0.0
        %4012 = vmatprep.subr.mxu0 0.0
        %4013 = vmatpush1.xpose.msra.mxu0 0.0
        %4014 = vmatprep.subr.mxu0 0.0
        %4015 = vmatpush1.xpose.msra.mxu0 0.0
        %4016 = vmatprep.subr.mxu0 0.0
        %4017 = vmatpush1.xpose.msra.mxu0 0.0
        %4018 = vmatprep.subr.mxu0 0.0
        %4019 = vmatpush1.xpose.msra.mxu0 0.0
        %4020 = vmatprep.subr.mxu0 0.0
        %4021 = vmatpush1.xpose.msra.mxu0 0.0
        %4022 = vmatprep.subr.mxu0 0.0
        %4023 = vmatpush1.xpose.msra.mxu0 0.0
        %4024 = vmatprep.subr.mxu0 0.0
        %4025 = vmatpush1.xpose.msra.mxu0 0.0
        %4026 = vmatprep.mubr.f32.mxu0 0.0
        %4027 = vmatmul.mubr.f32.gmra.mrb[0].mxu0 %v3958
        %v4028 = vpop.f32.mrb[0].mxu0
        %v4029 = vadd.f32 0.0, %v4028
        %v4030 = vpop.f32.mrb[0].mxu0
        %4031 = vdwg.mxu0
        %v4032 = vmul.f32 %v4029, 0.35355338
        %v4033 = vadd.f32 %v4032, %v3620
        %v4034 = vsel %vm1405, %v4033, -inf
        %4035 = vmax.xlane.f32.xlu0 %v4034
        %v4036 = vpop.xlane.xlu0 %4035
        %v4037 = vsub.f32 %v4033, %v4036
        %v4038 = vmul.f32 %v4037, 1.442695
        %v4039 = vpow.pop %v4038
        %v4040 = vsel %vm1405, %v4039, 0.0
        %4041 = vadd.xlane.f32.xlu0 %v4040
        %v4042 = vpop.xlane.xlu0 %4041
        %v4043 = vrcp.pop %v4042
        %v4044 = vmul.f32 %v4039, %v4043
        %4045 = vrot.lane.b32.xlu0 %v3612, 48
        %v4046 = vpop.permute.xlu0 %4045
        %v4049 = vsel %vm1405, %v4044, 0
        %4051 = vmatprep.subr.mxu0 0.0
        %4052 = vmatpush1.msra.mxu0 %v4046
        %4053 = vmatprep.subr.mxu0 0.0
        %4054 = vmatpush1.msra.mxu0 0.0
        %4055 = vmatprep.subr.mxu0 0.0
        %4056 = vmatpush1.msra.mxu0 0.0
        %4057 = vmatprep.subr.mxu0 0.0
        %4058 = vmatpush1.msra.mxu0 0.0
        %4059 = vmatprep.subr.mxu0 0.0
        %4060 = vmatpush1.msra.mxu0 0.0
        %4061 = vmatprep.subr.mxu0 0.0
        %4062 = vmatpush1.msra.mxu0 0.0
        %4063 = vmatprep.subr.mxu0 0.0
        %4064 = vmatpush1.msra.mxu0 0.0
        %4065 = vmatprep.subr.mxu0 0.0
        %4066 = vmatpush1.msra.mxu0 0.0
        %4067 = vmatprep.subr.mxu0 0.0
        %4068 = vmatpush1.msra.mxu0 0.0
        %4069 = vmatprep.subr.mxu0 0.0
        %4070 = vmatpush1.msra.mxu0 0.0
        %4071 = vmatprep.subr.mxu0 0.0
        %4072 = vmatpush1.msra.mxu0 0.0
        %4073 = vmatprep.subr.mxu0 0.0
        %4074 = vmatpush1.msra.mxu0 0.0
        %4075 = vmatprep.subr.mxu0 0.0
        %4076 = vmatpush1.msra.mxu0 0.0
        %4077 = vmatprep.subr.mxu0 0.0
        %4078 = vmatpush1.msra.mxu0 0.0
        %4079 = vmatprep.subr.mxu0 0.0
        %4080 = vmatpush1.msra.mxu0 0.0
        %4081 = vmatprep.subr.mxu0 0.0
        %4082 = vmatpush1.msra.mxu0 0.0
        %4083 = vmatprep.subr.mxu0 0.0
        %4084 = vmatpush1.msra.mxu0 0.0
        %4085 = vmatprep.subr.mxu0 0.0
        %4086 = vmatpush1.msra.mxu0 0.0
        %4087 = vmatprep.subr.mxu0 0.0
        %4088 = vmatpush1.msra.mxu0 0.0
        %4089 = vmatprep.subr.mxu0 0.0
        %4090 = vmatpush1.msra.mxu0 0.0
        %4091 = vmatprep.subr.mxu0 0.0
        %4092 = vmatpush1.msra.mxu0 0.0
        %4093 = vmatprep.subr.mxu0 0.0
        %4094 = vmatpush1.msra.mxu0 0.0
        %4095 = vmatprep.subr.mxu0 0.0
        %4096 = vmatpush1.msra.mxu0 0.0
        %4097 = vmatprep.subr.mxu0 0.0
        %4098 = vmatpush1.msra.mxu0 0.0
        %4099 = vmatprep.subr.mxu0 0.0
        %4100 = vmatpush1.msra.mxu0 0.0
        %4101 = vmatprep.subr.mxu0 0.0
        %4102 = vmatpush1.msra.mxu0 0.0
        %4103 = vmatprep.subr.mxu0 0.0
        %4104 = vmatpush1.msra.mxu0 0.0
        %4105 = vmatprep.subr.mxu0 0.0
        %4106 = vmatpush1.msra.mxu0 0.0
        %4107 = vmatprep.subr.mxu0 0.0
        %4108 = vmatpush1.msra.mxu0 0.0
        %4109 = vmatprep.subr.mxu0 0.0
        %4110 = vmatpush1.msra.mxu0 0.0
        %4111 = vmatprep.subr.mxu0 0.0
        %4112 = vmatpush1.msra.mxu0 0.0
        %4113 = vmatprep.subr.mxu0 0.0
        %4114 = vmatpush1.msra.mxu0 0.0
        %4115 = vmatprep.mubr.f32.mxu0 0.0
        %4116 = vmatmul.mubr.f32.gmra.mrb[0].mxu0 %v4049
        %v4117 = vpop.f32.mrb[0].mxu0
        %v4118 = vadd.f32 0.0, %v4117
        %v4119 = vpop.f32.mrb[0].mxu0
        %4120 = vdwg.mxu0
        %4121 = vrot.lane.b32.xlu0 %v3612, 104
        %v4122 = vpop.permute.xlu0 %4121
        %4123 = vrot.lane.b32.xlu0 %v3612, 72
        %v4124 = vpop.permute.xlu0 %4123
        %v4125 = vsel %vm1405, %v4122, 0
        %v4127 = vsel %vm1405, %v4124, 0
        %4129 = vmatprep.subr.mxu0 0.0
        %4130 = vmatpush1.xpose.msra.mxu0 %v4127
        %4131 = vmatprep.subr.mxu0 0.0
        %4132 = vmatpush1.xpose.msra.mxu0 0.0
        %4133 = vmatprep.subr.mxu0 0.0
        %4134 = vmatpush1.xpose.msra.mxu0 0.0
        %4135 = vmatprep.subr.mxu0 0.0
        %4136 = vmatpush1.xpose.msra.mxu0 0.0
        %4137 = vmatprep.subr.mxu0 0.0
        %4138 = vmatpush1.xpose.msra.mxu0 0.0
        %4139 = vmatprep.subr.mxu0 0.0
        %4140 = vmatpush1.xpose.msra.mxu0 0.0
        %4141 = vmatprep.subr.mxu0 0.0
        %4142 = vmatpush1.xpose.msra.mxu0 0.0
        %4143 = vmatprep.subr.mxu0 0.0
        %4144 = vmatpush1.xpose.msra.mxu0 0.0
        %4145 = vmatprep.subr.mxu0 0.0
        %4146 = vmatpush1.xpose.msra.mxu0 0.0
        %4147 = vmatprep.subr.mxu0 0.0
        %4148 = vmatpush1.xpose.msra.mxu0 0.0
        %4149 = vmatprep.subr.mxu0 0.0
        %4150 = vmatpush1.xpose.msra.mxu0 0.0
        %4151 = vmatprep.subr.mxu0 0.0
        %4152 = vmatpush1.xpose.msra.mxu0 0.0
        %4153 = vmatprep.subr.mxu0 0.0
        %4154 = vmatpush1.xpose.msra.mxu0 0.0
        %4155 = vmatprep.subr.mxu0 0.0
        %4156 = vmatpush1.xpose.msra.mxu0 0.0
        %4157 = vmatprep.subr.mxu0 0.0
        %4158 = vmatpush1.xpose.msra.mxu0 0.0
        %4159 = vmatprep.subr.mxu0 0.0
        %4160 = vmatpush1.xpose.msra.mxu0 0.0
        %4161 = vmatprep.subr.mxu0 0.0
        %4162 = vmatpush1.xpose.msra.mxu0 0.0
        %4163 = vmatprep.subr.mxu0 0.0
        %4164 = vmatpush1.xpose.msra.mxu0 0.0
        %4165 = vmatprep.subr.mxu0 0.0
        %4166 = vmatpush1.xpose.msra.mxu0 0.0
        %4167 = vmatprep.subr.mxu0 0.0
        %4168 = vmatpush1.xpose.msra.mxu0 0.0
        %4169 = vmatprep.subr.mxu0 0.0
        %4170 = vmatpush1.xpose.msra.mxu0 0.0
        %4171 = vmatprep.subr.mxu0 0.0
        %4172 = vmatpush1.xpose.msra.mxu0 0.0
        %4173 = vmatprep.subr.mxu0 0.0
        %4174 = vmatpush1.xpose.msra.mxu0 0.0
        %4175 = vmatprep.subr.mxu0 0.0
        %4176 = vmatpush1.xpose.msra.mxu0 0.0
        %4177 = vmatprep.subr.mxu0 0.0
        %4178 = vmatpush1.xpose.msra.mxu0 0.0
        %4179 = vmatprep.subr.mxu0 0.0
        %4180 = vmatpush1.xpose.msra.mxu0 0.0
        %4181 = vmatprep.subr.mxu0 0.0
        %4182 = vmatpush1.xpose.msra.mxu0 0.0
        %4183 = vmatprep.subr.mxu0 0.0
        %4184 = vmatpush1.xpose.msra.mxu0 0.0
        %4185 = vmatprep.subr.mxu0 0.0
        %4186 = vmatpush1.xpose.msra.mxu0 0.0
        %4187 = vmatprep.subr.mxu0 0.0
        %4188 = vmatpush1.xpose.msra.mxu0 0.0
        %4189 = vmatprep.subr.mxu0 0.0
        %4190 = vmatpush1.xpose.msra.mxu0 0.0
        %4191 = vmatprep.subr.mxu0 0.0
        %4192 = vmatpush1.xpose.msra.mxu0 0.0
        %4193 = vmatprep.mubr.f32.mxu0 0.0
        %4194 = vmatmul.mubr.f32.gmra.mrb[0].mxu0 %v4125
        %v4195 = vpop.f32.mrb[0].mxu0
        %v4196 = vadd.f32 0.0, %v4195
        %v4197 = vpop.f32.mrb[0].mxu0
        %4198 = vdwg.mxu0
        %v4199 = vmul.f32 %v4196, 0.35355338
        %v4200 = vadd.f32 %v4199, %v3620
        %v4201 = vsel %vm1405, %v4200, -inf
        %4202 = vmax.xlane.f32.xlu0 %v4201
        %v4203 = vpop.xlane.xlu0 %4202
        %v4204 = vsub.f32 %v4200, %v4203
        %v4205 = vmul.f32 %v4204, 1.442695
        %v4206 = vpow.pop %v4205
        %v4207 = vsel %vm1405, %v4206, 0.0
        %4208 = vadd.xlane.f32.xlu0 %v4207
        %v4209 = vpop.xlane.xlu0 %4208
        %v4210 = vrcp.pop %v4209
        %v4211 = vmul.f32 %v4206, %v4210
        %4212 = vrot.lane.b32.xlu0 %v3612, 40
        %v4213 = vpop.permute.xlu0 %4212
        %v4216 = vsel %vm1405, %v4211, 0
        %4218 = vmatprep.subr.mxu0 0.0
        %4219 = vmatpush1.msra.mxu0 %v4213
        %4220 = vmatprep.subr.mxu0 0.0
        %4221 = vmatpush1.msra.mxu0 0.0
        %4222 = vmatprep.subr.mxu0 0.0
        %4223 = vmatpush1.msra.mxu0 0.0
        %4224 = vmatprep.subr.mxu0 0.0
        %4225 = vmatpush1.msra.mxu0 0.0
        %4226 = vmatprep.subr.mxu0 0.0
        %4227 = vmatpush1.msra.mxu0 0.0
        %4228 = vmatprep.subr.mxu0 0.0
        %4229 = vmatpush1.msra.mxu0 0.0
        %4230 = vmatprep.subr.mxu0 0.0
        %4231 = vmatpush1.msra.mxu0 0.0
        %4232 = vmatprep.subr.mxu0 0.0
        %4233 = vmatpush1.msra.mxu0 0.0
        %4234 = vmatprep.subr.mxu0 0.0
        %4235 = vmatpush1.msra.mxu0 0.0
        %4236 = vmatprep.subr.mxu0 0.0
        %4237 = vmatpush1.msra.mxu0 0.0
        %4238 = vmatprep.subr.mxu0 0.0
        %4239 = vmatpush1.msra.mxu0 0.0
        %4240 = vmatprep.subr.mxu0 0.0
        %4241 = vmatpush1.msra.mxu0 0.0
        %4242 = vmatprep.subr.mxu0 0.0
        %4243 = vmatpush1.msra.mxu0 0.0
        %4244 = vmatprep.subr.mxu0 0.0
        %4245 = vmatpush1.msra.mxu0 0.0
        %4246 = vmatprep.subr.mxu0 0.0
        %4247 = vmatpush1.msra.mxu0 0.0
        %4248 = vmatprep.subr.mxu0 0.0
        %4249 = vmatpush1.msra.mxu0 0.0
        %4250 = vmatprep.subr.mxu0 0.0
        %4251 = vmatpush1.msra.mxu0 0.0
        %4252 = vmatprep.subr.mxu0 0.0
        %4253 = vmatpush1.msra.mxu0 0.0
        %4254 = vmatprep.subr.mxu0 0.0
        %4255 = vmatpush1.msra.mxu0 0.0
        %4256 = vmatprep.subr.mxu0 0.0
        %4257 = vmatpush1.msra.mxu0 0.0
        %4258 = vmatprep.subr.mxu0 0.0
        %4259 = vmatpush1.msra.mxu0 0.0
        %4260 = vmatprep.subr.mxu0 0.0
        %4261 = vmatpush1.msra.mxu0 0.0
        %4262 = vmatprep.subr.mxu0 0.0
        %4263 = vmatpush1.msra.mxu0 0.0
        %4264 = vmatprep.subr.mxu0 0.0
        %4265 = vmatpush1.msra.mxu0 0.0
        %4266 = vmatprep.subr.mxu0 0.0
        %4267 = vmatpush1.msra.mxu0 0.0
        %4268 = vmatprep.subr.mxu0 0.0
        %4269 = vmatpush1.msra.mxu0 0.0
        %4270 = vmatprep.subr.mxu0 0.0
        %4271 = vmatpush1.msra.mxu0 0.0
        %4272 = vmatprep.subr.mxu0 0.0
        %4273 = vmatpush1.msra.mxu0 0.0
        %4274 = vmatprep.subr.mxu0 0.0
        %4275 = vmatpush1.msra.mxu0 0.0
        %4276 = vmatprep.subr.mxu0 0.0
        %4277 = vmatpush1.msra.mxu0 0.0
        %4278 = vmatprep.subr.mxu0 0.0
        %4279 = vmatpush1.msra.mxu0 0.0
        %4280 = vmatprep.subr.mxu0 0.0
        %4281 = vmatpush1.msra.mxu0 0.0
        %4282 = vmatprep.mubr.f32.mxu0 0.0
        %4283 = vmatmul.mubr.f32.gmra.mrb[0].mxu0 %v4216
        %v4284 = vpop.f32.mrb[0].mxu0
        %v4285 = vadd.f32 0.0, %v4284
        %v4286 = vpop.f32.mrb[0].mxu0
        %4287 = vdwg.mxu0
        %4289 = vrot.lane.b32.xlu0 %v3951, 8
        %v4290 = vpop.permute.xlu0 %4289
        %4293 = vrot.lane.b32.xlu0 %v4118, 16
        %v4294 = vpop.permute.xlu0 %4293
        %4297 = vrot.lane.b32.xlu0 %v4285, 24
        %v4298 = vpop.permute.xlu0 %4297
        %v4300 = vsel %vm1405, %v3784, %v4290
        %v4301 = vsel %vm2079, %v4300, %v4294
        %v4302 = vsel %vm2081, %v4301, %v4298
        %v4304 = vlaneseq
        %v4305 = vshrl.u32 %v4304, 7
        %v4306 = vsub.s32 0, %v4305
        %v4307 = vrot.slane %v3533, %v4306
        %v4310 = vsel %vm1282, %v4302, 0
        %4312 = vmatprep.subr.mxu0 0.0
        %4313 = vmatpush1.msra.mxu0 %v3529
        %4314 = vmatprep.subr.mxu0 0.0
        %4315 = vmatpush1.msra.mxu0 %v3530
        %4316 = vmatprep.subr.mxu0 0.0
        %4317 = vmatpush1.msra.mxu0 %v3531
        %4318 = vmatprep.subr.mxu0 0.0
        %4319 = vmatpush1.msra.mxu0 %v3532
        %4320 = vmatprep.subr.mxu0 0.0
        %4321 = vmatpush1.msra.mxu0 0.0
        %4322 = vmatprep.subr.mxu0 0.0
        %4323 = vmatpush1.msra.mxu0 0.0
        %4324 = vmatprep.subr.mxu0 0.0
        %4325 = vmatpush1.msra.mxu0 0.0
        %4326 = vmatprep.subr.mxu0 0.0
        %4327 = vmatpush1.msra.mxu0 0.0
        %4328 = vmatprep.subr.mxu0 0.0
        %4329 = vmatpush1.msra.mxu0 0.0
        %4330 = vmatprep.subr.mxu0 0.0
        %4331 = vmatpush1.msra.mxu0 0.0
        %4332 = vmatprep.subr.mxu0 0.0
        %4333 = vmatpush1.msra.mxu0 0.0
        %4334 = vmatprep.subr.mxu0 0.0
        %4335 = vmatpush1.msra.mxu0 0.0
        %4336 = vmatprep.subr.mxu0 0.0
        %4337 = vmatpush1.msra.mxu0 0.0
        %4338 = vmatprep.subr.mxu0 0.0
        %4339 = vmatpush1.msra.mxu0 0.0
        %4340 = vmatprep.subr.mxu0 0.0
        %4341 = vmatpush1.msra.mxu0 0.0
        %4342 = vmatprep.subr.mxu0 0.0
        %4343 = vmatpush1.msra.mxu0 0.0
        %4344 = vmatprep.subr.mxu0 0.0
        %4345 = vmatpush1.msra.mxu0 0.0
        %4346 = vmatprep.subr.mxu0 0.0
        %4347 = vmatpush1.msra.mxu0 0.0
        %4348 = vmatprep.subr.mxu0 0.0
        %4349 = vmatpush1.msra.mxu0 0.0
        %4350 = vmatprep.subr.mxu0 0.0
        %4351 = vmatpush1.msra.mxu0 0.0
        %4352 = vmatprep.subr.mxu0 0.0
        %4353 = vmatpush1.msra.mxu0 0.0
        %4354 = vmatprep.subr.mxu0 0.0
        %4355 = vmatpush1.msra.mxu0 0.0
        %4356 = vmatprep.subr.mxu0 0.0
        %4357 = vmatpush1.msra.mxu0 0.0
        %4358 = vmatprep.subr.mxu0 0.0
        %4359 = vmatpush1.msra.mxu0 0.0
        %4360 = vmatprep.subr.mxu0 0.0
        %4361 = vmatpush1.msra.mxu0 0.0
        %4362 = vmatprep.subr.mxu0 0.0
        %4363 = vmatpush1.msra.mxu0 0.0
        %4364 = vmatprep.subr.mxu0 0.0
        %4365 = vmatpush1.msra.mxu0 0.0
        %4366 = vmatprep.subr.mxu0 0.0
        %4367 = vmatpush1.msra.mxu0 0.0
        %4368 = vmatprep.subr.mxu0 0.0
        %4369 = vmatpush1.msra.mxu0 0.0
        %4370 = vmatprep.subr.mxu0 0.0
        %4371 = vmatpush1.msra.mxu0 0.0
        %4372 = vmatprep.subr.mxu0 0.0
        %4373 = vmatpush1.msra.mxu0 0.0
        %4374 = vmatprep.subr.mxu0 0.0
        %4375 = vmatpush1.msra.mxu0 0.0
        %4376 = vmatprep.mubr.f32.mxu0 0.0
        %4377 = vmatmul.mubr.f32.gmra.mrb[0].mxu0 %v4310
        %v4378 = vpop.f32.mrb[0].mxu0
        %v4379 = vadd.f32 %v4307, %v4378
        %v4380 = vpop.f32.mrb[0].mxu0
        %4381 = vdwg.mxu0
        %v4382 = vadd.f32 %v3523, %v4379
        %v4383 = vsel %vm1282, %v4382, 0.0
        %4384 = vadd.xlane.f32.xlu0 %v4383
        %v4385 = vpop.xlane.xlu0 %4384
        %v4386 = vmul.f32 %v4385, %v1286
        %v4387 = vsub.f32 %v4382, %v4386
        %v4388 = vmul.f32 %v4387, %v4387
        %v4389 = vsel %vm1282, %v4388, 0.0
        %4390 = vadd.xlane.f32.xlu0 %v4389
        %v4391 = vpop.xlane.xlu0 %4390
        %v4392 = vmul.f32 %v4391, %v1286
        %v4393 = vadd.f32 %v4392, 1e-05
        %v4394 = vrsqrt.pop %v4393
        %v4395 = vmul.f32 %v4387, %v4394
        %v4397 = vlaneseq
        %v4398 = vshrl.u32 %v4397, 7
        %v4399 = vsub.s32 0, %v4398
        %v4400 = vrot.slane %v3534, %v4399
        %v4402 = vmul.f32 %v4395, %v4400
        %v4404 = vlaneseq
        %v4405 = vshrl.u32 %v4404, 7
        %v4406 = vsub.s32 0, %v4405
        %v4407 = vrot.slane %v3535, %v4406
        %v4409 = vadd.f32 %v4402, %v4407
        %v4410 = vld [vmem:[#allocation5] sm:$0xff]
        %v4411 = vld [vmem:[#allocation5 + $0x8] sm:$0xff]
        %v4412 = vld [vmem:[#allocation5 + $0x10] sm:$0xff]
        %v4413 = vld [vmem:[#allocation5 + $0x18] sm:$0xff]
        %v4414 = vld [vmem:[%s51] sm:$0x1]
        %v4415 = vld [vmem:[#allocation7] sm:$0xff]
        %v4416 = vld [vmem:[#allocation7 + $0x8] sm:$0xff]
        %v4417 = vld [vmem:[#allocation7 + $0x10] sm:$0xff]
        %v4418 = vld [vmem:[#allocation7 + $0x18] sm:$0xff]
        %v4419 = vld [vmem:[%s55] sm:$0x1]
        %v4420 = vld [vmem:[#allocation8] sm:$0xff]
        %v4421 = vld [vmem:[#allocation8 + $0x8] sm:$0xff]
        %v4422 = vld [vmem:[#allocation8 + $0x10] sm:$0xff]
        %v4423 = vld [vmem:[#allocation8 + $0x18] sm:$0xff]
        %v4424 = vld [vmem:[%s59] sm:$0x1]
        %v4425 = vld [vmem:[%s61] sm:$0x1]
        %v4426 = vld [vmem:[%s63] sm:$0x1]
        %v4428 = vlaneseq
        %v4429 = vshrl.u32 %v4428, 7
        %v4430 = vsub.s32 0, %v4429
        %v4431 = vrot.slane %v4414, %v4430
        %v4434 = vsel %vm1282, %v4409, 0
        %4436 = vmatprep.subr.mxu0 0.0
        %4437 = vmatpush1.msra.mxu0 %v4410
        %4438 = vmatprep.subr.mxu0 0.0
        %4439 = vmatpush1.msra.mxu0 %v4411
        %4440 = vmatprep.subr.mxu0 0.0
        %4441 = vmatpush1.msra.mxu0 %v4412
        %4442 = vmatprep.subr.mxu0 0.0
        %4443 = vmatpush1.msra.mxu0 %v4413
        %4444 = vmatprep.subr.mxu0 0.0
        %4445 = vmatpush1.msra.mxu0 0.0
        %4446 = vmatprep.subr.mxu0 0.0
        %4447 = vmatpush1.msra.mxu0 0.0
        %4448 = vmatprep.subr.mxu0 0.0
        %4449 = vmatpush1.msra.mxu0 0.0
        %4450 = vmatprep.subr.mxu0 0.0
        %4451 = vmatpush1.msra.mxu0 0.0
        %4452 = vmatprep.subr.mxu0 0.0
        %4453 = vmatpush1.msra.mxu0 0.0
        %4454 = vmatprep.subr.mxu0 0.0
        %4455 = vmatpush1.msra.mxu0 0.0
        %4456 = vmatprep.subr.mxu0 0.0
        %4457 = vmatpush1.msra.mxu0 0.0
        %4458 = vmatprep.subr.mxu0 0.0
        %4459 = vmatpush1.msra.mxu0 0.0
        %4460 = vmatprep.subr.mxu0 0.0
        %4461 = vmatpush1.msra.mxu0 0.0
        %4462 = vmatprep.subr.mxu0 0.0
        %4463 = vmatpush1.msra.mxu0 0.0
        %4464 = vmatprep.subr.mxu0 0.0
        %4465 = vmatpush1.msra.mxu0 0.0
        %4466 = vmatprep.subr.mxu0 0.0
        %4467 = vmatpush1.msra.mxu0 0.0
        %4468 = vmatprep.subr.mxu0 0.0
        %4469 = vmatpush1.msra.mxu0 0.0
        %4470 = vmatprep.subr.mxu0 0.0
        %4471 = vmatpush1.msra.mxu0 0.0
        %4472 = vmatprep.subr.mxu0 0.0
        %4473 = vmatpush1.msra.mxu0 0.0
        %4474 = vmatprep.subr.mxu0 0.0
        %4475 = vmatpush1.msra.mxu0 0.0
        %4476 = vmatprep.subr.mxu0 0.0
        %4477 = vmatpush1.msra.mxu0 0.0
        %4478 = vmatprep.subr.mxu0 0.0
        %4479 = vmatpush1.msra.mxu0 0.0
        %4480 = vmatprep.subr.mxu0 0.0
        %4481 = vmatpush1.msra.mxu0 0.0
        %4482 = vmatprep.subr.mxu0 0.0
        %4483 = vmatpush1.msra.mxu0 0.0
        %4484 = vmatprep.subr.mxu0 0.0
        %4485 = vmatpush1.msra.mxu0 0.0
        %4486 = vmatprep.subr.mxu0 0.0
        %4487 = vmatpush1.msra.mxu0 0.0
        %4488 = vmatprep.subr.mxu0 0.0
        %4489 = vmatpush1.msra.mxu0 0.0
        %4490 = vmatprep.subr.mxu0 0.0
        %4491 = vmatpush1.msra.mxu0 0.0
        %4492 = vmatprep.subr.mxu0 0.0
        %4493 = vmatpush1.msra.mxu0 0.0
        %4494 = vmatprep.subr.mxu0 0.0
        %4495 = vmatpush1.msra.mxu0 0.0
        %4496 = vmatprep.subr.mxu0 0.0
        %4497 = vmatpush1.msra.mxu0 0.0
        %4498 = vmatprep.subr.mxu0 0.0
        %4499 = vmatpush1.msra.mxu0 0.0
        %4500 = vmatprep.mubr.f32.mxu0 0.0
        %4501 = vmatmul.mubr.f32.gmra.mrb[0].mxu0 %v4434
        %v4502 = vpop.f32.mrb[0].mxu0
        %v4503 = vadd.f32 %v4431, %v4502
        %v4504 = vpop.f32.mrb[0].mxu0
        %4505 = vdwg.mxu0
        %v4507 = vlaneseq
        %v4508 = vshrl.u32 %v4507, 7
        %v4509 = vsub.s32 0, %v4508
        %v4510 = vrot.slane %v4419, %v4509
        %v4513 = vsel %vm1282, %v3492, 0
        %4515 = vmatprep.subr.mxu0 0.0
        %4516 = vmatpush1.msra.mxu0 %v4415
        %4517 = vmatprep.subr.mxu0 0.0
        %4518 = vmatpush1.msra.mxu0 %v4416
        %4519 = vmatprep.subr.mxu0 0.0
        %4520 = vmatpush1.msra.mxu0 %v4417
        %4521 = vmatprep.subr.mxu0 0.0
        %4522 = vmatpush1.msra.mxu0 %v4418
        %4523 = vmatprep.subr.mxu0 0.0
        %4524 = vmatpush1.msra.mxu0 0.0
        %4525 = vmatprep.subr.mxu0 0.0
        %4526 = vmatpush1.msra.mxu0 0.0
        %4527 = vmatprep.subr.mxu0 0.0
        %4528 = vmatpush1.msra.mxu0 0.0
        %4529 = vmatprep.subr.mxu0 0.0
        %4530 = vmatpush1.msra.mxu0 0.0
        %4531 = vmatprep.subr.mxu0 0.0
        %4532 = vmatpush1.msra.mxu0 0.0
        %4533 = vmatprep.subr.mxu0 0.0
        %4534 = vmatpush1.msra.mxu0 0.0
        %4535 = vmatprep.subr.mxu0 0.0
        %4536 = vmatpush1.msra.mxu0 0.0
        %4537 = vmatprep.subr.mxu0 0.0
        %4538 = vmatpush1.msra.mxu0 0.0
        %4539 = vmatprep.subr.mxu0 0.0
        %4540 = vmatpush1.msra.mxu0 0.0
        %4541 = vmatprep.subr.mxu0 0.0
        %4542 = vmatpush1.msra.mxu0 0.0
        %4543 = vmatprep.subr.mxu0 0.0
        %4544 = vmatpush1.msra.mxu0 0.0
        %4545 = vmatprep.subr.mxu0 0.0
        %4546 = vmatpush1.msra.mxu0 0.0
        %4547 = vmatprep.subr.mxu0 0.0
        %4548 = vmatpush1.msra.mxu0 0.0
        %4549 = vmatprep.subr.mxu0 0.0
        %4550 = vmatpush1.msra.mxu0 0.0
        %4551 = vmatprep.subr.mxu0 0.0
        %4552 = vmatpush1.msra.mxu0 0.0
        %4553 = vmatprep.subr.mxu0 0.0
        %4554 = vmatpush1.msra.mxu0 0.0
        %4555 = vmatprep.subr.mxu0 0.0
        %4556 = vmatpush1.msra.mxu0 0.0
        %4557 = vmatprep.subr.mxu0 0.0
        %4558 = vmatpush1.msra.mxu0 0.0
        %4559 = vmatprep.subr.mxu0 0.0
        %4560 = vmatpush1.msra.mxu0 0.0
        %4561 = vmatprep.subr.mxu0 0.0
        %4562 = vmatpush1.msra.mxu0 0.0
        %4563 = vmatprep.subr.mxu0 0.0
        %4564 = vmatpush1.msra.mxu0 0.0
        %4565 = vmatprep.subr.mxu0 0.0
        %4566 = vmatpush1.msra.mxu0 0.0
        %4567 = vmatprep.subr.mxu0 0.0
        %4568 = vmatpush1.msra.mxu0 0.0
        %4569 = vmatprep.subr.mxu0 0.0
        %4570 = vmatpush1.msra.mxu0 0.0
        %4571 = vmatprep.subr.mxu0 0.0
        %4572 = vmatpush1.msra.mxu0 0.0
        %4573 = vmatprep.subr.mxu0 0.0
        %4574 = vmatpush1.msra.mxu0 0.0
        %4575 = vmatprep.subr.mxu0 0.0
        %4576 = vmatpush1.msra.mxu0 0.0
        %4577 = vmatprep.subr.mxu0 0.0
        %4578 = vmatpush1.msra.mxu0 0.0
        %4579 = vmatprep.mubr.f32.mxu0 0.0
        %4580 = vmatmul.mubr.f32.gmra.mrb[0].mxu0 %v4513
        %v4581 = vpop.f32.mrb[0].mxu0
        %v4582 = vadd.f32 %v4510, %v4581
        %v4583 = vpop.f32.mrb[0].mxu0
        %4584 = vdwg.mxu0
        %v4586 = vsel %vm1405, %v4503, 0
        %v4589 = vsel %vm1405, %v4582, 0
        %4591 = vmatprep.subr.mxu0 0.0
        %4592 = vmatpush1.xpose.msra.mxu0 %v4589
        %4593 = vmatprep.subr.mxu0 0.0
        %4594 = vmatpush1.xpose.msra.mxu0 0.0
        %4595 = vmatprep.subr.mxu0 0.0
        %4596 = vmatpush1.xpose.msra.mxu0 0.0
        %4597 = vmatprep.subr.mxu0 0.0
        %4598 = vmatpush1.xpose.msra.mxu0 0.0
        %4599 = vmatprep.subr.mxu0 0.0
        %4600 = vmatpush1.xpose.msra.mxu0 0.0
        %4601 = vmatprep.subr.mxu0 0.0
        %4602 = vmatpush1.xpose.msra.mxu0 0.0
        %4603 = vmatprep.subr.mxu0 0.0
        %4604 = vmatpush1.xpose.msra.mxu0 0.0
        %4605 = vmatprep.subr.mxu0 0.0
        %4606 = vmatpush1.xpose.msra.mxu0 0.0
        %4607 = vmatprep.subr.mxu0 0.0
        %4608 = vmatpush1.xpose.msra.mxu0 0.0
        %4609 = vmatprep.subr.mxu0 0.0
        %4610 = vmatpush1.xpose.msra.mxu0 0.0
        %4611 = vmatprep.subr.mxu0 0.0
        %4612 = vmatpush1.xpose.msra.mxu0 0.0
        %4613 = vmatprep.subr.mxu0 0.0
        %4614 = vmatpush1.xpose.msra.mxu0 0.0
        %4615 = vmatprep.subr.mxu0 0.0
        %4616 = vmatpush1.xpose.msra.mxu0 0.0
        %4617 = vmatprep.subr.mxu0 0.0
        %4618 = vmatpush1.xpose.msra.mxu0 0.0
        %4619 = vmatprep.subr.mxu0 0.0
        %4620 = vmatpush1.xpose.msra.mxu0 0.0
        %4621 = vmatprep.subr.mxu0 0.0
        %4622 = vmatpush1.xpose.msra.mxu0 0.0
        %4623 = vmatprep.subr.mxu0 0.0
        %4624 = vmatpush1.xpose.msra.mxu0 0.0
        %4625 = vmatprep.subr.mxu0 0.0
        %4626 = vmatpush1.xpose.msra.mxu0 0.0
        %4627 = vmatprep.subr.mxu0 0.0
        %4628 = vmatpush1.xpose.msra.mxu0 0.0
        %4629 = vmatprep.subr.mxu0 0.0
        %4630 = vmatpush1.xpose.msra.mxu0 0.0
        %4631 = vmatprep.subr.mxu0 0.0
        %4632 = vmatpush1.xpose.msra.mxu0 0.0
        %4633 = vmatprep.subr.mxu0 0.0
        %4634 = vmatpush1.xpose.msra.mxu0 0.0
        %4635 = vmatprep.subr.mxu0 0.0
        %4636 = vmatpush1.xpose.msra.mxu0 0.0
        %4637 = vmatprep.subr.mxu0 0.0
        %4638 = vmatpush1.xpose.msra.mxu0 0.0
        %4639 = vmatprep.subr.mxu0 0.0
        %4640 = vmatpush1.xpose.msra.mxu0 0.0
        %4641 = vmatprep.subr.mxu0 0.0
        %4642 = vmatpush1.xpose.msra.mxu0 0.0
        %4643 = vmatprep.subr.mxu0 0.0
        %4644 = vmatpush1.xpose.msra.mxu0 0.0
        %4645 = vmatprep.subr.mxu0 0.0
        %4646 = vmatpush1.xpose.msra.mxu0 0.0
        %4647 = vmatprep.subr.mxu0 0.0
        %4648 = vmatpush1.xpose.msra.mxu0 0.0
        %4649 = vmatprep.subr.mxu0 0.0
        %4650 = vmatpush1.xpose.msra.mxu0 0.0
        %4651 = vmatprep.subr.mxu0 0.0
        %4652 = vmatpush1.xpose.msra.mxu0 0.0
        %4653 = vmatprep.subr.mxu0 0.0
        %4654 = vmatpush1.xpose.msra.mxu0 0.0
        %4655 = vmatprep.mubr.f32.mxu0 0.0
        %4656 = vmatmul.mubr.f32.gmra.mrb[0].mxu0 %v4586
        %v4657 = vpop.f32.mrb[0].mxu0
        %v4658 = vadd.f32 0.0, %v4657
        %v4659 = vpop.f32.mrb[0].mxu0
        %4660 = vdwg.mxu0
        %v4661 = vmul.f32 %v4658, 0.35355338
        %v4662 = vsel %vm1405, %v4661, -inf
        %4663 = vmax.xlane.f32.xlu0 %v4662
        %v4664 = vpop.xlane.xlu0 %4663
        %v4665 = vsub.f32 %v4661, %v4664
        %v4666 = vmul.f32 %v4665, 1.442695
        %v4667 = vpow.pop %v4666
        %v4668 = vsel %vm1405, %v4667, 0.0
        %4669 = vadd.xlane.f32.xlu0 %v4668
        %v4670 = vpop.xlane.xlu0 %4669
        %v4671 = vrcp.pop %v4670
        %v4672 = vmul.f32 %v4667, %v4671
        %4673 = vrot.lane.b32.xlu0 %v4582, 96
        %v4674 = vpop.permute.xlu0 %4673
        %v4677 = vsel %vm1405, %v4672, 0
        %4679 = vmatprep.subr.mxu0 0.0
        %4680 = vmatpush1.msra.mxu0 %v4674
        %4681 = vmatprep.subr.mxu0 0.0
        %4682 = vmatpush1.msra.mxu0 0.0
        %4683 = vmatprep.subr.mxu0 0.0
        %4684 = vmatpush1.msra.mxu0 0.0
        %4685 = vmatprep.subr.mxu0 0.0
        %4686 = vmatpush1.msra.mxu0 0.0
        %4687 = vmatprep.subr.mxu0 0.0
        %4688 = vmatpush1.msra.mxu0 0.0
        %4689 = vmatprep.subr.mxu0 0.0
        %4690 = vmatpush1.msra.mxu0 0.0
        %4691 = vmatprep.subr.mxu0 0.0
        %4692 = vmatpush1.msra.mxu0 0.0
        %4693 = vmatprep.subr.mxu0 0.0
        %4694 = vmatpush1.msra.mxu0 0.0
        %4695 = vmatprep.subr.mxu0 0.0
        %4696 = vmatpush1.msra.mxu0 0.0
        %4697 = vmatprep.subr.mxu0 0.0
        %4698 = vmatpush1.msra.mxu0 0.0
        %4699 = vmatprep.subr.mxu0 0.0
        %4700 = vmatpush1.msra.mxu0 0.0
        %4701 = vmatprep.subr.mxu0 0.0
        %4702 = vmatpush1.msra.mxu0 0.0
        %4703 = vmatprep.subr.mxu0 0.0
        %4704 = vmatpush1.msra.mxu0 0.0
        %4705 = vmatprep.subr.mxu0 0.0
        %4706 = vmatpush1.msra.mxu0 0.0
        %4707 = vmatprep.subr.mxu0 0.0
        %4708 = vmatpush1.msra.mxu0 0.0
        %4709 = vmatprep.subr.mxu0 0.0
        %4710 = vmatpush1.msra.mxu0 0.0
        %4711 = vmatprep.subr.mxu0 0.0
        %4712 = vmatpush1.msra.mxu0 0.0
        %4713 = vmatprep.subr.mxu0 0.0
        %4714 = vmatpush1.msra.mxu0 0.0
        %4715 = vmatprep.subr.mxu0 0.0
        %4716 = vmatpush1.msra.mxu0 0.0
        %4717 = vmatprep.subr.mxu0 0.0
        %4718 = vmatpush1.msra.mxu0 0.0
        %4719 = vmatprep.subr.mxu0 0.0
        %4720 = vmatpush1.msra.mxu0 0.0
        %4721 = vmatprep.subr.mxu0 0.0
        %4722 = vmatpush1.msra.mxu0 0.0
        %4723 = vmatprep.subr.mxu0 0.0
        %4724 = vmatpush1.msra.mxu0 0.0
        %4725 = vmatprep.subr.mxu0 0.0
        %4726 = vmatpush1.msra.mxu0 0.0
        %4727 = vmatprep.subr.mxu0 0.0
        %4728 = vmatpush1.msra.mxu0 0.0
        %4729 = vmatprep.subr.mxu0 0.0
        %4730 = vmatpush1.msra.mxu0 0.0
        %4731 = vmatprep.subr.mxu0 0.0
        %4732 = vmatpush1.msra.mxu0 0.0
        %4733 = vmatprep.subr.mxu0 0.0
        %4734 = vmatpush1.msra.mxu0 0.0
        %4735 = vmatprep.subr.mxu0 0.0
        %4736 = vmatpush1.msra.mxu0 0.0
        %4737 = vmatprep.subr.mxu0 0.0
        %4738 = vmatpush1.msra.mxu0 0.0
        %4739 = vmatprep.subr.mxu0 0.0
        %4740 = vmatpush1.msra.mxu0 0.0
        %4741 = vmatprep.subr.mxu0 0.0
        %4742 = vmatpush1.msra.mxu0 0.0
        %4743 = vmatprep.mubr.f32.mxu0 0.0
        %4744 = vmatmul.mubr.f32.gmra.mrb[0].mxu0 %v4677
        %v4745 = vpop.f32.mrb[0].mxu0
        %v4746 = vadd.f32 0.0, %v4745
        %v4747 = vpop.f32.mrb[0].mxu0
        %4748 = vdwg.mxu0
        %4749 = vrot.lane.b32.xlu0 %v4503, 120
        %v4750 = vpop.permute.xlu0 %4749
        %4751 = vrot.lane.b32.xlu0 %v4582, 120
        %v4752 = vpop.permute.xlu0 %4751
        %v4753 = vsel %vm1405, %v4750, 0
        %v4755 = vsel %vm1405, %v4752, 0
        %4757 = vmatprep.subr.mxu0 0.0
        %4758 = vmatpush1.xpose.msra.mxu0 %v4755
        %4759 = vmatprep.subr.mxu0 0.0
        %4760 = vmatpush1.xpose.msra.mxu0 0.0
        %4761 = vmatprep.subr.mxu0 0.0
        %4762 = vmatpush1.xpose.msra.mxu0 0.0
        %4763 = vmatprep.subr.mxu0 0.0
        %4764 = vmatpush1.xpose.msra.mxu0 0.0
        %4765 = vmatprep.subr.mxu0 0.0
        %4766 = vmatpush1.xpose.msra.mxu0 0.0
        %4767 = vmatprep.subr.mxu0 0.0
        %4768 = vmatpush1.xpose.msra.mxu0 0.0
        %4769 = vmatprep.subr.mxu0 0.0
        %4770 = vmatpush1.xpose.msra.mxu0 0.0
        %4771 = vmatprep.subr.mxu0 0.0
        %4772 = vmatpush1.xpose.msra.mxu0 0.0
        %4773 = vmatprep.subr.mxu0 0.0
        %4774 = vmatpush1.xpose.msra.mxu0 0.0
        %4775 = vmatprep.subr.mxu0 0.0
        %4776 = vmatpush1.xpose.msra.mxu0 0.0
        %4777 = vmatprep.subr.mxu0 0.0
        %4778 = vmatpush1.xpose.msra.mxu0 0.0
        %4779 = vmatprep.subr.mxu0 0.0
        %4780 = vmatpush1.xpose.msra.mxu0 0.0
        %4781 = vmatprep.subr.mxu0 0.0
        %4782 = vmatpush1.xpose.msra.mxu0 0.0
        %4783 = vmatprep.subr.mxu0 0.0
        %4784 = vmatpush1.xpose.msra.mxu0 0.0
        %4785 = vmatprep.subr.mxu0 0.0
        %4786 = vmatpush1.xpose.msra.mxu0 0.0
        %4787 = vmatprep.subr.mxu0 0.0
        %4788 = vmatpush1.xpose.msra.mxu0 0.0
        %4789 = vmatprep.subr.mxu0 0.0
        %4790 = vmatpush1.xpose.msra.mxu0 0.0
        %4791 = vmatprep.subr.mxu0 0.0
        %4792 = vmatpush1.xpose.msra.mxu0 0.0
        %4793 = vmatprep.subr.mxu0 0.0
        %4794 = vmatpush1.xpose.msra.mxu0 0.0
        %4795 = vmatprep.subr.mxu0 0.0
        %4796 = vmatpush1.xpose.msra.mxu0 0.0
        %4797 = vmatprep.subr.mxu0 0.0
        %4798 = vmatpush1.xpose.msra.mxu0 0.0
        %4799 = vmatprep.subr.mxu0 0.0
        %4800 = vmatpush1.xpose.msra.mxu0 0.0
        %4801 = vmatprep.subr.mxu0 0.0
        %4802 = vmatpush1.xpose.msra.mxu0 0.0
        %4803 = vmatprep.subr.mxu0 0.0
        %4804 = vmatpush1.xpose.msra.mxu0 0.0
        %4805 = vmatprep.subr.mxu0 0.0
        %4806 = vmatpush1.xpose.msra.mxu0 0.0
        %4807 = vmatprep.subr.mxu0 0.0
        %4808 = vmatpush1.xpose.msra.mxu0 0.0
        %4809 = vmatprep.subr.mxu0 0.0
        %4810 = vmatpush1.xpose.msra.mxu0 0.0
        %4811 = vmatprep.subr.mxu0 0.0
        %4812 = vmatpush1.xpose.msra.mxu0 0.0
        %4813 = vmatprep.subr.mxu0 0.0
        %4814 = vmatpush1.xpose.msra.mxu0 0.0
        %4815 = vmatprep.subr.mxu0 0.0
        %4816 = vmatpush1.xpose.msra.mxu0 0.0
        %4817 = vmatprep.subr.mxu0 0.0
        %4818 = vmatpush1.xpose.msra.mxu0 0.0
        %4819 = vmatprep.subr.mxu0 0.0
        %4820 = vmatpush1.xpose.msra.mxu0 0.0
        %4821 = vmatprep.mubr.f32.mxu0 0.0
        %4822 = vmatmul.mubr.f32.gmra.mrb[0].mxu0 %v4753
        %v4823 = vpop.f32.mrb[0].mxu0
        %v4824 = vadd.f32 0.0, %v4823
        %v4825 = vpop.f32.mrb[0].mxu0
        %4826 = vdwg.mxu0
        %v4827 = vmul.f32 %v4824, 0.35355338
        %v4828 = vsel %vm1405, %v4827, -inf
        %4829 = vmax.xlane.f32.xlu0 %v4828
        %v4830 = vpop.xlane.xlu0 %4829
        %v4831 = vsub.f32 %v4827, %v4830
        %v4832 = vmul.f32 %v4831, 1.442695
        %v4833 = vpow.pop %v4832
        %v4834 = vsel %vm1405, %v4833, 0.0
        %4835 = vadd.xlane.f32.xlu0 %v4834
        %v4836 = vpop.xlane.xlu0 %4835
        %v4837 = vrcp.pop %v4836
        %v4838 = vmul.f32 %v4833, %v4837
        %4839 = vrot.lane.b32.xlu0 %v4582, 88
        %v4840 = vpop.permute.xlu0 %4839
        %v4843 = vsel %vm1405, %v4838, 0
        %4845 = vmatprep.subr.mxu0 0.0
        %4846 = vmatpush1.msra.mxu0 %v4840
        %4847 = vmatprep.subr.mxu0 0.0
        %4848 = vmatpush1.msra.mxu0 0.0
        %4849 = vmatprep.subr.mxu0 0.0
        %4850 = vmatpush1.msra.mxu0 0.0
        %4851 = vmatprep.subr.mxu0 0.0
        %4852 = vmatpush1.msra.mxu0 0.0
        %4853 = vmatprep.subr.mxu0 0.0
        %4854 = vmatpush1.msra.mxu0 0.0
        %4855 = vmatprep.subr.mxu0 0.0
        %4856 = vmatpush1.msra.mxu0 0.0
        %4857 = vmatprep.subr.mxu0 0.0
        %4858 = vmatpush1.msra.mxu0 0.0
        %4859 = vmatprep.subr.mxu0 0.0
        %4860 = vmatpush1.msra.mxu0 0.0
        %4861 = vmatprep.subr.mxu0 0.0
        %4862 = vmatpush1.msra.mxu0 0.0
        %4863 = vmatprep.subr.mxu0 0.0
        %4864 = vmatpush1.msra.mxu0 0.0
        %4865 = vmatprep.subr.mxu0 0.0
        %4866 = vmatpush1.msra.mxu0 0.0
        %4867 = vmatprep.subr.mxu0 0.0
        %4868 = vmatpush1.msra.mxu0 0.0
        %4869 = vmatprep.subr.mxu0 0.0
        %4870 = vmatpush1.msra.mxu0 0.0
        %4871 = vmatprep.subr.mxu0 0.0
        %4872 = vmatpush1.msra.mxu0 0.0
        %4873 = vmatprep.subr.mxu0 0.0
        %4874 = vmatpush1.msra.mxu0 0.0
        %4875 = vmatprep.subr.mxu0 0.0
        %4876 = vmatpush1.msra.mxu0 0.0
        %4877 = vmatprep.subr.mxu0 0.0
        %4878 = vmatpush1.msra.mxu0 0.0
        %4879 = vmatprep.subr.mxu0 0.0
        %4880 = vmatpush1.msra.mxu0 0.0
        %4881 = vmatprep.subr.mxu0 0.0
        %4882 = vmatpush1.msra.mxu0 0.0
        %4883 = vmatprep.subr.mxu0 0.0
        %4884 = vmatpush1.msra.mxu0 0.0
        %4885 = vmatprep.subr.mxu0 0.0
        %4886 = vmatpush1.msra.mxu0 0.0
        %4887 = vmatprep.subr.mxu0 0.0
        %4888 = vmatpush1.msra.mxu0 0.0
        %4889 = vmatprep.subr.mxu0 0.0
        %4890 = vmatpush1.msra.mxu0 0.0
        %4891 = vmatprep.subr.mxu0 0.0
        %4892 = vmatpush1.msra.mxu0 0.0
        %4893 = vmatprep.subr.mxu0 0.0
        %4894 = vmatpush1.msra.mxu0 0.0
        %4895 = vmatprep.subr.mxu0 0.0
        %4896 = vmatpush1.msra.mxu0 0.0
        %4897 = vmatprep.subr.mxu0 0.0
        %4898 = vmatpush1.msra.mxu0 0.0
        %4899 = vmatprep.subr.mxu0 0.0
        %4900 = vmatpush1.msra.mxu0 0.0
        %4901 = vmatprep.subr.mxu0 0.0
        %4902 = vmatpush1.msra.mxu0 0.0
        %4903 = vmatprep.subr.mxu0 0.0
        %4904 = vmatpush1.msra.mxu0 0.0
        %4905 = vmatprep.subr.mxu0 0.0
        %4906 = vmatpush1.msra.mxu0 0.0
        %4907 = vmatprep.subr.mxu0 0.0
        %4908 = vmatpush1.msra.mxu0 0.0
        %4909 = vmatprep.mubr.f32.mxu0 0.0
        %4910 = vmatmul.mubr.f32.gmra.mrb[0].mxu0 %v4843
        %v4911 = vpop.f32.mrb[0].mxu0
        %v4912 = vadd.f32 0.0, %v4911
        %v4913 = vpop.f32.mrb[0].mxu0
        %4914 = vdwg.mxu0
        %4915 = vrot.lane.b32.xlu0 %v4503, 112
        %v4916 = vpop.permute.xlu0 %4915
        %4917 = vrot.lane.b32.xlu0 %v4582, 112
        %v4918 = vpop.permute.xlu0 %4917
        %v4919 = vsel %vm1405, %v4916, 0
        %v4921 = vsel %vm1405, %v4918, 0
        %4923 = vmatprep.subr.mxu0 0.0
        %4924 = vmatpush1.xpose.msra.mxu0 %v4921
        %4925 = vmatprep.subr.mxu0 0.0
        %4926 = vmatpush1.xpose.msra.mxu0 0.0
        %4927 = vmatprep.subr.mxu0 0.0
        %4928 = vmatpush1.xpose.msra.mxu0 0.0
        %4929 = vmatprep.subr.mxu0 0.0
        %4930 = vmatpush1.xpose.msra.mxu0 0.0
        %4931 = vmatprep.subr.mxu0 0.0
        %4932 = vmatpush1.xpose.msra.mxu0 0.0
        %4933 = vmatprep.subr.mxu0 0.0
        %4934 = vmatpush1.xpose.msra.mxu0 0.0
        %4935 = vmatprep.subr.mxu0 0.0
        %4936 = vmatpush1.xpose.msra.mxu0 0.0
        %4937 = vmatprep.subr.mxu0 0.0
        %4938 = vmatpush1.xpose.msra.mxu0 0.0
        %4939 = vmatprep.subr.mxu0 0.0
        %4940 = vmatpush1.xpose.msra.mxu0 0.0
        %4941 = vmatprep.subr.mxu0 0.0
        %4942 = vmatpush1.xpose.msra.mxu0 0.0
        %4943 = vmatprep.subr.mxu0 0.0
        %4944 = vmatpush1.xpose.msra.mxu0 0.0
        %4945 = vmatprep.subr.mxu0 0.0
        %4946 = vmatpush1.xpose.msra.mxu0 0.0
        %4947 = vmatprep.subr.mxu0 0.0
        %4948 = vmatpush1.xpose.msra.mxu0 0.0
        %4949 = vmatprep.subr.mxu0 0.0
        %4950 = vmatpush1.xpose.msra.mxu0 0.0
        %4951 = vmatprep.subr.mxu0 0.0
        %4952 = vmatpush1.xpose.msra.mxu0 0.0
        %4953 = vmatprep.subr.mxu0 0.0
        %4954 = vmatpush1.xpose.msra.mxu0 0.0
        %4955 = vmatprep.subr.mxu0 0.0
        %4956 = vmatpush1.xpose.msra.mxu0 0.0
        %4957 = vmatprep.subr.mxu0 0.0
        %4958 = vmatpush1.xpose.msra.mxu0 0.0
        %4959 = vmatprep.subr.mxu0 0.0
        %4960 = vmatpush1.xpose.msra.mxu0 0.0
        %4961 = vmatprep.subr.mxu0 0.0
        %4962 = vmatpush1.xpose.msra.mxu0 0.0
        %4963 = vmatprep.subr.mxu0 0.0
        %4964 = vmatpush1.xpose.msra.mxu0 0.0
        %4965 = vmatprep.subr.mxu0 0.0
        %4966 = vmatpush1.xpose.msra.mxu0 0.0
        %4967 = vmatprep.subr.mxu0 0.0
        %4968 = vmatpush1.xpose.msra.mxu0 0.0
        %4969 = vmatprep.subr.mxu0 0.0
        %4970 = vmatpush1.xpose.msra.mxu0 0.0
        %4971 = vmatprep.subr.mxu0 0.0
        %4972 = vmatpush1.xpose.msra.mxu0 0.0
        %4973 = vmatprep.subr.mxu0 0.0
        %4974 = vmatpush1.xpose.msra.mxu0 0.0
        %4975 = vmatprep.subr.mxu0 0.0
        %4976 = vmatpush1.xpose.msra.mxu0 0.0
        %4977 = vmatprep.subr.mxu0 0.0
        %4978 = vmatpush1.xpose.msra.mxu0 0.0
        %4979 = vmatprep.subr.mxu0 0.0
        %4980 = vmatpush1.xpose.msra.mxu0 0.0
        %4981 = vmatprep.subr.mxu0 0.0
        %4982 = vmatpush1.xpose.msra.mxu0 0.0
        %4983 = vmatprep.subr.mxu0 0.0
        %4984 = vmatpush1.xpose.msra.mxu0 0.0
        %4985 = vmatprep.subr.mxu0 0.0
        %4986 = vmatpush1.xpose.msra.mxu0 0.0
        %4987 = vmatprep.mubr.f32.mxu0 0.0
        %4988 = vmatmul.mubr.f32.gmra.mrb[0].mxu0 %v4919
        %v4989 = vpop.f32.mrb[0].mxu0
        %v4990 = vadd.f32 0.0, %v4989
        %v4991 = vpop.f32.mrb[0].mxu0
        %4992 = vdwg.mxu0
        %v4993 = vmul.f32 %v4990, 0.35355338
        %v4994 = vsel %vm1405, %v4993, -inf
        %4995 = vmax.xlane.f32.xlu0 %v4994
        %v4996 = vpop.xlane.xlu0 %4995
        %v4997 = vsub.f32 %v4993, %v4996
        %v4998 = vmul.f32 %v4997, 1.442695
        %v4999 = vpow.pop %v4998
        %v5000 = vsel %vm1405, %v4999, 0.0
        %5001 = vadd.xlane.f32.xlu0 %v5000
        %v5002 = vpop.xlane.xlu0 %5001
        %v5003 = vrcp.pop %v5002
        %v5004 = vmul.f32 %v4999, %v5003
        %5005 = vrot.lane.b32.xlu0 %v4582, 80
        %v5006 = vpop.permute.xlu0 %5005
        %v5009 = vsel %vm1405, %v5004, 0
        %5011 = vmatprep.subr.mxu0 0.0
        %5012 = vmatpush1.msra.mxu0 %v5006
        %5013 = vmatprep.subr.mxu0 0.0
        %5014 = vmatpush1.msra.mxu0 0.0
        %5015 = vmatprep.subr.mxu0 0.0
        %5016 = vmatpush1.msra.mxu0 0.0
        %5017 = vmatprep.subr.mxu0 0.0
        %5018 = vmatpush1.msra.mxu0 0.0
        %5019 = vmatprep.subr.mxu0 0.0
        %5020 = vmatpush1.msra.mxu0 0.0
        %5021 = vmatprep.subr.mxu0 0.0
        %5022 = vmatpush1.msra.mxu0 0.0
        %5023 = vmatprep.subr.mxu0 0.0
        %5024 = vmatpush1.msra.mxu0 0.0
        %5025 = vmatprep.subr.mxu0 0.0
        %5026 = vmatpush1.msra.mxu0 0.0
        %5027 = vmatprep.subr.mxu0 0.0
        %5028 = vmatpush1.msra.mxu0 0.0
        %5029 = vmatprep.subr.mxu0 0.0
        %5030 = vmatpush1.msra.mxu0 0.0
        %5031 = vmatprep.subr.mxu0 0.0
        %5032 = vmatpush1.msra.mxu0 0.0
        %5033 = vmatprep.subr.mxu0 0.0
        %5034 = vmatpush1.msra.mxu0 0.0
        %5035 = vmatprep.subr.mxu0 0.0
        %5036 = vmatpush1.msra.mxu0 0.0
        %5037 = vmatprep.subr.mxu0 0.0
        %5038 = vmatpush1.msra.mxu0 0.0
        %5039 = vmatprep.subr.mxu0 0.0
        %5040 = vmatpush1.msra.mxu0 0.0
        %5041 = vmatprep.subr.mxu0 0.0
        %5042 = vmatpush1.msra.mxu0 0.0
        %5043 = vmatprep.subr.mxu0 0.0
        %5044 = vmatpush1.msra.mxu0 0.0
        %5045 = vmatprep.subr.mxu0 0.0
        %5046 = vmatpush1.msra.mxu0 0.0
        %5047 = vmatprep.subr.mxu0 0.0
        %5048 = vmatpush1.msra.mxu0 0.0
        %5049 = vmatprep.subr.mxu0 0.0
        %5050 = vmatpush1.msra.mxu0 0.0
        %5051 = vmatprep.subr.mxu0 0.0
        %5052 = vmatpush1.msra.mxu0 0.0
        %5053 = vmatprep.subr.mxu0 0.0
        %5054 = vmatpush1.msra.mxu0 0.0
        %5055 = vmatprep.subr.mxu0 0.0
        %5056 = vmatpush1.msra.mxu0 0.0
        %5057 = vmatprep.subr.mxu0 0.0
        %5058 = vmatpush1.msra.mxu0 0.0
        %5059 = vmatprep.subr.mxu0 0.0
        %5060 = vmatpush1.msra.mxu0 0.0
        %5061 = vmatprep.subr.mxu0 0.0
        %5062 = vmatpush1.msra.mxu0 0.0
        %5063 = vmatprep.subr.mxu0 0.0
        %5064 = vmatpush1.msra.mxu0 0.0
        %5065 = vmatprep.subr.mxu0 0.0
        %5066 = vmatpush1.msra.mxu0 0.0
        %5067 = vmatprep.subr.mxu0 0.0
        %5068 = vmatpush1.msra.mxu0 0.0
        %5069 = vmatprep.subr.mxu0 0.0
        %5070 = vmatpush1.msra.mxu0 0.0
        %5071 = vmatprep.subr.mxu0 0.0
        %5072 = vmatpush1.msra.mxu0 0.0
        %5073 = vmatprep.subr.mxu0 0.0
        %5074 = vmatpush1.msra.mxu0 0.0
        %5075 = vmatprep.mubr.f32.mxu0 0.0
        %5076 = vmatmul.mubr.f32.gmra.mrb[0].mxu0 %v5009
        %v5077 = vpop.f32.mrb[0].mxu0
        %v5078 = vadd.f32 0.0, %v5077
        %v5079 = vpop.f32.mrb[0].mxu0
        %5080 = vdwg.mxu0
        %5081 = vrot.lane.b32.xlu0 %v4503, 104
        %v5082 = vpop.permute.xlu0 %5081
        %5083 = vrot.lane.b32.xlu0 %v4582, 104
        %v5084 = vpop.permute.xlu0 %5083
        %v5085 = vsel %vm1405, %v5082, 0
        %v5087 = vsel %vm1405, %v5084, 0
        %5089 = vmatprep.subr.mxu0 0.0
        %5090 = vmatpush1.xpose.msra.mxu0 %v5087
        %5091 = vmatprep.subr.mxu0 0.0
        %5092 = vmatpush1.xpose.msra.mxu0 0.0
        %5093 = vmatprep.subr.mxu0 0.0
        %5094 = vmatpush1.xpose.msra.mxu0 0.0
        %5095 = vmatprep.subr.mxu0 0.0
        %5096 = vmatpush1.xpose.msra.mxu0 0.0
        %5097 = vmatprep.subr.mxu0 0.0
        %5098 = vmatpush1.xpose.msra.mxu0 0.0
        %5099 = vmatprep.subr.mxu0 0.0
        %5100 = vmatpush1.xpose.msra.mxu0 0.0
        %5101 = vmatprep.subr.mxu0 0.0
        %5102 = vmatpush1.xpose.msra.mxu0 0.0
        %5103 = vmatprep.subr.mxu0 0.0
        %5104 = vmatpush1.xpose.msra.mxu0 0.0
        %5105 = vmatprep.subr.mxu0 0.0
        %5106 = vmatpush1.xpose.msra.mxu0 0.0
        %5107 = vmatprep.subr.mxu0 0.0
        %5108 = vmatpush1.xpose.msra.mxu0 0.0
        %5109 = vmatprep.subr.mxu0 0.0
        %5110 = vmatpush1.xpose.msra.mxu0 0.0
        %5111 = vmatprep.subr.mxu0 0.0
        %5112 = vmatpush1.xpose.msra.mxu0 0.0
        %5113 = vmatprep.subr.mxu0 0.0
        %5114 = vmatpush1.xpose.msra.mxu0 0.0
        %5115 = vmatprep.subr.mxu0 0.0
        %5116 = vmatpush1.xpose.msra.mxu0 0.0
        %5117 = vmatprep.subr.mxu0 0.0
        %5118 = vmatpush1.xpose.msra.mxu0 0.0
        %5119 = vmatprep.subr.mxu0 0.0
        %5120 = vmatpush1.xpose.msra.mxu0 0.0
        %5121 = vmatprep.subr.mxu0 0.0
        %5122 = vmatpush1.xpose.msra.mxu0 0.0
        %5123 = vmatprep.subr.mxu0 0.0
        %5124 = vmatpush1.xpose.msra.mxu0 0.0
        %5125 = vmatprep.subr.mxu0 0.0
        %5126 = vmatpush1.xpose.msra.mxu0 0.0
        %5127 = vmatprep.subr.mxu0 0.0
        %5128 = vmatpush1.xpose.msra.mxu0 0.0
        %5129 = vmatprep.subr.mxu0 0.0
        %5130 = vmatpush1.xpose.msra.mxu0 0.0
        %5131 = vmatprep.subr.mxu0 0.0
        %5132 = vmatpush1.xpose.msra.mxu0 0.0
        %5133 = vmatprep.subr.mxu0 0.0
        %5134 = vmatpush1.xpose.msra.mxu0 0.0
        %5135 = vmatprep.subr.mxu0 0.0
        %5136 = vmatpush1.xpose.msra.mxu0 0.0
        %5137 = vmatprep.subr.mxu0 0.0
        %5138 = vmatpush1.xpose.msra.mxu0 0.0
        %5139 = vmatprep.subr.mxu0 0.0
        %5140 = vmatpush1.xpose.msra.mxu0 0.0
        %5141 = vmatprep.subr.mxu0 0.0
        %5142 = vmatpush1.xpose.msra.mxu0 0.0
        %5143 = vmatprep.subr.mxu0 0.0
        %5144 = vmatpush1.xpose.msra.mxu0 0.0
        %5145 = vmatprep.subr.mxu0 0.0
        %5146 = vmatpush1.xpose.msra.mxu0 0.0
        %5147 = vmatprep.subr.mxu0 0.0
        %5148 = vmatpush1.xpose.msra.mxu0 0.0
        %5149 = vmatprep.subr.mxu0 0.0
        %5150 = vmatpush1.xpose.msra.mxu0 0.0
        %5151 = vmatprep.subr.mxu0 0.0
        %5152 = vmatpush1.xpose.msra.mxu0 0.0
        %5153 = vmatprep.mubr.f32.mxu0 0.0
        %5154 = vmatmul.mubr.f32.gmra.mrb[0].mxu0 %v5085
        %v5155 = vpop.f32.mrb[0].mxu0
        %v5156 = vadd.f32 0.0, %v5155
        %v5157 = vpop.f32.mrb[0].mxu0
        %5158 = vdwg.mxu0
        %v5159 = vmul.f32 %v5156, 0.35355338
        %v5160 = vsel %vm1405, %v5159, -inf
        %5161 = vmax.xlane.f32.xlu0 %v5160
        %v5162 = vpop.xlane.xlu0 %5161
        %v5163 = vsub.f32 %v5159, %v5162
        %v5164 = vmul.f32 %v5163, 1.442695
        %v5165 = vpow.pop %v5164
        %v5166 = vsel %vm1405, %v5165, 0.0
        %5167 = vadd.xlane.f32.xlu0 %v5166
        %v5168 = vpop.xlane.xlu0 %5167
        %v5169 = vrcp.pop %v5168
        %v5170 = vmul.f32 %v5165, %v5169
        %5171 = vrot.lane.b32.xlu0 %v4582, 72
        %v5172 = vpop.permute.xlu0 %5171
        %v5175 = vsel %vm1405, %v5170, 0
        %5177 = vmatprep.subr.mxu0 0.0
        %5178 = vmatpush1.msra.mxu0 %v5172
        %5179 = vmatprep.subr.mxu0 0.0
        %5180 = vmatpush1.msra.mxu0 0.0
        %5181 = vmatprep.subr.mxu0 0.0
        %5182 = vmatpush1.msra.mxu0 0.0
        %5183 = vmatprep.subr.mxu0 0.0
        %5184 = vmatpush1.msra.mxu0 0.0
        %5185 = vmatprep.subr.mxu0 0.0
        %5186 = vmatpush1.msra.mxu0 0.0
        %5187 = vmatprep.subr.mxu0 0.0
        %5188 = vmatpush1.msra.mxu0 0.0
        %5189 = vmatprep.subr.mxu0 0.0
        %5190 = vmatpush1.msra.mxu0 0.0
        %5191 = vmatprep.subr.mxu0 0.0
        %5192 = vmatpush1.msra.mxu0 0.0
        %5193 = vmatprep.subr.mxu0 0.0
        %5194 = vmatpush1.msra.mxu0 0.0
        %5195 = vmatprep.subr.mxu0 0.0
        %5196 = vmatpush1.msra.mxu0 0.0
        %5197 = vmatprep.subr.mxu0 0.0
        %5198 = vmatpush1.msra.mxu0 0.0
        %5199 = vmatprep.subr.mxu0 0.0
        %5200 = vmatpush1.msra.mxu0 0.0
        %5201 = vmatprep.subr.mxu0 0.0
        %5202 = vmatpush1.msra.mxu0 0.0
        %5203 = vmatprep.subr.mxu0 0.0
        %5204 = vmatpush1.msra.mxu0 0.0
        %5205 = vmatprep.subr.mxu0 0.0
        %5206 = vmatpush1.msra.mxu0 0.0
        %5207 = vmatprep.subr.mxu0 0.0
        %5208 = vmatpush1.msra.mxu0 0.0
        %5209 = vmatprep.subr.mxu0 0.0
        %5210 = vmatpush1.msra.mxu0 0.0
        %5211 = vmatprep.subr.mxu0 0.0
        %5212 = vmatpush1.msra.mxu0 0.0
        %5213 = vmatprep.subr.mxu0 0.0
        %5214 = vmatpush1.msra.mxu0 0.0
        %5215 = vmatprep.subr.mxu0 0.0
        %5216 = vmatpush1.msra.mxu0 0.0
        %5217 = vmatprep.subr.mxu0 0.0
        %5218 = vmatpush1.msra.mxu0 0.0
        %5219 = vmatprep.subr.mxu0 0.0
        %5220 = vmatpush1.msra.mxu0 0.0
        %5221 = vmatprep.subr.mxu0 0.0
        %5222 = vmatpush1.msra.mxu0 0.0
        %5223 = vmatprep.subr.mxu0 0.0
        %5224 = vmatpush1.msra.mxu0 0.0
        %5225 = vmatprep.subr.mxu0 0.0
        %5226 = vmatpush1.msra.mxu0 0.0
        %5227 = vmatprep.subr.mxu0 0.0
        %5228 = vmatpush1.msra.mxu0 0.0
        %5229 = vmatprep.subr.mxu0 0.0
        %5230 = vmatpush1.msra.mxu0 0.0
        %5231 = vmatprep.subr.mxu0 0.0
        %5232 = vmatpush1.msra.mxu0 0.0
        %5233 = vmatprep.subr.mxu0 0.0
        %5234 = vmatpush1.msra.mxu0 0.0
        %5235 = vmatprep.subr.mxu0 0.0
        %5236 = vmatpush1.msra.mxu0 0.0
        %5237 = vmatprep.subr.mxu0 0.0
        %5238 = vmatpush1.msra.mxu0 0.0
        %5239 = vmatprep.subr.mxu0 0.0
        %5240 = vmatpush1.msra.mxu0 0.0
        %5241 = vmatprep.mubr.f32.mxu0 0.0
        %5242 = vmatmul.mubr.f32.gmra.mrb[0].mxu0 %v5175
        %v5243 = vpop.f32.mrb[0].mxu0
        %v5244 = vadd.f32 0.0, %v5243
        %v5245 = vpop.f32.mrb[0].mxu0
        %5246 = vdwg.mxu0
        %5248 = vrot.lane.b32.xlu0 %v4912, 8
        %v5249 = vpop.permute.xlu0 %5248
        %5252 = vrot.lane.b32.xlu0 %v5078, 16
        %v5253 = vpop.permute.xlu0 %5252
        %5256 = vrot.lane.b32.xlu0 %v5244, 24
        %v5257 = vpop.permute.xlu0 %5256
        %v5259 = vsel %vm1405, %v4746, %v5249
        %v5260 = vsel %vm2079, %v5259, %v5253
        %v5261 = vsel %vm2081, %v5260, %v5257
        %v5263 = vlaneseq
        %v5264 = vshrl.u32 %v5263, 7
        %v5265 = vsub.s32 0, %v5264
        %v5266 = vrot.slane %v4424, %v5265
        %v5269 = vsel %vm1282, %v5261, 0
        %5271 = vmatprep.subr.mxu0 0.0
        %5272 = vmatpush1.msra.mxu0 %v4420
        %5273 = vmatprep.subr.mxu0 0.0
        %5274 = vmatpush1.msra.mxu0 %v4421
        %5275 = vmatprep.subr.mxu0 0.0
        %5276 = vmatpush1.msra.mxu0 %v4422
        %5277 = vmatprep.subr.mxu0 0.0
        %5278 = vmatpush1.msra.mxu0 %v4423
        %5279 = vmatprep.subr.mxu0 0.0
        %5280 = vmatpush1.msra.mxu0 0.0
        %5281 = vmatprep.subr.mxu0 0.0
        %5282 = vmatpush1.msra.mxu0 0.0
        %5283 = vmatprep.subr.mxu0 0.0
        %5284 = vmatpush1.msra.mxu0 0.0
        %5285 = vmatprep.subr.mxu0 0.0
        %5286 = vmatpush1.msra.mxu0 0.0
        %5287 = vmatprep.subr.mxu0 0.0
        %5288 = vmatpush1.msra.mxu0 0.0
        %5289 = vmatprep.subr.mxu0 0.0
        %5290 = vmatpush1.msra.mxu0 0.0
        %5291 = vmatprep.subr.mxu0 0.0
        %5292 = vmatpush1.msra.mxu0 0.0
        %5293 = vmatprep.subr.mxu0 0.0
        %5294 = vmatpush1.msra.mxu0 0.0
        %5295 = vmatprep.subr.mxu0 0.0
        %5296 = vmatpush1.msra.mxu0 0.0
        %5297 = vmatprep.subr.mxu0 0.0
        %5298 = vmatpush1.msra.mxu0 0.0
        %5299 = vmatprep.subr.mxu0 0.0
        %5300 = vmatpush1.msra.mxu0 0.0
        %5301 = vmatprep.subr.mxu0 0.0
        %5302 = vmatpush1.msra.mxu0 0.0
        %5303 = vmatprep.subr.mxu0 0.0
        %5304 = vmatpush1.msra.mxu0 0.0
        %5305 = vmatprep.subr.mxu0 0.0
        %5306 = vmatpush1.msra.mxu0 0.0
        %5307 = vmatprep.subr.mxu0 0.0
        %5308 = vmatpush1.msra.mxu0 0.0
        %5309 = vmatprep.subr.mxu0 0.0
        %5310 = vmatpush1.msra.mxu0 0.0
        %5311 = vmatprep.subr.mxu0 0.0
        %5312 = vmatpush1.msra.mxu0 0.0
        %5313 = vmatprep.subr.mxu0 0.0
        %5314 = vmatpush1.msra.mxu0 0.0
        %5315 = vmatprep.subr.mxu0 0.0
        %5316 = vmatpush1.msra.mxu0 0.0
        %5317 = vmatprep.subr.mxu0 0.0
        %5318 = vmatpush1.msra.mxu0 0.0
        %5319 = vmatprep.subr.mxu0 0.0
        %5320 = vmatpush1.msra.mxu0 0.0
        %5321 = vmatprep.subr.mxu0 0.0
        %5322 = vmatpush1.msra.mxu0 0.0
        %5323 = vmatprep.subr.mxu0 0.0
        %5324 = vmatpush1.msra.mxu0 0.0
        %5325 = vmatprep.subr.mxu0 0.0
        %5326 = vmatpush1.msra.mxu0 0.0
        %5327 = vmatprep.subr.mxu0 0.0
        %5328 = vmatpush1.msra.mxu0 0.0
        %5329 = vmatprep.subr.mxu0 0.0
        %5330 = vmatpush1.msra.mxu0 0.0
        %5331 = vmatprep.subr.mxu0 0.0
        %5332 = vmatpush1.msra.mxu0 0.0
        %5333 = vmatprep.subr.mxu0 0.0
        %5334 = vmatpush1.msra.mxu0 0.0
        %5335 = vmatprep.mubr.f32.mxu0 0.0
        %5336 = vmatmul.mubr.f32.gmra.mrb[0].mxu0 %v5269
        %v5337 = vpop.f32.mrb[0].mxu0
        %v5338 = vadd.f32 %v5266, %v5337
        %v5339 = vpop.f32.mrb[0].mxu0
        %5340 = vdwg.mxu0
        %v5341 = vadd.f32 %v4409, %v5338
        %v5342 = vsel %vm1282, %v5341, 0.0
        %5343 = vadd.xlane.f32.xlu0 %v5342
        %v5344 = vpop.xlane.xlu0 %5343
        %v5345 = vmul.f32 %v5344, %v1286
        %v5346 = vsub.f32 %v5341, %v5345
        %v5347 = vmul.f32 %v5346, %v5346
        %v5348 = vsel %vm1282, %v5347, 0.0
        %5349 = vadd.xlane.f32.xlu0 %v5348
        %v5350 = vpop.xlane.xlu0 %5349
        %v5351 = vmul.f32 %v5350, %v1286
        %v5352 = vadd.f32 %v5351, 1e-05
        %v5353 = vrsqrt.pop %v5352
        %v5354 = vmul.f32 %v5346, %v5353
        %v5356 = vlaneseq
        %v5357 = vshrl.u32 %v5356, 7
        %v5358 = vsub.s32 0, %v5357
        %v5359 = vrot.slane %v4425, %v5358
        %v5361 = vmul.f32 %v5354, %v5359
        %v5363 = vlaneseq
        %v5364 = vshrl.u32 %v5363, 7
        %v5365 = vsub.s32 0, %v5364
        %v5366 = vrot.slane %v4426, %v5365
        %v5368 = vadd.f32 %v5361, %v5366
        %v5369 = vld [vmem:[#allocation10] sm:$0xff]
        %v5370 = vld [vmem:[#allocation10 + $0x8] sm:$0xff]
        %v5371 = vld [vmem:[#allocation10 + $0x10] sm:$0xff]
        %v5372 = vld [vmem:[#allocation10 + $0x18] sm:$0xff]
        %v5373 = vld [vmem:[%s67] sm:$0x1]
        %v5374 = vld [vmem:[%s69] sm:$0xff]
        %v5375 = vld [vmem:[%s69 + $0x8] sm:$0xff]
        %v5376 = vld [vmem:[%s69 + $0x10] sm:$0xff]
        %v5377 = vld [vmem:[%s69 + $0x18] sm:$0xff]
        %v5378 = vld [vmem:[%s69 + $0x20] sm:$0xff]
        %v5379 = vld [vmem:[%s69 + $0x28] sm:$0xff]
        %v5380 = vld [vmem:[%s69 + $0x30] sm:$0xff]
        %v5381 = vld [vmem:[%s69 + $0x38] sm:$0xff]
        %v5382 = vld [vmem:[%s71] sm:$0x1]
        %v5383 = vld [vmem:[%s73] sm:$0x1]
        %v5384 = vld [vmem:[%s75] sm:$0x1]
        %v5386 = vlaneseq
        %v5387 = vshrl.u32 %v5386, 7
        %v5388 = vsub.s32 0, %v5387
        %v5389 = vrot.slane %v5373, %v5388
        %v5392 = vsel %vm1282, %v5368, 0
        %5394 = vmatprep.subr.mxu0 0.0
        %5395 = vmatpush1.msra.mxu0 %v5369
        %5396 = vmatprep.subr.mxu0 0.0
        %5397 = vmatpush1.msra.mxu0 %v5370
        %5398 = vmatprep.subr.mxu0 0.0
        %5399 = vmatpush1.msra.mxu0 %v5371
        %5400 = vmatprep.subr.mxu0 0.0
        %5401 = vmatpush1.msra.mxu0 %v5372
        %5402 = vmatprep.subr.mxu0 0.0
        %5403 = vmatpush1.msra.mxu0 0.0
        %5404 = vmatprep.subr.mxu0 0.0
        %5405 = vmatpush1.msra.mxu0 0.0
        %5406 = vmatprep.subr.mxu0 0.0
        %5407 = vmatpush1.msra.mxu0 0.0
        %5408 = vmatprep.subr.mxu0 0.0
        %5409 = vmatpush1.msra.mxu0 0.0
        %5410 = vmatprep.subr.mxu0 0.0
        %5411 = vmatpush1.msra.mxu0 0.0
        %5412 = vmatprep.subr.mxu0 0.0
        %5413 = vmatpush1.msra.mxu0 0.0
        %5414 = vmatprep.subr.mxu0 0.0
        %5415 = vmatpush1.msra.mxu0 0.0
        %5416 = vmatprep.subr.mxu0 0.0
        %5417 = vmatpush1.msra.mxu0 0.0
        %5418 = vmatprep.subr.mxu0 0.0
        %5419 = vmatpush1.msra.mxu0 0.0
        %5420 = vmatprep.subr.mxu0 0.0
        %5421 = vmatpush1.msra.mxu0 0.0
        %5422 = vmatprep.subr.mxu0 0.0
        %5423 = vmatpush1.msra.mxu0 0.0
        %5424 = vmatprep.subr.mxu0 0.0
        %5425 = vmatpush1.msra.mxu0 0.0
        %5426 = vmatprep.subr.mxu0 0.0
        %5427 = vmatpush1.msra.mxu0 0.0
        %5428 = vmatprep.subr.mxu0 0.0
        %5429 = vmatpush1.msra.mxu0 0.0
        %5430 = vmatprep.subr.mxu0 0.0
        %5431 = vmatpush1.msra.mxu0 0.0
        %5432 = vmatprep.subr.mxu0 0.0
        %5433 = vmatpush1.msra.mxu0 0.0
        %5434 = vmatprep.subr.mxu0 0.0
        %5435 = vmatpush1.msra.mxu0 0.0
        %5436 = vmatprep.subr.mxu0 0.0
        %5437 = vmatpush1.msra.mxu0 0.0
        %5438 = vmatprep.subr.mxu0 0.0
        %5439 = vmatpush1.msra.mxu0 0.0
        %5440 = vmatprep.subr.mxu0 0.0
        %5441 = vmatpush1.msra.mxu0 0.0
        %5442 = vmatprep.subr.mxu0 0.0
        %5443 = vmatpush1.msra.mxu0 0.0
        %5444 = vmatprep.subr.mxu0 0.0
        %5445 = vmatpush1.msra.mxu0 0.0
        %5446 = vmatprep.subr.mxu0 0.0
        %5447 = vmatpush1.msra.mxu0 0.0
        %5448 = vmatprep.subr.mxu0 0.0
        %5449 = vmatpush1.msra.mxu0 0.0
        %5450 = vmatprep.subr.mxu0 0.0
        %5451 = vmatpush1.msra.mxu0 0.0
        %5452 = vmatprep.subr.mxu0 0.0
        %5453 = vmatpush1.msra.mxu0 0.0
        %5454 = vmatprep.subr.mxu0 0.0
        %5455 = vmatpush1.msra.mxu0 0.0
        %5456 = vmatprep.subr.mxu0 0.0
        %5457 = vmatpush1.msra.mxu0 0.0
        %5458 = vmatprep.mubr.f32.mxu0 0.0
        %5459 = vmatmul.mubr.f32.gmra.mrb[0].mxu0 %v5392
        %v5460 = vpop.f32.mrb[0].mxu0
        %v5461 = vadd.f32 %v5389, %v5460
        %v5462 = vpop.f32.mrb[0].mxu0
        %5463 = vdwg.mxu0
        %v5464 = vmul.f32 %v5461, 0.5
        %v5465 = vmul.f32 %v5461, 0.70710677
        %v5466 = verf.f32.pop %v5465
        %v5467 = vadd.f32 %v5466, 1.0
        %v5468 = vmul.f32 %v5464, %v5467
        %v5470 = vlaneseq
        %v5471 = vshrl.u32 %v5470, 7
        %v5472 = vsub.s32 0, %v5471
        %v5473 = vrot.slane %v5382, %v5472
        %v5476 = vsel %vm2296, %v5468, 0
        %5478 = vmatprep.subr.mxu0 0.0
        %5479 = vmatpush1.msra.mxu0 %v5374
        %5480 = vmatprep.subr.mxu0 0.0
        %5481 = vmatpush1.msra.mxu0 %v5375
        %5482 = vmatprep.subr.mxu0 0.0
        %5483 = vmatpush1.msra.mxu0 %v5376
        %5484 = vmatprep.subr.mxu0 0.0
        %5485 = vmatpush1.msra.mxu0 %v5377
        %5486 = vmatprep.subr.mxu0 0.0
        %5487 = vmatpush1.msra.mxu0 %v5378
        %5488 = vmatprep.subr.mxu0 0.0
        %5489 = vmatpush1.msra.mxu0 %v5379
        %5490 = vmatprep.subr.mxu0 0.0
        %5491 = vmatpush1.msra.mxu0 %v5380
        %5492 = vmatprep.subr.mxu0 0.0
        %5493 = vmatpush1.msra.mxu0 %v5381
        %5494 = vmatprep.subr.mxu0 0.0
        %5495 = vmatpush1.msra.mxu0 0.0
        %5496 = vmatprep.subr.mxu0 0.0
        %5497 = vmatpush1.msra.mxu0 0.0
        %5498 = vmatprep.subr.mxu0 0.0
        %5499 = vmatpush1.msra.mxu0 0.0
        %5500 = vmatprep.subr.mxu0 0.0
        %5501 = vmatpush1.msra.mxu0 0.0
        %5502 = vmatprep.subr.mxu0 0.0
        %5503 = vmatpush1.msra.mxu0 0.0
        %5504 = vmatprep.subr.mxu0 0.0
        %5505 = vmatpush1.msra.mxu0 0.0
        %5506 = vmatprep.subr.mxu0 0.0
        %5507 = vmatpush1.msra.mxu0 0.0
        %5508 = vmatprep.subr.mxu0 0.0
        %5509 = vmatpush1.msra.mxu0 0.0
        %5510 = vmatprep.subr.mxu0 0.0
        %5511 = vmatpush1.msra.mxu0 0.0
        %5512 = vmatprep.subr.mxu0 0.0
        %5513 = vmatpush1.msra.mxu0 0.0
        %5514 = vmatprep.subr.mxu0 0.0
        %5515 = vmatpush1.msra.mxu0 0.0
        %5516 = vmatprep.subr.mxu0 0.0
        %5517 = vmatpush1.msra.mxu0 0.0
        %5518 = vmatprep.subr.mxu0 0.0
        %5519 = vmatpush1.msra.mxu0 0.0
        %5520 = vmatprep.subr.mxu0 0.0
        %5521 = vmatpush1.msra.mxu0 0.0
        %5522 = vmatprep.subr.mxu0 0.0
        %5523 = vmatpush1.msra.mxu0 0.0
        %5524 = vmatprep.subr.mxu0 0.0
        %5525 = vmatpush1.msra.mxu0 0.0
        %5526 = vmatprep.subr.mxu0 0.0
        %5527 = vmatpush1.msra.mxu0 0.0
        %5528 = vmatprep.subr.mxu0 0.0
        %5529 = vmatpush1.msra.mxu0 0.0
        %5530 = vmatprep.subr.mxu0 0.0
        %5531 = vmatpush1.msra.mxu0 0.0
        %5532 = vmatprep.subr.mxu0 0.0
        %5533 = vmatpush1.msra.mxu0 0.0
        %5534 = vmatprep.subr.mxu0 0.0
        %5535 = vmatpush1.msra.mxu0 0.0
        %5536 = vmatprep.subr.mxu0 0.0
        %5537 = vmatpush1.msra.mxu0 0.0
        %5538 = vmatprep.subr.mxu0 0.0
        %5539 = vmatpush1.msra.mxu0 0.0
        %5540 = vmatprep.subr.mxu0 0.0
        %5541 = vmatpush1.msra.mxu0 0.0
        %5542 = vmatprep.mubr.f32.mxu0 0.0
        %5543 = vmatmul.mubr.f32.gmra.mrb[0].mxu0 %v5476
        %v5544 = vpop.f32.mrb[0].mxu0
        %v5545 = vadd.f32 %v5473, %v5544
        %v5546 = vpop.f32.mrb[0].mxu0
        %5547 = vdwg.mxu0
        %v5548 = vadd.f32 %v5368, %v5545
        %v5549 = vsel %vm1282, %v5548, 0.0
        %5550 = vadd.xlane.f32.xlu0 %v5549
        %v5551 = vpop.xlane.xlu0 %5550
        %v5552 = vmul.f32 %v5551, %v1286
        %v5553 = vsub.f32 %v5548, %v5552
        %v5554 = vmul.f32 %v5553, %v5553
        %v5555 = vsel %vm1282, %v5554, 0.0
        %5556 = vadd.xlane.f32.xlu0 %v5555
        %v5557 = vpop.xlane.xlu0 %5556
        %v5558 = vmul.f32 %v5557, %v1286
        %v5559 = vadd.f32 %v5558, 1e-05
        %v5560 = vrsqrt.pop %v5559
        %v5561 = vmul.f32 %v5553, %v5560
        %v5563 = vlaneseq
        %v5564 = vshrl.u32 %v5563, 7
        %v5565 = vsub.s32 0, %v5564
        %v5566 = vrot.slane %v5383, %v5565
        %v5568 = vmul.f32 %v5561, %v5566
        %v5570 = vlaneseq
        %v5571 = vshrl.u32 %v5570, 7
        %v5572 = vsub.s32 0, %v5571
        %v5573 = vrot.slane %v5384, %v5572
        %v5575 = vadd.f32 %v5568, %v5573
        %s5576 = scalar_lea.vmem %s37, 32
        %v5577 = vld [vmem:[%s5576] sm:$0xff]
        %v5578 = vld [vmem:[%s5576 + $0x8] sm:$0xff]
        %v5579 = vld [vmem:[%s5576 + $0x10] sm:$0xff]
        %v5580 = vld [vmem:[%s5576 + $0x18] sm:$0xff]
        %s5581 = scalar_lea.vmem %s39, 1
        %v5582 = vld [vmem:[%s5581] sm:$0x1]
        %s5583 = scalar_lea.vmem [#allocation2], 32
        %v5584 = vld [vmem:[%s5583] sm:$0xff]
        %v5585 = vld [vmem:[%s5583 + $0x8] sm:$0xff]
        %v5586 = vld [vmem:[%s5583 + $0x10] sm:$0xff]
        %v5587 = vld [vmem:[%s5583 + $0x18] sm:$0xff]
        %s5588 = scalar_lea.vmem %s43, 1
        %v5589 = vld [vmem:[%s5588] sm:$0x1]
        %s5590 = scalar_lea.vmem %s45, 1
        %v5591 = vld [vmem:[%s5590] sm:$0x1]
        %s5592 = scalar_lea.vmem %s47, 1
        %v5593 = vld [vmem:[%s5592] sm:$0x1]
        %v5595 = vlaneseq
        %v5596 = vshrl.u32 %v5595, 7
        %v5597 = vsub.s32 0, %v5596
        %v5598 = vrot.slane %v5582, %v5597
        %v5601 = vsel %vm1282, %v5575, 0
        %5603 = vmatprep.subr.mxu0 0.0
        %5604 = vmatpush1.msra.mxu0 %v5577
        %5605 = vmatprep.subr.mxu0 0.0
        %5606 = vmatpush1.msra.mxu0 %v5578
        %5607 = vmatprep.subr.mxu0 0.0
        %5608 = vmatpush1.msra.mxu0 %v5579
        %5609 = vmatprep.subr.mxu0 0.0
        %5610 = vmatpush1.msra.mxu0 %v5580
        %5611 = vmatprep.subr.mxu0 0.0
        %5612 = vmatpush1.msra.mxu0 0.0
        %5613 = vmatprep.subr.mxu0 0.0
        %5614 = vmatpush1.msra.mxu0 0.0
        %5615 = vmatprep.subr.mxu0 0.0
        %5616 = vmatpush1.msra.mxu0 0.0
        %5617 = vmatprep.subr.mxu0 0.0
        %5618 = vmatpush1.msra.mxu0 0.0
        %5619 = vmatprep.subr.mxu0 0.0
        %5620 = vmatpush1.msra.mxu0 0.0
        %5621 = vmatprep.subr.mxu0 0.0
        %5622 = vmatpush1.msra.mxu0 0.0
        %5623 = vmatprep.subr.mxu0 0.0
        %5624 = vmatpush1.msra.mxu0 0.0
        %5625 = vmatprep.subr.mxu0 0.0
        %5626 = vmatpush1.msra.mxu0 0.0
        %5627 = vmatprep.subr.mxu0 0.0
        %5628 = vmatpush1.msra.mxu0 0.0
        %5629 = vmatprep.subr.mxu0 0.0
        %5630 = vmatpush1.msra.mxu0 0.0
        %5631 = vmatprep.subr.mxu0 0.0
        %5632 = vmatpush1.msra.mxu0 0.0
        %5633 = vmatprep.subr.mxu0 0.0
        %5634 = vmatpush1.msra.mxu0 0.0
        %5635 = vmatprep.subr.mxu0 0.0
        %5636 = vmatpush1.msra.mxu0 0.0
        %5637 = vmatprep.subr.mxu0 0.0
        %5638 = vmatpush1.msra.mxu0 0.0
        %5639 = vmatprep.subr.mxu0 0.0
        %5640 = vmatpush1.msra.mxu0 0.0
        %5641 = vmatprep.subr.mxu0 0.0
        %5642 = vmatpush1.msra.mxu0 0.0
        %5643 = vmatprep.subr.mxu0 0.0
        %5644 = vmatpush1.msra.mxu0 0.0
        %5645 = vmatprep.subr.mxu0 0.0
        %5646 = vmatpush1.msra.mxu0 0.0
        %5647 = vmatprep.subr.mxu0 0.0
        %5648 = vmatpush1.msra.mxu0 0.0
        %5649 = vmatprep.subr.mxu0 0.0
        %5650 = vmatpush1.msra.mxu0 0.0
        %5651 = vmatprep.subr.mxu0 0.0
        %5652 = vmatpush1.msra.mxu0 0.0
        %5653 = vmatprep.subr.mxu0 0.0
        %5654 = vmatpush1.msra.mxu0 0.0
        %5655 = vmatprep.subr.mxu0 0.0
        %5656 = vmatpush1.msra.mxu0 0.0
        %5657 = vmatprep.subr.mxu0 0.0
        %5658 = vmatpush1.msra.mxu0 0.0
        %5659 = vmatprep.subr.mxu0 0.0
        %5660 = vmatpush1.msra.mxu0 0.0
        %5661 = vmatprep.subr.mxu0 0.0
        %5662 = vmatpush1.msra.mxu0 0.0
        %5663 = vmatprep.subr.mxu0 0.0
        %5664 = vmatpush1.msra.mxu0 0.0
        %5665 = vmatprep.subr.mxu0 0.0
        %5666 = vmatpush1.msra.mxu0 0.0
        %5667 = vmatprep.mubr.f32.mxu0 0.0
        %5668 = vmatmul.mubr.f32.gmra.mrb[0].mxu0 %v5601
        %v5669 = vpop.f32.mrb[0].mxu0
        %v5670 = vadd.f32 %v5598, %v5669
        %v5671 = vpop.f32.mrb[0].mxu0
        %5672 = vdwg.mxu0
        %5674 = vrot.lane.b32.xlu0 %v5670, 96
        %v5675 = vpop.permute.xlu0 %5674
        %v5676 = vsel %vm1405, %v5670, 0
        %v5678 = vsel %vm1405, %v5675, 0
        %5680 = vmatprep.subr.mxu0 0.0
        %5681 = vmatpush1.xpose.msra.mxu0 %v5678
        %5682 = vmatprep.subr.mxu0 0.0
        %5683 = vmatpush1.xpose.msra.mxu0 0.0
        %5684 = vmatprep.subr.mxu0 0.0
        %5685 = vmatpush1.xpose.msra.mxu0 0.0
        %5686 = vmatprep.subr.mxu0 0.0
        %5687 = vmatpush1.xpose.msra.mxu0 0.0
        %5688 = vmatprep.subr.mxu0 0.0
        %5689 = vmatpush1.xpose.msra.mxu0 0.0
        %5690 = vmatprep.subr.mxu0 0.0
        %5691 = vmatpush1.xpose.msra.mxu0 0.0
        %5692 = vmatprep.subr.mxu0 0.0
        %5693 = vmatpush1.xpose.msra.mxu0 0.0
        %5694 = vmatprep.subr.mxu0 0.0
        %5695 = vmatpush1.xpose.msra.mxu0 0.0
        %5696 = vmatprep.subr.mxu0 0.0
        %5697 = vmatpush1.xpose.msra.mxu0 0.0
        %5698 = vmatprep.subr.mxu0 0.0
        %5699 = vmatpush1.xpose.msra.mxu0 0.0
        %5700 = vmatprep.subr.mxu0 0.0
        %5701 = vmatpush1.xpose.msra.mxu0 0.0
        %5702 = vmatprep.subr.mxu0 0.0
        %5703 = vmatpush1.xpose.msra.mxu0 0.0
        %5704 = vmatprep.subr.mxu0 0.0
        %5705 = vmatpush1.xpose.msra.mxu0 0.0
        %5706 = vmatprep.subr.mxu0 0.0
        %5707 = vmatpush1.xpose.msra.mxu0 0.0
        %5708 = vmatprep.subr.mxu0 0.0
        %5709 = vmatpush1.xpose.msra.mxu0 0.0
        %5710 = vmatprep.subr.mxu0 0.0
        %5711 = vmatpush1.xpose.msra.mxu0 0.0
        %5712 = vmatprep.subr.mxu0 0.0
        %5713 = vmatpush1.xpose.msra.mxu0 0.0
        %5714 = vmatprep.subr.mxu0 0.0
        %5715 = vmatpush1.xpose.msra.mxu0 0.0
        %5716 = vmatprep.subr.mxu0 0.0
        %5717 = vmatpush1.xpose.msra.mxu0 0.0
        %5718 = vmatprep.subr.mxu0 0.0
        %5719 = vmatpush1.xpose.msra.mxu0 0.0
        %5720 = vmatprep.subr.mxu0 0.0
        %5721 = vmatpush1.xpose.msra.mxu0 0.0
        %5722 = vmatprep.subr.mxu0 0.0
        %5723 = vmatpush1.xpose.msra.mxu0 0.0
        %5724 = vmatprep.subr.mxu0 0.0
        %5725 = vmatpush1.xpose.msra.mxu0 0.0
        %5726 = vmatprep.subr.mxu0 0.0
        %5727 = vmatpush1.xpose.msra.mxu0 0.0
        %5728 = vmatprep.subr.mxu0 0.0
        %5729 = vmatpush1.xpose.msra.mxu0 0.0
        %5730 = vmatprep.subr.mxu0 0.0
        %5731 = vmatpush1.xpose.msra.mxu0 0.0
        %5732 = vmatprep.subr.mxu0 0.0
        %5733 = vmatpush1.xpose.msra.mxu0 0.0
        %5734 = vmatprep.subr.mxu0 0.0
        %5735 = vmatpush1.xpose.msra.mxu0 0.0
        %5736 = vmatprep.subr.mxu0 0.0
        %5737 = vmatpush1.xpose.msra.mxu0 0.0
        %5738 = vmatprep.subr.mxu0 0.0
        %5739 = vmatpush1.xpose.msra.mxu0 0.0
        %5740 = vmatprep.subr.mxu0 0.0
        %5741 = vmatpush1.xpose.msra.mxu0 0.0
        %5742 = vmatprep.subr.mxu0 0.0
        %5743 = vmatpush1.xpose.msra.mxu0 0.0
        %5744 = vmatprep.mubr.f32.mxu0 0.0
        %5745 = vmatmul.mubr.f32.gmra.mrb[0].mxu0 %v5676
        %v5746 = vpop.f32.mrb[0].mxu0
        %v5747 = vadd.f32 0.0, %v5746
        %v5748 = vpop.f32.mrb[0].mxu0
        %5749 = vdwg.mxu0
        %v5750 = vmul.f32 %v5747, 0.35355338
        %v5751 = vadd.f32 %v5750, %v3620
        %v5752 = vsel %vm1405, %v5751, -inf
        %5753 = vmax.xlane.f32.xlu0 %v5752
        %v5754 = vpop.xlane.xlu0 %5753
        %v5755 = vsub.f32 %v5751, %v5754
        %v5756 = vmul.f32 %v5755, 1.442695
        %v5757 = vpow.pop %v5756
        %v5758 = vsel %vm1405, %v5757, 0.0
        %5759 = vadd.xlane.f32.xlu0 %v5758
        %v5760 = vpop.xlane.xlu0 %5759
        %v5761 = vrcp.pop %v5760
        %v5762 = vmul.f32 %v5757, %v5761
        %5763 = vrot.lane.b32.xlu0 %v5670, 64
        %v5764 = vpop.permute.xlu0 %5763
        %v5767 = vsel %vm1405, %v5762, 0
        %5769 = vmatprep.subr.mxu0 0.0
        %5770 = vmatpush1.msra.mxu0 %v5764
        %5771 = vmatprep.subr.mxu0 0.0
        %5772 = vmatpush1.msra.mxu0 0.0
        %5773 = vmatprep.subr.mxu0 0.0
        %5774 = vmatpush1.msra.mxu0 0.0
        %5775 = vmatprep.subr.mxu0 0.0
        %5776 = vmatpush1.msra.mxu0 0.0
        %5777 = vmatprep.subr.mxu0 0.0
        %5778 = vmatpush1.msra.mxu0 0.0
        %5779 = vmatprep.subr.mxu0 0.0
        %5780 = vmatpush1.msra.mxu0 0.0
        %5781 = vmatprep.subr.mxu0 0.0
        %5782 = vmatpush1.msra.mxu0 0.0
        %5783 = vmatprep.subr.mxu0 0.0
        %5784 = vmatpush1.msra.mxu0 0.0
        %5785 = vmatprep.subr.mxu0 0.0
        %5786 = vmatpush1.msra.mxu0 0.0
        %5787 = vmatprep.subr.mxu0 0.0
        %5788 = vmatpush1.msra.mxu0 0.0
        %5789 = vmatprep.subr.mxu0 0.0
        %5790 = vmatpush1.msra.mxu0 0.0
        %5791 = vmatprep.subr.mxu0 0.0
        %5792 = vmatpush1.msra.mxu0 0.0
        %5793 = vmatprep.subr.mxu0 0.0
        %5794 = vmatpush1.msra.mxu0 0.0
        %5795 = vmatprep.subr.mxu0 0.0
        %5796 = vmatpush1.msra.mxu0 0.0
        %5797 = vmatprep.subr.mxu0 0.0
        %5798 = vmatpush1.msra.mxu0 0.0
        %5799 = vmatprep.subr.mxu0 0.0
        %5800 = vmatpush1.msra.mxu0 0.0
        %5801 = vmatprep.subr.mxu0 0.0
        %5802 = vmatpush1.msra.mxu0 0.0
        %5803 = vmatprep.subr.mxu0 0.0
        %5804 = vmatpush1.msra.mxu0 0.0
        %5805 = vmatprep.subr.mxu0 0.0
        %5806 = vmatpush1.msra.mxu0 0.0
        %5807 = vmatprep.subr.mxu0 0.0
        %5808 = vmatpush1.msra.mxu0 0.0
        %5809 = vmatprep.subr.mxu0 0.0
        %5810 = vmatpush1.msra.mxu0 0.0
        %5811 = vmatprep.subr.mxu0 0.0
        %5812 = vmatpush1.msra.mxu0 0.0
        %5813 = vmatprep.subr.mxu0 0.0
        %5814 = vmatpush1.msra.mxu0 0.0
        %5815 = vmatprep.subr.mxu0 0.0
        %5816 = vmatpush1.msra.mxu0 0.0
        %5817 = vmatprep.subr.mxu0 0.0
        %5818 = vmatpush1.msra.mxu0 0.0
        %5819 = vmatprep.subr.mxu0 0.0
        %5820 = vmatpush1.msra.mxu0 0.0
        %5821 = vmatprep.subr.mxu0 0.0
        %5822 = vmatpush1.msra.mxu0 0.0
        %5823 = vmatprep.subr.mxu0 0.0
        %5824 = vmatpush1.msra.mxu0 0.0
        %5825 = vmatprep.subr.mxu0 0.0
        %5826 = vmatpush1.msra.mxu0 0.0
        %5827 = vmatprep.subr.mxu0 0.0
        %5828 = vmatpush1.msra.mxu0 0.0
        %5829 = vmatprep.subr.mxu0 0.0
        %5830 = vmatpush1.msra.mxu0 0.0
        %5831 = vmatprep.subr.mxu0 0.0
        %5832 = vmatpush1.msra.mxu0 0.0
        %5833 = vmatprep.mubr.f32.mxu0 0.0
        %5834 = vmatmul.mubr.f32.gmra.mrb[0].mxu0 %v5767
        %v5835 = vpop.f32.mrb[0].mxu0
        %v5836 = vadd.f32 0.0, %v5835
        %v5837 = vpop.f32.mrb[0].mxu0
        %5838 = vdwg.mxu0
        %5839 = vrot.lane.b32.xlu0 %v5670, 120
        %v5840 = vpop.permute.xlu0 %5839
        %5841 = vrot.lane.b32.xlu0 %v5670, 88
        %v5842 = vpop.permute.xlu0 %5841
        %v5843 = vsel %vm1405, %v5840, 0
        %v5845 = vsel %vm1405, %v5842, 0
        %5847 = vmatprep.subr.mxu0 0.0
        %5848 = vmatpush1.xpose.msra.mxu0 %v5845
        %5849 = vmatprep.subr.mxu0 0.0
        %5850 = vmatpush1.xpose.msra.mxu0 0.0
        %5851 = vmatprep.subr.mxu0 0.0
        %5852 = vmatpush1.xpose.msra.mxu0 0.0
        %5853 = vmatprep.subr.mxu0 0.0
        %5854 = vmatpush1.xpose.msra.mxu0 0.0
        %5855 = vmatprep.subr.mxu0 0.0
        %5856 = vmatpush1.xpose.msra.mxu0 0.0
        %5857 = vmatprep.subr.mxu0 0.0
        %5858 = vmatpush1.xpose.msra.mxu0 0.0
        %5859 = vmatprep.subr.mxu0 0.0
        %5860 = vmatpush1.xpose.msra.mxu0 0.0
        %5861 = vmatprep.subr.mxu0 0.0
        %5862 = vmatpush1.xpose.msra.mxu0 0.0
        %5863 = vmatprep.subr.mxu0 0.0
        %5864 = vmatpush1.xpose.msra.mxu0 0.0
        %5865 = vmatprep.subr.mxu0 0.0
        %5866 = vmatpush1.xpose.msra.mxu0 0.0
        %5867 = vmatprep.subr.mxu0 0.0
        %5868 = vmatpush1.xpose.msra.mxu0 0.0
        %5869 = vmatprep.subr.mxu0 0.0
        %5870 = vmatpush1.xpose.msra.mxu0 0.0
        %5871 = vmatprep.subr.mxu0 0.0
        %5872 = vmatpush1.xpose.msra.mxu0 0.0
        %5873 = vmatprep.subr.mxu0 0.0
        %5874 = vmatpush1.xpose.msra.mxu0 0.0
        %5875 = vmatprep.subr.mxu0 0.0
        %5876 = vmatpush1.xpose.msra.mxu0 0.0
        %5877 = vmatprep.subr.mxu0 0.0
        %5878 = vmatpush1.xpose.msra.mxu0 0.0
        %5879 = vmatprep.subr.mxu0 0.0
        %5880 = vmatpush1.xpose.msra.mxu0 0.0
        %5881 = vmatprep.subr.mxu0 0.0
        %5882 = vmatpush1.xpose.msra.mxu0 0.0
        %5883 = vmatprep.subr.mxu0 0.0
        %5884 = vmatpush1.xpose.msra.mxu0 0.0
        %5885 = vmatprep.subr.mxu0 0.0
        %5886 = vmatpush1.xpose.msra.mxu0 0.0
        %5887 = vmatprep.subr.mxu0 0.0
        %5888 = vmatpush1.xpose.msra.mxu0 0.0
        %5889 = vmatprep.subr.mxu0 0.0
        %5890 = vmatpush1.xpose.msra.mxu0 0.0
        %5891 = vmatprep.subr.mxu0 0.0
        %5892 = vmatpush1.xpose.msra.mxu0 0.0
        %5893 = vmatprep.subr.mxu0 0.0
        %5894 = vmatpush1.xpose.msra.mxu0 0.0
        %5895 = vmatprep.subr.mxu0 0.0
        %5896 = vmatpush1.xpose.msra.mxu0 0.0
        %5897 = vmatprep.subr.mxu0 0.0
        %5898 = vmatpush1.xpose.msra.mxu0 0.0
        %5899 = vmatprep.subr.mxu0 0.0
        %5900 = vmatpush1.xpose.msra.mxu0 0.0
        %5901 = vmatprep.subr.mxu0 0.0
        %5902 = vmatpush1.xpose.msra.mxu0 0.0
        %5903 = vmatprep.subr.mxu0 0.0
        %5904 = vmatpush1.xpose.msra.mxu0 0.0
        %5905 = vmatprep.subr.mxu0 0.0
        %5906 = vmatpush1.xpose.msra.mxu0 0.0
        %5907 = vmatprep.subr.mxu0 0.0
        %5908 = vmatpush1.xpose.msra.mxu0 0.0
        %5909 = vmatprep.subr.mxu0 0.0
        %5910 = vmatpush1.xpose.msra.mxu0 0.0
        %5911 = vmatprep.mubr.f32.mxu0 0.0
        %5912 = vmatmul.mubr.f32.gmra.mrb[0].mxu0 %v5843
        %v5913 = vpop.f32.mrb[0].mxu0
        %v5914 = vadd.f32 0.0, %v5913
        %v5915 = vpop.f32.mrb[0].mxu0
        %5916 = vdwg.mxu0
        %v5917 = vmul.f32 %v5914, 0.35355338
        %v5918 = vadd.f32 %v5917, %v3620
        %v5919 = vsel %vm1405, %v5918, -inf
        %5920 = vmax.xlane.f32.xlu0 %v5919
        %v5921 = vpop.xlane.xlu0 %5920
        %v5922 = vsub.f32 %v5918, %v5921
        %v5923 = vmul.f32 %v5922, 1.442695
        %v5924 = vpow.pop %v5923
        %v5925 = vsel %vm1405, %v5924, 0.0
        %5926 = vadd.xlane.f32.xlu0 %v5925
        %v5927 = vpop.xlane.xlu0 %5926
        %v5928 = vrcp.pop %v5927
        %v5929 = vmul.f32 %v5924, %v5928
        %5930 = vrot.lane.b32.xlu0 %v5670, 56
        %v5931 = vpop.permute.xlu0 %5930
        %v5934 = vsel %vm1405, %v5929, 0
        %5936 = vmatprep.subr.mxu0 0.0
        %5937 = vmatpush1.msra.mxu0 %v5931
        %5938 = vmatprep.subr.mxu0 0.0
        %5939 = vmatpush1.msra.mxu0 0.0
        %5940 = vmatprep.subr.mxu0 0.0
        %5941 = vmatpush1.msra.mxu0 0.0
        %5942 = vmatprep.subr.mxu0 0.0
        %5943 = vmatpush1.msra.mxu0 0.0
        %5944 = vmatprep.subr.mxu0 0.0
        %5945 = vmatpush1.msra.mxu0 0.0
        %5946 = vmatprep.subr.mxu0 0.0
        %5947 = vmatpush1.msra.mxu0 0.0
        %5948 = vmatprep.subr.mxu0 0.0
        %5949 = vmatpush1.msra.mxu0 0.0
        %5950 = vmatprep.subr.mxu0 0.0
        %5951 = vmatpush1.msra.mxu0 0.0
        %5952 = vmatprep.subr.mxu0 0.0
        %5953 = vmatpush1.msra.mxu0 0.0
        %5954 = vmatprep.subr.mxu0 0.0
        %5955 = vmatpush1.msra.mxu0 0.0
        %5956 = vmatprep.subr.mxu0 0.0
        %5957 = vmatpush1.msra.mxu0 0.0
        %5958 = vmatprep.subr.mxu0 0.0
        %5959 = vmatpush1.msra.mxu0 0.0
        %5960 = vmatprep.subr.mxu0 0.0
        %5961 = vmatpush1.msra.mxu0 0.0
        %5962 = vmatprep.subr.mxu0 0.0
        %5963 = vmatpush1.msra.mxu0 0.0
        %5964 = vmatprep.subr.mxu0 0.0
        %5965 = vmatpush1.msra.mxu0 0.0
        %5966 = vmatprep.subr.mxu0 0.0
        %5967 = vmatpush1.msra.mxu0 0.0
        %5968 = vmatprep.subr.mxu0 0.0
        %5969 = vmatpush1.msra.mxu0 0.0
        %5970 = vmatprep.subr.mxu0 0.0
        %5971 = vmatpush1.msra.mxu0 0.0
        %5972 = vmatprep.subr.mxu0 0.0
        %5973 = vmatpush1.msra.mxu0 0.0
        %5974 = vmatprep.subr.mxu0 0.0
        %5975 = vmatpush1.msra.mxu0 0.0
        %5976 = vmatprep.subr.mxu0 0.0
        %5977 = vmatpush1.msra.mxu0 0.0
        %5978 = vmatprep.subr.mxu0 0.0
        %5979 = vmatpush1.msra.mxu0 0.0
        %5980 = vmatprep.subr.mxu0 0.0
        %5981 = vmatpush1.msra.mxu0 0.0
        %5982 = vmatprep.subr.mxu0 0.0
        %5983 = vmatpush1.msra.mxu0 0.0
        %5984 = vmatprep.subr.mxu0 0.0
        %5985 = vmatpush1.msra.mxu0 0.0
        %5986 = vmatprep.subr.mxu0 0.0
        %5987 = vmatpush1.msra.mxu0 0.0
        %5988 = vmatprep.subr.mxu0 0.0
        %5989 = vmatpush1.msra.mxu0 0.0
        %5990 = vmatprep.subr.mxu0 0.0
        %5991 = vmatpush1.msra.mxu0 0.0
        %5992 = vmatprep.subr.mxu0 0.0
        %5993 = vmatpush1.msra.mxu0 0.0
        %5994 = vmatprep.subr.mxu0 0.0
        %5995 = vmatpush1.msra.mxu0 0.0
        %5996 = vmatprep.subr.mxu0 0.0
        %5997 = vmatpush1.msra.mxu0 0.0
        %5998 = vmatprep.subr.mxu0 0.0
        %5999 = vmatpush1.msra.mxu0 0.0
        %6000 = vmatprep.mubr.f32.mxu0 0.0
        %6001 = vmatmul.mubr.f32.gmra.mrb[0].mxu0 %v5934
        %v6002 = vpop.f32.mrb[0].mxu0
        %v6003 = vadd.f32 0.0, %v6002
        %v6004 = vpop.f32.mrb[0].mxu0
        %6005 = vdwg.mxu0
        %6006 = vrot.lane.b32.xlu0 %v5670, 112
        %v6007 = vpop.permute.xlu0 %6006
        %6008 = vrot.lane.b32.xlu0 %v5670, 80
        %v6009 = vpop.permute.xlu0 %6008
        %v6010 = vsel %vm1405, %v6007, 0
        %v6012 = vsel %vm1405, %v6009, 0
        %6014 = vmatprep.subr.mxu0 0.0
        %6015 = vmatpush1.xpose.msra.mxu0 %v6012
        %6016 = vmatprep.subr.mxu0 0.0
        %6017 = vmatpush1.xpose.msra.mxu0 0.0
        %6018 = vmatprep.subr.mxu0 0.0
        %6019 = vmatpush1.xpose.msra.mxu0 0.0
        %6020 = vmatprep.subr.mxu0 0.0
        %6021 = vmatpush1.xpose.msra.mxu0 0.0
        %6022 = vmatprep.subr.mxu0 0.0
        %6023 = vmatpush1.xpose.msra.mxu0 0.0
        %6024 = vmatprep.subr.mxu0 0.0
        %6025 = vmatpush1.xpose.msra.mxu0 0.0
        %6026 = vmatprep.subr.mxu0 0.0
        %6027 = vmatpush1.xpose.msra.mxu0 0.0
        %6028 = vmatprep.subr.mxu0 0.0
        %6029 = vmatpush1.xpose.msra.mxu0 0.0
        %6030 = vmatprep.subr.mxu0 0.0
        %6031 = vmatpush1.xpose.msra.mxu0 0.0
        %6032 = vmatprep.subr.mxu0 0.0
        %6033 = vmatpush1.xpose.msra.mxu0 0.0
        %6034 = vmatprep.subr.mxu0 0.0
        %6035 = vmatpush1.xpose.msra.mxu0 0.0
        %6036 = vmatprep.subr.mxu0 0.0
        %6037 = vmatpush1.xpose.msra.mxu0 0.0
        %6038 = vmatprep.subr.mxu0 0.0
        %6039 = vmatpush1.xpose.msra.mxu0 0.0
        %6040 = vmatprep.subr.mxu0 0.0
        %6041 = vmatpush1.xpose.msra.mxu0 0.0
        %6042 = vmatprep.subr.mxu0 0.0
        %6043 = vmatpush1.xpose.msra.mxu0 0.0
        %6044 = vmatprep.subr.mxu0 0.0
        %6045 = vmatpush1.xpose.msra.mxu0 0.0
        %6046 = vmatprep.subr.mxu0 0.0
        %6047 = vmatpush1.xpose.msra.mxu0 0.0
        %6048 = vmatprep.subr.mxu0 0.0
        %6049 = vmatpush1.xpose.msra.mxu0 0.0
        %6050 = vmatprep.subr.mxu0 0.0
        %6051 = vmatpush1.xpose.msra.mxu0 0.0
        %6052 = vmatprep.subr.mxu0 0.0
        %6053 = vmatpush1.xpose.msra.mxu0 0.0
        %6054 = vmatprep.subr.mxu0 0.0
        %6055 = vmatpush1.xpose.msra.mxu0 0.0
        %6056 = vmatprep.subr.mxu0 0.0
        %6057 = vmatpush1.xpose.msra.mxu0 0.0
        %6058 = vmatprep.subr.mxu0 0.0
        %6059 = vmatpush1.xpose.msra.mxu0 0.0
        %6060 = vmatprep.subr.mxu0 0.0
        %6061 = vmatpush1.xpose.msra.mxu0 0.0
        %6062 = vmatprep.subr.mxu0 0.0
        %6063 = vmatpush1.xpose.msra.mxu0 0.0
        %6064 = vmatprep.subr.mxu0 0.0
        %6065 = vmatpush1.xpose.msra.mxu0 0.0
        %6066 = vmatprep.subr.mxu0 0.0
        %6067 = vmatpush1.xpose.msra.mxu0 0.0
        %6068 = vmatprep.subr.mxu0 0.0
        %6069 = vmatpush1.xpose.msra.mxu0 0.0
        %6070 = vmatprep.subr.mxu0 0.0
        %6071 = vmatpush1.xpose.msra.mxu0 0.0
        %6072 = vmatprep.subr.mxu0 0.0
        %6073 = vmatpush1.xpose.msra.mxu0 0.0
        %6074 = vmatprep.subr.mxu0 0.0
        %6075 = vmatpush1.xpose.msra.mxu0 0.0
        %6076 = vmatprep.subr.mxu0 0.0
        %6077 = vmatpush1.xpose.msra.mxu0 0.0
        %6078 = vmatprep.mubr.f32.mxu0 0.0
        %6079 = vmatmul.mubr.f32.gmra.mrb[0].mxu0 %v6010
        %v6080 = vpop.f32.mrb[0].mxu0
        %v6081 = vadd.f32 0.0, %v6080
        %v6082 = vpop.f32.mrb[0].mxu0
        %6083 = vdwg.mxu0
        %v6084 = vmul.f32 %v6081, 0.35355338
        %v6085 = vadd.f32 %v6084, %v3620
        %v6086 = vsel %vm1405, %v6085, -inf
        %6087 = vmax.xlane.f32.xlu0 %v6086
        %v6088 = vpop.xlane.xlu0 %6087
        %v6089 = vsub.f32 %v6085, %v6088
        %v6090 = vmul.f32 %v6089, 1.442695
        %v6091 = vpow.pop %v6090
        %v6092 = vsel %vm1405, %v6091, 0.0
        %6093 = vadd.xlane.f32.xlu0 %v6092
        %v6094 = vpop.xlane.xlu0 %6093
        %v6095 = vrcp.pop %v6094
        %v6096 = vmul.f32 %v6091, %v6095
        %6097 = vrot.lane.b32.xlu0 %v5670, 48
        %v6098 = vpop.permute.xlu0 %6097
        %v6101 = vsel %vm1405, %v6096, 0
        %6103 = vmatprep.subr.mxu0 0.0
        %6104 = vmatpush1.msra.mxu0 %v6098
        %6105 = vmatprep.subr.mxu0 0.0
        %6106 = vmatpush1.msra.mxu0 0.0
        %6107 = vmatprep.subr.mxu0 0.0
        %6108 = vmatpush1.msra.mxu0 0.0
        %6109 = vmatprep.subr.mxu0 0.0
        %6110 = vmatpush1.msra.mxu0 0.0
        %6111 = vmatprep.subr.mxu0 0.0
        %6112 = vmatpush1.msra.mxu0 0.0
        %6113 = vmatprep.subr.mxu0 0.0
        %6114 = vmatpush1.msra.mxu0 0.0
        %6115 = vmatprep.subr.mxu0 0.0
        %6116 = vmatpush1.msra.mxu0 0.0
        %6117 = vmatprep.subr.mxu0 0.0
        %6118 = vmatpush1.msra.mxu0 0.0
        %6119 = vmatprep.subr.mxu0 0.0
        %6120 = vmatpush1.msra.mxu0 0.0
        %6121 = vmatprep.subr.mxu0 0.0
        %6122 = vmatpush1.msra.mxu0 0.0
        %6123 = vmatprep.subr.mxu0 0.0
        %6124 = vmatpush1.msra.mxu0 0.0
        %6125 = vmatprep.subr.mxu0 0.0
        %6126 = vmatpush1.msra.mxu0 0.0
        %6127 = vmatprep.subr.mxu0 0.0
        %6128 = vmatpush1.msra.mxu0 0.0
        %6129 = vmatprep.subr.mxu0 0.0
        %6130 = vmatpush1.msra.mxu0 0.0
        %6131 = vmatprep.subr.mxu0 0.0
        %6132 = vmatpush1.msra.mxu0 0.0
        %6133 = vmatprep.subr.mxu0 0.0
        %6134 = vmatpush1.msra.mxu0 0.0
        %6135 = vmatprep.subr.mxu0 0.0
        %6136 = vmatpush1.msra.mxu0 0.0
        %6137 = vmatprep.subr.mxu0 0.0
        %6138 = vmatpush1.msra.mxu0 0.0
        %6139 = vmatprep.subr.mxu0 0.0
        %6140 = vmatpush1.msra.mxu0 0.0
        %6141 = vmatprep.subr.mxu0 0.0
        %6142 = vmatpush1.msra.mxu0 0.0
        %6143 = vmatprep.subr.mxu0 0.0
        %6144 = vmatpush1.msra.mxu0 0.0
        %6145 = vmatprep.subr.mxu0 0.0
        %6146 = vmatpush1.msra.mxu0 0.0
        %6147 = vmatprep.subr.mxu0 0.0
        %6148 = vmatpush1.msra.mxu0 0.0
        %6149 = vmatprep.subr.mxu0 0.0
        %6150 = vmatpush1.msra.mxu0 0.0
        %6151 = vmatprep.subr.mxu0 0.0
        %6152 = vmatpush1.msra.mxu0 0.0
        %6153 = vmatprep.subr.mxu0 0.0
        %6154 = vmatpush1.msra.mxu0 0.0
        %6155 = vmatprep.subr.mxu0 0.0
        %6156 = vmatpush1.msra.mxu0 0.0
        %6157 = vmatprep.subr.mxu0 0.0
        %6158 = vmatpush1.msra.mxu0 0.0
        %6159 = vmatprep.subr.mxu0 0.0
        %6160 = vmatpush1.msra.mxu0 0.0
        %6161 = vmatprep.subr.mxu0 0.0
        %6162 = vmatpush1.msra.mxu0 0.0
        %6163 = vmatprep.subr.mxu0 0.0
        %6164 = vmatpush1.msra.mxu0 0.0
        %6165 = vmatprep.subr.mxu0 0.0
        %6166 = vmatpush1.msra.mxu0 0.0
        %6167 = vmatprep.mubr.f32.mxu0 0.0
        %6168 = vmatmul.mubr.f32.gmra.mrb[0].mxu0 %v6101
        %v6169 = vpop.f32.mrb[0].mxu0
        %v6170 = vadd.f32 0.0, %v6169
        %v6171 = vpop.f32.mrb[0].mxu0
        %6172 = vdwg.mxu0
        %6173 = vrot.lane.b32.xlu0 %v5670, 104
        %v6174 = vpop.permute.xlu0 %6173
        %6175 = vrot.lane.b32.xlu0 %v5670, 72
        %v6176 = vpop.permute.xlu0 %6175
        %v6177 = vsel %vm1405, %v6174, 0
        %v6179 = vsel %vm1405, %v6176, 0
        %6181 = vmatprep.subr.mxu0 0.0
        %6182 = vmatpush1.xpose.msra.mxu0 %v6179
        %6183 = vmatprep.subr.mxu0 0.0
        %6184 = vmatpush1.xpose.msra.mxu0 0.0
        %6185 = vmatprep.subr.mxu0 0.0
        %6186 = vmatpush1.xpose.msra.mxu0 0.0
        %6187 = vmatprep.subr.mxu0 0.0
        %6188 = vmatpush1.xpose.msra.mxu0 0.0
        %6189 = vmatprep.subr.mxu0 0.0
        %6190 = vmatpush1.xpose.msra.mxu0 0.0
        %6191 = vmatprep.subr.mxu0 0.0
        %6192 = vmatpush1.xpose.msra.mxu0 0.0
        %6193 = vmatprep.subr.mxu0 0.0
        %6194 = vmatpush1.xpose.msra.mxu0 0.0
        %6195 = vmatprep.subr.mxu0 0.0
        %6196 = vmatpush1.xpose.msra.mxu0 0.0
        %6197 = vmatprep.subr.mxu0 0.0
        %6198 = vmatpush1.xpose.msra.mxu0 0.0
        %6199 = vmatprep.subr.mxu0 0.0
        %6200 = vmatpush1.xpose.msra.mxu0 0.0
        %6201 = vmatprep.subr.mxu0 0.0
        %6202 = vmatpush1.xpose.msra.mxu0 0.0
        %6203 = vmatprep.subr.mxu0 0.0
        %6204 = vmatpush1.xpose.msra.mxu0 0.0
        %6205 = vmatprep.subr.mxu0 0.0
        %6206 = vmatpush1.xpose.msra.mxu0 0.0
        %6207 = vmatprep.subr.mxu0 0.0
        %6208 = vmatpush1.xpose.msra.mxu0 0.0
        %6209 = vmatprep.subr.mxu0 0.0
        %6210 = vmatpush1.xpose.msra.mxu0 0.0
        %6211 = vmatprep.subr.mxu0 0.0
        %6212 = vmatpush1.xpose.msra.mxu0 0.0
        %6213 = vmatprep.subr.mxu0 0.0
        %6214 = vmatpush1.xpose.msra.mxu0 0.0
        %6215 = vmatprep.subr.mxu0 0.0
        %6216 = vmatpush1.xpose.msra.mxu0 0.0
        %6217 = vmatprep.subr.mxu0 0.0
        %6218 = vmatpush1.xpose.msra.mxu0 0.0
        %6219 = vmatprep.subr.mxu0 0.0
        %6220 = vmatpush1.xpose.msra.mxu0 0.0
        %6221 = vmatprep.subr.mxu0 0.0
        %6222 = vmatpush1.xpose.msra.mxu0 0.0
        %6223 = vmatprep.subr.mxu0 0.0
        %6224 = vmatpush1.xpose.msra.mxu0 0.0
        %6225 = vmatprep.subr.mxu0 0.0
        %6226 = vmatpush1.xpose.msra.mxu0 0.0
        %6227 = vmatprep.subr.mxu0 0.0
        %6228 = vmatpush1.xpose.msra.mxu0 0.0
        %6229 = vmatprep.subr.mxu0 0.0
        %6230 = vmatpush1.xpose.msra.mxu0 0.0
        %6231 = vmatprep.subr.mxu0 0.0
        %6232 = vmatpush1.xpose.msra.mxu0 0.0
        %6233 = vmatprep.subr.mxu0 0.0
        %6234 = vmatpush1.xpose.msra.mxu0 0.0
        %6235 = vmatprep.subr.mxu0 0.0
        %6236 = vmatpush1.xpose.msra.mxu0 0.0
        %6237 = vmatprep.subr.mxu0 0.0
        %6238 = vmatpush1.xpose.msra.mxu0 0.0
        %6239 = vmatprep.subr.mxu0 0.0
        %6240 = vmatpush1.xpose.msra.mxu0 0.0
        %6241 = vmatprep.subr.mxu0 0.0
        %6242 = vmatpush1.xpose.msra.mxu0 0.0
        %6243 = vmatprep.subr.mxu0 0.0
        %6244 = vmatpush1.xpose.msra.mxu0 0.0
        %6245 = vmatprep.mubr.f32.mxu0 0.0
        %6246 = vmatmul.mubr.f32.gmra.mrb[0].mxu0 %v6177
        %v6247 = vpop.f32.mrb[0].mxu0
        %v6248 = vadd.f32 0.0, %v6247
        %v6249 = vpop.f32.mrb[0].mxu0
        %6250 = vdwg.mxu0
        %v6251 = vmul.f32 %v6248, 0.35355338
        %v6252 = vadd.f32 %v6251, %v3620
        %v6253 = vsel %vm1405, %v6252, -inf
        %6254 = vmax.xlane.f32.xlu0 %v6253
        %v6255 = vpop.xlane.xlu0 %6254
        %v6256 = vsub.f32 %v6252, %v6255
        %v6257 = vmul.f32 %v6256, 1.442695
        %v6258 = vpow.pop %v6257
        %v6259 = vsel %vm1405, %v6258, 0.0
        %6260 = vadd.xlane.f32.xlu0 %v6259
        %v6261 = vpop.xlane.xlu0 %6260
        %v6262 = vrcp.pop %v6261
        %v6263 = vmul.f32 %v6258, %v6262
        %6264 = vrot.lane.b32.xlu0 %v5670, 40
        %v6265 = vpop.permute.xlu0 %6264
        %v6268 = vsel %vm1405, %v6263, 0
        %6270 = vmatprep.subr.mxu0 0.0
        %6271 = vmatpush1.msra.mxu0 %v6265
        %6272 = vmatprep.subr.mxu0 0.0
        %6273 = vmatpush1.msra.mxu0 0.0
        %6274 = vmatprep.subr.mxu0 0.0
        %6275 = vmatpush1.msra.mxu0 0.0
        %6276 = vmatprep.subr.mxu0 0.0
        %6277 = vmatpush1.msra.mxu0 0.0
        %6278 = vmatprep.subr.mxu0 0.0
        %6279 = vmatpush1.msra.mxu0 0.0
        %6280 = vmatprep.subr.mxu0 0.0
        %6281 = vmatpush1.msra.mxu0 0.0
        %6282 = vmatprep.subr.mxu0 0.0
        %6283 = vmatpush1.msra.mxu0 0.0
        %6284 = vmatprep.subr.mxu0 0.0
        %6285 = vmatpush1.msra.mxu0 0.0
        %6286 = vmatprep.subr.mxu0 0.0
        %6287 = vmatpush1.msra.mxu0 0.0
        %6288 = vmatprep.subr.mxu0 0.0
        %6289 = vmatpush1.msra.mxu0 0.0
        %6290 = vmatprep.subr.mxu0 0.0
        %6291 = vmatpush1.msra.mxu0 0.0
        %6292 = vmatprep.subr.mxu0 0.0
        %6293 = vmatpush1.msra.mxu0 0.0
        %6294 = vmatprep.subr.mxu0 0.0
        %6295 = vmatpush1.msra.mxu0 0.0
        %6296 = vmatprep.subr.mxu0 0.0
        %6297 = vmatpush1.msra.mxu0 0.0
        %6298 = vmatprep.subr.mxu0 0.0
        %6299 = vmatpush1.msra.mxu0 0.0
        %6300 = vmatprep.subr.mxu0 0.0
        %6301 = vmatpush1.msra.mxu0 0.0
        %6302 = vmatprep.subr.mxu0 0.0
        %6303 = vmatpush1.msra.mxu0 0.0
        %6304 = vmatprep.subr.mxu0 0.0
        %6305 = vmatpush1.msra.mxu0 0.0
        %6306 = vmatprep.subr.mxu0 0.0
        %6307 = vmatpush1.msra.mxu0 0.0
        %6308 = vmatprep.subr.mxu0 0.0
        %6309 = vmatpush1.msra.mxu0 0.0
        %6310 = vmatprep.subr.mxu0 0.0
        %6311 = vmatpush1.msra.mxu0 0.0
        %6312 = vmatprep.subr.mxu0 0.0
        %6313 = vmatpush1.msra.mxu0 0.0
        %6314 = vmatprep.subr.mxu0 0.0
        %6315 = vmatpush1.msra.mxu0 0.0
        %6316 = vmatprep.subr.mxu0 0.0
        %6317 = vmatpush1.msra.mxu0 0.0
        %6318 = vmatprep.subr.mxu0 0.0
        %6319 = vmatpush1.msra.mxu0 0.0
        %6320 = vmatprep.subr.mxu0 0.0
        %6321 = vmatpush1.msra.mxu0 0.0
        %6322 = vmatprep.subr.mxu0 0.0
        %6323 = vmatpush1.msra.mxu0 0.0
        %6324 = vmatprep.subr.mxu0 0.0
        %6325 = vmatpush1.msra.mxu0 0.0
        %6326 = vmatprep.subr.mxu0 0.0
        %6327 = vmatpush1.msra.mxu0 0.0
        %6328 = vmatprep.subr.mxu0 0.0
        %6329 = vmatpush1.msra.mxu0 0.0
        %6330 = vmatprep.subr.mxu0 0.0
        %6331 = vmatpush1.msra.mxu0 0.0
        %6332 = vmatprep.subr.mxu0 0.0
        %6333 = vmatpush1.msra.mxu0 0.0
        %6334 = vmatprep.mubr.f32.mxu0 0.0
        %6335 = vmatmul.mubr.f32.gmra.mrb[0].mxu0 %v6268
        %v6336 = vpop.f32.mrb[0].mxu0
        %v6337 = vadd.f32 0.0, %v6336
        %v6338 = vpop.f32.mrb[0].mxu0
        %6339 = vdwg.mxu0
        %6341 = vrot.lane.b32.xlu0 %v6003, 8
        %v6342 = vpop.permute.xlu0 %6341
        %6345 = vrot.lane.b32.xlu0 %v6170, 16
        %v6346 = vpop.permute.xlu0 %6345
        %6349 = vrot.lane.b32.xlu0 %v6337, 24
        %v6350 = vpop.permute.xlu0 %6349
        %v6352 = vsel %vm1405, %v5836, %v6342
        %v6353 = vsel %vm2079, %v6352, %v6346
        %v6354 = vsel %vm2081, %v6353, %v6350
        %v6356 = vlaneseq
        %v6357 = vshrl.u32 %v6356, 7
        %v6358 = vsub.s32 0, %v6357
        %v6359 = vrot.slane %v5589, %v6358
        %v6362 = vsel %vm1282, %v6354, 0
        %6364 = vmatprep.subr.mxu0 0.0
        %6365 = vmatpush1.msra.mxu0 %v5584
        %6366 = vmatprep.subr.mxu0 0.0
        %6367 = vmatpush1.msra.mxu0 %v5585
        %6368 = vmatprep.subr.mxu0 0.0
        %6369 = vmatpush1.msra.mxu0 %v5586
        %6370 = vmatprep.subr.mxu0 0.0
        %6371 = vmatpush1.msra.mxu0 %v5587
        %6372 = vmatprep.subr.mxu0 0.0
        %6373 = vmatpush1.msra.mxu0 0.0
        %6374 = vmatprep.subr.mxu0 0.0
        %6375 = vmatpush1.msra.mxu0 0.0
        %6376 = vmatprep.subr.mxu0 0.0
        %6377 = vmatpush1.msra.mxu0 0.0
        %6378 = vmatprep.subr.mxu0 0.0
        %6379 = vmatpush1.msra.mxu0 0.0
        %6380 = vmatprep.subr.mxu0 0.0
        %6381 = vmatpush1.msra.mxu0 0.0
        %6382 = vmatprep.subr.mxu0 0.0
        %6383 = vmatpush1.msra.mxu0 0.0
        %6384 = vmatprep.subr.mxu0 0.0
        %6385 = vmatpush1.msra.mxu0 0.0
        %6386 = vmatprep.subr.mxu0 0.0
        %6387 = vmatpush1.msra.mxu0 0.0
        %6388 = vmatprep.subr.mxu0 0.0
        %6389 = vmatpush1.msra.mxu0 0.0
        %6390 = vmatprep.subr.mxu0 0.0
        %6391 = vmatpush1.msra.mxu0 0.0
        %6392 = vmatprep.subr.mxu0 0.0
        %6393 = vmatpush1.msra.mxu0 0.0
        %6394 = vmatprep.subr.mxu0 0.0
        %6395 = vmatpush1.msra.mxu0 0.0
        %6396 = vmatprep.subr.mxu0 0.0
        %6397 = vmatpush1.msra.mxu0 0.0
        %6398 = vmatprep.subr.mxu0 0.0
        %6399 = vmatpush1.msra.mxu0 0.0
        %6400 = vmatprep.subr.mxu0 0.0
        %6401 = vmatpush1.msra.mxu0 0.0
        %6402 = vmatprep.subr.mxu0 0.0
        %6403 = vmatpush1.msra.mxu0 0.0
        %6404 = vmatprep.subr.mxu0 0.0
        %6405 = vmatpush1.msra.mxu0 0.0
        %6406 = vmatprep.subr.mxu0 0.0
        %6407 = vmatpush1.msra.mxu0 0.0
        %6408 = vmatprep.subr.mxu0 0.0
        %6409 = vmatpush1.msra.mxu0 0.0
        %6410 = vmatprep.subr.mxu0 0.0
        %6411 = vmatpush1.msra.mxu0 0.0
        %6412 = vmatprep.subr.mxu0 0.0
        %6413 = vmatpush1.msra.mxu0 0.0
        %6414 = vmatprep.subr.mxu0 0.0
        %6415 = vmatpush1.msra.mxu0 0.0
        %6416 = vmatprep.subr.mxu0 0.0
        %6417 = vmatpush1.msra.mxu0 0.0
        %6418 = vmatprep.subr.mxu0 0.0
        %6419 = vmatpush1.msra.mxu0 0.0
        %6420 = vmatprep.subr.mxu0 0.0
        %6421 = vmatpush1.msra.mxu0 0.0
        %6422 = vmatprep.subr.mxu0 0.0
        %6423 = vmatpush1.msra.mxu0 0.0
        %6424 = vmatprep.subr.mxu0 0.0
        %6425 = vmatpush1.msra.mxu0 0.0
        %6426 = vmatprep.subr.mxu0 0.0
        %6427 = vmatpush1.msra.mxu0 0.0
        %6428 = vmatprep.mubr.f32.mxu0 0.0
        %6429 = vmatmul.mubr.f32.gmra.mrb[0].mxu0 %v6362
        %v6430 = vpop.f32.mrb[0].mxu0
        %v6431 = vadd.f32 %v6359, %v6430
        %v6432 = vpop.f32.mrb[0].mxu0
        %6433 = vdwg.mxu0
        %v6434 = vadd.f32 %v5575, %v6431
        %v6435 = vsel %vm1282, %v6434, 0.0
        %6436 = vadd.xlane.f32.xlu0 %v6435
        %v6437 = vpop.xlane.xlu0 %6436
        %v6438 = vmul.f32 %v6437, %v1286
        %v6439 = vsub.f32 %v6434, %v6438
        %v6440 = vmul.f32 %v6439, %v6439
        %v6441 = vsel %vm1282, %v6440, 0.0
        %6442 = vadd.xlane.f32.xlu0 %v6441
        %v6443 = vpop.xlane.xlu0 %6442
        %v6444 = vmul.f32 %v6443, %v1286
        %v6445 = vadd.f32 %v6444, 1e-05
        %v6446 = vrsqrt.pop %v6445
        %v6447 = vmul.f32 %v6439, %v6446
        %v6449 = vlaneseq
        %v6450 = vshrl.u32 %v6449, 7
        %v6451 = vsub.s32 0, %v6450
        %v6452 = vrot.slane %v5591, %v6451
        %v6454 = vmul.f32 %v6447, %v6452
        %v6456 = vlaneseq
        %v6457 = vshrl.u32 %v6456, 7
        %v6458 = vsub.s32 0, %v6457
        %v6459 = vrot.slane %v5593, %v6458
        %v6461 = vadd.f32 %v6454, %v6459
        %s6462 = scalar_lea.vmem [#allocation5], 32
        %v6463 = vld [vmem:[%s6462] sm:$0xff]
        %v6464 = vld [vmem:[%s6462 + $0x8] sm:$0xff]
        %v6465 = vld [vmem:[%s6462 + $0x10] sm:$0xff]
        %v6466 = vld [vmem:[%s6462 + $0x18] sm:$0xff]
        %s6467 = scalar_lea.vmem %s51, 1
        %v6468 = vld [vmem:[%s6467] sm:$0x1]
        %s6469 = scalar_lea.vmem [#allocation7], 32
        %v6470 = vld [vmem:[%s6469] sm:$0xff]
        %v6471 = vld [vmem:[%s6469 + $0x8] sm:$0xff]
        %v6472 = vld [vmem:[%s6469 + $0x10] sm:$0xff]
        %v6473 = vld [vmem:[%s6469 + $0x18] sm:$0xff]
        %s6474 = scalar_lea.vmem %s55, 1
        %v6475 = vld [vmem:[%s6474] sm:$0x1]
        %s6476 = scalar_lea.vmem [#allocation8], 32
        %v6477 = vld [vmem:[%s6476] sm:$0xff]
        %v6478 = vld [vmem:[%s6476 + $0x8] sm:$0xff]
        %v6479 = vld [vmem:[%s6476 + $0x10] sm:$0xff]
        %v6480 = vld [vmem:[%s6476 + $0x18] sm:$0xff]
        %s6481 = scalar_lea.vmem %s59, 1
        %v6482 = vld [vmem:[%s6481] sm:$0x1]
        %s6483 = scalar_lea.vmem %s61, 1
        %v6484 = vld [vmem:[%s6483] sm:$0x1]
        %s6485 = scalar_lea.vmem %s63, 1
        %v6486 = vld [vmem:[%s6485] sm:$0x1]
        %v6488 = vlaneseq
        %v6489 = vshrl.u32 %v6488, 7
        %v6490 = vsub.s32 0, %v6489
        %v6491 = vrot.slane %v6468, %v6490
        %v6494 = vsel %vm1282, %v6461, 0
        %6496 = vmatprep.subr.mxu0 0.0
        %6497 = vmatpush1.msra.mxu0 %v6463
        %6498 = vmatprep.subr.mxu0 0.0
        %6499 = vmatpush1.msra.mxu0 %v6464
        %6500 = vmatprep.subr.mxu0 0.0
        %6501 = vmatpush1.msra.mxu0 %v6465
        %6502 = vmatprep.subr.mxu0 0.0
        %6503 = vmatpush1.msra.mxu0 %v6466
        %6504 = vmatprep.subr.mxu0 0.0
        %6505 = vmatpush1.msra.mxu0 0.0
        %6506 = vmatprep.subr.mxu0 0.0
        %6507 = vmatpush1.msra.mxu0 0.0
        %6508 = vmatprep.subr.mxu0 0.0
        %6509 = vmatpush1.msra.mxu0 0.0
        %6510 = vmatprep.subr.mxu0 0.0
        %6511 = vmatpush1.msra.mxu0 0.0
        %6512 = vmatprep.subr.mxu0 0.0
        %6513 = vmatpush1.msra.mxu0 0.0
        %6514 = vmatprep.subr.mxu0 0.0
        %6515 = vmatpush1.msra.mxu0 0.0
        %6516 = vmatprep.subr.mxu0 0.0
        %6517 = vmatpush1.msra.mxu0 0.0
        %6518 = vmatprep.subr.mxu0 0.0
        %6519 = vmatpush1.msra.mxu0 0.0
        %6520 = vmatprep.subr.mxu0 0.0
        %6521 = vmatpush1.msra.mxu0 0.0
        %6522 = vmatprep.subr.mxu0 0.0
        %6523 = vmatpush1.msra.mxu0 0.0
        %6524 = vmatprep.subr.mxu0 0.0
        %6525 = vmatpush1.msra.mxu0 0.0
        %6526 = vmatprep.subr.mxu0 0.0
        %6527 = vmatpush1.msra.mxu0 0.0
        %6528 = vmatprep.subr.mxu0 0.0
        %6529 = vmatpush1.msra.mxu0 0.0
        %6530 = vmatprep.subr.mxu0 0.0
        %6531 = vmatpush1.msra.mxu0 0.0
        %6532 = vmatprep.subr.mxu0 0.0
        %6533 = vmatpush1.msra.mxu0 0.0
        %6534 = vmatprep.subr.mxu0 0.0
        %6535 = vmatpush1.msra.mxu0 0.0
        %6536 = vmatprep.subr.mxu0 0.0
        %6537 = vmatpush1.msra.mxu0 0.0
        %6538 = vmatprep.subr.mxu0 0.0
        %6539 = vmatpush1.msra.mxu0 0.0
        %6540 = vmatprep.subr.mxu0 0.0
        %6541 = vmatpush1.msra.mxu0 0.0
        %6542 = vmatprep.subr.mxu0 0.0
        %6543 = vmatpush1.msra.mxu0 0.0
        %6544 = vmatprep.subr.mxu0 0.0
        %6545 = vmatpush1.msra.mxu0 0.0
        %6546 = vmatprep.subr.mxu0 0.0
        %6547 = vmatpush1.msra.mxu0 0.0
        %6548 = vmatprep.subr.mxu0 0.0
        %6549 = vmatpush1.msra.mxu0 0.0
        %6550 = vmatprep.subr.mxu0 0.0
        %6551 = vmatpush1.msra.mxu0 0.0
        %6552 = vmatprep.subr.mxu0 0.0
        %6553 = vmatpush1.msra.mxu0 0.0
        %6554 = vmatprep.subr.mxu0 0.0
        %6555 = vmatpush1.msra.mxu0 0.0
        %6556 = vmatprep.subr.mxu0 0.0
        %6557 = vmatpush1.msra.mxu0 0.0
        %6558 = vmatprep.subr.mxu0 0.0
        %6559 = vmatpush1.msra.mxu0 0.0
        %6560 = vmatprep.mubr.f32.mxu0 0.0
        %6561 = vmatmul.mubr.f32.gmra.mrb[0].mxu0 %v6494
        %v6562 = vpop.f32.mrb[0].mxu0
        %v6563 = vadd.f32 %v6491, %v6562
        %v6564 = vpop.f32.mrb[0].mxu0
        %6565 = vdwg.mxu0
        %v6567 = vlaneseq
        %v6568 = vshrl.u32 %v6567, 7
        %v6569 = vsub.s32 0, %v6568
        %v6570 = vrot.slane %v6475, %v6569
        %6572 = vmatprep.subr.mxu0 0.0
        %6573 = vmatpush1.msra.mxu0 %v6470
        %6574 = vmatprep.subr.mxu0 0.0
        %6575 = vmatpush1.msra.mxu0 %v6471
        %6576 = vmatprep.subr.mxu0 0.0
        %6577 = vmatpush1.msra.mxu0 %v6472
        %6578 = vmatprep.subr.mxu0 0.0
        %6579 = vmatpush1.msra.mxu0 %v6473
        %6580 = vmatprep.subr.mxu0 0.0
        %6581 = vmatpush1.msra.mxu0 0.0
        %6582 = vmatprep.subr.mxu0 0.0
        %6583 = vmatpush1.msra.mxu0 0.0
        %6584 = vmatprep.subr.mxu0 0.0
        %6585 = vmatpush1.msra.mxu0 0.0
        %6586 = vmatprep.subr.mxu0 0.0
        %6587 = vmatpush1.msra.mxu0 0.0
        %6588 = vmatprep.subr.mxu0 0.0
        %6589 = vmatpush1.msra.mxu0 0.0
        %6590 = vmatprep.subr.mxu0 0.0
        %6591 = vmatpush1.msra.mxu0 0.0
        %6592 = vmatprep.subr.mxu0 0.0
        %6593 = vmatpush1.msra.mxu0 0.0
        %6594 = vmatprep.subr.mxu0 0.0
        %6595 = vmatpush1.msra.mxu0 0.0
        %6596 = vmatprep.subr.mxu0 0.0
        %6597 = vmatpush1.msra.mxu0 0.0
        %6598 = vmatprep.subr.mxu0 0.0
        %6599 = vmatpush1.msra.mxu0 0.0
        %6600 = vmatprep.subr.mxu0 0.0
        %6601 = vmatpush1.msra.mxu0 0.0
        %6602 = vmatprep.subr.mxu0 0.0
        %6603 = vmatpush1.msra.mxu0 0.0
        %6604 = vmatprep.subr.mxu0 0.0
        %6605 = vmatpush1.msra.mxu0 0.0
        %6606 = vmatprep.subr.mxu0 0.0
        %6607 = vmatpush1.msra.mxu0 0.0
        %6608 = vmatprep.subr.mxu0 0.0
        %6609 = vmatpush1.msra.mxu0 0.0
        %6610 = vmatprep.subr.mxu0 0.0
        %6611 = vmatpush1.msra.mxu0 0.0
        %6612 = vmatprep.subr.mxu0 0.0
        %6613 = vmatpush1.msra.mxu0 0.0
        %6614 = vmatprep.subr.mxu0 0.0
        %6615 = vmatpush1.msra.mxu0 0.0
        %6616 = vmatprep.subr.mxu0 0.0
        %6617 = vmatpush1.msra.mxu0 0.0
        %6618 = vmatprep.subr.mxu0 0.0
        %6619 = vmatpush1.msra.mxu0 0.0
        %6620 = vmatprep.subr.mxu0 0.0
        %6621 = vmatpush1.msra.mxu0 0.0
        %6622 = vmatprep.subr.mxu0 0.0
        %6623 = vmatpush1.msra.mxu0 0.0
        %6624 = vmatprep.subr.mxu0 0.0
        %6625 = vmatpush1.msra.mxu0 0.0
        %6626 = vmatprep.subr.mxu0 0.0
        %6627 = vmatpush1.msra.mxu0 0.0
        %6628 = vmatprep.subr.mxu0 0.0
        %6629 = vmatpush1.msra.mxu0 0.0
        %6630 = vmatprep.subr.mxu0 0.0
        %6631 = vmatpush1.msra.mxu0 0.0
        %6632 = vmatprep.subr.mxu0 0.0
        %6633 = vmatpush1.msra.mxu0 0.0
        %6634 = vmatprep.subr.mxu0 0.0
        %6635 = vmatpush1.msra.mxu0 0.0
        %6636 = vmatprep.mubr.f32.mxu0 0.0
        %6637 = vmatmul.mubr.f32.gmra.mrb[0].mxu0 %v4513
        %v6638 = vpop.f32.mrb[0].mxu0
        %v6639 = vadd.f32 %v6570, %v6638
        %v6640 = vpop.f32.mrb[0].mxu0
        %6641 = vdwg.mxu0
        %v6643 = vsel %vm1405, %v6563, 0
        %v6646 = vsel %vm1405, %v6639, 0
        %6648 = vmatprep.subr.mxu0 0.0
        %6649 = vmatpush1.xpose.msra.mxu0 %v6646
        %6650 = vmatprep.subr.mxu0 0.0
        %6651 = vmatpush1.xpose.msra.mxu0 0.0
        %6652 = vmatprep.subr.mxu0 0.0
        %6653 = vmatpush1.xpose.msra.mxu0 0.0
        %6654 = vmatprep.subr.mxu0 0.0
        %6655 = vmatpush1.xpose.msra.mxu0 0.0
        %6656 = vmatprep.subr.mxu0 0.0
        %6657 = vmatpush1.xpose.msra.mxu0 0.0
        %6658 = vmatprep.subr.mxu0 0.0
        %6659 = vmatpush1.xpose.msra.mxu0 0.0
        %6660 = vmatprep.subr.mxu0 0.0
        %6661 = vmatpush1.xpose.msra.mxu0 0.0
        %6662 = vmatprep.subr.mxu0 0.0
        %6663 = vmatpush1.xpose.msra.mxu0 0.0
        %6664 = vmatprep.subr.mxu0 0.0
        %6665 = vmatpush1.xpose.msra.mxu0 0.0
        %6666 = vmatprep.subr.mxu0 0.0
        %6667 = vmatpush1.xpose.msra.mxu0 0.0
        %6668 = vmatprep.subr.mxu0 0.0
        %6669 = vmatpush1.xpose.msra.mxu0 0.0
        %6670 = vmatprep.subr.mxu0 0.0
        %6671 = vmatpush1.xpose.msra.mxu0 0.0
        %6672 = vmatprep.subr.mxu0 0.0
        %6673 = vmatpush1.xpose.msra.mxu0 0.0
        %6674 = vmatprep.subr.mxu0 0.0
        %6675 = vmatpush1.xpose.msra.mxu0 0.0
        %6676 = vmatprep.subr.mxu0 0.0
        %6677 = vmatpush1.xpose.msra.mxu0 0.0
        %6678 = vmatprep.subr.mxu0 0.0
        %6679 = vmatpush1.xpose.msra.mxu0 0.0
        %6680 = vmatprep.subr.mxu0 0.0
        %6681 = vmatpush1.xpose.msra.mxu0 0.0
        %6682 = vmatprep.subr.mxu0 0.0
        %6683 = vmatpush1.xpose.msra.mxu0 0.0
        %6684 = vmatprep.subr.mxu0 0.0
        %6685 = vmatpush1.xpose.msra.mxu0 0.0
        %6686 = vmatprep.subr.mxu0 0.0
        %6687 = vmatpush1.xpose.msra.mxu0 0.0
        %6688 = vmatprep.subr.mxu0 0.0
        %6689 = vmatpush1.xpose.msra.mxu0 0.0
        %6690 = vmatprep.subr.mxu0 0.0
        %6691 = vmatpush1.xpose.msra.mxu0 0.0
        %6692 = vmatprep.subr.mxu0 0.0
        %6693 = vmatpush1.xpose.msra.mxu0 0.0
        %6694 = vmatprep.subr.mxu0 0.0
        %6695 = vmatpush1.xpose.msra.mxu0 0.0
        %6696 = vmatprep.subr.mxu0 0.0
        %6697 = vmatpush1.xpose.msra.mxu0 0.0
        %6698 = vmatprep.subr.mxu0 0.0
        %6699 = vmatpush1.xpose.msra.mxu0 0.0
        %6700 = vmatprep.subr.mxu0 0.0
        %6701 = vmatpush1.xpose.msra.mxu0 0.0
        %6702 = vmatprep.subr.mxu0 0.0
        %6703 = vmatpush1.xpose.msra.mxu0 0.0
        %6704 = vmatprep.subr.mxu0 0.0
        %6705 = vmatpush1.xpose.msra.mxu0 0.0
        %6706 = vmatprep.subr.mxu0 0.0
        %6707 = vmatpush1.xpose.msra.mxu0 0.0
        %6708 = vmatprep.subr.mxu0 0.0
        %6709 = vmatpush1.xpose.msra.mxu0 0.0
        %6710 = vmatprep.subr.mxu0 0.0
        %6711 = vmatpush1.xpose.msra.mxu0 0.0
        %6712 = vmatprep.mubr.f32.mxu0 0.0
        %6713 = vmatmul.mubr.f32.gmra.mrb[0].mxu0 %v6643
        %v6714 = vpop.f32.mrb[0].mxu0
        %v6715 = vadd.f32 0.0, %v6714
        %v6716 = vpop.f32.mrb[0].mxu0
        %6717 = vdwg.mxu0
        %v6718 = vmul.f32 %v6715, 0.35355338
        %v6719 = vsel %vm1405, %v6718, -inf
        %6720 = vmax.xlane.f32.xlu0 %v6719
        %v6721 = vpop.xlane.xlu0 %6720
        %v6722 = vsub.f32 %v6718, %v6721
        %v6723 = vmul.f32 %v6722, 1.442695
        %v6724 = vpow.pop %v6723
        %v6725 = vsel %vm1405, %v6724, 0.0
        %6726 = vadd.xlane.f32.xlu0 %v6725
        %v6727 = vpop.xlane.xlu0 %6726
        %v6728 = vrcp.pop %v6727
        %v6729 = vmul.f32 %v6724, %v6728
        %6730 = vrot.lane.b32.xlu0 %v6639, 96
        %v6731 = vpop.permute.xlu0 %6730
        %v6734 = vsel %vm1405, %v6729, 0
        %6736 = vmatprep.subr.mxu0 0.0
        %6737 = vmatpush1.msra.mxu0 %v6731
        %6738 = vmatprep.subr.mxu0 0.0
        %6739 = vmatpush1.msra.mxu0 0.0
        %6740 = vmatprep.subr.mxu0 0.0
        %6741 = vmatpush1.msra.mxu0 0.0
        %6742 = vmatprep.subr.mxu0 0.0
        %6743 = vmatpush1.msra.mxu0 0.0
        %6744 = vmatprep.subr.mxu0 0.0
        %6745 = vmatpush1.msra.mxu0 0.0
        %6746 = vmatprep.subr.mxu0 0.0
        %6747 = vmatpush1.msra.mxu0 0.0
        %6748 = vmatprep.subr.mxu0 0.0
        %6749 = vmatpush1.msra.mxu0 0.0
        %6750 = vmatprep.subr.mxu0 0.0
        %6751 = vmatpush1.msra.mxu0 0.0
        %6752 = vmatprep.subr.mxu0 0.0
        %6753 = vmatpush1.msra.mxu0 0.0
        %6754 = vmatprep.subr.mxu0 0.0
        %6755 = vmatpush1.msra.mxu0 0.0
        %6756 = vmatprep.subr.mxu0 0.0
        %6757 = vmatpush1.msra.mxu0 0.0
        %6758 = vmatprep.subr.mxu0 0.0
        %6759 = vmatpush1.msra.mxu0 0.0
        %6760 = vmatprep.subr.mxu0 0.0
        %6761 = vmatpush1.msra.mxu0 0.0
        %6762 = vmatprep.subr.mxu0 0.0
        %6763 = vmatpush1.msra.mxu0 0.0
        %6764 = vmatprep.subr.mxu0 0.0
        %6765 = vmatpush1.msra.mxu0 0.0
        %6766 = vmatprep.subr.mxu0 0.0
        %6767 = vmatpush1.msra.mxu0 0.0
        %6768 = vmatprep.subr.mxu0 0.0
        %6769 = vmatpush1.msra.mxu0 0.0
        %6770 = vmatprep.subr.mxu0 0.0
        %6771 = vmatpush1.msra.mxu0 0.0
        %6772 = vmatprep.subr.mxu0 0.0
        %6773 = vmatpush1.msra.mxu0 0.0
        %6774 = vmatprep.subr.mxu0 0.0
        %6775 = vmatpush1.msra.mxu0 0.0
        %6776 = vmatprep.subr.mxu0 0.0
        %6777 = vmatpush1.msra.mxu0 0.0
        %6778 = vmatprep.subr.mxu0 0.0
        %6779 = vmatpush1.msra.mxu0 0.0
        %6780 = vmatprep.subr.mxu0 0.0
        %6781 = vmatpush1.msra.mxu0 0.0
        %6782 = vmatprep.subr.mxu0 0.0
        %6783 = vmatpush1.msra.mxu0 0.0
        %6784 = vmatprep.subr.mxu0 0.0
        %6785 = vmatpush1.msra.mxu0 0.0
        %6786 = vmatprep.subr.mxu0 0.0
        %6787 = vmatpush1.msra.mxu0 0.0
        %6788 = vmatprep.subr.mxu0 0.0
        %6789 = vmatpush1.msra.mxu0 0.0
        %6790 = vmatprep.subr.mxu0 0.0
        %6791 = vmatpush1.msra.mxu0 0.0
        %6792 = vmatprep.subr.mxu0 0.0
        %6793 = vmatpush1.msra.mxu0 0.0
        %6794 = vmatprep.subr.mxu0 0.0
        %6795 = vmatpush1.msra.mxu0 0.0
        %6796 = vmatprep.subr.mxu0 0.0
        %6797 = vmatpush1.msra.mxu0 0.0
        %6798 = vmatprep.subr.mxu0 0.0
        %6799 = vmatpush1.msra.mxu0 0.0
        %6800 = vmatprep.mubr.f32.mxu0 0.0
        %6801 = vmatmul.mubr.f32.gmra.mrb[0].mxu0 %v6734
        %v6802 = vpop.f32.mrb[0].mxu0
        %v6803 = vadd.f32 0.0, %v6802
        %v6804 = vpop.f32.mrb[0].mxu0
        %6805 = vdwg.mxu0
        %6806 = vrot.lane.b32.xlu0 %v6563, 120
        %v6807 = vpop.permute.xlu0 %6806
        %6808 = vrot.lane.b32.xlu0 %v6639, 120
        %v6809 = vpop.permute.xlu0 %6808
        %v6810 = vsel %vm1405, %v6807, 0
        %v6812 = vsel %vm1405, %v6809, 0
        %6814 = vmatprep.subr.mxu0 0.0
        %6815 = vmatpush1.xpose.msra.mxu0 %v6812
        %6816 = vmatprep.subr.mxu0 0.0
        %6817 = vmatpush1.xpose.msra.mxu0 0.0
        %6818 = vmatprep.subr.mxu0 0.0
        %6819 = vmatpush1.xpose.msra.mxu0 0.0
        %6820 = vmatprep.subr.mxu0 0.0
        %6821 = vmatpush1.xpose.msra.mxu0 0.0
        %6822 = vmatprep.subr.mxu0 0.0
        %6823 = vmatpush1.xpose.msra.mxu0 0.0
        %6824 = vmatprep.subr.mxu0 0.0
        %6825 = vmatpush1.xpose.msra.mxu0 0.0
        %6826 = vmatprep.subr.mxu0 0.0
        %6827 = vmatpush1.xpose.msra.mxu0 0.0
        %6828 = vmatprep.subr.mxu0 0.0
        %6829 = vmatpush1.xpose.msra.mxu0 0.0
        %6830 = vmatprep.subr.mxu0 0.0
        %6831 = vmatpush1.xpose.msra.mxu0 0.0
        %6832 = vmatprep.subr.mxu0 0.0
        %6833 = vmatpush1.xpose.msra.mxu0 0.0
        %6834 = vmatprep.subr.mxu0 0.0
        %6835 = vmatpush1.xpose.msra.mxu0 0.0
        %6836 = vmatprep.subr.mxu0 0.0
        %6837 = vmatpush1.xpose.msra.mxu0 0.0
        %6838 = vmatprep.subr.mxu0 0.0
        %6839 = vmatpush1.xpose.msra.mxu0 0.0
        %6840 = vmatprep.subr.mxu0 0.0
        %6841 = vmatpush1.xpose.msra.mxu0 0.0
        %6842 = vmatprep.subr.mxu0 0.0
        %6843 = vmatpush1.xpose.msra.mxu0 0.0
        %6844 = vmatprep.subr.mxu0 0.0
        %6845 = vmatpush1.xpose.msra.mxu0 0.0
        %6846 = vmatprep.subr.mxu0 0.0
        %6847 = vmatpush1.xpose.msra.mxu0 0.0
        %6848 = vmatprep.subr.mxu0 0.0
        %6849 = vmatpush1.xpose.msra.mxu0 0.0
        %6850 = vmatprep.subr.mxu0 0.0
        %6851 = vmatpush1.xpose.msra.mxu0 0.0
        %6852 = vmatprep.subr.mxu0 0.0
        %6853 = vmatpush1.xpose.msra.mxu0 0.0
        %6854 = vmatprep.subr.mxu0 0.0
        %6855 = vmatpush1.xpose.msra.mxu0 0.0
        %6856 = vmatprep.subr.mxu0 0.0
        %6857 = vmatpush1.xpose.msra.mxu0 0.0
        %6858 = vmatprep.subr.mxu0 0.0
        %6859 = vmatpush1.xpose.msra.mxu0 0.0
        %6860 = vmatprep.subr.mxu0 0.0
        %6861 = vmatpush1.xpose.msra.mxu0 0.0
        %6862 = vmatprep.subr.mxu0 0.0
        %6863 = vmatpush1.xpose.msra.mxu0 0.0
        %6864 = vmatprep.subr.mxu0 0.0
        %6865 = vmatpush1.xpose.msra.mxu0 0.0
        %6866 = vmatprep.subr.mxu0 0.0
        %6867 = vmatpush1.xpose.msra.mxu0 0.0
        %6868 = vmatprep.subr.mxu0 0.0
        %6869 = vmatpush1.xpose.msra.mxu0 0.0
        %6870 = vmatprep.subr.mxu0 0.0
        %6871 = vmatpush1.xpose.msra.mxu0 0.0
        %6872 = vmatprep.subr.mxu0 0.0
        %6873 = vmatpush1.xpose.msra.mxu0 0.0
        %6874 = vmatprep.subr.mxu0 0.0
        %6875 = vmatpush1.xpose.msra.mxu0 0.0
        %6876 = vmatprep.subr.mxu0 0.0
        %6877 = vmatpush1.xpose.msra.mxu0 0.0
        %6878 = vmatprep.mubr.f32.mxu0 0.0
        %6879 = vmatmul.mubr.f32.gmra.mrb[0].mxu0 %v6810
        %v6880 = vpop.f32.mrb[0].mxu0
        %v6881 = vadd.f32 0.0, %v6880
        %v6882 = vpop.f32.mrb[0].mxu0
        %6883 = vdwg.mxu0
        %v6884 = vmul.f32 %v6881, 0.35355338
        %v6885 = vsel %vm1405, %v6884, -inf
        %6886 = vmax.xlane.f32.xlu0 %v6885
        %v6887 = vpop.xlane.xlu0 %6886
        %v6888 = vsub.f32 %v6884, %v6887
        %v6889 = vmul.f32 %v6888, 1.442695
        %v6890 = vpow.pop %v6889
        %v6891 = vsel %vm1405, %v6890, 0.0
        %6892 = vadd.xlane.f32.xlu0 %v6891
        %v6893 = vpop.xlane.xlu0 %6892
        %v6894 = vrcp.pop %v6893
        %v6895 = vmul.f32 %v6890, %v6894
        %6896 = vrot.lane.b32.xlu0 %v6639, 88
        %v6897 = vpop.permute.xlu0 %6896
        %v6900 = vsel %vm1405, %v6895, 0
        %6902 = vmatprep.subr.mxu0 0.0
        %6903 = vmatpush1.msra.mxu0 %v6897
        %6904 = vmatprep.subr.mxu0 0.0
        %6905 = vmatpush1.msra.mxu0 0.0
        %6906 = vmatprep.subr.mxu0 0.0
        %6907 = vmatpush1.msra.mxu0 0.0
        %6908 = vmatprep.subr.mxu0 0.0
        %6909 = vmatpush1.msra.mxu0 0.0
        %6910 = vmatprep.subr.mxu0 0.0
        %6911 = vmatpush1.msra.mxu0 0.0
        %6912 = vmatprep.subr.mxu0 0.0
        %6913 = vmatpush1.msra.mxu0 0.0
        %6914 = vmatprep.subr.mxu0 0.0
        %6915 = vmatpush1.msra.mxu0 0.0
        %6916 = vmatprep.subr.mxu0 0.0
        %6917 = vmatpush1.msra.mxu0 0.0
        %6918 = vmatprep.subr.mxu0 0.0
        %6919 = vmatpush1.msra.mxu0 0.0
        %6920 = vmatprep.subr.mxu0 0.0
        %6921 = vmatpush1.msra.mxu0 0.0
        %6922 = vmatprep.subr.mxu0 0.0
        %6923 = vmatpush1.msra.mxu0 0.0
        %6924 = vmatprep.subr.mxu0 0.0
        %6925 = vmatpush1.msra.mxu0 0.0
        %6926 = vmatprep.subr.mxu0 0.0
        %6927 = vmatpush1.msra.mxu0 0.0
        %6928 = vmatprep.subr.mxu0 0.0
        %6929 = vmatpush1.msra.mxu0 0.0
        %6930 = vmatprep.subr.mxu0 0.0
        %6931 = vmatpush1.msra.mxu0 0.0
        %6932 = vmatprep.subr.mxu0 0.0
        %6933 = vmatpush1.msra.mxu0 0.0
        %6934 = vmatprep.subr.mxu0 0.0
        %6935 = vmatpush1.msra.mxu0 0.0
        %6936 = vmatprep.subr.mxu0 0.0
        %6937 = vmatpush1.msra.mxu0 0.0
        %6938 = vmatprep.subr.mxu0 0.0
        %6939 = vmatpush1.msra.mxu0 0.0
        %6940 = vmatprep.subr.mxu0 0.0
        %6941 = vmatpush1.msra.mxu0 0.0
        %6942 = vmatprep.subr.mxu0 0.0
        %6943 = vmatpush1.msra.mxu0 0.0
        %6944 = vmatprep.subr.mxu0 0.0
        %6945 = vmatpush1.msra.mxu0 0.0
        %6946 = vmatprep.subr.mxu0 0.0
        %6947 = vmatpush1.msra.mxu0 0.0
        %6948 = vmatprep.subr.mxu0 0.0
        %6949 = vmatpush1.msra.mxu0 0.0
        %6950 = vmatprep.subr.mxu0 0.0
        %6951 = vmatpush1.msra.mxu0 0.0
        %6952 = vmatprep.subr.mxu0 0.0
        %6953 = vmatpush1.msra.mxu0 0.0
        %6954 = vmatprep.subr.mxu0 0.0
        %6955 = vmatpush1.msra.mxu0 0.0
        %6956 = vmatprep.subr.mxu0 0.0
        %6957 = vmatpush1.msra.mxu0 0.0
        %6958 = vmatprep.subr.mxu0 0.0
        %6959 = vmatpush1.msra.mxu0 0.0
        %6960 = vmatprep.subr.mxu0 0.0
        %6961 = vmatpush1.msra.mxu0 0.0
        %6962 = vmatprep.subr.mxu0 0.0
        %6963 = vmatpush1.msra.mxu0 0.0
        %6964 = vmatprep.subr.mxu0 0.0
        %6965 = vmatpush1.msra.mxu0 0.0
        %6966 = vmatprep.mubr.f32.mxu0 0.0
        %6967 = vmatmul.mubr.f32.gmra.mrb[0].mxu0 %v6900
        %v6968 = vpop.f32.mrb[0].mxu0
        %v6969 = vadd.f32 0.0, %v6968
        %v6970 = vpop.f32.mrb[0].mxu0
        %6971 = vdwg.mxu0
        %6972 = vrot.lane.b32.xlu0 %v6563, 112
        %v6973 = vpop.permute.xlu0 %6972
        %6974 = vrot.lane.b32.xlu0 %v6639, 112
        %v6975 = vpop.permute.xlu0 %6974
        %v6976 = vsel %vm1405, %v6973, 0
        %v6978 = vsel %vm1405, %v6975, 0
        %6980 = vmatprep.subr.mxu0 0.0
        %6981 = vmatpush1.xpose.msra.mxu0 %v6978
        %6982 = vmatprep.subr.mxu0 0.0
        %6983 = vmatpush1.xpose.msra.mxu0 0.0
        %6984 = vmatprep.subr.mxu0 0.0
        %6985 = vmatpush1.xpose.msra.mxu0 0.0
        %6986 = vmatprep.subr.mxu0 0.0
        %6987 = vmatpush1.xpose.msra.mxu0 0.0
        %6988 = vmatprep.subr.mxu0 0.0
        %6989 = vmatpush1.xpose.msra.mxu0 0.0
        %6990 = vmatprep.subr.mxu0 0.0
        %6991 = vmatpush1.xpose.msra.mxu0 0.0
        %6992 = vmatprep.subr.mxu0 0.0
        %6993 = vmatpush1.xpose.msra.mxu0 0.0
        %6994 = vmatprep.subr.mxu0 0.0
        %6995 = vmatpush1.xpose.msra.mxu0 0.0
        %6996 = vmatprep.subr.mxu0 0.0
        %6997 = vmatpush1.xpose.msra.mxu0 0.0
        %6998 = vmatprep.subr.mxu0 0.0
        %6999 = vmatpush1.xpose.msra.mxu0 0.0
        %7000 = vmatprep.subr.mxu0 0.0
        %7001 = vmatpush1.xpose.msra.mxu0 0.0
        %7002 = vmatprep.subr.mxu0 0.0
        %7003 = vmatpush1.xpose.msra.mxu0 0.0
        %7004 = vmatprep.subr.mxu0 0.0
        %7005 = vmatpush1.xpose.msra.mxu0 0.0
        %7006 = vmatprep.subr.mxu0 0.0
        %7007 = vmatpush1.xpose.msra.mxu0 0.0
        %7008 = vmatprep.subr.mxu0 0.0
        %7009 = vmatpush1.xpose.msra.mxu0 0.0
        %7010 = vmatprep.subr.mxu0 0.0
        %7011 = vmatpush1.xpose.msra.mxu0 0.0
        %7012 = vmatprep.subr.mxu0 0.0
        %7013 = vmatpush1.xpose.msra.mxu0 0.0
        %7014 = vmatprep.subr.mxu0 0.0
        %7015 = vmatpush1.xpose.msra.mxu0 0.0
        %7016 = vmatprep.subr.mxu0 0.0
        %7017 = vmatpush1.xpose.msra.mxu0 0.0
        %7018 = vmatprep.subr.mxu0 0.0
        %7019 = vmatpush1.xpose.msra.mxu0 0.0
        %7020 = vmatprep.subr.mxu0 0.0
        %7021 = vmatpush1.xpose.msra.mxu0 0.0
        %7022 = vmatprep.subr.mxu0 0.0
        %7023 = vmatpush1.xpose.msra.mxu0 0.0
        %7024 = vmatprep.subr.mxu0 0.0
        %7025 = vmatpush1.xpose.msra.mxu0 0.0
        %7026 = vmatprep.subr.mxu0 0.0
        %7027 = vmatpush1.xpose.msra.mxu0 0.0
        %7028 = vmatprep.subr.mxu0 0.0
        %7029 = vmatpush1.xpose.msra.mxu0 0.0
        %7030 = vmatprep.subr.mxu0 0.0
        %7031 = vmatpush1.xpose.msra.mxu0 0.0
        %7032 = vmatprep.subr.mxu0 0.0
        %7033 = vmatpush1.xpose.msra.mxu0 0.0
        %7034 = vmatprep.subr.mxu0 0.0
        %7035 = vmatpush1.xpose.msra.mxu0 0.0
        %7036 = vmatprep.subr.mxu0 0.0
        %7037 = vmatpush1.xpose.msra.mxu0 0.0
        %7038 = vmatprep.subr.mxu0 0.0
        %7039 = vmatpush1.xpose.msra.mxu0 0.0
        %7040 = vmatprep.subr.mxu0 0.0
        %7041 = vmatpush1.xpose.msra.mxu0 0.0
        %7042 = vmatprep.subr.mxu0 0.0
        %7043 = vmatpush1.xpose.msra.mxu0 0.0
        %7044 = vmatprep.mubr.f32.mxu0 0.0
        %7045 = vmatmul.mubr.f32.gmra.mrb[0].mxu0 %v6976
        %v7046 = vpop.f32.mrb[0].mxu0
        %v7047 = vadd.f32 0.0, %v7046
        %v7048 = vpop.f32.mrb[0].mxu0
        %7049 = vdwg.mxu0
        %v7050 = vmul.f32 %v7047, 0.35355338
        %v7051 = vsel %vm1405, %v7050, -inf
        %7052 = vmax.xlane.f32.xlu0 %v7051
        %v7053 = vpop.xlane.xlu0 %7052
        %v7054 = vsub.f32 %v7050, %v7053
        %v7055 = vmul.f32 %v7054, 1.442695
        %v7056 = vpow.pop %v7055
        %v7057 = vsel %vm1405, %v7056, 0.0
        %7058 = vadd.xlane.f32.xlu0 %v7057
        %v7059 = vpop.xlane.xlu0 %7058
        %v7060 = vrcp.pop %v7059
        %v7061 = vmul.f32 %v7056, %v7060
        %7062 = vrot.lane.b32.xlu0 %v6639, 80
        %v7063 = vpop.permute.xlu0 %7062
        %v7066 = vsel %vm1405, %v7061, 0
        %7068 = vmatprep.subr.mxu0 0.0
        %7069 = vmatpush1.msra.mxu0 %v7063
        %7070 = vmatprep.subr.mxu0 0.0
        %7071 = vmatpush1.msra.mxu0 0.0
        %7072 = vmatprep.subr.mxu0 0.0
        %7073 = vmatpush1.msra.mxu0 0.0
        %7074 = vmatprep.subr.mxu0 0.0
        %7075 = vmatpush1.msra.mxu0 0.0
        %7076 = vmatprep.subr.mxu0 0.0
        %7077 = vmatpush1.msra.mxu0 0.0
        %7078 = vmatprep.subr.mxu0 0.0
        %7079 = vmatpush1.msra.mxu0 0.0
        %7080 = vmatprep.subr.mxu0 0.0
        %7081 = vmatpush1.msra.mxu0 0.0
        %7082 = vmatprep.subr.mxu0 0.0
        %7083 = vmatpush1.msra.mxu0 0.0
        %7084 = vmatprep.subr.mxu0 0.0
        %7085 = vmatpush1.msra.mxu0 0.0
        %7086 = vmatprep.subr.mxu0 0.0
        %7087 = vmatpush1.msra.mxu0 0.0
        %7088 = vmatprep.subr.mxu0 0.0
        %7089 = vmatpush1.msra.mxu0 0.0
        %7090 = vmatprep.subr.mxu0 0.0
        %7091 = vmatpush1.msra.mxu0 0.0
        %7092 = vmatprep.subr.mxu0 0.0
        %7093 = vmatpush1.msra.mxu0 0.0
        %7094 = vmatprep.subr.mxu0 0.0
        %7095 = vmatpush1.msra.mxu0 0.0
        %7096 = vmatprep.subr.mxu0 0.0
        %7097 = vmatpush1.msra.mxu0 0.0
        %7098 = vmatprep.subr.mxu0 0.0
        %7099 = vmatpush1.msra.mxu0 0.0
        %7100 = vmatprep.subr.mxu0 0.0
        %7101 = vmatpush1.msra.mxu0 0.0
        %7102 = vmatprep.subr.mxu0 0.0
        %7103 = vmatpush1.msra.mxu0 0.0
        %7104 = vmatprep.subr.mxu0 0.0
        %7105 = vmatpush1.msra.mxu0 0.0
        %7106 = vmatprep.subr.mxu0 0.0
        %7107 = vmatpush1.msra.mxu0 0.0
        %7108 = vmatprep.subr.mxu0 0.0
        %7109 = vmatpush1.msra.mxu0 0.0
        %7110 = vmatprep.subr.mxu0 0.0
        %7111 = vmatpush1.msra.mxu0 0.0
        %7112 = vmatprep.subr.mxu0 0.0
        %7113 = vmatpush1.msra.mxu0 0.0
        %7114 = vmatprep.subr.mxu0 0.0
        %7115 = vmatpush1.msra.mxu0 0.0
        %7116 = vmatprep.subr.mxu0 0.0
        %7117 = vmatpush1.msra.mxu0 0.0
        %7118 = vmatprep.subr.mxu0 0.0
        %7119 = vmatpush1.msra.mxu0 0.0
        %7120 = vmatprep.subr.mxu0 0.0
        %7121 = vmatpush1.msra.mxu0 0.0
        %7122 = vmatprep.subr.mxu0 0.0
        %7123 = vmatpush1.msra.mxu0 0.0
        %7124 = vmatprep.subr.mxu0 0.0
        %7125 = vmatpush1.msra.mxu0 0.0
        %7126 = vmatprep.subr.mxu0 0.0
        %7127 = vmatpush1.msra.mxu0 0.0
        %7128 = vmatprep.subr.mxu0 0.0
        %7129 = vmatpush1.msra.mxu0 0.0
        %7130 = vmatprep.subr.mxu0 0.0
        %7131 = vmatpush1.msra.mxu0 0.0
        %7132 = vmatprep.mubr.f32.mxu0 0.0
        %7133 = vmatmul.mubr.f32.gmra.mrb[0].mxu0 %v7066
        %v7134 = vpop.f32.mrb[0].mxu0
        %v7135 = vadd.f32 0.0, %v7134
        %v7136 = vpop.f32.mrb[0].mxu0
        %7137 = vdwg.mxu0
        %7138 = vrot.lane.b32.xlu0 %v6563, 104
        %v7139 = vpop.permute.xlu0 %7138
        %7140 = vrot.lane.b32.xlu0 %v6639, 104
        %v7141 = vpop.permute.xlu0 %7140
        %v7142 = vsel %vm1405, %v7139, 0
        %v7144 = vsel %vm1405, %v7141, 0
        %7146 = vmatprep.subr.mxu0 0.0
        %7147 = vmatpush1.xpose.msra.mxu0 %v7144
        %7148 = vmatprep.subr.mxu0 0.0
        %7149 = vmatpush1.xpose.msra.mxu0 0.0
        %7150 = vmatprep.subr.mxu0 0.0
        %7151 = vmatpush1.xpose.msra.mxu0 0.0
        %7152 = vmatprep.subr.mxu0 0.0
        %7153 = vmatpush1.xpose.msra.mxu0 0.0
        %7154 = vmatprep.subr.mxu0 0.0
        %7155 = vmatpush1.xpose.msra.mxu0 0.0
        %7156 = vmatprep.subr.mxu0 0.0
        %7157 = vmatpush1.xpose.msra.mxu0 0.0
        %7158 = vmatprep.subr.mxu0 0.0
        %7159 = vmatpush1.xpose.msra.mxu0 0.0
        %7160 = vmatprep.subr.mxu0 0.0
        %7161 = vmatpush1.xpose.msra.mxu0 0.0
        %7162 = vmatprep.subr.mxu0 0.0
        %7163 = vmatpush1.xpose.msra.mxu0 0.0
        %7164 = vmatprep.subr.mxu0 0.0
        %7165 = vmatpush1.xpose.msra.mxu0 0.0
        %7166 = vmatprep.subr.mxu0 0.0
        %7167 = vmatpush1.xpose.msra.mxu0 0.0
        %7168 = vmatprep.subr.mxu0 0.0
        %7169 = vmatpush1.xpose.msra.mxu0 0.0
        %7170 = vmatprep.subr.mxu0 0.0
        %7171 = vmatpush1.xpose.msra.mxu0 0.0
        %7172 = vmatprep.subr.mxu0 0.0
        %7173 = vmatpush1.xpose.msra.mxu0 0.0
        %7174 = vmatprep.subr.mxu0 0.0
        %7175 = vmatpush1.xpose.msra.mxu0 0.0
        %7176 = vmatprep.subr.mxu0 0.0
        %7177 = vmatpush1.xpose.msra.mxu0 0.0
        %7178 = vmatprep.subr.mxu0 0.0
        %7179 = vmatpush1.xpose.msra.mxu0 0.0
        %7180 = vmatprep.subr.mxu0 0.0
        %7181 = vmatpush1.xpose.msra.mxu0 0.0
        %7182 = vmatprep.subr.mxu0 0.0
        %7183 = vmatpush1.xpose.msra.mxu0 0.0
        %7184 = vmatprep.subr.mxu0 0.0
        %7185 = vmatpush1.xpose.msra.mxu0 0.0
        %7186 = vmatprep.subr.mxu0 0.0
        %7187 = vmatpush1.xpose.msra.mxu0 0.0
        %7188 = vmatprep.subr.mxu0 0.0
        %7189 = vmatpush1.xpose.msra.mxu0 0.0
        %7190 = vmatprep.subr.mxu0 0.0
        %7191 = vmatpush1.xpose.msra.mxu0 0.0
        %7192 = vmatprep.subr.mxu0 0.0
        %7193 = vmatpush1.xpose.msra.mxu0 0.0
        %7194 = vmatprep.subr.mxu0 0.0
        %7195 = vmatpush1.xpose.msra.mxu0 0.0
        %7196 = vmatprep.subr.mxu0 0.0
        %7197 = vmatpush1.xpose.msra.mxu0 0.0
        %7198 = vmatprep.subr.mxu0 0.0
        %7199 = vmatpush1.xpose.msra.mxu0 0.0
        %7200 = vmatprep.subr.mxu0 0.0
        %7201 = vmatpush1.xpose.msra.mxu0 0.0
        %7202 = vmatprep.subr.mxu0 0.0
        %7203 = vmatpush1.xpose.msra.mxu0 0.0
        %7204 = vmatprep.subr.mxu0 0.0
        %7205 = vmatpush1.xpose.msra.mxu0 0.0
        %7206 = vmatprep.subr.mxu0 0.0
        %7207 = vmatpush1.xpose.msra.mxu0 0.0
        %7208 = vmatprep.subr.mxu0 0.0
        %7209 = vmatpush1.xpose.msra.mxu0 0.0
        %7210 = vmatprep.mubr.f32.mxu0 0.0
        %7211 = vmatmul.mubr.f32.gmra.mrb[0].mxu0 %v7142
        %v7212 = vpop.f32.mrb[0].mxu0
        %v7213 = vadd.f32 0.0, %v7212
        %v7214 = vpop.f32.mrb[0].mxu0
        %7215 = vdwg.mxu0
        %v7216 = vmul.f32 %v7213, 0.35355338
        %v7217 = vsel %vm1405, %v7216, -inf
        %7218 = vmax.xlane.f32.xlu0 %v7217
        %v7219 = vpop.xlane.xlu0 %7218
        %v7220 = vsub.f32 %v7216, %v7219
        %v7221 = vmul.f32 %v7220, 1.442695
        %v7222 = vpow.pop %v7221
        %v7223 = vsel %vm1405, %v7222, 0.0
        %7224 = vadd.xlane.f32.xlu0 %v7223
        %v7225 = vpop.xlane.xlu0 %7224
        %v7226 = vrcp.pop %v7225
        %v7227 = vmul.f32 %v7222, %v7226
        %7228 = vrot.lane.b32.xlu0 %v6639, 72
        %v7229 = vpop.permute.xlu0 %7228
        %v7232 = vsel %vm1405, %v7227, 0
        %7234 = vmatprep.subr.mxu0 0.0
        %7235 = vmatpush1.msra.mxu0 %v7229
        %7236 = vmatprep.subr.mxu0 0.0
        %7237 = vmatpush1.msra.mxu0 0.0
        %7238 = vmatprep.subr.mxu0 0.0
        %7239 = vmatpush1.msra.mxu0 0.0
        %7240 = vmatprep.subr.mxu0 0.0
        %7241 = vmatpush1.msra.mxu0 0.0
        %7242 = vmatprep.subr.mxu0 0.0
        %7243 = vmatpush1.msra.mxu0 0.0
        %7244 = vmatprep.subr.mxu0 0.0
        %7245 = vmatpush1.msra.mxu0 0.0
        %7246 = vmatprep.subr.mxu0 0.0
        %7247 = vmatpush1.msra.mxu0 0.0
        %7248 = vmatprep.subr.mxu0 0.0
        %7249 = vmatpush1.msra.mxu0 0.0
        %7250 = vmatprep.subr.mxu0 0.0
        %7251 = vmatpush1.msra.mxu0 0.0
        %7252 = vmatprep.subr.mxu0 0.0
        %7253 = vmatpush1.msra.mxu0 0.0
        %7254 = vmatprep.subr.mxu0 0.0
        %7255 = vmatpush1.msra.mxu0 0.0
        %7256 = vmatprep.subr.mxu0 0.0
        %7257 = vmatpush1.msra.mxu0 0.0
        %7258 = vmatprep.subr.mxu0 0.0
        %7259 = vmatpush1.msra.mxu0 0.0
        %7260 = vmatprep.subr.mxu0 0.0
        %7261 = vmatpush1.msra.mxu0 0.0
        %7262 = vmatprep.subr.mxu0 0.0
        %7263 = vmatpush1.msra.mxu0 0.0
        %7264 = vmatprep.subr.mxu0 0.0
        %7265 = vmatpush1.msra.mxu0 0.0
        %7266 = vmatprep.subr.mxu0 0.0
        %7267 = vmatpush1.msra.mxu0 0.0
        %7268 = vmatprep.subr.mxu0 0.0
        %7269 = vmatpush1.msra.mxu0 0.0
        %7270 = vmatprep.subr.mxu0 0.0
        %7271 = vmatpush1.msra.mxu0 0.0
        %7272 = vmatprep.subr.mxu0 0.0
        %7273 = vmatpush1.msra.mxu0 0.0
        %7274 = vmatprep.subr.mxu0 0.0
        %7275 = vmatpush1.msra.mxu0 0.0
        %7276 = vmatprep.subr.mxu0 0.0
        %7277 = vmatpush1.msra.mxu0 0.0
        %7278 = vmatprep.subr.mxu0 0.0
        %7279 = vmatpush1.msra.mxu0 0.0
        %7280 = vmatprep.subr.mxu0 0.0
        %7281 = vmatpush1.msra.mxu0 0.0
        %7282 = vmatprep.subr.mxu0 0.0
        %7283 = vmatpush1.msra.mxu0 0.0
        %7284 = vmatprep.subr.mxu0 0.0
        %7285 = vmatpush1.msra.mxu0 0.0
        %7286 = vmatprep.subr.mxu0 0.0
        %7287 = vmatpush1.msra.mxu0 0.0
        %7288 = vmatprep.subr.mxu0 0.0
        %7289 = vmatpush1.msra.mxu0 0.0
        %7290 = vmatprep.subr.mxu0 0.0
        %7291 = vmatpush1.msra.mxu0 0.0
        %7292 = vmatprep.subr.mxu0 0.0
        %7293 = vmatpush1.msra.mxu0 0.0
        %7294 = vmatprep.subr.mxu0 0.0
        %7295 = vmatpush1.msra.mxu0 0.0
        %7296 = vmatprep.subr.mxu0 0.0
        %7297 = vmatpush1.msra.mxu0 0.0
        %7298 = vmatprep.mubr.f32.mxu0 0.0
        %7299 = vmatmul.mubr.f32.gmra.mrb[0].mxu0 %v7232
        %v7300 = vpop.f32.mrb[0].mxu0
        %v7301 = vadd.f32 0.0, %v7300
        %v7302 = vpop.f32.mrb[0].mxu0
        %7303 = vdwg.mxu0
        %7305 = vrot.lane.b32.xlu0 %v6969, 8
        %v7306 = vpop.permute.xlu0 %7305
        %7309 = vrot.lane.b32.xlu0 %v7135, 16
        %v7310 = vpop.permute.xlu0 %7309
        %7313 = vrot.lane.b32.xlu0 %v7301, 24
        %v7314 = vpop.permute.xlu0 %7313
        %v7316 = vsel %vm1405, %v6803, %v7306
        %v7317 = vsel %vm2079, %v7316, %v7310
        %v7318 = vsel %vm2081, %v7317, %v7314
        %v7320 = vlaneseq
        %v7321 = vshrl.u32 %v7320, 7
        %v7322 = vsub.s32 0, %v7321
        %v7323 = vrot.slane %v6482, %v7322
        %v7326 = vsel %vm1282, %v7318, 0
        %7328 = vmatprep.subr.mxu0 0.0
        %7329 = vmatpush1.msra.mxu0 %v6477
        %7330 = vmatprep.subr.mxu0 0.0
        %7331 = vmatpush1.msra.mxu0 %v6478
        %7332 = vmatprep.subr.mxu0 0.0
        %7333 = vmatpush1.msra.mxu0 %v6479
        %7334 = vmatprep.subr.mxu0 0.0
        %7335 = vmatpush1.msra.mxu0 %v6480
        %7336 = vmatprep.subr.mxu0 0.0
        %7337 = vmatpush1.msra.mxu0 0.0
        %7338 = vmatprep.subr.mxu0 0.0
        %7339 = vmatpush1.msra.mxu0 0.0
        %7340 = vmatprep.subr.mxu0 0.0
        %7341 = vmatpush1.msra.mxu0 0.0
        %7342 = vmatprep.subr.mxu0 0.0
        %7343 = vmatpush1.msra.mxu0 0.0
        %7344 = vmatprep.subr.mxu0 0.0
        %7345 = vmatpush1.msra.mxu0 0.0
        %7346 = vmatprep.subr.mxu0 0.0
        %7347 = vmatpush1.msra.mxu0 0.0
        %7348 = vmatprep.subr.mxu0 0.0
        %7349 = vmatpush1.msra.mxu0 0.0
        %7350 = vmatprep.subr.mxu0 0.0
        %7351 = vmatpush1.msra.mxu0 0.0
        %7352 = vmatprep.subr.mxu0 0.0
        %7353 = vmatpush1.msra.mxu0 0.0
        %7354 = vmatprep.subr.mxu0 0.0
        %7355 = vmatpush1.msra.mxu0 0.0
        %7356 = vmatprep.subr.mxu0 0.0
        %7357 = vmatpush1.msra.mxu0 0.0
        %7358 = vmatprep.subr.mxu0 0.0
        %7359 = vmatpush1.msra.mxu0 0.0
        %7360 = vmatprep.subr.mxu0 0.0
        %7361 = vmatpush1.msra.mxu0 0.0
        %7362 = vmatprep.subr.mxu0 0.0
        %7363 = vmatpush1.msra.mxu0 0.0
        %7364 = vmatprep.subr.mxu0 0.0
        %7365 = vmatpush1.msra.mxu0 0.0
        %7366 = vmatprep.subr.mxu0 0.0
        %7367 = vmatpush1.msra.mxu0 0.0
        %7368 = vmatprep.subr.mxu0 0.0
        %7369 = vmatpush1.msra.mxu0 0.0
        %7370 = vmatprep.subr.mxu0 0.0
        %7371 = vmatpush1.msra.mxu0 0.0
        %7372 = vmatprep.subr.mxu0 0.0
        %7373 = vmatpush1.msra.mxu0 0.0
        %7374 = vmatprep.subr.mxu0 0.0
        %7375 = vmatpush1.msra.mxu0 0.0
        %7376 = vmatprep.subr.mxu0 0.0
        %7377 = vmatpush1.msra.mxu0 0.0
        %7378 = vmatprep.subr.mxu0 0.0
        %7379 = vmatpush1.msra.mxu0 0.0
        %7380 = vmatprep.subr.mxu0 0.0
        %7381 = vmatpush1.msra.mxu0 0.0
        %7382 = vmatprep.subr.mxu0 0.0
        %7383 = vmatpush1.msra.mxu0 0.0
        %7384 = vmatprep.subr.mxu0 0.0
        %7385 = vmatpush1.msra.mxu0 0.0
        %7386 = vmatprep.subr.mxu0 0.0
        %7387 = vmatpush1.msra.mxu0 0.0
        %7388 = vmatprep.subr.mxu0 0.0
        %7389 = vmatpush1.msra.mxu0 0.0
        %7390 = vmatprep.subr.mxu0 0.0
        %7391 = vmatpush1.msra.mxu0 0.0
        %7392 = vmatprep.mubr.f32.mxu0 0.0
        %7393 = vmatmul.mubr.f32.gmra.mrb[0].mxu0 %v7326
        %v7394 = vpop.f32.mrb[0].mxu0
        %v7395 = vadd.f32 %v7323, %v7394
        %v7396 = vpop.f32.mrb[0].mxu0
        %7397 = vdwg.mxu0
        %v7398 = vadd.f32 %v6461, %v7395
        %v7399 = vsel %vm1282, %v7398, 0.0
        %7400 = vadd.xlane.f32.xlu0 %v7399
        %v7401 = vpop.xlane.xlu0 %7400
        %v7402 = vmul.f32 %v7401, %v1286
        %v7403 = vsub.f32 %v7398, %v7402
        %v7404 = vmul.f32 %v7403, %v7403
        %v7405 = vsel %vm1282, %v7404, 0.0
        %7406 = vadd.xlane.f32.xlu0 %v7405
        %v7407 = vpop.xlane.xlu0 %7406
        %v7408 = vmul.f32 %v7407, %v1286
        %v7409 = vadd.f32 %v7408, 1e-05
        %v7410 = vrsqrt.pop %v7409
        %v7411 = vmul.f32 %v7403, %v7410
        %v7413 = vlaneseq
        %v7414 = vshrl.u32 %v7413, 7
        %v7415 = vsub.s32 0, %v7414
        %v7416 = vrot.slane %v6484, %v7415
        %v7418 = vmul.f32 %v7411, %v7416
        %v7420 = vlaneseq
        %v7421 = vshrl.u32 %v7420, 7
        %v7422 = vsub.s32 0, %v7421
        %v7423 = vrot.slane %v6486, %v7422
        %v7425 = vadd.f32 %v7418, %v7423
        %s7426 = scalar_lea.vmem [#allocation10], 32
        %v7427 = vld [vmem:[%s7426] sm:$0xff]
        %v7428 = vld [vmem:[%s7426 + $0x8] sm:$0xff]
        %v7429 = vld [vmem:[%s7426 + $0x10] sm:$0xff]
        %v7430 = vld [vmem:[%s7426 + $0x18] sm:$0xff]
        %s7431 = scalar_lea.vmem %s67, 1
        %v7432 = vld [vmem:[%s7431] sm:$0x1]
        %s7433 = scalar_lea.vmem %s69, 64
        %v7434 = vld [vmem:[%s7433] sm:$0xff]
        %v7435 = vld [vmem:[%s7433 + $0x8] sm:$0xff]
        %v7436 = vld [vmem:[%s7433 + $0x10] sm:$0xff]
        %v7437 = vld [vmem:[%s7433 + $0x18] sm:$0xff]
        %v7438 = vld [vmem:[%s7433 + $0x20] sm:$0xff]
        %v7439 = vld [vmem:[%s7433 + $0x28] sm:$0xff]
        %v7440 = vld [vmem:[%s7433 + $0x30] sm:$0xff]
        %v7441 = vld [vmem:[%s7433 + $0x38] sm:$0xff]
        %s7442 = scalar_lea.vmem %s71, 1
        %v7443 = vld [vmem:[%s7442] sm:$0x1]
        %s7444 = scalar_lea.vmem %s73, 1
        %v7445 = vld [vmem:[%s7444] sm:$0x1]
        %s7446 = scalar_lea.vmem %s75, 1
        %v7447 = vld [vmem:[%s7446] sm:$0x1]
        %v7449 = vlaneseq
        %v7450 = vshrl.u32 %v7449, 7
        %v7451 = vsub.s32 0, %v7450
        %v7452 = vrot.slane %v7432, %v7451
        %v7455 = vsel %vm1282, %v7425, 0
        %7457 = vmatprep.subr.mxu0 0.0
        %7458 = vmatpush1.msra.mxu0 %v7427
        %7459 = vmatprep.subr.mxu0 0.0
        %7460 = vmatpush1.msra.mxu0 %v7428
        %7461 = vmatprep.subr.mxu0 0.0
        %7462 = vmatpush1.msra.mxu0 %v7429
        %7463 = vmatprep.subr.mxu0 0.0
        %7464 = vmatpush1.msra.mxu0 %v7430
        %7465 = vmatprep.subr.mxu0 0.0
        %7466 = vmatpush1.msra.mxu0 0.0
        %7467 = vmatprep.subr.mxu0 0.0
        %7468 = vmatpush1.msra.mxu0 0.0
        %7469 = vmatprep.subr.mxu0 0.0
        %7470 = vmatpush1.msra.mxu0 0.0
        %7471 = vmatprep.subr.mxu0 0.0
        %7472 = vmatpush1.msra.mxu0 0.0
        %7473 = vmatprep.subr.mxu0 0.0
        %7474 = vmatpush1.msra.mxu0 0.0
        %7475 = vmatprep.subr.mxu0 0.0
        %7476 = vmatpush1.msra.mxu0 0.0
        %7477 = vmatprep.subr.mxu0 0.0
        %7478 = vmatpush1.msra.mxu0 0.0
        %7479 = vmatprep.subr.mxu0 0.0
        %7480 = vmatpush1.msra.mxu0 0.0
        %7481 = vmatprep.subr.mxu0 0.0
        %7482 = vmatpush1.msra.mxu0 0.0
        %7483 = vmatprep.subr.mxu0 0.0
        %7484 = vmatpush1.msra.mxu0 0.0
        %7485 = vmatprep.subr.mxu0 0.0
        %7486 = vmatpush1.msra.mxu0 0.0
        %7487 = vmatprep.subr.mxu0 0.0
        %7488 = vmatpush1.msra.mxu0 0.0
        %7489 = vmatprep.subr.mxu0 0.0
        %7490 = vmatpush1.msra.mxu0 0.0
        %7491 = vmatprep.subr.mxu0 0.0
        %7492 = vmatpush1.msra.mxu0 0.0
        %7493 = vmatprep.subr.mxu0 0.0
        %7494 = vmatpush1.msra.mxu0 0.0
        %7495 = vmatprep.subr.mxu0 0.0
        %7496 = vmatpush1.msra.mxu0 0.0
        %7497 = vmatprep.subr.mxu0 0.0
        %7498 = vmatpush1.msra.mxu0 0.0
        %7499 = vmatprep.subr.mxu0 0.0
        %7500 = vmatpush1.msra.mxu0 0.0
        %7501 = vmatprep.subr.mxu0 0.0
        %7502 = vmatpush1.msra.mxu0 0.0
        %7503 = vmatprep.subr.mxu0 0.0
        %7504 = vmatpush1.msra.mxu0 0.0
        %7505 = vmatprep.subr.mxu0 0.0
        %7506 = vmatpush1.msra.mxu0 0.0
        %7507 = vmatprep.subr.mxu0 0.0
        %7508 = vmatpush1.msra.mxu0 0.0
        %7509 = vmatprep.subr.mxu0 0.0
        %7510 = vmatpush1.msra.mxu0 0.0
        %7511 = vmatprep.subr.mxu0 0.0
        %7512 = vmatpush1.msra.mxu0 0.0
        %7513 = vmatprep.subr.mxu0 0.0
        %7514 = vmatpush1.msra.mxu0 0.0
        %7515 = vmatprep.subr.mxu0 0.0
        %7516 = vmatpush1.msra.mxu0 0.0
        %7517 = vmatprep.subr.mxu0 0.0
        %7518 = vmatpush1.msra.mxu0 0.0
        %7519 = vmatprep.subr.mxu0 0.0
        %7520 = vmatpush1.msra.mxu0 0.0
        %7521 = vmatprep.mubr.f32.mxu0 0.0
        %7522 = vmatmul.mubr.f32.gmra.mrb[0].mxu0 %v7455
        %v7523 = vpop.f32.mrb[0].mxu0
        %v7524 = vadd.f32 %v7452, %v7523
        %v7525 = vpop.f32.mrb[0].mxu0
        %7526 = vdwg.mxu0
        %v7527 = vmul.f32 %v7524, 0.5
        %v7528 = vmul.f32 %v7524, 0.70710677
        %v7529 = verf.f32.pop %v7528
        %v7530 = vadd.f32 %v7529, 1.0
        %v7531 = vmul.f32 %v7527, %v7530
        %v7533 = vlaneseq
        %v7534 = vshrl.u32 %v7533, 7
        %v7535 = vsub.s32 0, %v7534
        %v7536 = vrot.slane %v7443, %v7535
        %v7539 = vsel %vm2296, %v7531, 0
        %7541 = vmatprep.subr.mxu0 0.0
        %7542 = vmatpush1.msra.mxu0 %v7434
        %7543 = vmatprep.subr.mxu0 0.0
        %7544 = vmatpush1.msra.mxu0 %v7435
        %7545 = vmatprep.subr.mxu0 0.0
        %7546 = vmatpush1.msra.mxu0 %v7436
        %7547 = vmatprep.subr.mxu0 0.0
        %7548 = vmatpush1.msra.mxu0 %v7437
        %7549 = vmatprep.subr.mxu0 0.0
        %7550 = vmatpush1.msra.mxu0 %v7438
        %7551 = vmatprep.subr.mxu0 0.0
        %7552 = vmatpush1.msra.mxu0 %v7439
        %7553 = vmatprep.subr.mxu0 0.0
        %7554 = vmatpush1.msra.mxu0 %v7440
        %7555 = vmatprep.subr.mxu0 0.0
        %7556 = vmatpush1.msra.mxu0 %v7441
        %7557 = vmatprep.subr.mxu0 0.0
        %7558 = vmatpush1.msra.mxu0 0.0
        %7559 = vmatprep.subr.mxu0 0.0
        %7560 = vmatpush1.msra.mxu0 0.0
        %7561 = vmatprep.subr.mxu0 0.0
        %7562 = vmatpush1.msra.mxu0 0.0
        %7563 = vmatprep.subr.mxu0 0.0
        %7564 = vmatpush1.msra.mxu0 0.0
        %7565 = vmatprep.subr.mxu0 0.0
        %7566 = vmatpush1.msra.mxu0 0.0
        %7567 = vmatprep.subr.mxu0 0.0
        %7568 = vmatpush1.msra.mxu0 0.0
        %7569 = vmatprep.subr.mxu0 0.0
        %7570 = vmatpush1.msra.mxu0 0.0
        %7571 = vmatprep.subr.mxu0 0.0
        %7572 = vmatpush1.msra.mxu0 0.0
        %7573 = vmatprep.subr.mxu0 0.0
        %7574 = vmatpush1.msra.mxu0 0.0
        %7575 = vmatprep.subr.mxu0 0.0
        %7576 = vmatpush1.msra.mxu0 0.0
        %7577 = vmatprep.subr.mxu0 0.0
        %7578 = vmatpush1.msra.mxu0 0.0
        %7579 = vmatprep.subr.mxu0 0.0
        %7580 = vmatpush1.msra.mxu0 0.0
        %7581 = vmatprep.subr.mxu0 0.0
        %7582 = vmatpush1.msra.mxu0 0.0
        %7583 = vmatprep.subr.mxu0 0.0
        %7584 = vmatpush1.msra.mxu0 0.0
        %7585 = vmatprep.subr.mxu0 0.0
        %7586 = vmatpush1.msra.mxu0 0.0
        %7587 = vmatprep.subr.mxu0 0.0
        %7588 = vmatpush1.msra.mxu0 0.0
        %7589 = vmatprep.subr.mxu0 0.0
        %7590 = vmatpush1.msra.mxu0 0.0
        %7591 = vmatprep.subr.mxu0 0.0
        %7592 = vmatpush1.msra.mxu0 0.0
        %7593 = vmatprep.subr.mxu0 0.0
        %7594 = vmatpush1.msra.mxu0 0.0
        %7595 = vmatprep.subr.mxu0 0.0
        %7596 = vmatpush1.msra.mxu0 0.0
        %7597 = vmatprep.subr.mxu0 0.0
        %7598 = vmatpush1.msra.mxu0 0.0
        %7599 = vmatprep.subr.mxu0 0.0
        %7600 = vmatpush1.msra.mxu0 0.0
        %7601 = vmatprep.subr.mxu0 0.0
        %7602 = vmatpush1.msra.mxu0 0.0
        %7603 = vmatprep.subr.mxu0 0.0
        %7604 = vmatpush1.msra.mxu0 0.0
        %7605 = vmatprep.mubr.f32.mxu0 0.0
        %7606 = vmatmul.mubr.f32.gmra.mrb[0].mxu0 %v7539
        %v7607 = vpop.f32.mrb[0].mxu0
        %v7608 = vadd.f32 %v7536, %v7607
        %v7609 = vpop.f32.mrb[0].mxu0
        %7610 = vdwg.mxu0
        %v7611 = vadd.f32 %v7425, %v7608
        %v7612 = vsel %vm1282, %v7611, 0.0
        %7613 = vadd.xlane.f32.xlu0 %v7612
        %v7614 = vpop.xlane.xlu0 %7613
        %v7615 = vmul.f32 %v7614, %v1286
        %v7616 = vsub.f32 %v7611, %v7615
        %v7617 = vmul.f32 %v7616, %v7616
        %v7618 = vsel %vm1282, %v7617, 0.0
        %7619 = vadd.xlane.f32.xlu0 %v7618
        %v7620 = vpop.xlane.xlu0 %7619
        %v7621 = vmul.f32 %v7620, %v1286
        %v7622 = vadd.f32 %v7621, 1e-05
        %v7623 = vrsqrt.pop %v7622
        %v7624 = vmul.f32 %v7616, %v7623
        %v7626 = vlaneseq
        %v7627 = vshrl.u32 %v7626, 7
        %v7628 = vsub.s32 0, %v7627
        %v7629 = vrot.slane %v7445, %v7628
        %v7631 = vmul.f32 %v7624, %v7629
        %v7633 = vlaneseq
        %v7634 = vshrl.u32 %v7633, 7
        %v7635 = vsub.s32 0, %v7634
        %v7636 = vrot.slane %v7447, %v7635
        %v7638 = vadd.f32 %v7631, %v7636
        %7639 = vst.msk [vmem:[%s1270] sm:$0xff] %vm1282, %v7638
        %s7640 = sand.u32 %s916, 1
        %s7641 = scalar_lea.sflag [#allocation4], %s7640
        %s7642 = sand.u32 %s916, 1
        %s7643 = smul.addr %s7642, 8
        %s7644 = scalar_lea.vmem [#allocation11], %s7643
        %s7645 = sand.u32 %s942, 1
        %s7646 = scalar_lea.sflag [#allocation13], %s7645
        %s7647 = sand.u32 %s942, 1
        %s7648 = smul.addr %s7647, 8
        %s7649 = scalar_lea.vmem [#allocation12], %s7648
        // Predicated region
        $region193: #{bart_forward.1} parent=171 // pred_check
          %p7650 = pneg %p926
        $region194: #{bart_forward.1} parent=171 // pred_check_branch
          %7652 = sbr.rel (%p7650) target = $region196
        $region195: #{bart_forward.1} parent=171 // pred_region
          %s7654 = ssub.s32 128, 128
          %7655 = vsyncadd %s7641, %s7654
          %s7656 = smul.addr %s100, 128
          %s7657 = scalar_lea.hbm %s77, %s7656
          %s7659 = sshll.u32 %s7644, 4
          %s7660 = int_to_ptr.vmem [resolvable:$true] %s7659
          %7662 = dma.vmem_to_hbm [thread:$0]  %s7660, 128, %s7657, %s7641
        $region196: #{bart_forward.1} parent=171 // pred_fallthru
          _
        // Predicated region
        $region197: #{bart_forward.1} parent=171 // pred_check
          %p7663 = pneg %p952
        $region198: #{bart_forward.1} parent=171 // pred_check_branch
          %7665 = sbr.rel (%p7663) target = $region200
        $region199: #{bart_forward.1} parent=171 // pred_region
          %s7667 = ssub.s32 128, 128
          %7668 = vsyncadd %s7646, %s7667
          %s7669 = smul.addr %s100, 128
          %s7670 = scalar_lea.hbm %s79, %s7669
          %s7672 = sshll.u32 %s7649, 4
          %s7673 = int_to_ptr.vmem [resolvable:$true] %s7672
          %7675 = dma.vmem_to_hbm [thread:$0]  %s7673, 128, %s7670, %s7646
        $region200: #{bart_forward.1} parent=171 // pred_fallthru
          _
      $region172: #{bart_forward.1} parent=5 // pred_fallthru
        _
      %p7676 = scmp.le.s32.totalorder 2, %s95
      // Predicated region
      $region201: #{bart_forward.1} parent=5 // pred_check
        %p7677 = pneg %p7676
      $region202: #{bart_forward.1} parent=5 // pred_check_branch
        %7679 = sbr.rel (%p7677) target = $region204
      $region203: #{bart_forward.1} parent=5 // pred_region
        %s7680 = ssub.s32 %s95, 2
        // Predicated region
        $region205: #{bart_forward.1} parent=203 // pred_check
          %p7681 = pneg %p932
        $region206: #{bart_forward.1} parent=203 // pred_check_branch
          %7683 = sbr.rel (%p7681) target = $region208
        $region207: #{bart_forward.1} parent=203 // pred_region
          %s7684 = sand.u32 %s917, 1
          %s7685 = scalar_lea.sflag [#allocation4], %s7684
          %s7686 = sand.u32 %s917, 1
          %s7687 = smul.addr %s7686, 8
          %s7688 = scalar_lea.vmem [#allocation11], %s7687
          %7689 = dma.done %s7685, 128
        $region208: #{bart_forward.1} parent=203 // pred_fallthru
          _
        // Predicated region
        $region209: #{bart_forward.1} parent=203 // pred_check
          %p7690 = pneg %p958
        $region210: #{bart_forward.1} parent=203 // pred_check_branch
          %7692 = sbr.rel (%p7690) target = $region212
        $region211: #{bart_forward.1} parent=203 // pred_region
          %s7693 = sand.u32 %s943, 1
          %s7694 = scalar_lea.sflag [#allocation13], %s7693
          %s7695 = sand.u32 %s943, 1
          %s7696 = smul.addr %s7695, 8
          %s7697 = scalar_lea.vmem [#allocation12], %s7696
          %7698 = dma.done %s7694, 128
        $region212: #{bart_forward.1} parent=203 // pred_fallthru
          _
      $region204: #{bart_forward.1} parent=5 // pred_fallthru
        _
    $region6: #{bart_forward.1} parent=1 // loop_footer
      %s99 = sadd.s32 1, %s95
    $region7: #{bart_forward.1} parent=1 // loop_footer_branch
      %94 = sbr.rel target = $region3
    $region8: #{bart_forward.1} parent=1 // loop_exit
      _
    %7699 = vsyncpa [#allocation3], 1
    %s7700 = scalar_lea.sflag [#allocation3], 1
    %7701 = vsyncpa %s7700, 1
    %7702 = vsyncpa [#allocation6], 1
    %7703 = vsyncpa [#allocation9], 1
    %7704 = vsyncpa [#allocation4], 1
    %s7705 = scalar_lea.sflag [#allocation4], 1
    %7706 = vsyncpa %s7705, 1
    %7707 = vsyncpa [#allocation13], 1
    %s7708 = scalar_lea.sflag [#allocation13], 1
    %7709 = vsyncpa %s7708, 1

</llo_original>
